<compile_context>
chip_gen: v7x
topology: tpu7x:2x2x1
jax: 0.10.0
libtpu: 0.0.40
codegen_flags: <defaults>
</compile_context>

<pallas_src>
import functools

import jax
import jax.numpy as jnp
from jax.experimental import pallas as pl


# ----------------------------------------------------------------------------
# Small helpers used inside kernels
# ----------------------------------------------------------------------------
def _layernorm(x, g, b, eps):
    mu = jnp.mean(x, axis=-1, keepdims=True)
    var = jnp.mean(jnp.square(x - mu), axis=-1, keepdims=True)
    return (x - mu) * jax.lax.rsqrt(var + eps) * g + b


# ----------------------------------------------------------------------------
# Kernel 1: embedding linear + GRU input projection for BOTH directions, fused.
#   gi = (x @ We + be) @ Wih_cat + bih_cat          (S*B, 6H)
#   column layout: [fwd r | fwd z | fwd n | bwd r | bwd z | bwd n]
#   (bih_cat already contains b_ih + b_hh for the r/z gates; b_hn is added in the
#    recurrence where it must be gated by r.)
# ----------------------------------------------------------------------------
def _emb_gi_kernel(x_ref, we_ref, be_ref, wi_ref, bi_ref, o_ref):
    xe = jnp.dot(x_ref[...], we_ref[...], preferred_element_type=jnp.float32) + be_ref[...]
    o_ref[...] = jnp.dot(xe, wi_ref[...], preferred_element_type=jnp.float32) + bi_ref[...]


def emb_inproj(x_flat, emb_w, emb_b, wih_cat, bih_cat):
    n = x_flat.shape[0]
    out = wih_cat.shape[1]
    return pl.pallas_call(
        _emb_gi_kernel,
        out_shape=jax.ShapeDtypeStruct((n, out), jnp.float32),
    )(x_flat, emb_w, emb_b, wih_cat, bih_cat)


# ----------------------------------------------------------------------------
# Kernel 2: fused bidirectional GRU recurrence (grid-free, unrolled over time).
# Inputs:  gi (S, B, 6H)  precomputed input-side gate pre-activations
#          whh_f / whh_b (H, 3H), bhhn_f / bhhn_b (1, H)
# Output:  (2, S, B, H)   [0]=forward hidden at time t, [1]=backward hidden at t
# ----------------------------------------------------------------------------
def _bigru_kernel(gi_ref, whh_f_ref, whh_b_ref, bhhn_f_ref, bhhn_b_ref, o_ref, *, S, H):
    B = gi_ref.shape[1]
    wf = whh_f_ref[...]
    wb = whh_b_ref[...]
    bnf = bhhn_f_ref[...]
    bnb = bhhn_b_ref[...]
    H3 = 3 * H

    h_f = jnp.zeros((B, H), jnp.float32)
    h_b = jnp.zeros((B, H), jnp.float32)

    for s in range(S):                      # static unroll; recurrence is serial anyway
        gi_fwd = gi_ref[s][:, :H3]          # (B, 3H) for time s
        gi_bwd = gi_ref[S - 1 - s][:, H3:]  # (B, 3H) for time S-1-s

        gh_f = jnp.dot(h_f, wf, preferred_element_type=jnp.float32)   # (B, 3H)
        gh_b = jnp.dot(h_b, wb, preferred_element_type=jnp.float32)

        # forward direction (gate order r, z, n as torch.nn.GRU)
        r_f = jax.nn.sigmoid(gi_fwd[:, :H] + gh_f[:, :H])
        z_f = jax.nn.sigmoid(gi_fwd[:, H:2 * H] + gh_f[:, H:2 * H])
        n_f = jnp.tanh(gi_fwd[:, 2 * H:] + r_f * (gh_f[:, 2 * H:] + bnf))
        h_f = (1.0 - z_f) * n_f + z_f * h_f

        # backward direction
        r_b = jax.nn.sigmoid(gi_bwd[:, :H] + gh_b[:, :H])
        z_b = jax.nn.sigmoid(gi_bwd[:, H:2 * H] + gh_b[:, H:2 * H])
        n_b = jnp.tanh(gi_bwd[:, 2 * H:] + r_b * (gh_b[:, 2 * H:] + bnb))
        h_b = (1.0 - z_b) * n_b + z_b * h_b

        o_ref[0, s] = h_f
        o_ref[1, S - 1 - s] = h_b


def bigru(gi, whh_f, whh_b, bhhn_f, bhhn_b, *, S, H):
    B = gi.shape[1]
    return pl.pallas_call(
        functools.partial(_bigru_kernel, S=S, H=H),
        out_shape=jax.ShapeDtypeStruct((2, S, B, H), jnp.float32),
    )(gi, whh_f, whh_b, bhhn_f, bhhn_b)


# ----------------------------------------------------------------------------
# Kernel 3: one fully-fused post-norm TransformerEncoderLayer.
# x is token-flat, batch-major: row = b*S + s, width D. mask_add is (B, 1, S)
# additive (0 / -1e9). Heads & batches are statically unrolled; head-concat is
# folded into out_proj as sum_h (o_h @ Wout[h*hd:(h+1)*hd, :]).
# ----------------------------------------------------------------------------
def _encoder_layer_kernel(x_ref, mask_ref,
                          wqkv_ref, bqkv_ref, wo_ref, bo_ref,
                          g1_ref, b1_ref, w1_ref, bf1_ref, w2_ref, bf2_ref,
                          g2_ref, b2_ref, o_ref, *, B, S, nH, hd, eps):
    D = nH * hd
    scale = 1.0 / float(hd) ** 0.5

    x = x_ref[...]                                            # (B*S, D)
    wo = wo_ref[...]                                          # (D, D)
    qkv = jnp.dot(x, wqkv_ref[...],
                  preferred_element_type=jnp.float32) + bqkv_ref[...]   # (B*S, 3D)

    for b in range(B):
        r0 = b * S
        x_b = x[r0:r0 + S, :]                                 # (S, D)
        qkv_b = qkv[r0:r0 + S, :]                             # (S, 3D)
        m_b = mask_ref[b]                                     # (1, S) additive mask

        attn_b = jnp.zeros((S, D), jnp.float32)
        for h in range(nH):
            q = qkv_b[:, h * hd:(h + 1) * hd]
            k = qkv_b[:, D + h * hd:D + (h + 1) * hd]
            v = qkv_b[:, 2 * D + h * hd:2 * D + (h + 1) * hd]
            s = jax.lax.dot_general(q, k, (((1,), (1,)), ((), ())),
                                    preferred_element_type=jnp.float32) * scale
            s = s + m_b                                       # broadcast over query rows
            s = s - jnp.max(s, axis=-1, keepdims=True)
            p = jnp.exp(s)
            p = p / jnp.sum(p, axis=-1, keepdims=True)
            o_h = jnp.dot(p, v, preferred_element_type=jnp.float32)      # (S, hd)
            attn_b = attn_b + jnp.dot(o_h, wo[h * hd:(h + 1) * hd, :],
                                      preferred_element_type=jnp.float32)
        attn_b = attn_b + bo_ref[...]

        h1 = _layernorm(x_b + attn_b, g1_ref[...], b1_ref[...], eps)
        ff = jnp.maximum(jnp.dot(h1, w1_ref[...],
                                 preferred_element_type=jnp.float32) + bf1_ref[...], 0.0)
        ff = jnp.dot(ff, w2_ref[...], preferred_element_type=jnp.float32) + bf2_ref[...]
        o_ref[r0:r0 + S, :] = _layernorm(h1 + ff, g2_ref[...], b2_ref[...], eps)


def encoder_layer(xb, mask_add, lp, *, B, S, nH, hd, eps=1e-5):
    N, D = xb.shape
    return pl.pallas_call(
        functools.partial(_encoder_layer_kernel, B=B, S=S, nH=nH, hd=hd, eps=eps),
        out_shape=jax.ShapeDtypeStruct((N, D), jnp.float32),
    )(xb, mask_add, lp['wqkv'], lp['bqkv'], lp['wo'], lp['bo'],
      lp['ln1_g'], lp['ln1_b'], lp['w1'], lp['b1'], lp['w2'], lp['b2'],
      lp['ln2_g'], lp['ln2_b'])


# ----------------------------------------------------------------------------
# Kernel 4: the three output projections fused into one matmul (D, 3*out).
# ----------------------------------------------------------------------------
def _proj_kernel(x_ref, w_ref, b_ref, o_ref):
    o_ref[...] = jnp.dot(x_ref[...], w_ref[...],
                         preferred_element_type=jnp.float32) + b_ref[...]


def fused_proj(xb, w, b):
    n = xb.shape[0]
    return pl.pallas_call(
        _proj_kernel,
        out_shape=jax.ShapeDtypeStruct((n, w.shape[1]), jnp.float32),
    )(xb, w, b)


# ----------------------------------------------------------------------------
# Parameters + forward-pass glue
# ----------------------------------------------------------------------------
def init_params(key, args, out_channels):
    V2 = args['VOCAB_SIZE'] * 2
    E = args['EMB_DIM']
    H = args['HIDDEN']
    D = H * (2 if args['BIDIRECTION'] else 1)
    F = args['FEED_DIM']
    keys = iter(jax.random.split(key, 64))

    def rnd(shape, scale=0.05):
        return scale * jax.random.normal(next(keys), shape, dtype=jnp.float32)

    p = {'emb_w': rnd((V2, E)), 'emb_b': rnd((1, E))}

    # Raw GRU params (gate order r, z, n), then fold into fused layouts.
    wih_f, wih_b = rnd((E, 3 * H)), rnd((E, 3 * H))
    bih_f, bih_b = rnd((1, 3 * H)), rnd((1, 3 * H))
    bhh_f, bhh_b = rnd((1, 3 * H)), rnd((1, 3 * H))

    def fold_bias(bih, bhh):   # pre-sum r/z recurrent biases; keep b_hn out (gated by r)
        return jnp.concatenate([bih[:, :2 * H] + bhh[:, :2 * H], bih[:, 2 * H:]], axis=1)

    p['wih_cat'] = jnp.concatenate([wih_f, wih_b], axis=1)                    # (E, 6H)
    p['bih_cat'] = jnp.concatenate([fold_bias(bih_f, bhh_f),
                                    fold_bias(bih_b, bhh_b)], axis=1)          # (1, 6H)
    p['whh_f'], p['whh_b'] = rnd((H, 3 * H)), rnd((H, 3 * H))
    p['bhhn_f'], p['bhhn_b'] = bhh_f[:, 2 * H:], bhh_b[:, 2 * H:]              # (1, H)

    layers = []
    for _ in range(args['ENC_LAYERS']):
        layers.append(dict(
            wqkv=rnd((D, 3 * D)), bqkv=rnd((1, 3 * D)),
            wo=rnd((D, D)), bo=rnd((1, D)),
            ln1_g=jnp.ones((1, D), jnp.float32), ln1_b=jnp.zeros((1, D), jnp.float32),
            w1=rnd((D, F)), b1=rnd((1, F)),
            w2=rnd((F, D)), b2=rnd((1, D)),
            ln2_g=jnp.ones((1, D), jnp.float32), ln2_b=jnp.zeros((1, D), jnp.float32),
        ))
    p['layers'] = layers

    p['proj_w'] = rnd((D, 3 * out_channels))
    p['proj_b'] = rnd((1, 3 * out_channels))
    return p


def forward(params, x, masks, args):
    S, B, _ = x.shape
    H = args['HIDDEN']
    D = H * (2 if args['BIDIRECTION'] else 1)
    nH = args['ATTN_HEAD']
    hd = D // nH

    # RNN_encoder: emb linear (dropout = identity at eval) + fused bi-GRU.
    gi = emb_inproj(x.reshape(S * B, -1), params['emb_w'], params['emb_b'],
                    params['wih_cat'], params['bih_cat'])          # (S*B, 6H)
    gi = gi.reshape(S, B, 6 * H)
    h = bigru(gi, params['whh_f'], params['whh_b'],
              params['bhhn_f'], params['bhhn_b'], S=S, H=H)        # (2, S, B, H)

    # (2,S,B,H) -> batch-major tokens (B*S, 2H): row = b*S + s, cols = [fwd | bwd]
    xb = h.transpose(2, 1, 0, 3).reshape(B * S, D)

    # TransformerEncoder with src_key_padding_mask (True = ignore).
    mask_add = jnp.where(masks, -1e9, 0.0).astype(jnp.float32).reshape(B, 1, S)
    for lp in params['layers']:
        xb = encoder_layer(xb, mask_add, lp, B=B, S=S, nH=nH, hd=hd)

    # torch.stack([proj(x) for proj in linear_projectors]) -> (3, S, B, out)
    y = fused_proj(xb, params['proj_w'], params['proj_b'])         # (B*S, 3*out)
    out_ch = params['proj_b'].shape[1] // 3
    return y.reshape(B, S, 3, out_ch).transpose(2, 1, 0, 3)


if __name__ == "__main__":
    args = dict(VOCAB_SIZE=8, EMB_DIM=32, HIDDEN=32, LAYERS=1, DROPOUT=0.0,
                BIDIRECTION=True, RNN_TYPE='GRU', ATTN_HEAD=4, FEED_DIM=64,
                ENC_LAYERS=2)
    out_channels = 8
    S, B = 8, 2

    key = jax.random.PRNGKey(0)
    k_param, k_x = jax.random.split(key)
    params = init_params(k_param, args, out_channels)

    x = jax.random.normal(k_x, (S, B, args['VOCAB_SIZE'] * 2), dtype=jnp.float32)
    masks = jnp.array([[False] * S,
                       [False] * (S - 2) + [True] * 2])            # (B, S), True = pad

    fwd = jax.jit(functools.partial(forward, args=args))
    out = jax.block_until_ready(fwd(params, x, masks))

    assert out.shape == (3, S, B, out_channels), out.shape
    assert bool(jnp.all(jnp.isfinite(out)))
    print("KERNEL_OK")
</pallas_src>

<mosaic_0001>
module attributes {stable_mosaic.version = 11 : i64} {
  func.func @_emb_gi_kernel(%arg0: memref<16x16xf32, #tpu.memory_space<vmem>>, %arg1: memref<16x32xf32, #tpu.memory_space<vmem>>, %arg2: memref<1x32xf32, #tpu.memory_space<vmem>>, %arg3: memref<32x192xf32, #tpu.memory_space<vmem>>, %arg4: memref<1x192xf32, #tpu.memory_space<vmem>>, %arg5: memref<16x192xf32, #tpu.memory_space<vmem>>) attributes {dimension_semantics = [], scalar_prefetch = 0 : i64, scratch_operands = 0 : i64, tpu.core_type = #tpu.core_type<tc>} {
    %c0 = arith.constant 0 : index
    %c0_0 = arith.constant 0 : index
    %0 = vector.load %arg0[%c0, %c0_0] : memref<16x16xf32, #tpu.memory_space<vmem>>, vector<16x16xf32>
    %c0_1 = arith.constant 0 : index
    %c0_2 = arith.constant 0 : index
    %1 = vector.load %arg1[%c0_1, %c0_2] : memref<16x32xf32, #tpu.memory_space<vmem>>, vector<16x32xf32>
    %cst = arith.constant dense<0.000000e+00> : vector<16x32xf32>
    %2 = tpu.matmul %0, %1, %cst {dimension_numbers = #tpu.dot_dimension_numbers<[1], [0], [0], [1], [0, 0, 1, 1], [], []>} : vector<16x16xf32>, vector<16x32xf32>, vector<16x32xf32> -> vector<16x32xf32>
    %c0_3 = arith.constant 0 : index
    %c0_4 = arith.constant 0 : index
    %3 = vector.load %arg2[%c0_3, %c0_4] : memref<1x32xf32, #tpu.memory_space<vmem>>, vector<1x32xf32>
    %4 = vector.broadcast %3 : vector<1x32xf32> to vector<16x32xf32>
    %5 = arith.addf %2, %4 : vector<16x32xf32>
    %c0_5 = arith.constant 0 : index
    %c0_6 = arith.constant 0 : index
    %6 = vector.load %arg3[%c0_5, %c0_6] : memref<32x192xf32, #tpu.memory_space<vmem>>, vector<32x192xf32>
    %cst_7 = arith.constant dense<0.000000e+00> : vector<16x192xf32>
    %7 = tpu.matmul %5, %6, %cst_7 {dimension_numbers = #tpu.dot_dimension_numbers<[1], [0], [0], [1], [0, 0, 1, 1], [], []>} : vector<16x32xf32>, vector<32x192xf32>, vector<16x192xf32> -> vector<16x192xf32>
    %c0_8 = arith.constant 0 : index
    %c0_9 = arith.constant 0 : index
    %8 = vector.load %arg4[%c0_8, %c0_9] : memref<1x192xf32, #tpu.memory_space<vmem>>, vector<1x192xf32>
    %9 = vector.broadcast %8 : vector<1x192xf32> to vector<16x192xf32>
    %10 = arith.addf %7, %9 : vector<16x192xf32>
    %c0_10 = arith.constant 0 : index
    %c0_11 = arith.constant 0 : index
    %11 = vector.load %arg5[%c0_10, %c0_11] : memref<16x192xf32, #tpu.memory_space<vmem>>, vector<16x192xf32>
    tpu.vector_store %arg5[%c0_10, %c0_11], %10 {strides = array<i32>} : memref<16x192xf32, #tpu.memory_space<vmem>>, vector<16x192xf32>,
    return
  }
}

module attributes {stable_mosaic.version = 11 : i64} {
  func.func @_bigru_kernel(%arg0: memref<8x2x192xf32, #tpu.memory_space<vmem>>, %arg1: memref<32x96xf32, #tpu.memory_space<vmem>>, %arg2: memref<32x96xf32, #tpu.memory_space<vmem>>, %arg3: memref<1x32xf32, #tpu.memory_space<vmem>>, %arg4: memref<1x32xf32, #tpu.memory_space<vmem>>, %arg5: memref<2x8x2x32xf32, #tpu.memory_space<vmem>>) attributes {dimension_semantics = [], scalar_prefetch = 0 : i64, scratch_operands = 0 : i64, tpu.core_type = #tpu.core_type<tc>} {
    %c0 = arith.constant 0 : index
    %c0_0 = arith.constant 0 : index
    %0 = vector.load %arg1[%c0, %c0_0] : memref<32x96xf32, #tpu.memory_space<vmem>>, vector<32x96xf32>
    %c0_1 = arith.constant 0 : index
    %c0_2 = arith.constant 0 : index
    %1 = vector.load %arg2[%c0_1, %c0_2] : memref<32x96xf32, #tpu.memory_space<vmem>>, vector<32x96xf32>
    %c0_3 = arith.constant 0 : index
    %c0_4 = arith.constant 0 : index
    %2 = vector.load %arg3[%c0_3, %c0_4] : memref<1x32xf32, #tpu.memory_space<vmem>>, vector<1x32xf32>
    %c0_5 = arith.constant 0 : index
    %c0_6 = arith.constant 0 : index
    %3 = vector.load %arg4[%c0_5, %c0_6] : memref<1x32xf32, #tpu.memory_space<vmem>>, vector<1x32xf32>
    %cst = arith.constant 0.000000e+00 : f32
    %4 = vector.broadcast %cst : f32 to vector<2x32xf32>
    %cst_7 = arith.constant 0.000000e+00 : f32
    %5 = vector.broadcast %cst_7 : f32 to vector<2x32xf32>
    %c0_8 = arith.constant 0 : index
    %c0_9 = arith.constant 0 : index
    %c0_10 = arith.constant 0 : index
    %6 = vector.load %arg0[%c0_8, %c0_9, %c0_10] : memref<8x2x192xf32, #tpu.memory_space<vmem>>, vector<1x2x192xf32>
    %7 = vector.shape_cast %6 : vector<1x2x192xf32> to vector<2x192xf32>
    %8 = vector.extract_strided_slice %7 {offsets = [0, 0], sizes = [2, 96], strides = [1, 1]} : vector<2x192xf32> to vector<2x96xf32>
    %c7 = arith.constant 7 : index
    %c0_11 = arith.constant 0 : index
    %c0_12 = arith.constant 0 : index
    %9 = vector.load %arg0[%c7, %c0_11, %c0_12] : memref<8x2x192xf32, #tpu.memory_space<vmem>>, vector<1x2x192xf32>
    %10 = vector.shape_cast %9 : vector<1x2x192xf32> to vector<2x192xf32>
    %11 = vector.extract_strided_slice %10 {offsets = [0, 96], sizes = [2, 96], strides = [1, 1]} : vector<2x192xf32> to vector<2x96xf32>
    %cst_13 = arith.constant dense<0.000000e+00> : vector<2x96xf32>
    %12 = tpu.matmul %4, %0, %cst_13 {dimension_numbers = #tpu.dot_dimension_numbers<[1], [0], [0], [1], [0, 0, 1, 1], [], []>} : vector<2x32xf32>, vector<32x96xf32>, vector<2x96xf32> -> vector<2x96xf32>
    %cst_14 = arith.constant dense<0.000000e+00> : vector<2x96xf32>
    %13 = tpu.matmul %5, %1, %cst_14 {dimension_numbers = #tpu.dot_dimension_numbers<[1], [0], [0], [1], [0, 0, 1, 1], [], []>} : vector<2x32xf32>, vector<32x96xf32>, vector<2x96xf32> -> vector<2x96xf32>
    %14 = vector.extract_strided_slice %8 {offsets = [0, 0], sizes = [2, 32], strides = [1, 1]} : vector<2x96xf32> to vector<2x32xf32>
    %15 = vector.extract_strided_slice %12 {offsets = [0, 0], sizes = [2, 32], strides = [1, 1]} : vector<2x96xf32> to vector<2x32xf32>
    %16 = arith.addf %14, %15 : vector<2x32xf32>
    %17 = arith.negf %16 : vector<2x32xf32>
    %18 = math.exp %17 : vector<2x32xf32>
    %cst_15 = arith.constant 1.000000e+00 : f32
    %19 = vector.broadcast %cst_15 : f32 to vector<2x32xf32>
    %20 = arith.addf %19, %18 : vector<2x32xf32>
    %21 = arith.divf %19, %20 : vector<2x32xf32>
    %22 = vector.extract_strided_slice %8 {offsets = [0, 32], sizes = [2, 32], strides = [1, 1]} : vector<2x96xf32> to vector<2x32xf32>
    %23 = vector.extract_strided_slice %12 {offsets = [0, 32], sizes = [2, 32], strides = [1, 1]} : vector<2x96xf32> to vector<2x32xf32>
    %24 = arith.addf %22, %23 : vector<2x32xf32>
    %25 = arith.negf %24 : vector<2x32xf32>
    %26 = math.exp %25 : vector<2x32xf32>
    %cst_16 = arith.constant 1.000000e+00 : f32
    %27 = vector.broadcast %cst_16 : f32 to vector<2x32xf32>
    %28 = arith.addf %27, %26 : vector<2x32xf32>
    %29 = arith.divf %27, %28 : vector<2x32xf32>
    %30 = vector.extract_strided_slice %8 {offsets = [0, 64], sizes = [2, 32], strides = [1, 1]} : vector<2x96xf32> to vector<2x32xf32>
    %31 = vector.extract_strided_slice %12 {offsets = [0, 64], sizes = [2, 32], strides = [1, 1]} : vector<2x96xf32> to vector<2x32xf32>
    %32 = vector.broadcast %2 : vector<1x32xf32> to vector<2x32xf32>
    %33 = arith.addf %31, %32 : vector<2x32xf32>
    %34 = arith.mulf %21, %33 : vector<2x32xf32>
    %35 = arith.addf %30, %34 : vector<2x32xf32>
    %36 = math.tanh %35 : vector<2x32xf32>
    %cst_17 = arith.constant 1.000000e+00 : f32
    %37 = vector.broadcast %cst_17 : f32 to vector<2x32xf32>
    %38 = arith.subf %37, %29 : vector<2x32xf32>
    %39 = arith.mulf %38, %36 : vector<2x32xf32>
    %40 = arith.mulf %29, %4 : vector<2x32xf32>
    %41 = arith.addf %39, %40 : vector<2x32xf32>
    %42 = vector.extract_strided_slice %11 {offsets = [0, 0], sizes = [2, 32], strides = [1, 1]} : vector<2x96xf32> to vector<2x32xf32>
    %43 = vector.extract_strided_slice %13 {offsets = [0, 0], sizes = [2, 32], strides = [1, 1]} : vector<2x96xf32> to vector<2x32xf32>
    %44 = arith.addf %42, %43 : vector<2x32xf32>
    %45 = arith.negf %44 : vector<2x32xf32>
    %46 = math.exp %45 : vector<2x32xf32>
    %cst_18 = arith.constant 1.000000e+00 : f32
    %47 = vector.broadcast %cst_18 : f32 to vector<2x32xf32>
    %48 = arith.addf %47, %46 : vector<2x32xf32>
    %49 = arith.divf %47, %48 : vector<2x32xf32>
    %50 = vector.extract_strided_slice %11 {offsets = [0, 32], sizes = [2, 32], strides = [1, 1]} : vector<2x96xf32> to vector<2x32xf32>
    %51 = vector.extract_strided_slice %13 {offsets = [0, 32], sizes = [2, 32], strides = [1, 1]} : vector<2x96xf32> to vector<2x32xf32>
    %52 = arith.addf %50, %51 : vector<2x32xf32>
    %53 = arith.negf %52 : vector<2x32xf32>
    %54 = math.exp %53 : vector<2x32xf32>
    %cst_19 = arith.constant 1.000000e+00 : f32
    %55 = vector.broadcast %cst_19 : f32 to vector<2x32xf32>
    %56 = arith.addf %55, %54 : vector<2x32xf32>
    %57 = arith.divf %55, %56 : vector<2x32xf32>
    %58 = vector.extract_strided_slice %11 {offsets = [0, 64], sizes = [2, 32], strides = [1, 1]} : vector<2x96xf32> to vector<2x32xf32>
    %59 = vector.extract_strided_slice %13 {offsets = [0, 64], sizes = [2, 32], strides = [1, 1]} : vector<2x96xf32> to vector<2x32xf32>
    %60 = vector.broadcast %3 : vector<1x32xf32> to vector<2x32xf32>
    %61 = arith.addf %59, %60 : vector<2x32xf32>
    %62 = arith.mulf %49, %61 : vector<2x32xf32>
    %63 = arith.addf %58, %62 : vector<2x32xf32>
    %64 = math.tanh %63 : vector<2x32xf32>
    %cst_20 = arith.constant 1.000000e+00 : f32
    %65 = vector.broadcast %cst_20 : f32 to vector<2x32xf32>
    %66 = arith.subf %65, %57 : vector<2x32xf32>
    %67 = arith.mulf %66, %64 : vector<2x32xf32>
    %68 = arith.mulf %57, %5 : vector<2x32xf32>
    %69 = arith.addf %67, %68 : vector<2x32xf32>
    %c0_21 = arith.constant 0 : index
    %c0_22 = arith.constant 0 : index
    %c0_23 = arith.constant 0 : index
    %c0_24 = arith.constant 0 : index
    %70 = vector.load %arg5[%c0_21, %c0_22, %c0_23, %c0_24] : memref<2x8x2x32xf32, #tpu.memory_space<vmem>>, vector<1x1x2x32xf32>
    %71 = vector.shape_cast %70 : vector<1x1x2x32xf32> to vector<2x32xf32>
    %72 = vector.shape_cast %41 : vector<2x32xf32> to vector<1x1x2x32xf32>
    tpu.vector_store %arg5[%c0_21, %c0_22, %c0_23, %c0_24], %72 {strides = array<i32>} : memref<2x8x2x32xf32, #tpu.memory_space<vmem>>, vector<1x1x2x32xf32>,
    %c1 = arith.constant 1 : index
    %c7_25 = arith.constant 7 : index
    %c0_26 = arith.constant 0 : index
    %c0_27 = arith.constant 0 : index
    %73 = vector.load %arg5[%c1, %c7_25, %c0_26, %c0_27] : memref<2x8x2x32xf32, #tpu.memory_space<vmem>>, vector<1x1x2x32xf32>
    %74 = vector.shape_cast %73 : vector<1x1x2x32xf32> to vector<2x32xf32>
    %75 = vector.shape_cast %69 : vector<2x32xf32> to vector<1x1x2x32xf32>
    tpu.vector_store %arg5[%c1, %c7_25, %c0_26, %c0_27], %75 {strides = array<i32>} : memref<2x8x2x32xf32, #tpu.memory_space<vmem>>, vector<1x1x2x32xf32>,
    %c1_28 = arith.constant 1 : index
    %c0_29 = arith.constant 0 : index
    %c0_30 = arith.constant 0 : index
    %76 = vector.load %arg0[%c1_28, %c0_29, %c0_30] : memref<8x2x192xf32, #tpu.memory_space<vmem>>, vector<1x2x192xf32>
    %77 = vector.shape_cast %76 : vector<1x2x192xf32> to vector<2x192xf32>
    %78 = vector.extract_strided_slice %77 {offsets = [0, 0], sizes = [2, 96], strides = [1, 1]} : vector<2x192xf32> to vector<2x96xf32>
    %c6 = arith.constant 6 : index
    %c0_31 = arith.constant 0 : index
    %c0_32 = arith.constant 0 : index
    %79 = vector.load %arg0[%c6, %c0_31, %c0_32] : memref<8x2x192xf32, #tpu.memory_space<vmem>>, vector<1x2x192xf32>
    %80 = vector.shape_cast %79 : vector<1x2x192xf32> to vector<2x192xf32>
    %81 = vector.extract_strided_slice %80 {offsets = [0, 96], sizes = [2, 96], strides = [1, 1]} : vector<2x192xf32> to vector<2x96xf32>
    %cst_33 = arith.constant dense<0.000000e+00> : vector<2x96xf32>
    %82 = tpu.matmul %41, %0, %cst_33 {dimension_numbers = #tpu.dot_dimension_numbers<[1], [0], [0], [1], [0, 0, 1, 1], [], []>} : vector<2x32xf32>, vector<32x96xf32>, vector<2x96xf32> -> vector<2x96xf32>
    %cst_34 = arith.constant dense<0.000000e+00> : vector<2x96xf32>
    %83 = tpu.matmul %69, %1, %cst_34 {dimension_numbers = #tpu.dot_dimension_numbers<[1], [0], [0], [1], [0, 0, 1, 1], [], []>} : vector<2x32xf32>, vector<32x96xf32>, vector<2x96xf32> -> vector<2x96xf32>
    %84 = vector.extract_strided_slice %78 {offsets = [0, 0], sizes = [2, 32], strides = [1, 1]} : vector<2x96xf32> to vector<2x32xf32>
    %85 = vector.extract_strided_slice %82 {offsets = [0, 0], sizes = [2, 32], strides = [1, 1]} : vector<2x96xf32> to vector<2x32xf32>
    %86 = arith.addf %84, %85 : vector<2x32xf32>
    %87 = arith.negf %86 : vector<2x32xf32>
    %88 = math.exp %87 : vector<2x32xf32>
    %cst_35 = arith.constant 1.000000e+00 : f32
    %89 = vector.broadcast %cst_35 : f32 to vector<2x32xf32>
    %90 = arith.addf %89, %88 : vector<2x32xf32>
    %91 = arith.divf %89, %90 : vector<2x32xf32>
    %92 = vector.extract_strided_slice %78 {offsets = [0, 32], sizes = [2, 32], strides = [1, 1]} : vector<2x96xf32> to vector<2x32xf32>
    %93 = vector.extract_strided_slice %82 {offsets = [0, 32], sizes = [2, 32], strides = [1, 1]} : vector<2x96xf32> to vector<2x32xf32>
    %94 = arith.addf %92, %93 : vector<2x32xf32>
    %95 = arith.negf %94 : vector<2x32xf32>
    %96 = math.exp %95 : vector<2x32xf32>
    %cst_36 = arith.constant 1.000000e+00 : f32
    %97 = vector.broadcast %cst_36 : f32 to vector<2x32xf32>
    %98 = arith.addf %97, %96 : vector<2x32xf32>
    %99 = arith.divf %97, %98 : vector<2x32xf32>
    %100 = vector.extract_strided_slice %78 {offsets = [0, 64], sizes = [2, 32], strides = [1, 1]} : vector<2x96xf32> to vector<2x32xf32>
    %101 = vector.extract_strided_slice %82 {offsets = [0, 64], sizes = [2, 32], strides = [1, 1]} : vector<2x96xf32> to vector<2x32xf32>
    %102 = vector.broadcast %2 : vector<1x32xf32> to vector<2x32xf32>
    %103 = arith.addf %101, %102 : vector<2x32xf32>
    %104 = arith.mulf %91, %103 : vector<2x32xf32>
    %105 = arith.addf %100, %104 : vector<2x32xf32>
    %106 = math.tanh %105 : vector<2x32xf32>
    %cst_37 = arith.constant 1.000000e+00 : f32
    %107 = vector.broadcast %cst_37 : f32 to vector<2x32xf32>
    %108 = arith.subf %107, %99 : vector<2x32xf32>
    %109 = arith.mulf %108, %106 : vector<2x32xf32>
    %110 = arith.mulf %99, %41 : vector<2x32xf32>
    %111 = arith.addf %109, %110 : vector<2x32xf32>
    %112 = vector.extract_strided_slice %81 {offsets = [0, 0], sizes = [2, 32], strides = [1, 1]} : vector<2x96xf32> to vector<2x32xf32>
    %113 = vector.extract_strided_slice %83 {offsets = [0, 0], sizes = [2, 32], strides = [1, 1]} : vector<2x96xf32> to vector<2x32xf32>
    %114 = arith.addf %112, %113 : vector<2x32xf32>
    %115 = arith.negf %114 : vector<2x32xf32>
    %116 = math.exp %115 : vector<2x32xf32>
    %cst_38 = arith.constant 1.000000e+00 : f32
    %117 = vector.broadcast %cst_38 : f32 to vector<2x32xf32>
    %118 = arith.addf %117, %116 : vector<2x32xf32>
    %119 = arith.divf %117, %118 : vector<2x32xf32>
    %120 = vector.extract_strided_slice %81 {offsets = [0, 32], sizes = [2, 32], strides = [1, 1]} : vector<2x96xf32> to vector<2x32xf32>
    %121 = vector.extract_strided_slice %83 {offsets = [0, 32], sizes = [2, 32], strides = [1, 1]} : vector<2x96xf32> to vector<2x32xf32>
    %122 = arith.addf %120, %121 : vector<2x32xf32>
    %123 = arith.negf %122 : vector<2x32xf32>
    %124 = math.exp %123 : vector<2x32xf32>
    %cst_39 = arith.constant 1.000000e+00 : f32
    %125 = vector.broadcast %cst_39 : f32 to vector<2x32xf32>
    %126 = arith.addf %125, %124 : vector<2x32xf32>
    %127 = arith.divf %125, %126 : vector<2x32xf32>
    %128 = vector.extract_strided_slice %81 {offsets = [0, 64], sizes = [2, 32], strides = [1, 1]} : vector<2x96xf32> to vector<2x32xf32>
    %129 = vector.extract_strided_slice %83 {offsets = [0, 64], sizes = [2, 32], strides = [1, 1]} : vector<2x96xf32> to vector<2x32xf32>
    %130 = vector.broadcast %3 : vector<1x32xf32> to vector<2x32xf32>
    %131 = arith.addf %129, %130 : vector<2x32xf32>
    %132 = arith.mulf %119, %131 : vector<2x32xf32>
    %133 = arith.addf %128, %132 : vector<2x32xf32>
    %134 = math.tanh %133 : vector<2x32xf32>
    %cst_40 = arith.constant 1.000000e+00 : f32
    %135 = vector.broadcast %cst_40 : f32 to vector<2x32xf32>
    %136 = arith.subf %135, %127 : vector<2x32xf32>
    %137 = arith.mulf %136, %134 : vector<2x32xf32>
    %138 = arith.mulf %127, %69 : vector<2x32xf32>
    %139 = arith.addf %137, %138 : vector<2x32xf32>
    %c0_41 = arith.constant 0 : index
    %c1_42 = arith.constant 1 : index
    %c0_43 = arith.constant 0 : index
    %c0_44 = arith.constant 0 : index
    %140 = vector.load %arg5[%c0_41, %c1_42, %c0_43, %c0_44] : memref<2x8x2x32xf32, #tpu.memory_space<vmem>>, vector<1x1x2x32xf32>
    %141 = vector.shape_cast %140 : vector<1x1x2x32xf32> to vector<2x32xf32>
    %142 = vector.shape_cast %111 : vector<2x32xf32> to vector<1x1x2x32xf32>
    tpu.vector_store %arg5[%c0_41, %c1_42, %c0_43, %c0_44], %142 {strides = array<i32>} : memref<2x8x2x32xf32, #tpu.memory_space<vmem>>, vector<1x1x2x32xf32>,
    %c1_45 = arith.constant 1 : index
    %c6_46 = arith.constant 6 : index
    %c0_47 = arith.constant 0 : index
    %c0_48 = arith.constant 0 : index
    %143 = vector.load %arg5[%c1_45, %c6_46, %c0_47, %c0_48] : memref<2x8x2x32xf32, #tpu.memory_space<vmem>>, vector<1x1x2x32xf32>
    %144 = vector.shape_cast %143 : vector<1x1x2x32xf32> to vector<2x32xf32>
    %145 = vector.shape_cast %139 : vector<2x32xf32> to vector<1x1x2x32xf32>
    tpu.vector_store %arg5[%c1_45, %c6_46, %c0_47, %c0_48], %145 {strides = array<i32>} : memref<2x8x2x32xf32, #tpu.memory_space<vmem>>, vector<1x1x2x32xf32>,
    %c2 = arith.constant 2 : index
    %c0_49 = arith.constant 0 : index
    %c0_50 = arith.constant 0 : index
    %146 = vector.load %arg0[%c2, %c0_49, %c0_50] : memref<8x2x192xf32, #tpu.memory_space<vmem>>, vector<1x2x192xf32>
    %147 = vector.shape_cast %146 : vector<1x2x192xf32> to vector<2x192xf32>
    %148 = vector.extract_strided_slice %147 {offsets = [0, 0], sizes = [2, 96], strides = [1, 1]} : vector<2x192xf32> to vector<2x96xf32>
    %c5 = arith.constant 5 : index
    %c0_51 = arith.constant 0 : index
    %c0_52 = arith.constant 0 : index
    %149 = vector.load %arg0[%c5, %c0_51, %c0_52] : memref<8x2x192xf32, #tpu.memory_space<vmem>>, vector<1x2x192xf32>
    %150 = vector.shape_cast %149 : vector<1x2x192xf32> to vector<2x192xf32>
    %151 = vector.extract_strided_slice %150 {offsets = [0, 96], sizes = [2, 96], strides = [1, 1]} : vector<2x192xf32> to vector<2x96xf32>
    %cst_53 = arith.constant dense<0.000000e+00> : vector<2x96xf32>
    %152 = tpu.matmul %111, %0, %cst_53 {dimension_numbers = #tpu.dot_dimension_numbers<[1], [0], [0], [1], [0, 0, 1, 1], [], []>} : vector<2x32xf32>, vector<32x96xf32>, vector<2x96xf32> -> vector<2x96xf32>
    %cst_54 = arith.constant dense<0.000000e+00> : vector<2x96xf32>
    %153 = tpu.matmul %139, %1, %cst_54 {dimension_numbers = #tpu.dot_dimension_numbers<[1], [0], [0], [1], [0, 0, 1, 1], [], []>} : vector<2x32xf32>, vector<32x96xf32>, vector<2x96xf32> -> vector<2x96xf32>
    %154 = vector.extract_strided_slice %148 {offsets = [0, 0], sizes = [2, 32], strides = [1, 1]} : vector<2x96xf32> to vector<2x32xf32>
    %155 = vector.extract_strided_slice %152 {offsets = [0, 0], sizes = [2, 32], strides = [1, 1]} : vector<2x96xf32> to vector<2x32xf32>
    %156 = arith.addf %154, %155 : vector<2x32xf32>
    %157 = arith.negf %156 : vector<2x32xf32>
    %158 = math.exp %157 : vector<2x32xf32>
    %cst_55 = arith.constant 1.000000e+00 : f32
    %159 = vector.broadcast %cst_55 : f32 to vector<2x32xf32>
    %160 = arith.addf %159, %158 : vector<2x32xf32>
    %161 = arith.divf %159, %160 : vector<2x32xf32>
    %162 = vector.extract_strided_slice %148 {offsets = [0, 32], sizes = [2, 32], strides = [1, 1]} : vector<2x96xf32> to vector<2x32xf32>
    %163 = vector.extract_strided_slice %152 {offsets = [0, 32], sizes = [2, 32], strides = [1, 1]} : vector<2x96xf32> to vector<2x32xf32>
    %164 = arith.addf %162, %163 : vector<2x32xf32>
    %165 = arith.negf %164 : vector<2x32xf32>
    %166 = math.exp %165 : vector<2x32xf32>
    %cst_56 = arith.constant 1.000000e+00 : f32
    %167 = vector.broadcast %cst_56 : f32 to vector<2x32xf32>
    %168 = arith.addf %167, %166 : vector<2x32xf32>
    %169 = arith.divf %167, %168 : vector<2x32xf32>
    %170 = vector.extract_strided_slice %148 {offsets = [0, 64], sizes = [2, 32], strides = [1, 1]} : vector<2x96xf32> to vector<2x32xf32>
    %171 = vector.extract_strided_slice %152 {offsets = [0, 64], sizes = [2, 32], strides = [1, 1]} : vector<2x96xf32> to vector<2x32xf32>
    %172 = vector.broadcast %2 : vector<1x32xf32> to vector<2x32xf32>
    %173 = arith.addf %171, %172 : vector<2x32xf32>
    %174 = arith.mulf %161, %173 : vector<2x32xf32>
    %175 = arith.addf %170, %174 : vector<2x32xf32>
    %176 = math.tanh %175 : vector<2x32xf32>
    %cst_57 = arith.constant 1.000000e+00 : f32
    %177 = vector.broadcast %cst_57 : f32 to vector<2x32xf32>
    %178 = arith.subf %177, %169 : vector<2x32xf32>
    %179 = arith.mulf %178, %176 : vector<2x32xf32>
    %180 = arith.mulf %169, %111 : vector<2x32xf32>
    %181 = arith.addf %179, %180 : vector<2x32xf32>
    %182 = vector.extract_strided_slice %151 {offsets = [0, 0], sizes = [2, 32], strides = [1, 1]} : vector<2x96xf32> to vector<2x32xf32>
    %183 = vector.extract_strided_slice %153 {offsets = [0, 0], sizes = [2, 32], strides = [1, 1]} : vector<2x96xf32> to vector<2x32xf32>
    %184 = arith.addf %182, %183 : vector<2x32xf32>
    %185 = arith.negf %184 : vector<2x32xf32>
    %186 = math.exp %185 : vector<2x32xf32>
    %cst_58 = arith.constant 1.000000e+00 : f32
    %187 = vector.broadcast %cst_58 : f32 to vector<2x32xf32>
    %188 = arith.addf %187, %186 : vector<2x32xf32>
    %189 = arith.divf %187, %188 : vector<2x32xf32>
    %190 = vector.extract_strided_slice %151 {offsets = [0, 32], sizes = [2, 32], strides = [1, 1]} : vector<2x96xf32> to vector<2x32xf32>
    %191 = vector.extract_strided_slice %153 {offsets = [0, 32], sizes = [2, 32], strides = [1, 1]} : vector<2x96xf32> to vector<2x32xf32>
    %192 = arith.addf %190, %191 : vector<2x32xf32>
    %193 = arith.negf %192 : vector<2x32xf32>
    %194 = math.exp %193 : vector<2x32xf32>
    %cst_59 = arith.constant 1.000000e+00 : f32
    %195 = vector.broadcast %cst_59 : f32 to vector<2x32xf32>
    %196 = arith.addf %195, %194 : vector<2x32xf32>
    %197 = arith.divf %195, %196 : vector<2x32xf32>
    %198 = vector.extract_strided_slice %151 {offsets = [0, 64], sizes = [2, 32], strides = [1, 1]} : vector<2x96xf32> to vector<2x32xf32>
    %199 = vector.extract_strided_slice %153 {offsets = [0, 64], sizes = [2, 32], strides = [1, 1]} : vector<2x96xf32> to vector<2x32xf32>
    %200 = vector.broadcast %3 : vector<1x32xf32> to vector<2x32xf32>
    %201 = arith.addf %199, %200 : vector<2x32xf32>
    %202 = arith.mulf %189, %201 : vector<2x32xf32>
    %203 = arith.addf %198, %202 : vector<2x32xf32>
    %204 = math.tanh %203 : vector<2x32xf32>
    %cst_60 = arith.constant 1.000000e+00 : f32
    %205 = vector.broadcast %cst_60 : f32 to vector<2x32xf32>
    %206 = arith.subf %205, %197 : vector<2x32xf32>
    %207 = arith.mulf %206, %204 : vector<2x32xf32>
    %208 = arith.mulf %197, %139 : vector<2x32xf32>
    %209 = arith.addf %207, %208 : vector<2x32xf32>
    %c0_61 = arith.constant 0 : index
    %c2_62 = arith.constant 2 : index
    %c0_63 = arith.constant 0 : index
    %c0_64 = arith.constant 0 : index
    %210 = vector.load %arg5[%c0_61, %c2_62, %c0_63, %c0_64] : memref<2x8x2x32xf32, #tpu.memory_space<vmem>>, vector<1x1x2x32xf32>
    %211 = vector.shape_cast %210 : vector<1x1x2x32xf32> to vector<2x32xf32>
    %212 = vector.shape_cast %181 : vector<2x32xf32> to vector<1x1x2x32xf32>
    tpu.vector_store %arg5[%c0_61, %c2_62, %c0_63, %c0_64], %212 {strides = array<i32>} : memref<2x8x2x32xf32, #tpu.memory_space<vmem>>, vector<1x1x2x32xf32>,
    %c1_65 = arith.constant 1 : index
    %c5_66 = arith.constant 5 : index
    %c0_67 = arith.constant 0 : index
    %c0_68 = arith.constant 0 : index
    %213 = vector.load %arg5[%c1_65, %c5_66, %c0_67, %c0_68] : memref<2x8x2x32xf32, #tpu.memory_space<vmem>>, vector<1x1x2x32xf32>
    %214 = vector.shape_cast %213 : vector<1x1x2x32xf32> to vector<2x32xf32>
    %215 = vector.shape_cast %209 : vector<2x32xf32> to vector<1x1x2x32xf32>
    tpu.vector_store %arg5[%c1_65, %c5_66, %c0_67, %c0_68], %215 {strides = array<i32>} : memref<2x8x2x32xf32, #tpu.memory_space<vmem>>, vector<1x1x2x32xf32>,
    %c3 = arith.constant 3 : index
    %c0_69 = arith.constant 0 : index
    %c0_70 = arith.constant 0 : index
    %216 = vector.load %arg0[%c3, %c0_69, %c0_70] : memref<8x2x192xf32, #tpu.memory_space<vmem>>, vector<1x2x192xf32>
    %217 = vector.shape_cast %216 : vector<1x2x192xf32> to vector<2x192xf32>
    %218 = vector.extract_strided_slice %217 {offsets = [0, 0], sizes = [2, 96], strides = [1, 1]} : vector<2x192xf32> to vector<2x96xf32>
    %c4 = arith.constant 4 : index
    %c0_71 = arith.constant 0 : index
    %c0_72 = arith.constant 0 : index
    %219 = vector.load %arg0[%c4, %c0_71, %c0_72] : memref<8x2x192xf32, #tpu.memory_space<vmem>>, vector<1x2x192xf32>
    %220 = vector.shape_cast %219 : vector<1x2x192xf32> to vector<2x192xf32>
    %221 = vector.extract_strided_slice %220 {offsets = [0, 96], sizes = [2, 96], strides = [1, 1]} : vector<2x192xf32> to vector<2x96xf32>
    %cst_73 = arith.constant dense<0.000000e+00> : vector<2x96xf32>
    %222 = tpu.matmul %181, %0, %cst_73 {dimension_numbers = #tpu.dot_dimension_numbers<[1], [0], [0], [1], [0, 0, 1, 1], [], []>} : vector<2x32xf32>, vector<32x96xf32>, vector<2x96xf32> -> vector<2x96xf32>
    %cst_74 = arith.constant dense<0.000000e+00> : vector<2x96xf32>
    %223 = tpu.matmul %209, %1, %cst_74 {dimension_numbers = #tpu.dot_dimension_numbers<[1], [0], [0], [1], [0, 0, 1, 1], [], []>} : vector<2x32xf32>, vector<32x96xf32>, vector<2x96xf32> -> vector<2x96xf32>
    %224 = vector.extract_strided_slice %218 {offsets = [0, 0], sizes = [2, 32], strides = [1, 1]} : vector<2x96xf32> to vector<2x32xf32>
    %225 = vector.extract_strided_slice %222 {offsets = [0, 0], sizes = [2, 32], strides = [1, 1]} : vector<2x96xf32> to vector<2x32xf32>
    %226 = arith.addf %224, %225 : vector<2x32xf32>
    %227 = arith.negf %226 : vector<2x32xf32>
    %228 = math.exp %227 : vector<2x32xf32>
    %cst_75 = arith.constant 1.000000e+00 : f32
    %229 = vector.broadcast %cst_75 : f32 to vector<2x32xf32>
    %230 = arith.addf %229, %228 : vector<2x32xf32>
    %231 = arith.divf %229, %230 : vector<2x32xf32>
    %232 = vector.extract_strided_slice %218 {offsets = [0, 32], sizes = [2, 32], strides = [1, 1]} : vector<2x96xf32> to vector<2x32xf32>
    %233 = vector.extract_strided_slice %222 {offsets = [0, 32], sizes = [2, 32], strides = [1, 1]} : vector<2x96xf32> to vector<2x32xf32>
    %234 = arith.addf %232, %233 : vector<2x32xf32>
    %235 = arith.negf %234 : vector<2x32xf32>
    %236 = math.exp %235 : vector<2x32xf32>
    %cst_76 = arith.constant 1.000000e+00 : f32
    %237 = vector.broadcast %cst_76 : f32 to vector<2x32xf32>
    %238 = arith.addf %237, %236 : vector<2x32xf32>
    %239 = arith.divf %237, %238 : vector<2x32xf32>
    %240 = vector.extract_strided_slice %218 {offsets = [0, 64], sizes = [2, 32], strides = [1, 1]} : vector<2x96xf32> to vector<2x32xf32>
    %241 = vector.extract_strided_slice %222 {offsets = [0, 64], sizes = [2, 32], strides = [1, 1]} : vector<2x96xf32> to vector<2x32xf32>
    %242 = vector.broadcast %2 : vector<1x32xf32> to vector<2x32xf32>
    %243 = arith.addf %241, %242 : vector<2x32xf32>
    %244 = arith.mulf %231, %243 : vector<2x32xf32>
    %245 = arith.addf %240, %244 : vector<2x32xf32>
    %246 = math.tanh %245 : vector<2x32xf32>
    %cst_77 = arith.constant 1.000000e+00 : f32
    %247 = vector.broadcast %cst_77 : f32 to vector<2x32xf32>
    %248 = arith.subf %247, %239 : vector<2x32xf32>
    %249 = arith.mulf %248, %246 : vector<2x32xf32>
    %250 = arith.mulf %239, %181 : vector<2x32xf32>
    %251 = arith.addf %249, %250 : vector<2x32xf32>
    %252 = vector.extract_strided_slice %221 {offsets = [0, 0], sizes = [2, 32], strides = [1, 1]} : vector<2x96xf32> to vector<2x32xf32>
    %253 = vector.extract_strided_slice %223 {offsets = [0, 0], sizes = [2, 32], strides = [1, 1]} : vector<2x96xf32> to vector<2x32xf32>
    %254 = arith.addf %252, %253 : vector<2x32xf32>
    %255 = arith.negf %254 : vector<2x32xf32>
    %256 = math.exp %255 : vector<2x32xf32>
    %cst_78 = arith.constant 1.000000e+00 : f32
    %257 = vector.broadcast %cst_78 : f32 to vector<2x32xf32>
    %258 = arith.addf %257, %256 : vector<2x32xf32>
    %259 = arith.divf %257, %258 : vector<2x32xf32>
    %260 = vector.extract_strided_slice %221 {offsets = [0, 32], sizes = [2, 32], strides = [1, 1]} : vector<2x96xf32> to vector<2x32xf32>
    %261 = vector.extract_strided_slice %223 {offsets = [0, 32], sizes = [2, 32], strides = [1, 1]} : vector<2x96xf32> to vector<2x32xf32>
    %262 = arith.addf %260, %261 : vector<2x32xf32>
    %263 = arith.negf %262 : vector<2x32xf32>
    %264 = math.exp %263 : vector<2x32xf32>
    %cst_79 = arith.constant 1.000000e+00 : f32
    %265 = vector.broadcast %cst_79 : f32 to vector<2x32xf32>
    %266 = arith.addf %265, %264 : vector<2x32xf32>
    %267 = arith.divf %265, %266 : vector<2x32xf32>
    %268 = vector.extract_strided_slice %221 {offsets = [0, 64], sizes = [2, 32], strides = [1, 1]} : vector<2x96xf32> to vector<2x32xf32>
    %269 = vector.extract_strided_slice %223 {offsets = [0, 64], sizes = [2, 32], strides = [1, 1]} : vector<2x96xf32> to vector<2x32xf32>
    %270 = vector.broadcast %3 : vector<1x32xf32> to vector<2x32xf32>
    %271 = arith.addf %269, %270 : vector<2x32xf32>
    %272 = arith.mulf %259, %271 : vector<2x32xf32>
    %273 = arith.addf %268, %272 : vector<2x32xf32>
    %274 = math.tanh %273 : vector<2x32xf32>
    %cst_80 = arith.constant 1.000000e+00 : f32
    %275 = vector.broadcast %cst_80 : f32 to vector<2x32xf32>
    %276 = arith.subf %275, %267 : vector<2x32xf32>
    %277 = arith.mulf %276, %274 : vector<2x32xf32>
    %278 = arith.mulf %267, %209 : vector<2x32xf32>
    %279 = arith.addf %277, %278 : vector<2x32xf32>
    %c0_81 = arith.constant 0 : index
    %c3_82 = arith.constant 3 : index
    %c0_83 = arith.constant 0 : index
    %c0_84 = arith.constant 0 : index
    %280 = vector.load %arg5[%c0_81, %c3_82, %c0_83, %c0_84] : memref<2x8x2x32xf32, #tpu.memory_space<vmem>>, vector<1x1x2x32xf32>
    %281 = vector.shape_cast %280 : vector<1x1x2x32xf32> to vector<2x32xf32>
    %282 = vector.shape_cast %251 : vector<2x32xf32> to vector<1x1x2x32xf32>
    tpu.vector_store %arg5[%c0_81, %c3_82, %c0_83, %c0_84], %282 {strides = array<i32>} : memref<2x8x2x32xf32, #tpu.memory_space<vmem>>, vector<1x1x2x32xf32>,
    %c1_85 = arith.constant 1 : index
    %c4_86 = arith.constant 4 : index
    %c0_87 = arith.constant 0 : index
    %c0_88 = arith.constant 0 : index
    %283 = vector.load %arg5[%c1_85, %c4_86, %c0_87, %c0_88] : memref<2x8x2x32xf32, #tpu.memory_space<vmem>>, vector<1x1x2x32xf32>
    %284 = vector.shape_cast %283 : vector<1x1x2x32xf32> to vector<2x32xf32>
    %285 = vector.shape_cast %279 : vector<2x32xf32> to vector<1x1x2x32xf32>
    tpu.vector_store %arg5[%c1_85, %c4_86, %c0_87, %c0_88], %285 {strides = array<i32>} : memref<2x8x2x32xf32, #tpu.memory_space<vmem>>, vector<1x1x2x32xf32>,
    %c4_89 = arith.constant 4 : index
    %c0_90 = arith.constant 0 : index
    %c0_91 = arith.constant 0 : index
    %286 = vector.load %arg0[%c4_89, %c0_90, %c0_91] : memref<8x2x192xf32, #tpu.memory_space<vmem>>, vector<1x2x192xf32>
    %287 = vector.shape_cast %286 : vector<1x2x192xf32> to vector<2x192xf32>
    %288 = vector.extract_strided_slice %287 {offsets = [0, 0], sizes = [2, 96], strides = [1, 1]} : vector<2x192xf32> to vector<2x96xf32>
    %c3_92 = arith.constant 3 : index
    %c0_93 = arith.constant 0 : index
    %c0_94 = arith.constant 0 : index
    %289 = vector.load %arg0[%c3_92, %c0_93, %c0_94] : memref<8x2x192xf32, #tpu.memory_space<vmem>>, vector<1x2x192xf32>
    %290 = vector.shape_cast %289 : vector<1x2x192xf32> to vector<2x192xf32>
    %291 = vector.extract_strided_slice %290 {offsets = [0, 96], sizes = [2, 96], strides = [1, 1]} : vector<2x192xf32> to vector<2x96xf32>
    %cst_95 = arith.constant dense<0.000000e+00> : vector<2x96xf32>
    %292 = tpu.matmul %251, %0, %cst_95 {dimension_numbers = #tpu.dot_dimension_numbers<[1], [0], [0], [1], [0, 0, 1, 1], [], []>} : vector<2x32xf32>, vector<32x96xf32>, vector<2x96xf32> -> vector<2x96xf32>
    %cst_96 = arith.constant dense<0.000000e+00> : vector<2x96xf32>
    %293 = tpu.matmul %279, %1, %cst_96 {dimension_numbers = #tpu.dot_dimension_numbers<[1], [0], [0], [1], [0, 0, 1, 1], [], []>} : vector<2x32xf32>, vector<32x96xf32>, vector<2x96xf32> -> vector<2x96xf32>
    %294 = vector.extract_strided_slice %288 {offsets = [0, 0], sizes = [2, 32], strides = [1, 1]} : vector<2x96xf32> to vector<2x32xf32>
    %295 = vector.extract_strided_slice %292 {offsets = [0, 0], sizes = [2, 32], strides = [1, 1]} : vector<2x96xf32> to vector<2x32xf32>
    %296 = arith.addf %294, %295 : vector<2x32xf32>
    %297 = arith.negf %296 : vector<2x32xf32>
    %298 = math.exp %297 : vector<2x32xf32>
    %cst_97 = arith.constant 1.000000e+00 : f32
    %299 = vector.broadcast %cst_97 : f32 to vector<2x32xf32>
    %300 = arith.addf %299, %298 : vector<2x32xf32>
    %301 = arith.divf %299, %300 : vector<2x32xf32>
    %302 = vector.extract_strided_slice %288 {offsets = [0, 32], sizes = [2, 32], strides = [1, 1]} : vector<2x96xf32> to vector<2x32xf32>
    %303 = vector.extract_strided_slice %292 {offsets = [0, 32], sizes = [2, 32], strides = [1, 1]} : vector<2x96xf32> to vector<2x32xf32>
    %304 = arith.addf %302, %303 : vector<2x32xf32>
    %305 = arith.negf %304 : vector<2x32xf32>
    %306 = math.exp %305 : vector<2x32xf32>
    %cst_98 = arith.constant 1.000000e+00 : f32
    %307 = vector.broadcast %cst_98 : f32 to vector<2x32xf32>
    %308 = arith.addf %307, %306 : vector<2x32xf32>
    %309 = arith.divf %307, %308 : vector<2x32xf32>
    %310 = vector.extract_strided_slice %288 {offsets = [0, 64], sizes = [2, 32], strides = [1, 1]} : vector<2x96xf32> to vector<2x32xf32>
    %311 = vector.extract_strided_slice %292 {offsets = [0, 64], sizes = [2, 32], strides = [1, 1]} : vector<2x96xf32> to vector<2x32xf32>
    %312 = vector.broadcast %2 : vector<1x32xf32> to vector<2x32xf32>
    %313 = arith.addf %311, %312 : vector<2x32xf32>
    %314 = arith.mulf %301, %313 : vector<2x32xf32>
    %315 = arith.addf %310, %314 : vector<2x32xf32>
    %316 = math.tanh %315 : vector<2x32xf32>
    %cst_99 = arith.constant 1.000000e+00 : f32
    %317 = vector.broadcast %cst_99 : f32 to vector<2x32xf32>
    %318 = arith.subf %317, %309 : vector<2x32xf32>
    %319 = arith.mulf %318, %316 : vector<2x32xf32>
    %320 = arith.mulf %309, %251 : vector<2x32xf32>
    %321 = arith.addf %319, %320 : vector<2x32xf32>
    %322 = vector.extract_strided_slice %291 {offsets = [0, 0], sizes = [2, 32], strides = [1, 1]} : vector<2x96xf32> to vector<2x32xf32>
    %323 = vector.extract_strided_slice %293 {offsets = [0, 0], sizes = [2, 32], strides = [1, 1]} : vector<2x96xf32> to vector<2x32xf32>
    %324 = arith.addf %322, %323 : vector<2x32xf32>
    %325 = arith.negf %324 : vector<2x32xf32>
    %326 = math.exp %325 : vector<2x32xf32>
    %cst_100 = arith.constant 1.000000e+00 : f32
    %327 = vector.broadcast %cst_100 : f32 to vector<2x32xf32>
    %328 = arith.addf %327, %326 : vector<2x32xf32>
    %329 = arith.divf %327, %328 : vector<2x32xf32>
    %330 = vector.extract_strided_slice %291 {offsets = [0, 32], sizes = [2, 32], strides = [1, 1]} : vector<2x96xf32> to vector<2x32xf32>
    %331 = vector.extract_strided_slice %293 {offsets = [0, 32], sizes = [2, 32], strides = [1, 1]} : vector<2x96xf32> to vector<2x32xf32>
    %332 = arith.addf %330, %331 : vector<2x32xf32>
    %333 = arith.negf %332 : vector<2x32xf32>
    %334 = math.exp %333 : vector<2x32xf32>
    %cst_101 = arith.constant 1.000000e+00 : f32
    %335 = vector.broadcast %cst_101 : f32 to vector<2x32xf32>
    %336 = arith.addf %335, %334 : vector<2x32xf32>
    %337 = arith.divf %335, %336 : vector<2x32xf32>
    %338 = vector.extract_strided_slice %291 {offsets = [0, 64], sizes = [2, 32], strides = [1, 1]} : vector<2x96xf32> to vector<2x32xf32>
    %339 = vector.extract_strided_slice %293 {offsets = [0, 64], sizes = [2, 32], strides = [1, 1]} : vector<2x96xf32> to vector<2x32xf32>
    %340 = vector.broadcast %3 : vector<1x32xf32> to vector<2x32xf32>
    %341 = arith.addf %339, %340 : vector<2x32xf32>
    %342 = arith.mulf %329, %341 : vector<2x32xf32>
    %343 = arith.addf %338, %342 : vector<2x32xf32>
    %344 = math.tanh %343 : vector<2x32xf32>
    %cst_102 = arith.constant 1.000000e+00 : f32
    %345 = vector.broadcast %cst_102 : f32 to vector<2x32xf32>
    %346 = arith.subf %345, %337 : vector<2x32xf32>
    %347 = arith.mulf %346, %344 : vector<2x32xf32>
    %348 = arith.mulf %337, %279 : vector<2x32xf32>
    %349 = arith.addf %347, %348 : vector<2x32xf32>
    %c0_103 = arith.constant 0 : index
    %c4_104 = arith.constant 4 : index
    %c0_105 = arith.constant 0 : index
    %c0_106 = arith.constant 0 : index
    %350 = vector.load %arg5[%c0_103, %c4_104, %c0_105, %c0_106] : memref<2x8x2x32xf32, #tpu.memory_space<vmem>>, vector<1x1x2x32xf32>
    %351 = vector.shape_cast %350 : vector<1x1x2x32xf32> to vector<2x32xf32>
    %352 = vector.shape_cast %321 : vector<2x32xf32> to vector<1x1x2x32xf32>
    tpu.vector_store %arg5[%c0_103, %c4_104, %c0_105, %c0_106], %352 {strides = array<i32>} : memref<2x8x2x32xf32, #tpu.memory_space<vmem>>, vector<1x1x2x32xf32>,
    %c1_107 = arith.constant 1 : index
    %c3_108 = arith.constant 3 : index
    %c0_109 = arith.constant 0 : index
    %c0_110 = arith.constant 0 : index
    %353 = vector.load %arg5[%c1_107, %c3_108, %c0_109, %c0_110] : memref<2x8x2x32xf32, #tpu.memory_space<vmem>>, vector<1x1x2x32xf32>
    %354 = vector.shape_cast %353 : vector<1x1x2x32xf32> to vector<2x32xf32>
    %355 = vector.shape_cast %349 : vector<2x32xf32> to vector<1x1x2x32xf32>
    tpu.vector_store %arg5[%c1_107, %c3_108, %c0_109, %c0_110], %355 {strides = array<i32>} : memref<2x8x2x32xf32, #tpu.memory_space<vmem>>, vector<1x1x2x32xf32>,
    %c5_111 = arith.constant 5 : index
    %c0_112 = arith.constant 0 : index
    %c0_113 = arith.constant 0 : index
    %356 = vector.load %arg0[%c5_111, %c0_112, %c0_113] : memref<8x2x192xf32, #tpu.memory_space<vmem>>, vector<1x2x192xf32>
    %357 = vector.shape_cast %356 : vector<1x2x192xf32> to vector<2x192xf32>
    %358 = vector.extract_strided_slice %357 {offsets = [0, 0], sizes = [2, 96], strides = [1, 1]} : vector<2x192xf32> to vector<2x96xf32>
    %c2_114 = arith.constant 2 : index
    %c0_115 = arith.constant 0 : index
    %c0_116 = arith.constant 0 : index
    %359 = vector.load %arg0[%c2_114, %c0_115, %c0_116] : memref<8x2x192xf32, #tpu.memory_space<vmem>>, vector<1x2x192xf32>
    %360 = vector.shape_cast %359 : vector<1x2x192xf32> to vector<2x192xf32>
    %361 = vector.extract_strided_slice %360 {offsets = [0, 96], sizes = [2, 96], strides = [1, 1]} : vector<2x192xf32> to vector<2x96xf32>
    %cst_117 = arith.constant dense<0.000000e+00> : vector<2x96xf32>
    %362 = tpu.matmul %321, %0, %cst_117 {dimension_numbers = #tpu.dot_dimension_numbers<[1], [0], [0], [1], [0, 0, 1, 1], [], []>} : vector<2x32xf32>, vector<32x96xf32>, vector<2x96xf32> -> vector<2x96xf32>
    %cst_118 = arith.constant dense<0.000000e+00> : vector<2x96xf32>
    %363 = tpu.matmul %349, %1, %cst_118 {dimension_numbers = #tpu.dot_dimension_numbers<[1], [0], [0], [1], [0, 0, 1, 1], [], []>} : vector<2x32xf32>, vector<32x96xf32>, vector<2x96xf32> -> vector<2x96xf32>
    %364 = vector.extract_strided_slice %358 {offsets = [0, 0], sizes = [2, 32], strides = [1, 1]} : vector<2x96xf32> to vector<2x32xf32>
    %365 = vector.extract_strided_slice %362 {offsets = [0, 0], sizes = [2, 32], strides = [1, 1]} : vector<2x96xf32> to vector<2x32xf32>
    %366 = arith.addf %364, %365 : vector<2x32xf32>
    %367 = arith.negf %366 : vector<2x32xf32>
    %368 = math.exp %367 : vector<2x32xf32>
    %cst_119 = arith.constant 1.000000e+00 : f32
    %369 = vector.broadcast %cst_119 : f32 to vector<2x32xf32>
    %370 = arith.addf %369, %368 : vector<2x32xf32>
    %371 = arith.divf %369, %370 : vector<2x32xf32>
    %372 = vector.extract_strided_slice %358 {offsets = [0, 32], sizes = [2, 32], strides = [1, 1]} : vector<2x96xf32> to vector<2x32xf32>
    %373 = vector.extract_strided_slice %362 {offsets = [0, 32], sizes = [2, 32], strides = [1, 1]} : vector<2x96xf32> to vector<2x32xf32>
    %374 = arith.addf %372, %373 : vector<2x32xf32>
    %375 = arith.negf %374 : vector<2x32xf32>
    %376 = math.exp %375 : vector<2x32xf32>
    %cst_120 = arith.constant 1.000000e+00 : f32
    %377 = vector.broadcast %cst_120 : f32 to vector<2x32xf32>
    %378 = arith.addf %377, %376 : vector<2x32xf32>
    %379 = arith.divf %377, %378 : vector<2x32xf32>
    %380 = vector.extract_strided_slice %358 {offsets = [0, 64], sizes = [2, 32], strides = [1, 1]} : vector<2x96xf32> to vector<2x32xf32>
    %381 = vector.extract_strided_slice %362 {offsets = [0, 64], sizes = [2, 32], strides = [1, 1]} : vector<2x96xf32> to vector<2x32xf32>
    %382 = vector.broadcast %2 : vector<1x32xf32> to vector<2x32xf32>
    %383 = arith.addf %381, %382 : vector<2x32xf32>
    %384 = arith.mulf %371, %383 : vector<2x32xf32>
    %385 = arith.addf %380, %384 : vector<2x32xf32>
    %386 = math.tanh %385 : vector<2x32xf32>
    %cst_121 = arith.constant 1.000000e+00 : f32
    %387 = vector.broadcast %cst_121 : f32 to vector<2x32xf32>
    %388 = arith.subf %387, %379 : vector<2x32xf32>
    %389 = arith.mulf %388, %386 : vector<2x32xf32>
    %390 = arith.mulf %379, %321 : vector<2x32xf32>
    %391 = arith.addf %389, %390 : vector<2x32xf32>
    %392 = vector.extract_strided_slice %361 {offsets = [0, 0], sizes = [2, 32], strides = [1, 1]} : vector<2x96xf32> to vector<2x32xf32>
    %393 = vector.extract_strided_slice %363 {offsets = [0, 0], sizes = [2, 32], strides = [1, 1]} : vector<2x96xf32> to vector<2x32xf32>
    %394 = arith.addf %392, %393 : vector<2x32xf32>
    %395 = arith.negf %394 : vector<2x32xf32>
    %396 = math.exp %395 : vector<2x32xf32>
    %cst_122 = arith.constant 1.000000e+00 : f32
    %397 = vector.broadcast %cst_122 : f32 to vector<2x32xf32>
    %398 = arith.addf %397, %396 : vector<2x32xf32>
    %399 = arith.divf %397, %398 : vector<2x32xf32>
    %400 = vector.extract_strided_slice %361 {offsets = [0, 32], sizes = [2, 32], strides = [1, 1]} : vector<2x96xf32> to vector<2x32xf32>
    %401 = vector.extract_strided_slice %363 {offsets = [0, 32], sizes = [2, 32], strides = [1, 1]} : vector<2x96xf32> to vector<2x32xf32>
    %402 = arith.addf %400, %401 : vector<2x32xf32>
    %403 = arith.negf %402 : vector<2x32xf32>
    %404 = math.exp %403 : vector<2x32xf32>
    %cst_123 = arith.constant 1.000000e+00 : f32
    %405 = vector.broadcast %cst_123 : f32 to vector<2x32xf32>
    %406 = arith.addf %405, %404 : vector<2x32xf32>
    %407 = arith.divf %405, %406 : vector<2x32xf32>
    %408 = vector.extract_strided_slice %361 {offsets = [0, 64], sizes = [2, 32], strides = [1, 1]} : vector<2x96xf32> to vector<2x32xf32>
    %409 = vector.extract_strided_slice %363 {offsets = [0, 64], sizes = [2, 32], strides = [1, 1]} : vector<2x96xf32> to vector<2x32xf32>
    %410 = vector.broadcast %3 : vector<1x32xf32> to vector<2x32xf32>
    %411 = arith.addf %409, %410 : vector<2x32xf32>
    %412 = arith.mulf %399, %411 : vector<2x32xf32>
    %413 = arith.addf %408, %412 : vector<2x32xf32>
    %414 = math.tanh %413 : vector<2x32xf32>
    %cst_124 = arith.constant 1.000000e+00 : f32
    %415 = vector.broadcast %cst_124 : f32 to vector<2x32xf32>
    %416 = arith.subf %415, %407 : vector<2x32xf32>
    %417 = arith.mulf %416, %414 : vector<2x32xf32>
    %418 = arith.mulf %407, %349 : vector<2x32xf32>
    %419 = arith.addf %417, %418 : vector<2x32xf32>
    %c0_125 = arith.constant 0 : index
    %c5_126 = arith.constant 5 : index
    %c0_127 = arith.constant 0 : index
    %c0_128 = arith.constant 0 : index
    %420 = vector.load %arg5[%c0_125, %c5_126, %c0_127, %c0_128] : memref<2x8x2x32xf32, #tpu.memory_space<vmem>>, vector<1x1x2x32xf32>
    %421 = vector.shape_cast %420 : vector<1x1x2x32xf32> to vector<2x32xf32>
    %422 = vector.shape_cast %391 : vector<2x32xf32> to vector<1x1x2x32xf32>
    tpu.vector_store %arg5[%c0_125, %c5_126, %c0_127, %c0_128], %422 {strides = array<i32>} : memref<2x8x2x32xf32, #tpu.memory_space<vmem>>, vector<1x1x2x32xf32>,
    %c1_129 = arith.constant 1 : index
    %c2_130 = arith.constant 2 : index
    %c0_131 = arith.constant 0 : index
    %c0_132 = arith.constant 0 : index
    %423 = vector.load %arg5[%c1_129, %c2_130, %c0_131, %c0_132] : memref<2x8x2x32xf32, #tpu.memory_space<vmem>>, vector<1x1x2x32xf32>
    %424 = vector.shape_cast %423 : vector<1x1x2x32xf32> to vector<2x32xf32>
    %425 = vector.shape_cast %419 : vector<2x32xf32> to vector<1x1x2x32xf32>
    tpu.vector_store %arg5[%c1_129, %c2_130, %c0_131, %c0_132], %425 {strides = array<i32>} : memref<2x8x2x32xf32, #tpu.memory_space<vmem>>, vector<1x1x2x32xf32>,
    %c6_133 = arith.constant 6 : index
    %c0_134 = arith.constant 0 : index
    %c0_135 = arith.constant 0 : index
    %426 = vector.load %arg0[%c6_133, %c0_134, %c0_135] : memref<8x2x192xf32, #tpu.memory_space<vmem>>, vector<1x2x192xf32>
    %427 = vector.shape_cast %426 : vector<1x2x192xf32> to vector<2x192xf32>
    %428 = vector.extract_strided_slice %427 {offsets = [0, 0], sizes = [2, 96], strides = [1, 1]} : vector<2x192xf32> to vector<2x96xf32>
    %c1_136 = arith.constant 1 : index
    %c0_137 = arith.constant 0 : index
    %c0_138 = arith.constant 0 : index
    %429 = vector.load %arg0[%c1_136, %c0_137, %c0_138] : memref<8x2x192xf32, #tpu.memory_space<vmem>>, vector<1x2x192xf32>
    %430 = vector.shape_cast %429 : vector<1x2x192xf32> to vector<2x192xf32>
    %431 = vector.extract_strided_slice %430 {offsets = [0, 96], sizes = [2, 96], strides = [1, 1]} : vector<2x192xf32> to vector<2x96xf32>
    %cst_139 = arith.constant dense<0.000000e+00> : vector<2x96xf32>
    %432 = tpu.matmul %391, %0, %cst_139 {dimension_numbers = #tpu.dot_dimension_numbers<[1], [0], [0], [1], [0, 0, 1, 1], [], []>} : vector<2x32xf32>, vector<32x96xf32>, vector<2x96xf32> -> vector<2x96xf32>
    %cst_140 = arith.constant dense<0.000000e+00> : vector<2x96xf32>
    %433 = tpu.matmul %419, %1, %cst_140 {dimension_numbers = #tpu.dot_dimension_numbers<[1], [0], [0], [1], [0, 0, 1, 1], [], []>} : vector<2x32xf32>, vector<32x96xf32>, vector<2x96xf32> -> vector<2x96xf32>
    %434 = vector.extract_strided_slice %428 {offsets = [0, 0], sizes = [2, 32], strides = [1, 1]} : vector<2x96xf32> to vector<2x32xf32>
    %435 = vector.extract_strided_slice %432 {offsets = [0, 0], sizes = [2, 32], strides = [1, 1]} : vector<2x96xf32> to vector<2x32xf32>
    %436 = arith.addf %434, %435 : vector<2x32xf32>
    %437 = arith.negf %436 : vector<2x32xf32>
    %438 = math.exp %437 : vector<2x32xf32>
    %cst_141 = arith.constant 1.000000e+00 : f32
    %439 = vector.broadcast %cst_141 : f32 to vector<2x32xf32>
    %440 = arith.addf %439, %438 : vector<2x32xf32>
    %441 = arith.divf %439, %440 : vector<2x32xf32>
    %442 = vector.extract_strided_slice %428 {offsets = [0, 32], sizes = [2, 32], strides = [1, 1]} : vector<2x96xf32> to vector<2x32xf32>
    %443 = vector.extract_strided_slice %432 {offsets = [0, 32], sizes = [2, 32], strides = [1, 1]} : vector<2x96xf32> to vector<2x32xf32>
    %444 = arith.addf %442, %443 : vector<2x32xf32>
    %445 = arith.negf %444 : vector<2x32xf32>
    %446 = math.exp %445 : vector<2x32xf32>
    %cst_142 = arith.constant 1.000000e+00 : f32
    %447 = vector.broadcast %cst_142 : f32 to vector<2x32xf32>
    %448 = arith.addf %447, %446 : vector<2x32xf32>
    %449 = arith.divf %447, %448 : vector<2x32xf32>
    %450 = vector.extract_strided_slice %428 {offsets = [0, 64], sizes = [2, 32], strides = [1, 1]} : vector<2x96xf32> to vector<2x32xf32>
    %451 = vector.extract_strided_slice %432 {offsets = [0, 64], sizes = [2, 32], strides = [1, 1]} : vector<2x96xf32> to vector<2x32xf32>
    %452 = vector.broadcast %2 : vector<1x32xf32> to vector<2x32xf32>
    %453 = arith.addf %451, %452 : vector<2x32xf32>
    %454 = arith.mulf %441, %453 : vector<2x32xf32>
    %455 = arith.addf %450, %454 : vector<2x32xf32>
    %456 = math.tanh %455 : vector<2x32xf32>
    %cst_143 = arith.constant 1.000000e+00 : f32
    %457 = vector.broadcast %cst_143 : f32 to vector<2x32xf32>
    %458 = arith.subf %457, %449 : vector<2x32xf32>
    %459 = arith.mulf %458, %456 : vector<2x32xf32>
    %460 = arith.mulf %449, %391 : vector<2x32xf32>
    %461 = arith.addf %459, %460 : vector<2x32xf32>
    %462 = vector.extract_strided_slice %431 {offsets = [0, 0], sizes = [2, 32], strides = [1, 1]} : vector<2x96xf32> to vector<2x32xf32>
    %463 = vector.extract_strided_slice %433 {offsets = [0, 0], sizes = [2, 32], strides = [1, 1]} : vector<2x96xf32> to vector<2x32xf32>
    %464 = arith.addf %462, %463 : vector<2x32xf32>
    %465 = arith.negf %464 : vector<2x32xf32>
    %466 = math.exp %465 : vector<2x32xf32>
    %cst_144 = arith.constant 1.000000e+00 : f32
    %467 = vector.broadcast %cst_144 : f32 to vector<2x32xf32>
    %468 = arith.addf %467, %466 : vector<2x32xf32>
    %469 = arith.divf %467, %468 : vector<2x32xf32>
    %470 = vector.extract_strided_slice %431 {offsets = [0, 32], sizes = [2, 32], strides = [1, 1]} : vector<2x96xf32> to vector<2x32xf32>
    %471 = vector.extract_strided_slice %433 {offsets = [0, 32], sizes = [2, 32], strides = [1, 1]} : vector<2x96xf32> to vector<2x32xf32>
    %472 = arith.addf %470, %471 : vector<2x32xf32>
    %473 = arith.negf %472 : vector<2x32xf32>
    %474 = math.exp %473 : vector<2x32xf32>
    %cst_145 = arith.constant 1.000000e+00 : f32
    %475 = vector.broadcast %cst_145 : f32 to vector<2x32xf32>
    %476 = arith.addf %475, %474 : vector<2x32xf32>
    %477 = arith.divf %475, %476 : vector<2x32xf32>
    %478 = vector.extract_strided_slice %431 {offsets = [0, 64], sizes = [2, 32], strides = [1, 1]} : vector<2x96xf32> to vector<2x32xf32>
    %479 = vector.extract_strided_slice %433 {offsets = [0, 64], sizes = [2, 32], strides = [1, 1]} : vector<2x96xf32> to vector<2x32xf32>
    %480 = vector.broadcast %3 : vector<1x32xf32> to vector<2x32xf32>
    %481 = arith.addf %479, %480 : vector<2x32xf32>
    %482 = arith.mulf %469, %481 : vector<2x32xf32>
    %483 = arith.addf %478, %482 : vector<2x32xf32>
    %484 = math.tanh %483 : vector<2x32xf32>
    %cst_146 = arith.constant 1.000000e+00 : f32
    %485 = vector.broadcast %cst_146 : f32 to vector<2x32xf32>
    %486 = arith.subf %485, %477 : vector<2x32xf32>
    %487 = arith.mulf %486, %484 : vector<2x32xf32>
    %488 = arith.mulf %477, %419 : vector<2x32xf32>
    %489 = arith.addf %487, %488 : vector<2x32xf32>
    %c0_147 = arith.constant 0 : index
    %c6_148 = arith.constant 6 : index
    %c0_149 = arith.constant 0 : index
    %c0_150 = arith.constant 0 : index
    %490 = vector.load %arg5[%c0_147, %c6_148, %c0_149, %c0_150] : memref<2x8x2x32xf32, #tpu.memory_space<vmem>>, vector<1x1x2x32xf32>
    %491 = vector.shape_cast %490 : vector<1x1x2x32xf32> to vector<2x32xf32>
    %492 = vector.shape_cast %461 : vector<2x32xf32> to vector<1x1x2x32xf32>
    tpu.vector_store %arg5[%c0_147, %c6_148, %c0_149, %c0_150], %492 {strides = array<i32>} : memref<2x8x2x32xf32, #tpu.memory_space<vmem>>, vector<1x1x2x32xf32>,
    %c1_151 = arith.constant 1 : index
    %c1_152 = arith.constant 1 : index
    %c0_153 = arith.constant 0 : index
    %c0_154 = arith.constant 0 : index
    %493 = vector.load %arg5[%c1_151, %c1_152, %c0_153, %c0_154] : memref<2x8x2x32xf32, #tpu.memory_space<vmem>>, vector<1x1x2x32xf32>
    %494 = vector.shape_cast %493 : vector<1x1x2x32xf32> to vector<2x32xf32>
    %495 = vector.shape_cast %489 : vector<2x32xf32> to vector<1x1x2x32xf32>
    tpu.vector_store %arg5[%c1_151, %c1_152, %c0_153, %c0_154], %495 {strides = array<i32>} : memref<2x8x2x32xf32, #tpu.memory_space<vmem>>, vector<1x1x2x32xf32>,
    %c7_155 = arith.constant 7 : index
    %c0_156 = arith.constant 0 : index
    %c0_157 = arith.constant 0 : index
    %496 = vector.load %arg0[%c7_155, %c0_156, %c0_157] : memref<8x2x192xf32, #tpu.memory_space<vmem>>, vector<1x2x192xf32>
    %497 = vector.shape_cast %496 : vector<1x2x192xf32> to vector<2x192xf32>
    %498 = vector.extract_strided_slice %497 {offsets = [0, 0], sizes = [2, 96], strides = [1, 1]} : vector<2x192xf32> to vector<2x96xf32>
    %c0_158 = arith.constant 0 : index
    %c0_159 = arith.constant 0 : index
    %c0_160 = arith.constant 0 : index
    %499 = vector.load %arg0[%c0_158, %c0_159, %c0_160] : memref<8x2x192xf32, #tpu.memory_space<vmem>>, vector<1x2x192xf32>
    %500 = vector.shape_cast %499 : vector<1x2x192xf32> to vector<2x192xf32>
    %501 = vector.extract_strided_slice %500 {offsets = [0, 96], sizes = [2, 96], strides = [1, 1]} : vector<2x192xf32> to vector<2x96xf32>
    %cst_161 = arith.constant dense<0.000000e+00> : vector<2x96xf32>
    %502 = tpu.matmul %461, %0, %cst_161 {dimension_numbers = #tpu.dot_dimension_numbers<[1], [0], [0], [1], [0, 0, 1, 1], [], []>} : vector<2x32xf32>, vector<32x96xf32>, vector<2x96xf32> -> vector<2x96xf32>
    %cst_162 = arith.constant dense<0.000000e+00> : vector<2x96xf32>
    %503 = tpu.matmul %489, %1, %cst_162 {dimension_numbers = #tpu.dot_dimension_numbers<[1], [0], [0], [1], [0, 0, 1, 1], [], []>} : vector<2x32xf32>, vector<32x96xf32>, vector<2x96xf32> -> vector<2x96xf32>
    %504 = vector.extract_strided_slice %498 {offsets = [0, 0], sizes = [2, 32], strides = [1, 1]} : vector<2x96xf32> to vector<2x32xf32>
    %505 = vector.extract_strided_slice %502 {offsets = [0, 0], sizes = [2, 32], strides = [1, 1]} : vector<2x96xf32> to vector<2x32xf32>
    %506 = arith.addf %504, %505 : vector<2x32xf32>
    %507 = arith.negf %506 : vector<2x32xf32>
    %508 = math.exp %507 : vector<2x32xf32>
    %cst_163 = arith.constant 1.000000e+00 : f32
    %509 = vector.broadcast %cst_163 : f32 to vector<2x32xf32>
    %510 = arith.addf %509, %508 : vector<2x32xf32>
    %511 = arith.divf %509, %510 : vector<2x32xf32>
    %512 = vector.extract_strided_slice %498 {offsets = [0, 32], sizes = [2, 32], strides = [1, 1]} : vector<2x96xf32> to vector<2x32xf32>
    %513 = vector.extract_strided_slice %502 {offsets = [0, 32], sizes = [2, 32], strides = [1, 1]} : vector<2x96xf32> to vector<2x32xf32>
    %514 = arith.addf %512, %513 : vector<2x32xf32>
    %515 = arith.negf %514 : vector<2x32xf32>
    %516 = math.exp %515 : vector<2x32xf32>
    %cst_164 = arith.constant 1.000000e+00 : f32
    %517 = vector.broadcast %cst_164 : f32 to vector<2x32xf32>
    %518 = arith.addf %517, %516 : vector<2x32xf32>
    %519 = arith.divf %517, %518 : vector<2x32xf32>
    %520 = vector.extract_strided_slice %498 {offsets = [0, 64], sizes = [2, 32], strides = [1, 1]} : vector<2x96xf32> to vector<2x32xf32>
    %521 = vector.extract_strided_slice %502 {offsets = [0, 64], sizes = [2, 32], strides = [1, 1]} : vector<2x96xf32> to vector<2x32xf32>
    %522 = vector.broadcast %2 : vector<1x32xf32> to vector<2x32xf32>
    %523 = arith.addf %521, %522 : vector<2x32xf32>
    %524 = arith.mulf %511, %523 : vector<2x32xf32>
    %525 = arith.addf %520, %524 : vector<2x32xf32>
    %526 = math.tanh %525 : vector<2x32xf32>
    %cst_165 = arith.constant 1.000000e+00 : f32
    %527 = vector.broadcast %cst_165 : f32 to vector<2x32xf32>
    %528 = arith.subf %527, %519 : vector<2x32xf32>
    %529 = arith.mulf %528, %526 : vector<2x32xf32>
    %530 = arith.mulf %519, %461 : vector<2x32xf32>
    %531 = arith.addf %529, %530 : vector<2x32xf32>
    %532 = vector.extract_strided_slice %501 {offsets = [0, 0], sizes = [2, 32], strides = [1, 1]} : vector<2x96xf32> to vector<2x32xf32>
    %533 = vector.extract_strided_slice %503 {offsets = [0, 0], sizes = [2, 32], strides = [1, 1]} : vector<2x96xf32> to vector<2x32xf32>
    %534 = arith.addf %532, %533 : vector<2x32xf32>
    %535 = arith.negf %534 : vector<2x32xf32>
    %536 = math.exp %535 : vector<2x32xf32>
    %cst_166 = arith.constant 1.000000e+00 : f32
    %537 = vector.broadcast %cst_166 : f32 to vector<2x32xf32>
    %538 = arith.addf %537, %536 : vector<2x32xf32>
    %539 = arith.divf %537, %538 : vector<2x32xf32>
    %540 = vector.extract_strided_slice %501 {offsets = [0, 32], sizes = [2, 32], strides = [1, 1]} : vector<2x96xf32> to vector<2x32xf32>
    %541 = vector.extract_strided_slice %503 {offsets = [0, 32], sizes = [2, 32], strides = [1, 1]} : vector<2x96xf32> to vector<2x32xf32>
    %542 = arith.addf %540, %541 : vector<2x32xf32>
    %543 = arith.negf %542 : vector<2x32xf32>
    %544 = math.exp %543 : vector<2x32xf32>
    %cst_167 = arith.constant 1.000000e+00 : f32
    %545 = vector.broadcast %cst_167 : f32 to vector<2x32xf32>
    %546 = arith.addf %545, %544 : vector<2x32xf32>
    %547 = arith.divf %545, %546 : vector<2x32xf32>
    %548 = vector.extract_strided_slice %501 {offsets = [0, 64], sizes = [2, 32], strides = [1, 1]} : vector<2x96xf32> to vector<2x32xf32>
    %549 = vector.extract_strided_slice %503 {offsets = [0, 64], sizes = [2, 32], strides = [1, 1]} : vector<2x96xf32> to vector<2x32xf32>
    %550 = vector.broadcast %3 : vector<1x32xf32> to vector<2x32xf32>
    %551 = arith.addf %549, %550 : vector<2x32xf32>
    %552 = arith.mulf %539, %551 : vector<2x32xf32>
    %553 = arith.addf %548, %552 : vector<2x32xf32>
    %554 = math.tanh %553 : vector<2x32xf32>
    %cst_168 = arith.constant 1.000000e+00 : f32
    %555 = vector.broadcast %cst_168 : f32 to vector<2x32xf32>
    %556 = arith.subf %555, %547 : vector<2x32xf32>
    %557 = arith.mulf %556, %554 : vector<2x32xf32>
    %558 = arith.mulf %547, %489 : vector<2x32xf32>
    %559 = arith.addf %557, %558 : vector<2x32xf32>
    %c0_169 = arith.constant 0 : index
    %c7_170 = arith.constant 7 : index
    %c0_171 = arith.constant 0 : index
    %c0_172 = arith.constant 0 : index
    %560 = vector.load %arg5[%c0_169, %c7_170, %c0_171, %c0_172] : memref<2x8x2x32xf32, #tpu.memory_space<vmem>>, vector<1x1x2x32xf32>
    %561 = vector.shape_cast %560 : vector<1x1x2x32xf32> to vector<2x32xf32>
    %562 = vector.shape_cast %531 : vector<2x32xf32> to vector<1x1x2x32xf32>
    tpu.vector_store %arg5[%c0_169, %c7_170, %c0_171, %c0_172], %562 {strides = array<i32>} : memref<2x8x2x32xf32, #tpu.memory_space<vmem>>, vector<1x1x2x32xf32>,
    %c1_173 = arith.constant 1 : index
    %c0_174 = arith.constant 0 : index
    %c0_175 = arith.constant 0 : index
    %c0_176 = arith.constant 0 : index
    %563 = vector.load %arg5[%c1_173, %c0_174, %c0_175, %c0_176] : memref<2x8x2x32xf32, #tpu.memory_space<vmem>>, vector<1x1x2x32xf32>
    %564 = vector.shape_cast %563 : vector<1x1x2x32xf32> to vector<2x32xf32>
    %565 = vector.shape_cast %559 : vector<2x32xf32> to vector<1x1x2x32xf32>
    tpu.vector_store %arg5[%c1_173, %c0_174, %c0_175, %c0_176], %565 {strides = array<i32>} : memref<2x8x2x32xf32, #tpu.memory_space<vmem>>, vector<1x1x2x32xf32>,
    return
  }
}

module attributes {stable_mosaic.version = 11 : i64} {
  func.func @_encoder_layer_kernel(%arg0: memref<16x64xf32, #tpu.memory_space<vmem>>, %arg1: memref<2x1x8xf32, #tpu.memory_space<vmem>>, %arg2: memref<64x192xf32, #tpu.memory_space<vmem>>, %arg3: memref<1x192xf32, #tpu.memory_space<vmem>>, %arg4: memref<64x64xf32, #tpu.memory_space<vmem>>, %arg5: memref<1x64xf32, #tpu.memory_space<vmem>>, %arg6: memref<1x64xf32, #tpu.memory_space<vmem>>, %arg7: memref<1x64xf32, #tpu.memory_space<vmem>>, %arg8: memref<64x64xf32, #tpu.memory_space<vmem>>, %arg9: memref<1x64xf32, #tpu.memory_space<vmem>>, %arg10: memref<64x64xf32, #tpu.memory_space<vmem>>, %arg11: memref<1x64xf32, #tpu.memory_space<vmem>>, %arg12: memref<1x64xf32, #tpu.memory_space<vmem>>, %arg13: memref<1x64xf32, #tpu.memory_space<vmem>>, %arg14: memref<16x64xf32, #tpu.memory_space<vmem>>) attributes {dimension_semantics = [], scalar_prefetch = 0 : i64, scratch_operands = 0 : i64, tpu.core_type = #tpu.core_type<tc>} {
    %c0 = arith.constant 0 : index
    %c0_0 = arith.constant 0 : index
    %0 = vector.load %arg0[%c0, %c0_0] : memref<16x64xf32, #tpu.memory_space<vmem>>, vector<16x64xf32>
    %c0_1 = arith.constant 0 : index
    %c0_2 = arith.constant 0 : index
    %1 = vector.load %arg4[%c0_1, %c0_2] : memref<64x64xf32, #tpu.memory_space<vmem>>, vector<64x64xf32>
    %c0_3 = arith.constant 0 : index
    %c0_4 = arith.constant 0 : index
    %2 = vector.load %arg2[%c0_3, %c0_4] : memref<64x192xf32, #tpu.memory_space<vmem>>, vector<64x192xf32>
    %cst = arith.constant dense<0.000000e+00> : vector<16x192xf32>
    %3 = tpu.matmul %0, %2, %cst {dimension_numbers = #tpu.dot_dimension_numbers<[1], [0], [0], [1], [0, 0, 1, 1], [], []>} : vector<16x64xf32>, vector<64x192xf32>, vector<16x192xf32> -> vector<16x192xf32>
    %c0_5 = arith.constant 0 : index
    %c0_6 = arith.constant 0 : index
    %4 = vector.load %arg3[%c0_5, %c0_6] : memref<1x192xf32, #tpu.memory_space<vmem>>, vector<1x192xf32>
    %5 = vector.broadcast %4 : vector<1x192xf32> to vector<16x192xf32>
    %6 = arith.addf %3, %5 : vector<16x192xf32>
    %7 = vector.extract_strided_slice %0 {offsets = [0, 0], sizes = [8, 64], strides = [1, 1]} : vector<16x64xf32> to vector<8x64xf32>
    %8 = vector.extract_strided_slice %6 {offsets = [0, 0], sizes = [8, 192], strides = [1, 1]} : vector<16x192xf32> to vector<8x192xf32>
    %c0_7 = arith.constant 0 : index
    %c0_8 = arith.constant 0 : index
    %c0_9 = arith.constant 0 : index
    %9 = vector.load %arg1[%c0_7, %c0_8, %c0_9] : memref<2x1x8xf32, #tpu.memory_space<vmem>>, vector<1x1x8xf32>
    %10 = vector.shape_cast %9 : vector<1x1x8xf32> to vector<1x8xf32>
    %cst_10 = arith.constant 0.000000e+00 : f32
    %11 = vector.broadcast %cst_10 : f32 to vector<8x64xf32>
    %12 = vector.extract_strided_slice %8 {offsets = [0, 0], sizes = [8, 16], strides = [1, 1]} : vector<8x192xf32> to vector<8x16xf32>
    %13 = vector.extract_strided_slice %8 {offsets = [0, 64], sizes = [8, 16], strides = [1, 1]} : vector<8x192xf32> to vector<8x16xf32>
    %14 = vector.extract_strided_slice %8 {offsets = [0, 128], sizes = [8, 16], strides = [1, 1]} : vector<8x192xf32> to vector<8x16xf32>
    %cst_11 = arith.constant dense<0.000000e+00> : vector<8x8xf32>
    %15 = tpu.matmul %12, %13, %cst_11 {dimension_numbers = #tpu.dot_dimension_numbers<[1], [1], [0], [0], [0, 0, 1, 0], [], []>} : vector<8x16xf32>, vector<8x16xf32>, vector<8x8xf32> -> vector<8x8xf32>
    %cst_12 = arith.constant 2.500000e-01 : f32
    %16 = vector.broadcast %cst_12 : f32 to vector<8x8xf32>
    %17 = arith.mulf %15, %16 : vector<8x8xf32>
    %18 = vector.broadcast %10 : vector<1x8xf32> to vector<8x8xf32>
    %19 = arith.addf %17, %18 : vector<8x8xf32>
    %cst_13 = arith.constant dense<0xFF800000> : vector<8xf32>
    %20 = vector.multi_reduction <maximumf>, %19, %cst_13 [1] : vector<8x8xf32> to vector<8xf32>
    %21 = vector.shape_cast %20 : vector<8xf32> to vector<8x1xf32>
    %22 = vector.broadcast %21 : vector<8x1xf32> to vector<8x8xf32>
    %23 = arith.subf %19, %22 : vector<8x8xf32>
    %24 = math.exp %23 : vector<8x8xf32>
    %cst_14 = arith.constant dense<0.000000e+00> : vector<8xf32>
    %25 = vector.multi_reduction <add>, %24, %cst_14 [1] : vector<8x8xf32> to vector<8xf32>
    %26 = vector.shape_cast %25 : vector<8xf32> to vector<8x1xf32>
    %27 = vector.broadcast %26 : vector<8x1xf32> to vector<8x8xf32>
    %28 = arith.divf %24, %27 : vector<8x8xf32>
    %cst_15 = arith.constant dense<0.000000e+00> : vector<8x16xf32>
    %29 = tpu.matmul %28, %14, %cst_15 {dimension_numbers = #tpu.dot_dimension_numbers<[1], [0], [0], [1], [0, 0, 1, 1], [], []>} : vector<8x8xf32>, vector<8x16xf32>, vector<8x16xf32> -> vector<8x16xf32>
    %30 = vector.extract_strided_slice %1 {offsets = [0, 0], sizes = [16, 64], strides = [1, 1]} : vector<64x64xf32> to vector<16x64xf32>
    %cst_16 = arith.constant dense<0.000000e+00> : vector<8x64xf32>
    %31 = tpu.matmul %29, %30, %cst_16 {dimension_numbers = #tpu.dot_dimension_numbers<[1], [0], [0], [1], [0, 0, 1, 1], [], []>} : vector<8x16xf32>, vector<16x64xf32>, vector<8x64xf32> -> vector<8x64xf32>
    %32 = arith.addf %11, %31 : vector<8x64xf32>
    %33 = vector.extract_strided_slice %8 {offsets = [0, 16], sizes = [8, 16], strides = [1, 1]} : vector<8x192xf32> to vector<8x16xf32>
    %34 = vector.extract_strided_slice %8 {offsets = [0, 80], sizes = [8, 16], strides = [1, 1]} : vector<8x192xf32> to vector<8x16xf32>
    %35 = vector.extract_strided_slice %8 {offsets = [0, 144], sizes = [8, 16], strides = [1, 1]} : vector<8x192xf32> to vector<8x16xf32>
    %cst_17 = arith.constant dense<0.000000e+00> : vector<8x8xf32>
    %36 = tpu.matmul %33, %34, %cst_17 {dimension_numbers = #tpu.dot_dimension_numbers<[1], [1], [0], [0], [0, 0, 1, 0], [], []>} : vector<8x16xf32>, vector<8x16xf32>, vector<8x8xf32> -> vector<8x8xf32>
    %cst_18 = arith.constant 2.500000e-01 : f32
    %37 = vector.broadcast %cst_18 : f32 to vector<8x8xf32>
    %38 = arith.mulf %36, %37 : vector<8x8xf32>
    %39 = vector.broadcast %10 : vector<1x8xf32> to vector<8x8xf32>
    %40 = arith.addf %38, %39 : vector<8x8xf32>
    %cst_19 = arith.constant dense<0xFF800000> : vector<8xf32>
    %41 = vector.multi_reduction <maximumf>, %40, %cst_19 [1] : vector<8x8xf32> to vector<8xf32>
    %42 = vector.shape_cast %41 : vector<8xf32> to vector<8x1xf32>
    %43 = vector.broadcast %42 : vector<8x1xf32> to vector<8x8xf32>
    %44 = arith.subf %40, %43 : vector<8x8xf32>
    %45 = math.exp %44 : vector<8x8xf32>
    %cst_20 = arith.constant dense<0.000000e+00> : vector<8xf32>
    %46 = vector.multi_reduction <add>, %45, %cst_20 [1] : vector<8x8xf32> to vector<8xf32>
    %47 = vector.shape_cast %46 : vector<8xf32> to vector<8x1xf32>
    %48 = vector.broadcast %47 : vector<8x1xf32> to vector<8x8xf32>
    %49 = arith.divf %45, %48 : vector<8x8xf32>
    %cst_21 = arith.constant dense<0.000000e+00> : vector<8x16xf32>
    %50 = tpu.matmul %49, %35, %cst_21 {dimension_numbers = #tpu.dot_dimension_numbers<[1], [0], [0], [1], [0, 0, 1, 1], [], []>} : vector<8x8xf32>, vector<8x16xf32>, vector<8x16xf32> -> vector<8x16xf32>
    %51 = vector.extract_strided_slice %1 {offsets = [16, 0], sizes = [16, 64], strides = [1, 1]} : vector<64x64xf32> to vector<16x64xf32>
    %cst_22 = arith.constant dense<0.000000e+00> : vector<8x64xf32>
    %52 = tpu.matmul %50, %51, %cst_22 {dimension_numbers = #tpu.dot_dimension_numbers<[1], [0], [0], [1], [0, 0, 1, 1], [], []>} : vector<8x16xf32>, vector<16x64xf32>, vector<8x64xf32> -> vector<8x64xf32>
    %53 = arith.addf %32, %52 : vector<8x64xf32>
    %54 = vector.extract_strided_slice %8 {offsets = [0, 32], sizes = [8, 16], strides = [1, 1]} : vector<8x192xf32> to vector<8x16xf32>
    %55 = vector.extract_strided_slice %8 {offsets = [0, 96], sizes = [8, 16], strides = [1, 1]} : vector<8x192xf32> to vector<8x16xf32>
    %56 = vector.extract_strided_slice %8 {offsets = [0, 160], sizes = [8, 16], strides = [1, 1]} : vector<8x192xf32> to vector<8x16xf32>
    %cst_23 = arith.constant dense<0.000000e+00> : vector<8x8xf32>
    %57 = tpu.matmul %54, %55, %cst_23 {dimension_numbers = #tpu.dot_dimension_numbers<[1], [1], [0], [0], [0, 0, 1, 0], [], []>} : vector<8x16xf32>, vector<8x16xf32>, vector<8x8xf32> -> vector<8x8xf32>
    %cst_24 = arith.constant 2.500000e-01 : f32
    %58 = vector.broadcast %cst_24 : f32 to vector<8x8xf32>
    %59 = arith.mulf %57, %58 : vector<8x8xf32>
    %60 = vector.broadcast %10 : vector<1x8xf32> to vector<8x8xf32>
    %61 = arith.addf %59, %60 : vector<8x8xf32>
    %cst_25 = arith.constant dense<0xFF800000> : vector<8xf32>
    %62 = vector.multi_reduction <maximumf>, %61, %cst_25 [1] : vector<8x8xf32> to vector<8xf32>
    %63 = vector.shape_cast %62 : vector<8xf32> to vector<8x1xf32>
    %64 = vector.broadcast %63 : vector<8x1xf32> to vector<8x8xf32>
    %65 = arith.subf %61, %64 : vector<8x8xf32>
    %66 = math.exp %65 : vector<8x8xf32>
    %cst_26 = arith.constant dense<0.000000e+00> : vector<8xf32>
    %67 = vector.multi_reduction <add>, %66, %cst_26 [1] : vector<8x8xf32> to vector<8xf32>
    %68 = vector.shape_cast %67 : vector<8xf32> to vector<8x1xf32>
    %69 = vector.broadcast %68 : vector<8x1xf32> to vector<8x8xf32>
    %70 = arith.divf %66, %69 : vector<8x8xf32>
    %cst_27 = arith.constant dense<0.000000e+00> : vector<8x16xf32>
    %71 = tpu.matmul %70, %56, %cst_27 {dimension_numbers = #tpu.dot_dimension_numbers<[1], [0], [0], [1], [0, 0, 1, 1], [], []>} : vector<8x8xf32>, vector<8x16xf32>, vector<8x16xf32> -> vector<8x16xf32>
    %72 = vector.extract_strided_slice %1 {offsets = [32, 0], sizes = [16, 64], strides = [1, 1]} : vector<64x64xf32> to vector<16x64xf32>
    %cst_28 = arith.constant dense<0.000000e+00> : vector<8x64xf32>
    %73 = tpu.matmul %71, %72, %cst_28 {dimension_numbers = #tpu.dot_dimension_numbers<[1], [0], [0], [1], [0, 0, 1, 1], [], []>} : vector<8x16xf32>, vector<16x64xf32>, vector<8x64xf32> -> vector<8x64xf32>
    %74 = arith.addf %53, %73 : vector<8x64xf32>
    %75 = vector.extract_strided_slice %8 {offsets = [0, 48], sizes = [8, 16], strides = [1, 1]} : vector<8x192xf32> to vector<8x16xf32>
    %76 = vector.extract_strided_slice %8 {offsets = [0, 112], sizes = [8, 16], strides = [1, 1]} : vector<8x192xf32> to vector<8x16xf32>
    %77 = vector.extract_strided_slice %8 {offsets = [0, 176], sizes = [8, 16], strides = [1, 1]} : vector<8x192xf32> to vector<8x16xf32>
    %cst_29 = arith.constant dense<0.000000e+00> : vector<8x8xf32>
    %78 = tpu.matmul %75, %76, %cst_29 {dimension_numbers = #tpu.dot_dimension_numbers<[1], [1], [0], [0], [0, 0, 1, 0], [], []>} : vector<8x16xf32>, vector<8x16xf32>, vector<8x8xf32> -> vector<8x8xf32>
    %cst_30 = arith.constant 2.500000e-01 : f32
    %79 = vector.broadcast %cst_30 : f32 to vector<8x8xf32>
    %80 = arith.mulf %78, %79 : vector<8x8xf32>
    %81 = vector.broadcast %10 : vector<1x8xf32> to vector<8x8xf32>
    %82 = arith.addf %80, %81 : vector<8x8xf32>
    %cst_31 = arith.constant dense<0xFF800000> : vector<8xf32>
    %83 = vector.multi_reduction <maximumf>, %82, %cst_31 [1] : vector<8x8xf32> to vector<8xf32>
    %84 = vector.shape_cast %83 : vector<8xf32> to vector<8x1xf32>
    %85 = vector.broadcast %84 : vector<8x1xf32> to vector<8x8xf32>
    %86 = arith.subf %82, %85 : vector<8x8xf32>
    %87 = math.exp %86 : vector<8x8xf32>
    %cst_32 = arith.constant dense<0.000000e+00> : vector<8xf32>
    %88 = vector.multi_reduction <add>, %87, %cst_32 [1] : vector<8x8xf32> to vector<8xf32>
    %89 = vector.shape_cast %88 : vector<8xf32> to vector<8x1xf32>
    %90 = vector.broadcast %89 : vector<8x1xf32> to vector<8x8xf32>
    %91 = arith.divf %87, %90 : vector<8x8xf32>
    %cst_33 = arith.constant dense<0.000000e+00> : vector<8x16xf32>
    %92 = tpu.matmul %91, %77, %cst_33 {dimension_numbers = #tpu.dot_dimension_numbers<[1], [0], [0], [1], [0, 0, 1, 1], [], []>} : vector<8x8xf32>, vector<8x16xf32>, vector<8x16xf32> -> vector<8x16xf32>
    %93 = vector.extract_strided_slice %1 {offsets = [48, 0], sizes = [16, 64], strides = [1, 1]} : vector<64x64xf32> to vector<16x64xf32>
    %cst_34 = arith.constant dense<0.000000e+00> : vector<8x64xf32>
    %94 = tpu.matmul %92, %93, %cst_34 {dimension_numbers = #tpu.dot_dimension_numbers<[1], [0], [0], [1], [0, 0, 1, 1], [], []>} : vector<8x16xf32>, vector<16x64xf32>, vector<8x64xf32> -> vector<8x64xf32>
    %95 = arith.addf %74, %94 : vector<8x64xf32>
    %c0_35 = arith.constant 0 : index
    %c0_36 = arith.constant 0 : index
    %96 = vector.load %arg5[%c0_35, %c0_36] : memref<1x64xf32, #tpu.memory_space<vmem>>, vector<1x64xf32>
    %97 = vector.broadcast %96 : vector<1x64xf32> to vector<8x64xf32>
    %98 = arith.addf %95, %97 : vector<8x64xf32>
    %99 = arith.addf %7, %98 : vector<8x64xf32>
    %c0_37 = arith.constant 0 : index
    %c0_38 = arith.constant 0 : index
    %100 = vector.load %arg6[%c0_37, %c0_38] : memref<1x64xf32, #tpu.memory_space<vmem>>, vector<1x64xf32>
    %c0_39 = arith.constant 0 : index
    %c0_40 = arith.constant 0 : index
    %101 = vector.load %arg7[%c0_39, %c0_40] : memref<1x64xf32, #tpu.memory_space<vmem>>, vector<1x64xf32>
    %cst_41 = arith.constant dense<0.000000e+00> : vector<8xf32>
    %102 = vector.multi_reduction <add>, %99, %cst_41 [1] : vector<8x64xf32> to vector<8xf32>
    %103 = vector.shape_cast %102 : vector<8xf32> to vector<8x1xf32>
    %cst_42 = arith.constant 6.400000e+01 : f32
    %104 = vector.broadcast %cst_42 : f32 to vector<8x1xf32>
    %105 = arith.divf %103, %104 : vector<8x1xf32>
    %106 = vector.broadcast %105 : vector<8x1xf32> to vector<8x64xf32>
    %107 = arith.subf %99, %106 : vector<8x64xf32>
    %108 = arith.mulf %107, %107 : vector<8x64xf32>
    %cst_43 = arith.constant dense<0.000000e+00> : vector<8xf32>
    %109 = vector.multi_reduction <add>, %108, %cst_43 [1] : vector<8x64xf32> to vector<8xf32>
    %110 = vector.shape_cast %109 : vector<8xf32> to vector<8x1xf32>
    %cst_44 = arith.constant 6.400000e+01 : f32
    %111 = vector.broadcast %cst_44 : f32 to vector<8x1xf32>
    %112 = arith.divf %110, %111 : vector<8x1xf32>
    %113 = vector.broadcast %105 : vector<8x1xf32> to vector<8x64xf32>
    %114 = arith.subf %99, %113 : vector<8x64xf32>
    %cst_45 = arith.constant 9.99999974E-6 : f32
    %115 = vector.broadcast %cst_45 : f32 to vector<8x1xf32>
    %116 = arith.addf %112, %115 : vector<8x1xf32>
    %117 = math.rsqrt %116 : vector<8x1xf32>
    %118 = vector.broadcast %117 : vector<8x1xf32> to vector<8x64xf32>
    %119 = arith.mulf %114, %118 : vector<8x64xf32>
    %120 = vector.broadcast %100 : vector<1x64xf32> to vector<8x64xf32>
    %121 = arith.mulf %119, %120 : vector<8x64xf32>
    %122 = vector.broadcast %101 : vector<1x64xf32> to vector<8x64xf32>
    %123 = arith.addf %121, %122 : vector<8x64xf32>
    %c0_46 = arith.constant 0 : index
    %c0_47 = arith.constant 0 : index
    %124 = vector.load %arg8[%c0_46, %c0_47] : memref<64x64xf32, #tpu.memory_space<vmem>>, vector<64x64xf32>
    %cst_48 = arith.constant dense<0.000000e+00> : vector<8x64xf32>
    %125 = tpu.matmul %123, %124, %cst_48 {dimension_numbers = #tpu.dot_dimension_numbers<[1], [0], [0], [1], [0, 0, 1, 1], [], []>} : vector<8x64xf32>, vector<64x64xf32>, vector<8x64xf32> -> vector<8x64xf32>
    %c0_49 = arith.constant 0 : index
    %c0_50 = arith.constant 0 : index
    %126 = vector.load %arg9[%c0_49, %c0_50] : memref<1x64xf32, #tpu.memory_space<vmem>>, vector<1x64xf32>
    %127 = vector.broadcast %126 : vector<1x64xf32> to vector<8x64xf32>
    %128 = arith.addf %125, %127 : vector<8x64xf32>
    %cst_51 = arith.constant 0.000000e+00 : f32
    %129 = vector.broadcast %cst_51 : f32 to vector<8x64xf32>
    %130 = arith.maximumf %128, %129 : vector<8x64xf32>
    %c0_52 = arith.constant 0 : index
    %c0_53 = arith.constant 0 : index
    %131 = vector.load %arg10[%c0_52, %c0_53] : memref<64x64xf32, #tpu.memory_space<vmem>>, vector<64x64xf32>
    %cst_54 = arith.constant dense<0.000000e+00> : vector<8x64xf32>
    %132 = tpu.matmul %130, %131, %cst_54 {dimension_numbers = #tpu.dot_dimension_numbers<[1], [0], [0], [1], [0, 0, 1, 1], [], []>} : vector<8x64xf32>, vector<64x64xf32>, vector<8x64xf32> -> vector<8x64xf32>
    %c0_55 = arith.constant 0 : index
    %c0_56 = arith.constant 0 : index
    %133 = vector.load %arg11[%c0_55, %c0_56] : memref<1x64xf32, #tpu.memory_space<vmem>>, vector<1x64xf32>
    %134 = vector.broadcast %133 : vector<1x64xf32> to vector<8x64xf32>
    %135 = arith.addf %132, %134 : vector<8x64xf32>
    %136 = arith.addf %123, %135 : vector<8x64xf32>
    %c0_57 = arith.constant 0 : index
    %c0_58 = arith.constant 0 : index
    %137 = vector.load %arg12[%c0_57, %c0_58] : memref<1x64xf32, #tpu.memory_space<vmem>>, vector<1x64xf32>
    %c0_59 = arith.constant 0 : index
    %c0_60 = arith.constant 0 : index
    %138 = vector.load %arg13[%c0_59, %c0_60] : memref<1x64xf32, #tpu.memory_space<vmem>>, vector<1x64xf32>
    %cst_61 = arith.constant dense<0.000000e+00> : vector<8xf32>
    %139 = vector.multi_reduction <add>, %136, %cst_61 [1] : vector<8x64xf32> to vector<8xf32>
    %140 = vector.shape_cast %139 : vector<8xf32> to vector<8x1xf32>
    %cst_62 = arith.constant 6.400000e+01 : f32
    %141 = vector.broadcast %cst_62 : f32 to vector<8x1xf32>
    %142 = arith.divf %140, %141 : vector<8x1xf32>
    %143 = vector.broadcast %142 : vector<8x1xf32> to vector<8x64xf32>
    %144 = arith.subf %136, %143 : vector<8x64xf32>
    %145 = arith.mulf %144, %144 : vector<8x64xf32>
    %cst_63 = arith.constant dense<0.000000e+00> : vector<8xf32>
    %146 = vector.multi_reduction <add>, %145, %cst_63 [1] : vector<8x64xf32> to vector<8xf32>
    %147 = vector.shape_cast %146 : vector<8xf32> to vector<8x1xf32>
    %cst_64 = arith.constant 6.400000e+01 : f32
    %148 = vector.broadcast %cst_64 : f32 to vector<8x1xf32>
    %149 = arith.divf %147, %148 : vector<8x1xf32>
    %150 = vector.broadcast %142 : vector<8x1xf32> to vector<8x64xf32>
    %151 = arith.subf %136, %150 : vector<8x64xf32>
    %cst_65 = arith.constant 9.99999974E-6 : f32
    %152 = vector.broadcast %cst_65 : f32 to vector<8x1xf32>
    %153 = arith.addf %149, %152 : vector<8x1xf32>
    %154 = math.rsqrt %153 : vector<8x1xf32>
    %155 = vector.broadcast %154 : vector<8x1xf32> to vector<8x64xf32>
    %156 = arith.mulf %151, %155 : vector<8x64xf32>
    %157 = vector.broadcast %137 : vector<1x64xf32> to vector<8x64xf32>
    %158 = arith.mulf %156, %157 : vector<8x64xf32>
    %159 = vector.broadcast %138 : vector<1x64xf32> to vector<8x64xf32>
    %160 = arith.addf %158, %159 : vector<8x64xf32>
    %c0_66 = arith.constant 0 : index
    %c0_67 = arith.constant 0 : index
    %161 = vector.load %arg14[%c0_66, %c0_67] : memref<16x64xf32, #tpu.memory_space<vmem>>, vector<8x64xf32>
    tpu.vector_store %arg14[%c0_66, %c0_67], %160 {strides = array<i32>} : memref<16x64xf32, #tpu.memory_space<vmem>>, vector<8x64xf32>,
    %162 = vector.extract_strided_slice %0 {offsets = [8, 0], sizes = [8, 64], strides = [1, 1]} : vector<16x64xf32> to vector<8x64xf32>
    %163 = vector.extract_strided_slice %6 {offsets = [8, 0], sizes = [8, 192], strides = [1, 1]} : vector<16x192xf32> to vector<8x192xf32>
    %c1 = arith.constant 1 : index
    %c0_68 = arith.constant 0 : index
    %c0_69 = arith.constant 0 : index
    %164 = vector.load %arg1[%c1, %c0_68, %c0_69] : memref<2x1x8xf32, #tpu.memory_space<vmem>>, vector<1x1x8xf32>
    %165 = vector.shape_cast %164 : vector<1x1x8xf32> to vector<1x8xf32>
    %cst_70 = arith.constant 0.000000e+00 : f32
    %166 = vector.broadcast %cst_70 : f32 to vector<8x64xf32>
    %167 = vector.extract_strided_slice %163 {offsets = [0, 0], sizes = [8, 16], strides = [1, 1]} : vector<8x192xf32> to vector<8x16xf32>
    %168 = vector.extract_strided_slice %163 {offsets = [0, 64], sizes = [8, 16], strides = [1, 1]} : vector<8x192xf32> to vector<8x16xf32>
    %169 = vector.extract_strided_slice %163 {offsets = [0, 128], sizes = [8, 16], strides = [1, 1]} : vector<8x192xf32> to vector<8x16xf32>
    %cst_71 = arith.constant dense<0.000000e+00> : vector<8x8xf32>
    %170 = tpu.matmul %167, %168, %cst_71 {dimension_numbers = #tpu.dot_dimension_numbers<[1], [1], [0], [0], [0, 0, 1, 0], [], []>} : vector<8x16xf32>, vector<8x16xf32>, vector<8x8xf32> -> vector<8x8xf32>
    %cst_72 = arith.constant 2.500000e-01 : f32
    %171 = vector.broadcast %cst_72 : f32 to vector<8x8xf32>
    %172 = arith.mulf %170, %171 : vector<8x8xf32>
    %173 = vector.broadcast %165 : vector<1x8xf32> to vector<8x8xf32>
    %174 = arith.addf %172, %173 : vector<8x8xf32>
    %cst_73 = arith.constant dense<0xFF800000> : vector<8xf32>
    %175 = vector.multi_reduction <maximumf>, %174, %cst_73 [1] : vector<8x8xf32> to vector<8xf32>
    %176 = vector.shape_cast %175 : vector<8xf32> to vector<8x1xf32>
    %177 = vector.broadcast %176 : vector<8x1xf32> to vector<8x8xf32>
    %178 = arith.subf %174, %177 : vector<8x8xf32>
    %179 = math.exp %178 : vector<8x8xf32>
    %cst_74 = arith.constant dense<0.000000e+00> : vector<8xf32>
    %180 = vector.multi_reduction <add>, %179, %cst_74 [1] : vector<8x8xf32> to vector<8xf32>
    %181 = vector.shape_cast %180 : vector<8xf32> to vector<8x1xf32>
    %182 = vector.broadcast %181 : vector<8x1xf32> to vector<8x8xf32>
    %183 = arith.divf %179, %182 : vector<8x8xf32>
    %cst_75 = arith.constant dense<0.000000e+00> : vector<8x16xf32>
    %184 = tpu.matmul %183, %169, %cst_75 {dimension_numbers = #tpu.dot_dimension_numbers<[1], [0], [0], [1], [0, 0, 1, 1], [], []>} : vector<8x8xf32>, vector<8x16xf32>, vector<8x16xf32> -> vector<8x16xf32>
    %185 = vector.extract_strided_slice %1 {offsets = [0, 0], sizes = [16, 64], strides = [1, 1]} : vector<64x64xf32> to vector<16x64xf32>
    %cst_76 = arith.constant dense<0.000000e+00> : vector<8x64xf32>
    %186 = tpu.matmul %184, %185, %cst_76 {dimension_numbers = #tpu.dot_dimension_numbers<[1], [0], [0], [1], [0, 0, 1, 1], [], []>} : vector<8x16xf32>, vector<16x64xf32>, vector<8x64xf32> -> vector<8x64xf32>
    %187 = arith.addf %166, %186 : vector<8x64xf32>
    %188 = vector.extract_strided_slice %163 {offsets = [0, 16], sizes = [8, 16], strides = [1, 1]} : vector<8x192xf32> to vector<8x16xf32>
    %189 = vector.extract_strided_slice %163 {offsets = [0, 80], sizes = [8, 16], strides = [1, 1]} : vector<8x192xf32> to vector<8x16xf32>
    %190 = vector.extract_strided_slice %163 {offsets = [0, 144], sizes = [8, 16], strides = [1, 1]} : vector<8x192xf32> to vector<8x16xf32>
    %cst_77 = arith.constant dense<0.000000e+00> : vector<8x8xf32>
    %191 = tpu.matmul %188, %189, %cst_77 {dimension_numbers = #tpu.dot_dimension_numbers<[1], [1], [0], [0], [0, 0, 1, 0], [], []>} : vector<8x16xf32>, vector<8x16xf32>, vector<8x8xf32> -> vector<8x8xf32>
    %cst_78 = arith.constant 2.500000e-01 : f32
    %192 = vector.broadcast %cst_78 : f32 to vector<8x8xf32>
    %193 = arith.mulf %191, %192 : vector<8x8xf32>
    %194 = vector.broadcast %165 : vector<1x8xf32> to vector<8x8xf32>
    %195 = arith.addf %193, %194 : vector<8x8xf32>
    %cst_79 = arith.constant dense<0xFF800000> : vector<8xf32>
    %196 = vector.multi_reduction <maximumf>, %195, %cst_79 [1] : vector<8x8xf32> to vector<8xf32>
    %197 = vector.shape_cast %196 : vector<8xf32> to vector<8x1xf32>
    %198 = vector.broadcast %197 : vector<8x1xf32> to vector<8x8xf32>
    %199 = arith.subf %195, %198 : vector<8x8xf32>
    %200 = math.exp %199 : vector<8x8xf32>
    %cst_80 = arith.constant dense<0.000000e+00> : vector<8xf32>
    %201 = vector.multi_reduction <add>, %200, %cst_80 [1] : vector<8x8xf32> to vector<8xf32>
    %202 = vector.shape_cast %201 : vector<8xf32> to vector<8x1xf32>
    %203 = vector.broadcast %202 : vector<8x1xf32> to vector<8x8xf32>
    %204 = arith.divf %200, %203 : vector<8x8xf32>
    %cst_81 = arith.constant dense<0.000000e+00> : vector<8x16xf32>
    %205 = tpu.matmul %204, %190, %cst_81 {dimension_numbers = #tpu.dot_dimension_numbers<[1], [0], [0], [1], [0, 0, 1, 1], [], []>} : vector<8x8xf32>, vector<8x16xf32>, vector<8x16xf32> -> vector<8x16xf32>
    %206 = vector.extract_strided_slice %1 {offsets = [16, 0], sizes = [16, 64], strides = [1, 1]} : vector<64x64xf32> to vector<16x64xf32>
    %cst_82 = arith.constant dense<0.000000e+00> : vector<8x64xf32>
    %207 = tpu.matmul %205, %206, %cst_82 {dimension_numbers = #tpu.dot_dimension_numbers<[1], [0], [0], [1], [0, 0, 1, 1], [], []>} : vector<8x16xf32>, vector<16x64xf32>, vector<8x64xf32> -> vector<8x64xf32>
    %208 = arith.addf %187, %207 : vector<8x64xf32>
    %209 = vector.extract_strided_slice %163 {offsets = [0, 32], sizes = [8, 16], strides = [1, 1]} : vector<8x192xf32> to vector<8x16xf32>
    %210 = vector.extract_strided_slice %163 {offsets = [0, 96], sizes = [8, 16], strides = [1, 1]} : vector<8x192xf32> to vector<8x16xf32>
    %211 = vector.extract_strided_slice %163 {offsets = [0, 160], sizes = [8, 16], strides = [1, 1]} : vector<8x192xf32> to vector<8x16xf32>
    %cst_83 = arith.constant dense<0.000000e+00> : vector<8x8xf32>
    %212 = tpu.matmul %209, %210, %cst_83 {dimension_numbers = #tpu.dot_dimension_numbers<[1], [1], [0], [0], [0, 0, 1, 0], [], []>} : vector<8x16xf32>, vector<8x16xf32>, vector<8x8xf32> -> vector<8x8xf32>
    %cst_84 = arith.constant 2.500000e-01 : f32
    %213 = vector.broadcast %cst_84 : f32 to vector<8x8xf32>
    %214 = arith.mulf %212, %213 : vector<8x8xf32>
    %215 = vector.broadcast %165 : vector<1x8xf32> to vector<8x8xf32>
    %216 = arith.addf %214, %215 : vector<8x8xf32>
    %cst_85 = arith.constant dense<0xFF800000> : vector<8xf32>
    %217 = vector.multi_reduction <maximumf>, %216, %cst_85 [1] : vector<8x8xf32> to vector<8xf32>
    %218 = vector.shape_cast %217 : vector<8xf32> to vector<8x1xf32>
    %219 = vector.broadcast %218 : vector<8x1xf32> to vector<8x8xf32>
    %220 = arith.subf %216, %219 : vector<8x8xf32>
    %221 = math.exp %220 : vector<8x8xf32>
    %cst_86 = arith.constant dense<0.000000e+00> : vector<8xf32>
    %222 = vector.multi_reduction <add>, %221, %cst_86 [1] : vector<8x8xf32> to vector<8xf32>
    %223 = vector.shape_cast %222 : vector<8xf32> to vector<8x1xf32>
    %224 = vector.broadcast %223 : vector<8x1xf32> to vector<8x8xf32>
    %225 = arith.divf %221, %224 : vector<8x8xf32>
    %cst_87 = arith.constant dense<0.000000e+00> : vector<8x16xf32>
    %226 = tpu.matmul %225, %211, %cst_87 {dimension_numbers = #tpu.dot_dimension_numbers<[1], [0], [0], [1], [0, 0, 1, 1], [], []>} : vector<8x8xf32>, vector<8x16xf32>, vector<8x16xf32> -> vector<8x16xf32>
    %227 = vector.extract_strided_slice %1 {offsets = [32, 0], sizes = [16, 64], strides = [1, 1]} : vector<64x64xf32> to vector<16x64xf32>
    %cst_88 = arith.constant dense<0.000000e+00> : vector<8x64xf32>
    %228 = tpu.matmul %226, %227, %cst_88 {dimension_numbers = #tpu.dot_dimension_numbers<[1], [0], [0], [1], [0, 0, 1, 1], [], []>} : vector<8x16xf32>, vector<16x64xf32>, vector<8x64xf32> -> vector<8x64xf32>
    %229 = arith.addf %208, %228 : vector<8x64xf32>
    %230 = vector.extract_strided_slice %163 {offsets = [0, 48], sizes = [8, 16], strides = [1, 1]} : vector<8x192xf32> to vector<8x16xf32>
    %231 = vector.extract_strided_slice %163 {offsets = [0, 112], sizes = [8, 16], strides = [1, 1]} : vector<8x192xf32> to vector<8x16xf32>
    %232 = vector.extract_strided_slice %163 {offsets = [0, 176], sizes = [8, 16], strides = [1, 1]} : vector<8x192xf32> to vector<8x16xf32>
    %cst_89 = arith.constant dense<0.000000e+00> : vector<8x8xf32>
    %233 = tpu.matmul %230, %231, %cst_89 {dimension_numbers = #tpu.dot_dimension_numbers<[1], [1], [0], [0], [0, 0, 1, 0], [], []>} : vector<8x16xf32>, vector<8x16xf32>, vector<8x8xf32> -> vector<8x8xf32>
    %cst_90 = arith.constant 2.500000e-01 : f32
    %234 = vector.broadcast %cst_90 : f32 to vector<8x8xf32>
    %235 = arith.mulf %233, %234 : vector<8x8xf32>
    %236 = vector.broadcast %165 : vector<1x8xf32> to vector<8x8xf32>
    %237 = arith.addf %235, %236 : vector<8x8xf32>
    %cst_91 = arith.constant dense<0xFF800000> : vector<8xf32>
    %238 = vector.multi_reduction <maximumf>, %237, %cst_91 [1] : vector<8x8xf32> to vector<8xf32>
    %239 = vector.shape_cast %238 : vector<8xf32> to vector<8x1xf32>
    %240 = vector.broadcast %239 : vector<8x1xf32> to vector<8x8xf32>
    %241 = arith.subf %237, %240 : vector<8x8xf32>
    %242 = math.exp %241 : vector<8x8xf32>
    %cst_92 = arith.constant dense<0.000000e+00> : vector<8xf32>
    %243 = vector.multi_reduction <add>, %242, %cst_92 [1] : vector<8x8xf32> to vector<8xf32>
    %244 = vector.shape_cast %243 : vector<8xf32> to vector<8x1xf32>
    %245 = vector.broadcast %244 : vector<8x1xf32> to vector<8x8xf32>
    %246 = arith.divf %242, %245 : vector<8x8xf32>
    %cst_93 = arith.constant dense<0.000000e+00> : vector<8x16xf32>
    %247 = tpu.matmul %246, %232, %cst_93 {dimension_numbers = #tpu.dot_dimension_numbers<[1], [0], [0], [1], [0, 0, 1, 1], [], []>} : vector<8x8xf32>, vector<8x16xf32>, vector<8x16xf32> -> vector<8x16xf32>
    %248 = vector.extract_strided_slice %1 {offsets = [48, 0], sizes = [16, 64], strides = [1, 1]} : vector<64x64xf32> to vector<16x64xf32>
    %cst_94 = arith.constant dense<0.000000e+00> : vector<8x64xf32>
    %249 = tpu.matmul %247, %248, %cst_94 {dimension_numbers = #tpu.dot_dimension_numbers<[1], [0], [0], [1], [0, 0, 1, 1], [], []>} : vector<8x16xf32>, vector<16x64xf32>, vector<8x64xf32> -> vector<8x64xf32>
    %250 = arith.addf %229, %249 : vector<8x64xf32>
    %c0_95 = arith.constant 0 : index
    %c0_96 = arith.constant 0 : index
    %251 = vector.load %arg5[%c0_95, %c0_96] : memref<1x64xf32, #tpu.memory_space<vmem>>, vector<1x64xf32>
    %252 = vector.broadcast %251 : vector<1x64xf32> to vector<8x64xf32>
    %253 = arith.addf %250, %252 : vector<8x64xf32>
    %254 = arith.addf %162, %253 : vector<8x64xf32>
    %c0_97 = arith.constant 0 : index
    %c0_98 = arith.constant 0 : index
    %255 = vector.load %arg6[%c0_97, %c0_98] : memref<1x64xf32, #tpu.memory_space<vmem>>, vector<1x64xf32>
    %c0_99 = arith.constant 0 : index
    %c0_100 = arith.constant 0 : index
    %256 = vector.load %arg7[%c0_99, %c0_100] : memref<1x64xf32, #tpu.memory_space<vmem>>, vector<1x64xf32>
    %cst_101 = arith.constant dense<0.000000e+00> : vector<8xf32>
    %257 = vector.multi_reduction <add>, %254, %cst_101 [1] : vector<8x64xf32> to vector<8xf32>
    %258 = vector.shape_cast %257 : vector<8xf32> to vector<8x1xf32>
    %cst_102 = arith.constant 6.400000e+01 : f32
    %259 = vector.broadcast %cst_102 : f32 to vector<8x1xf32>
    %260 = arith.divf %258, %259 : vector<8x1xf32>
    %261 = vector.broadcast %260 : vector<8x1xf32> to vector<8x64xf32>
    %262 = arith.subf %254, %261 : vector<8x64xf32>
    %263 = arith.mulf %262, %262 : vector<8x64xf32>
    %cst_103 = arith.constant dense<0.000000e+00> : vector<8xf32>
    %264 = vector.multi_reduction <add>, %263, %cst_103 [1] : vector<8x64xf32> to vector<8xf32>
    %265 = vector.shape_cast %264 : vector<8xf32> to vector<8x1xf32>
    %cst_104 = arith.constant 6.400000e+01 : f32
    %266 = vector.broadcast %cst_104 : f32 to vector<8x1xf32>
    %267 = arith.divf %265, %266 : vector<8x1xf32>
    %268 = vector.broadcast %260 : vector<8x1xf32> to vector<8x64xf32>
    %269 = arith.subf %254, %268 : vector<8x64xf32>
    %cst_105 = arith.constant 9.99999974E-6 : f32
    %270 = vector.broadcast %cst_105 : f32 to vector<8x1xf32>
    %271 = arith.addf %267, %270 : vector<8x1xf32>
    %272 = math.rsqrt %271 : vector<8x1xf32>
    %273 = vector.broadcast %272 : vector<8x1xf32> to vector<8x64xf32>
    %274 = arith.mulf %269, %273 : vector<8x64xf32>
    %275 = vector.broadcast %255 : vector<1x64xf32> to vector<8x64xf32>
    %276 = arith.mulf %274, %275 : vector<8x64xf32>
    %277 = vector.broadcast %256 : vector<1x64xf32> to vector<8x64xf32>
    %278 = arith.addf %276, %277 : vector<8x64xf32>
    %c0_106 = arith.constant 0 : index
    %c0_107 = arith.constant 0 : index
    %279 = vector.load %arg8[%c0_106, %c0_107] : memref<64x64xf32, #tpu.memory_space<vmem>>, vector<64x64xf32>
    %cst_108 = arith.constant dense<0.000000e+00> : vector<8x64xf32>
    %280 = tpu.matmul %278, %279, %cst_108 {dimension_numbers = #tpu.dot_dimension_numbers<[1], [0], [0], [1], [0, 0, 1, 1], [], []>} : vector<8x64xf32>, vector<64x64xf32>, vector<8x64xf32> -> vector<8x64xf32>
    %c0_109 = arith.constant 0 : index
    %c0_110 = arith.constant 0 : index
    %281 = vector.load %arg9[%c0_109, %c0_110] : memref<1x64xf32, #tpu.memory_space<vmem>>, vector<1x64xf32>
    %282 = vector.broadcast %281 : vector<1x64xf32> to vector<8x64xf32>
    %283 = arith.addf %280, %282 : vector<8x64xf32>
    %cst_111 = arith.constant 0.000000e+00 : f32
    %284 = vector.broadcast %cst_111 : f32 to vector<8x64xf32>
    %285 = arith.maximumf %283, %284 : vector<8x64xf32>
    %c0_112 = arith.constant 0 : index
    %c0_113 = arith.constant 0 : index
    %286 = vector.load %arg10[%c0_112, %c0_113] : memref<64x64xf32, #tpu.memory_space<vmem>>, vector<64x64xf32>
    %cst_114 = arith.constant dense<0.000000e+00> : vector<8x64xf32>
    %287 = tpu.matmul %285, %286, %cst_114 {dimension_numbers = #tpu.dot_dimension_numbers<[1], [0], [0], [1], [0, 0, 1, 1], [], []>} : vector<8x64xf32>, vector<64x64xf32>, vector<8x64xf32> -> vector<8x64xf32>
    %c0_115 = arith.constant 0 : index
    %c0_116 = arith.constant 0 : index
    %288 = vector.load %arg11[%c0_115, %c0_116] : memref<1x64xf32, #tpu.memory_space<vmem>>, vector<1x64xf32>
    %289 = vector.broadcast %288 : vector<1x64xf32> to vector<8x64xf32>
    %290 = arith.addf %287, %289 : vector<8x64xf32>
    %291 = arith.addf %278, %290 : vector<8x64xf32>
    %c0_117 = arith.constant 0 : index
    %c0_118 = arith.constant 0 : index
    %292 = vector.load %arg12[%c0_117, %c0_118] : memref<1x64xf32, #tpu.memory_space<vmem>>, vector<1x64xf32>
    %c0_119 = arith.constant 0 : index
    %c0_120 = arith.constant 0 : index
    %293 = vector.load %arg13[%c0_119, %c0_120] : memref<1x64xf32, #tpu.memory_space<vmem>>, vector<1x64xf32>
    %cst_121 = arith.constant dense<0.000000e+00> : vector<8xf32>
    %294 = vector.multi_reduction <add>, %291, %cst_121 [1] : vector<8x64xf32> to vector<8xf32>
    %295 = vector.shape_cast %294 : vector<8xf32> to vector<8x1xf32>
    %cst_122 = arith.constant 6.400000e+01 : f32
    %296 = vector.broadcast %cst_122 : f32 to vector<8x1xf32>
    %297 = arith.divf %295, %296 : vector<8x1xf32>
    %298 = vector.broadcast %297 : vector<8x1xf32> to vector<8x64xf32>
    %299 = arith.subf %291, %298 : vector<8x64xf32>
    %300 = arith.mulf %299, %299 : vector<8x64xf32>
    %cst_123 = arith.constant dense<0.000000e+00> : vector<8xf32>
    %301 = vector.multi_reduction <add>, %300, %cst_123 [1] : vector<8x64xf32> to vector<8xf32>
    %302 = vector.shape_cast %301 : vector<8xf32> to vector<8x1xf32>
    %cst_124 = arith.constant 6.400000e+01 : f32
    %303 = vector.broadcast %cst_124 : f32 to vector<8x1xf32>
    %304 = arith.divf %302, %303 : vector<8x1xf32>
    %305 = vector.broadcast %297 : vector<8x1xf32> to vector<8x64xf32>
    %306 = arith.subf %291, %305 : vector<8x64xf32>
    %cst_125 = arith.constant 9.99999974E-6 : f32
    %307 = vector.broadcast %cst_125 : f32 to vector<8x1xf32>
    %308 = arith.addf %304, %307 : vector<8x1xf32>
    %309 = math.rsqrt %308 : vector<8x1xf32>
    %310 = vector.broadcast %309 : vector<8x1xf32> to vector<8x64xf32>
    %311 = arith.mulf %306, %310 : vector<8x64xf32>
    %312 = vector.broadcast %292 : vector<1x64xf32> to vector<8x64xf32>
    %313 = arith.mulf %311, %312 : vector<8x64xf32>
    %314 = vector.broadcast %293 : vector<1x64xf32> to vector<8x64xf32>
    %315 = arith.addf %313, %314 : vector<8x64xf32>
    %c8 = arith.constant 8 : index
    %c0_126 = arith.constant 0 : index
    %316 = vector.load %arg14[%c8, %c0_126] : memref<16x64xf32, #tpu.memory_space<vmem>>, vector<8x64xf32>
    tpu.vector_store %arg14[%c8, %c0_126], %315 {strides = array<i32>} : memref<16x64xf32, #tpu.memory_space<vmem>>, vector<8x64xf32>,
    return
  }
}

module attributes {stable_mosaic.version = 11 : i64} {
  func.func @_proj_kernel(%arg0: memref<16x64xf32, #tpu.memory_space<vmem>>, %arg1: memref<64x24xf32, #tpu.memory_space<vmem>>, %arg2: memref<1x24xf32, #tpu.memory_space<vmem>>, %arg3: memref<16x24xf32, #tpu.memory_space<vmem>>) attributes {dimension_semantics = [], scalar_prefetch = 0 : i64, scratch_operands = 0 : i64, tpu.core_type = #tpu.core_type<tc>} {
    %c0 = arith.constant 0 : index
    %c0_0 = arith.constant 0 : index
    %0 = vector.load %arg0[%c0, %c0_0] : memref<16x64xf32, #tpu.memory_space<vmem>>, vector<16x64xf32>
    %c0_1 = arith.constant 0 : index
    %c0_2 = arith.constant 0 : index
    %1 = vector.load %arg1[%c0_1, %c0_2] : memref<64x24xf32, #tpu.memory_space<vmem>>, vector<64x24xf32>
    %cst = arith.constant dense<0.000000e+00> : vector<16x24xf32>
    %2 = tpu.matmul %0, %1, %cst {dimension_numbers = #tpu.dot_dimension_numbers<[1], [0], [0], [1], [0, 0, 1, 1], [], []>} : vector<16x64xf32>, vector<64x24xf32>, vector<16x24xf32> -> vector<16x24xf32>
    %c0_3 = arith.constant 0 : index
    %c0_4 = arith.constant 0 : index
    %3 = vector.load %arg2[%c0_3, %c0_4] : memref<1x24xf32, #tpu.memory_space<vmem>>, vector<1x24xf32>
    %4 = vector.broadcast %3 : vector<1x24xf32> to vector<16x24xf32>
    %5 = arith.addf %2, %4 : vector<16x24xf32>
    %c0_5 = arith.constant 0 : index
    %c0_6 = arith.constant 0 : index
    %6 = vector.load %arg3[%c0_5, %c0_6] : memref<16x24xf32, #tpu.memory_space<vmem>>, vector<16x24xf32>
    tpu.vector_store %arg3[%c0_5, %c0_6], %5 {strides = array<i32>} : memref<16x24xf32, #tpu.memory_space<vmem>>, vector<16x24xf32>,
    return
  }
}

</mosaic_0001>

<llo_original>
// kernel: forward.5
$region0: #{forward.5}
  #allocation0 [shape = 'u32[]', space=smem, size = 0x4, offset = 0x4, fixed_abs, tag = 'smem constant byte address 0x4 - core index']
  #allocation1 [shape = 'u32[144,128]{1,0:T(1,128)}', space=vmem, size = 0x12000, scoped, tag = 'internal scratch']
  %s0 = inlined_call_operand.vmem [shape: f32[16,16], index: 0, kind: input, shape index: {}]
  %s1 = inlined_call_operand.hbm [shape: f32[16,32], index: 1, kind: input, shape index: {}]
  %s2 = inlined_call_operand.vmem [shape: f32[1,32], index: 2, kind: input, shape index: {}]
  %s3 = inlined_call_operand.vmem [shape: f32[32,192], index: 3, kind: input, shape index: {}]
  %s4 = inlined_call_operand.vmem [shape: f32[1,192], index: 4, kind: input, shape index: {}]
  %s5 = inlined_call_operand.vmem [shape: f32[16,192], index: 5, kind: output, shape index: {}]
  %s6 = sld [smem:[#allocation0]]
  $region34: #{forward.5} parent=0
    _
  %s8 = ssub.s32 1, %s6
  %s9 = scalar_select 0, %s8, %s6
  $region1: #{forward.5} parent=0
    #allocation2 [shape = 'u8[8192]{0}', space=vmem, size = 0x2000, scoped, tag = 'input window, operand 1, single buffered']
    #allocation3 [shape = 's32[1]{0}', space=sflag, size = 0x4, scoped, tag = 'scoped memory for forward.5']
    %10 = vsyncpa [#allocation3], 0
    // Predicated region
    $region2: #{forward.5} parent=1 // pred_check
      _
    $region3: #{forward.5} parent=1 // pred_check_branch
      %12 = sbr.rel (0) target = $region5
    $region4: #{forward.5} parent=1 // pred_region
      _
    $region5: #{forward.5} parent=1 // pred_fallthru
      _
    // Predicated region
    $region6: #{forward.5} parent=1 // pred_check
      _
    $region7: #{forward.5} parent=1 // pred_check_branch
      %14 = sbr.rel (0) target = $region9
    $region8: #{forward.5} parent=1 // pred_region
      %s16 = ssub.s32 256, 256
      %17 = vsyncadd [#allocation3], %s16
      %s18 = sshll.u32 [#allocation2], 4
      %s19 = int_to_ptr.vmem [resolvable:$true] %s18
      %24 = dma.hbm_to_vmem [thread:$0]  %s1, 256, %s19, [#allocation3], 128, 128, 8
    $region9: #{forward.5} parent=1 // pred_fallthru
      _
    // Predicated region
    $region10: #{forward.5} parent=1 // pred_check
      _
    $region11: #{forward.5} parent=1 // pred_check_branch
      %26 = sbr.rel (0) target = $region13
    $region12: #{forward.5} parent=1 // pred_region
      _
    $region13: #{forward.5} parent=1 // pred_fallthru
      _
    // Predicated region
    $region14: #{forward.5} parent=1 // pred_check
      _
    $region15: #{forward.5} parent=1 // pred_check_branch
      %28 = sbr.rel (0) target = $region17
    $region16: #{forward.5} parent=1 // pred_region
      _
    $region17: #{forward.5} parent=1 // pred_fallthru
      _
    // Predicated region
    $region18: #{forward.5} parent=1 // pred_check
      _
    $region19: #{forward.5} parent=1 // pred_check_branch
      %30 = sbr.rel (0) target = $region21
    $region20: #{forward.5} parent=1 // pred_region
      _
    $region21: #{forward.5} parent=1 // pred_fallthru
      _
    // Predicated region
    $region22: #{forward.5} parent=1 // pred_check
      _
    $region23: #{forward.5} parent=1 // pred_check_branch
      %32 = sbr.rel (0) target = $region25
    $region24: #{forward.5} parent=1 // pred_region
      %33 = dma.done [#allocation3], 256
    $region25: #{forward.5} parent=1 // pred_fallthru
      _
    %v34 = vld [vmem:[%s0] sm:$0xff]
    %v35 = vld [vmem:[%s0 + $0x8] sm:$0xff]
    %v36 = vld [vmem:[#allocation2] sm:$0xff]
    %v37 = vld [vmem:[#allocation2 + $0x8] sm:$0xff]
    %v38 = vld [vmem:[%s2] sm:$0x1]
    %v40 = vlaneseq
    %v41 = vshrl.u32 %v40, 7
    %v42 = vsub.s32 0, %v41
    %v43 = vrot.slane %v38, %v42
    %vm45 = vcmask 130048
    %v47 = vsel %vm45, %v34, 0
    %v50 = vsel %vm45, %v35, 0
    %52 = vmatprep.subr.mxu0 0.0
    %53 = vmatpush1.msra.mxu0 %v36
    %54 = vmatprep.subr.mxu0 0.0
    %55 = vmatpush1.msra.mxu0 %v37
    %56 = vmatprep.subr.mxu0 0.0
    %57 = vmatpush1.msra.mxu0 0.0
    %58 = vmatprep.subr.mxu0 0.0
    %59 = vmatpush1.msra.mxu0 0.0
    %60 = vmatprep.subr.mxu0 0.0
    %61 = vmatpush1.msra.mxu0 0.0
    %62 = vmatprep.subr.mxu0 0.0
    %63 = vmatpush1.msra.mxu0 0.0
    %64 = vmatprep.subr.mxu0 0.0
    %65 = vmatpush1.msra.mxu0 0.0
    %66 = vmatprep.subr.mxu0 0.0
    %67 = vmatpush1.msra.mxu0 0.0
    %68 = vmatprep.subr.mxu0 0.0
    %69 = vmatpush1.msra.mxu0 0.0
    %70 = vmatprep.subr.mxu0 0.0
    %71 = vmatpush1.msra.mxu0 0.0
    %72 = vmatprep.subr.mxu0 0.0
    %73 = vmatpush1.msra.mxu0 0.0
    %74 = vmatprep.subr.mxu0 0.0
    %75 = vmatpush1.msra.mxu0 0.0
    %76 = vmatprep.subr.mxu0 0.0
    %77 = vmatpush1.msra.mxu0 0.0
    %78 = vmatprep.subr.mxu0 0.0
    %79 = vmatpush1.msra.mxu0 0.0
    %80 = vmatprep.subr.mxu0 0.0
    %81 = vmatpush1.msra.mxu0 0.0
    %82 = vmatprep.subr.mxu0 0.0
    %83 = vmatpush1.msra.mxu0 0.0
    %84 = vmatprep.subr.mxu0 0.0
    %85 = vmatpush1.msra.mxu0 0.0
    %86 = vmatprep.subr.mxu0 0.0
    %87 = vmatpush1.msra.mxu0 0.0
    %88 = vmatprep.subr.mxu0 0.0
    %89 = vmatpush1.msra.mxu0 0.0
    %90 = vmatprep.subr.mxu0 0.0
    %91 = vmatpush1.msra.mxu0 0.0
    %92 = vmatprep.subr.mxu0 0.0
    %93 = vmatpush1.msra.mxu0 0.0
    %94 = vmatprep.subr.mxu0 0.0
    %95 = vmatpush1.msra.mxu0 0.0
    %96 = vmatprep.subr.mxu0 0.0
    %97 = vmatpush1.msra.mxu0 0.0
    %98 = vmatprep.subr.mxu0 0.0
    %99 = vmatpush1.msra.mxu0 0.0
    %100 = vmatprep.subr.mxu0 0.0
    %101 = vmatpush1.msra.mxu0 0.0
    %102 = vmatprep.subr.mxu0 0.0
    %103 = vmatpush1.msra.mxu0 0.0
    %104 = vmatprep.subr.mxu0 0.0
    %105 = vmatpush1.msra.mxu0 0.0
    %106 = vmatprep.subr.mxu0 0.0
    %107 = vmatpush1.msra.mxu0 0.0
    %108 = vmatprep.subr.mxu0 0.0
    %109 = vmatpush1.msra.mxu0 0.0
    %110 = vmatprep.subr.mxu0 0.0
    %111 = vmatpush1.msra.mxu0 0.0
    %112 = vmatprep.subr.mxu0 0.0
    %113 = vmatpush1.msra.mxu0 0.0
    %114 = vmatprep.subr.mxu0 0.0
    %115 = vmatpush1.msra.mxu0 0.0
    %116 = vmatprep.mubr.f32.mxu0 0.0
    %117 = vmatmul.mubr.f32.gmra.mrb[0].mxu0 %v47
    %v118 = vpop.f32.mrb[0].mxu0
    %v119 = vadd.f32 %v43, %v118
    %v120 = vpop.f32.mrb[0].mxu0
    %121 = vmatprep.mubr.f32.mxu0 0.0
    %122 = vmatmul.mubr.f32.gmra.mrb[0].mxu0 %v50
    %v123 = vpop.f32.mrb[0].mxu0
    %v124 = vadd.f32 %v43, %v123
    %v125 = vpop.f32.mrb[0].mxu0
    %126 = vdwg.mxu0
    %v127 = vld [vmem:[%s3] sm:$0xff]
    %v128 = vld [vmem:[%s3 + $0x8] sm:$0xff]
    %v129 = vld [vmem:[%s3 + $0x10] sm:$0xff]
    %v130 = vld [vmem:[%s3 + $0x18] sm:$0xff]
    %v131 = vld [vmem:[%s3 + $0x20] sm:$0xff]
    %v132 = vld [vmem:[%s3 + $0x28] sm:$0xff]
    %v133 = vld [vmem:[%s3 + $0x30] sm:$0xff]
    %v134 = vld [vmem:[%s3 + $0x38] sm:$0xff]
    %v135 = vld [vmem:[%s4] sm:$0x3]
    %v137 = vlaneseq
    %v138 = vshrl.u32 %v137, 7
    %v139 = vsub.s32 0, %v138
    %v140 = vrot.slane %v135, %v139
    %v141 = vlaneseq
    %v142 = vshrl.u32 %v141, 7
    %v143 = vsub.s32 1, %v142
    %v144 = vrot.slane %v135, %v143
    %vm147 = vcmask 261120
    %v149 = vsel %vm147, %v119, 0
    %v152 = vsel %vm147, %v124, 0
    %154 = vmatprep.subr.mxu0 %v128
    %155 = vmatpush1.msra.mxu0 %v127
    %156 = vmatprep.subr.mxu0 %v130
    %157 = vmatpush1.msra.mxu0 %v129
    %158 = vmatprep.subr.mxu0 %v132
    %159 = vmatpush1.msra.mxu0 %v131
    %160 = vmatprep.subr.mxu0 %v134
    %161 = vmatpush1.msra.mxu0 %v133
    %162 = vmatprep.subr.mxu0 0.0
    %163 = vmatpush1.msra.mxu0 0.0
    %164 = vmatprep.subr.mxu0 0.0
    %165 = vmatpush1.msra.mxu0 0.0
    %166 = vmatprep.subr.mxu0 0.0
    %167 = vmatpush1.msra.mxu0 0.0
    %168 = vmatprep.subr.mxu0 0.0
    %169 = vmatpush1.msra.mxu0 0.0
    %170 = vmatprep.subr.mxu0 0.0
    %171 = vmatpush1.msra.mxu0 0.0
    %172 = vmatprep.subr.mxu0 0.0
    %173 = vmatpush1.msra.mxu0 0.0
    %174 = vmatprep.subr.mxu0 0.0
    %175 = vmatpush1.msra.mxu0 0.0
    %176 = vmatprep.subr.mxu0 0.0
    %177 = vmatpush1.msra.mxu0 0.0
    %178 = vmatprep.subr.mxu0 0.0
    %179 = vmatpush1.msra.mxu0 0.0
    %180 = vmatprep.subr.mxu0 0.0
    %181 = vmatpush1.msra.mxu0 0.0
    %182 = vmatprep.subr.mxu0 0.0
    %183 = vmatpush1.msra.mxu0 0.0
    %184 = vmatprep.subr.mxu0 0.0
    %185 = vmatpush1.msra.mxu0 0.0
    %186 = vmatprep.subr.mxu0 0.0
    %187 = vmatpush1.msra.mxu0 0.0
    %188 = vmatprep.subr.mxu0 0.0
    %189 = vmatpush1.msra.mxu0 0.0
    %190 = vmatprep.subr.mxu0 0.0
    %191 = vmatpush1.msra.mxu0 0.0
    %192 = vmatprep.subr.mxu0 0.0
    %193 = vmatpush1.msra.mxu0 0.0
    %194 = vmatprep.subr.mxu0 0.0
    %195 = vmatpush1.msra.mxu0 0.0
    %196 = vmatprep.subr.mxu0 0.0
    %197 = vmatpush1.msra.mxu0 0.0
    %198 = vmatprep.subr.mxu0 0.0
    %199 = vmatpush1.msra.mxu0 0.0
    %200 = vmatprep.subr.mxu0 0.0
    %201 = vmatpush1.msra.mxu0 0.0
    %202 = vmatprep.subr.mxu0 0.0
    %203 = vmatpush1.msra.mxu0 0.0
    %204 = vmatprep.subr.mxu0 0.0
    %205 = vmatpush1.msra.mxu0 0.0
    %206 = vmatprep.subr.mxu0 0.0
    %207 = vmatpush1.msra.mxu0 0.0
    %208 = vmatprep.subr.mxu0 0.0
    %209 = vmatpush1.msra.mxu0 0.0
    %210 = vmatprep.subr.mxu0 0.0
    %211 = vmatpush1.msra.mxu0 0.0
    %212 = vmatprep.subr.mxu0 0.0
    %213 = vmatpush1.msra.mxu0 0.0
    %214 = vmatprep.subr.mxu0 0.0
    %215 = vmatpush1.msra.mxu0 0.0
    %216 = vmatprep.subr.mxu0 0.0
    %217 = vmatpush1.msra.mxu0 0.0
    %218 = vmatprep.mubr.f32.mxu0 0.0
    %219 = vmatmul.mubr.f32.gmra.mrb[0].mxu0 %v149
    %v220 = vpop.f32.mrb[0].mxu0
    %v221 = vadd.f32 %v140, %v220
    %v222 = vpop.f32.mrb[0].mxu0
    %v223 = vadd.f32 %v144, %v222
    %224 = vmatprep.mubr.f32.mxu0 0.0
    %225 = vmatmul.mubr.f32.gmra.mrb[0].mxu0 %v152
    %v226 = vpop.f32.mrb[0].mxu0
    %v227 = vadd.f32 %v140, %v226
    %v228 = vpop.f32.mrb[0].mxu0
    %v229 = vadd.f32 %v144, %v228
    %230 = vdwg.mxu0
    %231 = vst [vmem:[%s5] sm:$0xff] %v221
    %vm232 = vcmask 523264
    %233 = vst.msk [vmem:[%s5 + $0x8] sm:$0xff] %vm232, %v223
    %234 = vst [vmem:[%s5 + $0x10] sm:$0xff] %v227
    %235 = vst.msk [vmem:[%s5 + $0x18] sm:$0xff] %vm232, %v229
    // Predicated region
    $region26: #{forward.5} parent=1 // pred_check
      _
    $region27: #{forward.5} parent=1 // pred_check_branch
      %237 = sbr.rel (0) target = $region29
    $region28: #{forward.5} parent=1 // pred_region
      _
    $region29: #{forward.5} parent=1 // pred_fallthru
      _
    // Predicated region
    $region30: #{forward.5} parent=1 // pred_check
      _
    $region31: #{forward.5} parent=1 // pred_check_branch
      %239 = sbr.rel (0) target = $region33
    $region32: #{forward.5} parent=1 // pred_region
      _
    $region33: #{forward.5} parent=1 // pred_fallthru
      _
    %240 = vsyncpa [#allocation3], 1

// kernel: forward.9
$region0: #{forward.9}
  #allocation0 [shape = 'u32[]', space=smem, size = 0x4, offset = 0x4, fixed_abs, tag = 'smem constant byte address 0x4 - core index']
  #allocation1 [shape = 'u32[144,128]{1,0:T(1,128)}', space=vmem, size = 0x12000, scoped, tag = 'internal scratch']
  %s0 = inlined_call_operand.vmem [shape: f32[16,64], index: 0, kind: input, shape index: {}]
  %s1 = inlined_call_operand.vmem [shape: f32[64,24], index: 1, kind: input, shape index: {}]
  %s2 = inlined_call_operand.vmem [shape: f32[1,24], index: 2, kind: input, shape index: {}]
  %s3 = inlined_call_operand.vmem [shape: f32[16,24], index: 3, kind: output, shape index: {}]
  %s4 = sld [smem:[#allocation0]]
  $region22: #{forward.9} parent=0
    _
  %s6 = ssub.s32 1, %s4
  %s7 = scalar_select 0, %s6, %s4
  // Predicated region
  $region2: #{forward.9} parent=0 // pred_check
    _
  $region3: #{forward.9} parent=0 // pred_check_branch
    %9 = sbr.rel (0) target = $region5
  $region4: #{forward.9} parent=0 // pred_region
    _
  $region5: #{forward.9} parent=0 // pred_fallthru
    _
  // Predicated region
  $region6: #{forward.9} parent=0 // pred_check
    _
  $region7: #{forward.9} parent=0 // pred_check_branch
    %11 = sbr.rel (0) target = $region9
  $region8: #{forward.9} parent=0 // pred_region
    _
  $region9: #{forward.9} parent=0 // pred_fallthru
    _
  // Predicated region
  $region10: #{forward.9} parent=0 // pred_check
    _
  $region11: #{forward.9} parent=0 // pred_check_branch
    %13 = sbr.rel (0) target = $region13
  $region12: #{forward.9} parent=0 // pred_region
    _
  $region13: #{forward.9} parent=0 // pred_fallthru
    _
  %v14 = vld [vmem:[%s0] sm:$0xff]
  %v15 = vld [vmem:[%s0 + $0x8] sm:$0xff]
  %v16 = vld [vmem:[%s1] sm:$0xff]
  %v17 = vld [vmem:[%s1 + $0x8] sm:$0xff]
  %v18 = vld [vmem:[%s1 + $0x10] sm:$0xff]
  %v19 = vld [vmem:[%s1 + $0x18] sm:$0xff]
  %v20 = vld [vmem:[%s1 + $0x20] sm:$0xff]
  %v21 = vld [vmem:[%s1 + $0x28] sm:$0xff]
  %v22 = vld [vmem:[%s1 + $0x30] sm:$0xff]
  %v23 = vld [vmem:[%s1 + $0x38] sm:$0xff]
  %v24 = vld [vmem:[%s2] sm:$0x1]
  %v26 = vlaneseq
  %v27 = vshrl.u32 %v26, 7
  %v28 = vsub.s32 0, %v27
  %v29 = vrot.slane %v24, %v28
  %vm31 = vcmask 523264
  %v33 = vsel %vm31, %v14, 0
  %v36 = vsel %vm31, %v15, 0
  %38 = vmatprep.subr.mxu0 0.0
  %39 = vmatpush1.msra.mxu0 %v16
  %40 = vmatprep.subr.mxu0 0.0
  %41 = vmatpush1.msra.mxu0 %v17
  %42 = vmatprep.subr.mxu0 0.0
  %43 = vmatpush1.msra.mxu0 %v18
  %44 = vmatprep.subr.mxu0 0.0
  %45 = vmatpush1.msra.mxu0 %v19
  %46 = vmatprep.subr.mxu0 0.0
  %47 = vmatpush1.msra.mxu0 %v20
  %48 = vmatprep.subr.mxu0 0.0
  %49 = vmatpush1.msra.mxu0 %v21
  %50 = vmatprep.subr.mxu0 0.0
  %51 = vmatpush1.msra.mxu0 %v22
  %52 = vmatprep.subr.mxu0 0.0
  %53 = vmatpush1.msra.mxu0 %v23
  %54 = vmatprep.subr.mxu0 0.0
  %55 = vmatpush1.msra.mxu0 0.0
  %56 = vmatprep.subr.mxu0 0.0
  %57 = vmatpush1.msra.mxu0 0.0
  %58 = vmatprep.subr.mxu0 0.0
  %59 = vmatpush1.msra.mxu0 0.0
  %60 = vmatprep.subr.mxu0 0.0
  %61 = vmatpush1.msra.mxu0 0.0
  %62 = vmatprep.subr.mxu0 0.0
  %63 = vmatpush1.msra.mxu0 0.0
  %64 = vmatprep.subr.mxu0 0.0
  %65 = vmatpush1.msra.mxu0 0.0
  %66 = vmatprep.subr.mxu0 0.0
  %67 = vmatpush1.msra.mxu0 0.0
  %68 = vmatprep.subr.mxu0 0.0
  %69 = vmatpush1.msra.mxu0 0.0
  %70 = vmatprep.subr.mxu0 0.0
  %71 = vmatpush1.msra.mxu0 0.0
  %72 = vmatprep.subr.mxu0 0.0
  %73 = vmatpush1.msra.mxu0 0.0
  %74 = vmatprep.subr.mxu0 0.0
  %75 = vmatpush1.msra.mxu0 0.0
  %76 = vmatprep.subr.mxu0 0.0
  %77 = vmatpush1.msra.mxu0 0.0
  %78 = vmatprep.subr.mxu0 0.0
  %79 = vmatpush1.msra.mxu0 0.0
  %80 = vmatprep.subr.mxu0 0.0
  %81 = vmatpush1.msra.mxu0 0.0
  %82 = vmatprep.subr.mxu0 0.0
  %83 = vmatpush1.msra.mxu0 0.0
  %84 = vmatprep.subr.mxu0 0.0
  %85 = vmatpush1.msra.mxu0 0.0
  %86 = vmatprep.subr.mxu0 0.0
  %87 = vmatpush1.msra.mxu0 0.0
  %88 = vmatprep.subr.mxu0 0.0
  %89 = vmatpush1.msra.mxu0 0.0
  %90 = vmatprep.subr.mxu0 0.0
  %91 = vmatpush1.msra.mxu0 0.0
  %92 = vmatprep.subr.mxu0 0.0
  %93 = vmatpush1.msra.mxu0 0.0
  %94 = vmatprep.subr.mxu0 0.0
  %95 = vmatpush1.msra.mxu0 0.0
  %96 = vmatprep.subr.mxu0 0.0
  %97 = vmatpush1.msra.mxu0 0.0
  %98 = vmatprep.subr.mxu0 0.0
  %99 = vmatpush1.msra.mxu0 0.0
  %100 = vmatprep.subr.mxu0 0.0
  %101 = vmatpush1.msra.mxu0 0.0
  %102 = vmatprep.mubr.f32.mxu0 0.0
  %103 = vmatmul.mubr.f32.gmra.mrb[0].mxu0 %v33
  %v104 = vpop.f32.mrb[0].mxu0
  %v105 = vadd.f32 %v29, %v104
  %v106 = vpop.f32.mrb[0].mxu0
  %107 = vmatprep.mubr.f32.mxu0 0.0
  %108 = vmatmul.mubr.f32.gmra.mrb[0].mxu0 %v36
  %v109 = vpop.f32.mrb[0].mxu0
  %v110 = vadd.f32 %v29, %v109
  %v111 = vpop.f32.mrb[0].mxu0
  %112 = vdwg.mxu0
  %vm113 = vcmask 195584
  %114 = vst.msk [vmem:[%s3] sm:$0xff] %vm113, %v105
  %115 = vst.msk [vmem:[%s3 + $0x8] sm:$0xff] %vm113, %v110
  // Predicated region
  $region14: #{forward.9} parent=0 // pred_check
    _
  $region15: #{forward.9} parent=0 // pred_check_branch
    %117 = sbr.rel (0) target = $region17
  $region16: #{forward.9} parent=0 // pred_region
    _
  $region17: #{forward.9} parent=0 // pred_fallthru
    _
  // Predicated region
  $region18: #{forward.9} parent=0 // pred_check
    _
  $region19: #{forward.9} parent=0 // pred_check_branch
    %119 = sbr.rel (0) target = $region21
  $region20: #{forward.9} parent=0 // pred_region
    _
  $region21: #{forward.9} parent=0 // pred_fallthru
    _

// kernel: forward.6
$region0: #{forward.6}
  #allocation0 [shape = 'u32[]', space=smem, size = 0x4, offset = 0x4, fixed_abs, tag = 'smem constant byte address 0x4 - core index']
  #allocation1 [shape = 'u32[144,128]{1,0:T(1,128)}', space=vmem, size = 0x12000, scoped, tag = 'internal scratch']
  %s0 = inlined_call_operand.vmem [shape: f32[8,2,192], index: 0, kind: input, shape index: {}]
  %s1 = inlined_call_operand.vmem [shape: f32[32,96], index: 1, kind: input, shape index: {}]
  %s2 = inlined_call_operand.vmem [shape: f32[32,96], index: 2, kind: input, shape index: {}]
  %s3 = inlined_call_operand.vmem [shape: f32[1,32], index: 3, kind: input, shape index: {}]
  %s4 = inlined_call_operand.vmem [shape: f32[1,32], index: 4, kind: input, shape index: {}]
  %s5 = inlined_call_operand.vmem [shape: f32[2,8,2,32], index: 5, kind: output, shape index: {}]
  %s6 = sld [smem:[#allocation0]]
  $region30: #{forward.6} parent=0
    _
  %s8 = ssub.s32 1, %s6
  %s9 = scalar_select 0, %s8, %s6
  // Predicated region
  $region2: #{forward.6} parent=0 // pred_check
    _
  $region3: #{forward.6} parent=0 // pred_check_branch
    %11 = sbr.rel (0) target = $region5
  $region4: #{forward.6} parent=0 // pred_region
    _
  $region5: #{forward.6} parent=0 // pred_fallthru
    _
  // Predicated region
  $region6: #{forward.6} parent=0 // pred_check
    _
  $region7: #{forward.6} parent=0 // pred_check_branch
    %13 = sbr.rel (0) target = $region9
  $region8: #{forward.6} parent=0 // pred_region
    _
  $region9: #{forward.6} parent=0 // pred_fallthru
    _
  // Predicated region
  $region10: #{forward.6} parent=0 // pred_check
    _
  $region11: #{forward.6} parent=0 // pred_check_branch
    %15 = sbr.rel (0) target = $region13
  $region12: #{forward.6} parent=0 // pred_region
    _
  $region13: #{forward.6} parent=0 // pred_fallthru
    _
  // Predicated region
  $region14: #{forward.6} parent=0 // pred_check
    _
  $region15: #{forward.6} parent=0 // pred_check_branch
    %17 = sbr.rel (0) target = $region17
  $region16: #{forward.6} parent=0 // pred_region
    _
  $region17: #{forward.6} parent=0 // pred_fallthru
    _
  // Predicated region
  $region18: #{forward.6} parent=0 // pred_check
    _
  $region19: #{forward.6} parent=0 // pred_check_branch
    %19 = sbr.rel (0) target = $region21
  $region20: #{forward.6} parent=0 // pred_region
    _
  $region21: #{forward.6} parent=0 // pred_fallthru
    _
  %v20 = vld [vmem:[%s1] sm:$0xff]
  %v21 = vld [vmem:[%s1 + $0x8] sm:$0xff]
  %v22 = vld [vmem:[%s1 + $0x10] sm:$0xff]
  %v23 = vld [vmem:[%s1 + $0x18] sm:$0xff]
  %v24 = vld [vmem:[%s2] sm:$0xff]
  %v25 = vld [vmem:[%s2 + $0x8] sm:$0xff]
  %v26 = vld [vmem:[%s2 + $0x10] sm:$0xff]
  %v27 = vld [vmem:[%s2 + $0x18] sm:$0xff]
  %v28 = vld [vmem:[%s3] sm:$0x1]
  %v29 = vld [vmem:[%s4] sm:$0x1]
  %v30 = vld [vmem:[%s0] sm:$0xf]
  %s31 = scalar_lea.vmem %s0, 28
  %v32 = vld [vmem:[%s31] sm:$0xf]
  %vm33 = vcmask 261120
  %v35 = vsel %vm33, 0.0, 0
  %37 = vmatprep.subr.mxu0 0.0
  %38 = vmatpush1.msra.mxu0 %v20
  %39 = vmatprep.subr.mxu0 0.0
  %40 = vmatpush1.msra.mxu0 %v21
  %41 = vmatprep.subr.mxu0 0.0
  %42 = vmatpush1.msra.mxu0 %v22
  %43 = vmatprep.subr.mxu0 0.0
  %44 = vmatpush1.msra.mxu0 %v23
  %45 = vmatprep.subr.mxu0 0.0
  %46 = vmatpush1.msra.mxu0 0.0
  %47 = vmatprep.subr.mxu0 0.0
  %48 = vmatpush1.msra.mxu0 0.0
  %49 = vmatprep.subr.mxu0 0.0
  %50 = vmatpush1.msra.mxu0 0.0
  %51 = vmatprep.subr.mxu0 0.0
  %52 = vmatpush1.msra.mxu0 0.0
  %53 = vmatprep.subr.mxu0 0.0
  %54 = vmatpush1.msra.mxu0 0.0
  %55 = vmatprep.subr.mxu0 0.0
  %56 = vmatpush1.msra.mxu0 0.0
  %57 = vmatprep.subr.mxu0 0.0
  %58 = vmatpush1.msra.mxu0 0.0
  %59 = vmatprep.subr.mxu0 0.0
  %60 = vmatpush1.msra.mxu0 0.0
  %61 = vmatprep.subr.mxu0 0.0
  %62 = vmatpush1.msra.mxu0 0.0
  %63 = vmatprep.subr.mxu0 0.0
  %64 = vmatpush1.msra.mxu0 0.0
  %65 = vmatprep.subr.mxu0 0.0
  %66 = vmatpush1.msra.mxu0 0.0
  %67 = vmatprep.subr.mxu0 0.0
  %68 = vmatpush1.msra.mxu0 0.0
  %69 = vmatprep.subr.mxu0 0.0
  %70 = vmatpush1.msra.mxu0 0.0
  %71 = vmatprep.subr.mxu0 0.0
  %72 = vmatpush1.msra.mxu0 0.0
  %73 = vmatprep.subr.mxu0 0.0
  %74 = vmatpush1.msra.mxu0 0.0
  %75 = vmatprep.subr.mxu0 0.0
  %76 = vmatpush1.msra.mxu0 0.0
  %77 = vmatprep.subr.mxu0 0.0
  %78 = vmatpush1.msra.mxu0 0.0
  %79 = vmatprep.subr.mxu0 0.0
  %80 = vmatpush1.msra.mxu0 0.0
  %81 = vmatprep.subr.mxu0 0.0
  %82 = vmatpush1.msra.mxu0 0.0
  %83 = vmatprep.subr.mxu0 0.0
  %84 = vmatpush1.msra.mxu0 0.0
  %85 = vmatprep.subr.mxu0 0.0
  %86 = vmatpush1.msra.mxu0 0.0
  %87 = vmatprep.subr.mxu0 0.0
  %88 = vmatpush1.msra.mxu0 0.0
  %89 = vmatprep.subr.mxu0 0.0
  %90 = vmatpush1.msra.mxu0 0.0
  %91 = vmatprep.subr.mxu0 0.0
  %92 = vmatpush1.msra.mxu0 0.0
  %93 = vmatprep.subr.mxu0 0.0
  %94 = vmatpush1.msra.mxu0 0.0
  %95 = vmatprep.subr.mxu0 0.0
  %96 = vmatpush1.msra.mxu0 0.0
  %97 = vmatprep.subr.mxu0 0.0
  %98 = vmatpush1.msra.mxu0 0.0
  %99 = vmatprep.subr.mxu0 0.0
  %100 = vmatpush1.msra.mxu0 0.0
  %101 = vmatprep.mubr.f32.mxu0 0.0
  %102 = vmatmul.mubr.f32.gmra.mrb[0].mxu0 %v35
  %v103 = vpop.f32.mrb[0].mxu0
  %v104 = vadd.f32 0.0, %v103
  %v105 = vpop.f32.mrb[0].mxu0
  %106 = vdwg.mxu0
  %107 = vmatprep.subr.mxu0 0.0
  %108 = vmatpush1.msra.mxu0 %v24
  %109 = vmatprep.subr.mxu0 0.0
  %110 = vmatpush1.msra.mxu0 %v25
  %111 = vmatprep.subr.mxu0 0.0
  %112 = vmatpush1.msra.mxu0 %v26
  %113 = vmatprep.subr.mxu0 0.0
  %114 = vmatpush1.msra.mxu0 %v27
  %115 = vmatprep.subr.mxu0 0.0
  %116 = vmatpush1.msra.mxu0 0.0
  %117 = vmatprep.subr.mxu0 0.0
  %118 = vmatpush1.msra.mxu0 0.0
  %119 = vmatprep.subr.mxu0 0.0
  %120 = vmatpush1.msra.mxu0 0.0
  %121 = vmatprep.subr.mxu0 0.0
  %122 = vmatpush1.msra.mxu0 0.0
  %123 = vmatprep.subr.mxu0 0.0
  %124 = vmatpush1.msra.mxu0 0.0
  %125 = vmatprep.subr.mxu0 0.0
  %126 = vmatpush1.msra.mxu0 0.0
  %127 = vmatprep.subr.mxu0 0.0
  %128 = vmatpush1.msra.mxu0 0.0
  %129 = vmatprep.subr.mxu0 0.0
  %130 = vmatpush1.msra.mxu0 0.0
  %131 = vmatprep.subr.mxu0 0.0
  %132 = vmatpush1.msra.mxu0 0.0
  %133 = vmatprep.subr.mxu0 0.0
  %134 = vmatpush1.msra.mxu0 0.0
  %135 = vmatprep.subr.mxu0 0.0
  %136 = vmatpush1.msra.mxu0 0.0
  %137 = vmatprep.subr.mxu0 0.0
  %138 = vmatpush1.msra.mxu0 0.0
  %139 = vmatprep.subr.mxu0 0.0
  %140 = vmatpush1.msra.mxu0 0.0
  %141 = vmatprep.subr.mxu0 0.0
  %142 = vmatpush1.msra.mxu0 0.0
  %143 = vmatprep.subr.mxu0 0.0
  %144 = vmatpush1.msra.mxu0 0.0
  %145 = vmatprep.subr.mxu0 0.0
  %146 = vmatpush1.msra.mxu0 0.0
  %147 = vmatprep.subr.mxu0 0.0
  %148 = vmatpush1.msra.mxu0 0.0
  %149 = vmatprep.subr.mxu0 0.0
  %150 = vmatpush1.msra.mxu0 0.0
  %151 = vmatprep.subr.mxu0 0.0
  %152 = vmatpush1.msra.mxu0 0.0
  %153 = vmatprep.subr.mxu0 0.0
  %154 = vmatpush1.msra.mxu0 0.0
  %155 = vmatprep.subr.mxu0 0.0
  %156 = vmatpush1.msra.mxu0 0.0
  %157 = vmatprep.subr.mxu0 0.0
  %158 = vmatpush1.msra.mxu0 0.0
  %159 = vmatprep.subr.mxu0 0.0
  %160 = vmatpush1.msra.mxu0 0.0
  %161 = vmatprep.subr.mxu0 0.0
  %162 = vmatpush1.msra.mxu0 0.0
  %163 = vmatprep.subr.mxu0 0.0
  %164 = vmatpush1.msra.mxu0 0.0
  %165 = vmatprep.subr.mxu0 0.0
  %166 = vmatpush1.msra.mxu0 0.0
  %167 = vmatprep.subr.mxu0 0.0
  %168 = vmatpush1.msra.mxu0 0.0
  %169 = vmatprep.subr.mxu0 0.0
  %170 = vmatpush1.msra.mxu0 0.0
  %171 = vmatprep.mubr.f32.mxu0 0.0
  %172 = vmatmul.mubr.f32.gmra.mrb[0].mxu0 %v35
  %v173 = vpop.f32.mrb[0].mxu0
  %v174 = vadd.f32 0.0, %v173
  %v175 = vpop.f32.mrb[0].mxu0
  %176 = vdwg.mxu0
  %v177 = vadd.f32 %v30, %v104
  %v178 = vxor.u32 %v177, 2147483648
  %v179 = vmul.f32 %v178, 1.442695
  %v180 = vpow.pop %v179
  %v181 = vadd.f32 %v180, 1.0
  %v182 = vrcp.pop %v181
  %v183 = vmul.f32 1.0, %v182
  %v185 = vlaneseq
  %v186 = vshrl.u32 %v185, 7
  %v187 = vsub.s32 0, %v186
  %v188 = vrot.slane %v28, %v187
  %189 = vrot.lane.b32.xlu0 %v188, 64
  %v190 = vpop.permute.xlu0 %189
  %v192 = vadd.f32 %v104, %v190
  %v195 = vunpack.c.l.s4 1983009808
  %v196 = vunpack.c.0.s8 %v195
  %v197 = vlaneseq
  %v198 = vshrl.u32 %v197, 7
  %v199 = vsub.s32 %v196, %v198
  %v200 = vrot.slane %v192, %v199
  %201 = vrot.lane.b32.xlu0 %v200, 64
  %v202 = vpop.permute.xlu0 %201
  %v204 = vmul.f32 %v183, %v202
  %206 = vrot.lane.b32.xlu0 %v204, 64
  %v207 = vpop.permute.xlu0 %206
  %v209 = vadd.f32 %v30, %v207
  %v210 = vtanh.pop %v209
  %v211 = vsub.f32 1.0, %v183
  %213 = vrot.lane.b32.xlu0 %v210, 96
  %v214 = vpop.permute.xlu0 %213
  %v216 = vmul.f32 %v211, %v214
  %v217 = vmul.f32 %v183, 0.0
  %v218 = vadd.f32 %v216, %v217
  %v221 = vunpack.c.l.s4 1983009808
  %v222 = vunpack.c.0.s8 %v221
  %v223 = vlaneseq
  %v224 = vshrl.u32 %v223, 7
  %v225 = vsub.s32 %v222, %v224
  %v226 = vrot.slane %v174, %v225
  %227 = vrot.lane.b32.xlu0 %v226, 96
  %v228 = vpop.permute.xlu0 %227
  %v230 = vadd.f32 %v32, %v228
  %v231 = vxor.u32 %v230, 2147483648
  %v232 = vmul.f32 %v231, 1.442695
  %v233 = vpow.pop %v232
  %v234 = vadd.f32 %v233, 1.0
  %v235 = vrcp.pop %v234
  %v236 = vmul.f32 1.0, %v235
  %v238 = vrot.slane %v32, 2
  %v240 = vadd.f32 %v238, %v228
  %v241 = vxor.u32 %v240, 2147483648
  %v242 = vmul.f32 %v241, 1.442695
  %v243 = vpow.pop %v242
  %v244 = vadd.f32 %v243, 1.0
  %v245 = vrcp.pop %v244
  %v246 = vmul.f32 1.0, %v245
  %v248 = vlaneseq
  %v249 = vshrl.u32 %v248, 7
  %v250 = vsub.s32 0, %v249
  %v251 = vrot.slane %v29, %v250
  %252 = vrot.lane.b32.xlu0 %v251, 64
  %v253 = vpop.permute.xlu0 %252
  %v255 = vadd.f32 %v174, %v253
  %v258 = vunpack.c.l.s4 1983009808
  %v259 = vunpack.c.0.s8 %v258
  %v260 = vlaneseq
  %v261 = vshrl.u32 %v260, 7
  %v262 = vsub.s32 %v259, %v261
  %v263 = vrot.slane %v255, %v262
  %264 = vrot.lane.b32.xlu0 %v263, 32
  %v265 = vpop.permute.xlu0 %264
  %v267 = vmul.f32 %v236, %v265
  %268 = vrot.lane.b32.xlu0 %v32, 96
  %v269 = vpop.permute.xlu0 %268
  %v270 = vrot.slane %v269, 2
  %273 = vrot.lane.b32.xlu0 %v267, 32
  %v274 = vpop.permute.xlu0 %273
  %v276 = vadd.f32 %v270, %v274
  %v277 = vtanh.pop %v276
  %v278 = vsub.f32 1.0, %v246
  %v279 = vmul.f32 %v278, %v277
  %v280 = vmul.f32 %v246, 0.0
  %v281 = vadd.f32 %v279, %v280
  %v284 = vunpack.c.l.s4 1983009808
  %v285 = vunpack.c.0.s8 %v284
  %v286 = vlaneseq
  %v287 = vshrl.u32 %v286, 7
  %v288 = vsub.s32 %v285, %v287
  %v289 = vrot.slane %v218, %v288
  %290 = vrot.lane.b32.xlu0 %v289, 96
  %v291 = vpop.permute.xlu0 %290
  %vm293 = vcmask 254976
  %294 = vst.msk [vmem:[%s5] sm:$0x3] %vm293, %v291
  %s295 = scalar_lea.vmem %s5, 30
  %296 = vst.msk [vmem:[%s295] sm:$0x3] %vm293, %v281
  %s297 = scalar_lea.vmem %s0, 4
  %v298 = vld [vmem:[%s297] sm:$0xf]
  %s299 = scalar_lea.vmem %s0, 24
  %v300 = vld [vmem:[%s299] sm:$0xf]
  %v301 = vsel %vm33, %v291, 0
  %303 = vmatprep.subr.mxu0 0.0
  %304 = vmatpush1.msra.mxu0 %v20
  %305 = vmatprep.subr.mxu0 0.0
  %306 = vmatpush1.msra.mxu0 %v21
  %307 = vmatprep.subr.mxu0 0.0
  %308 = vmatpush1.msra.mxu0 %v22
  %309 = vmatprep.subr.mxu0 0.0
  %310 = vmatpush1.msra.mxu0 %v23
  %311 = vmatprep.subr.mxu0 0.0
  %312 = vmatpush1.msra.mxu0 0.0
  %313 = vmatprep.subr.mxu0 0.0
  %314 = vmatpush1.msra.mxu0 0.0
  %315 = vmatprep.subr.mxu0 0.0
  %316 = vmatpush1.msra.mxu0 0.0
  %317 = vmatprep.subr.mxu0 0.0
  %318 = vmatpush1.msra.mxu0 0.0
  %319 = vmatprep.subr.mxu0 0.0
  %320 = vmatpush1.msra.mxu0 0.0
  %321 = vmatprep.subr.mxu0 0.0
  %322 = vmatpush1.msra.mxu0 0.0
  %323 = vmatprep.subr.mxu0 0.0
  %324 = vmatpush1.msra.mxu0 0.0
  %325 = vmatprep.subr.mxu0 0.0
  %326 = vmatpush1.msra.mxu0 0.0
  %327 = vmatprep.subr.mxu0 0.0
  %328 = vmatpush1.msra.mxu0 0.0
  %329 = vmatprep.subr.mxu0 0.0
  %330 = vmatpush1.msra.mxu0 0.0
  %331 = vmatprep.subr.mxu0 0.0
  %332 = vmatpush1.msra.mxu0 0.0
  %333 = vmatprep.subr.mxu0 0.0
  %334 = vmatpush1.msra.mxu0 0.0
  %335 = vmatprep.subr.mxu0 0.0
  %336 = vmatpush1.msra.mxu0 0.0
  %337 = vmatprep.subr.mxu0 0.0
  %338 = vmatpush1.msra.mxu0 0.0
  %339 = vmatprep.subr.mxu0 0.0
  %340 = vmatpush1.msra.mxu0 0.0
  %341 = vmatprep.subr.mxu0 0.0
  %342 = vmatpush1.msra.mxu0 0.0
  %343 = vmatprep.subr.mxu0 0.0
  %344 = vmatpush1.msra.mxu0 0.0
  %345 = vmatprep.subr.mxu0 0.0
  %346 = vmatpush1.msra.mxu0 0.0
  %347 = vmatprep.subr.mxu0 0.0
  %348 = vmatpush1.msra.mxu0 0.0
  %349 = vmatprep.subr.mxu0 0.0
  %350 = vmatpush1.msra.mxu0 0.0
  %351 = vmatprep.subr.mxu0 0.0
  %352 = vmatpush1.msra.mxu0 0.0
  %353 = vmatprep.subr.mxu0 0.0
  %354 = vmatpush1.msra.mxu0 0.0
  %355 = vmatprep.subr.mxu0 0.0
  %356 = vmatpush1.msra.mxu0 0.0
  %357 = vmatprep.subr.mxu0 0.0
  %358 = vmatpush1.msra.mxu0 0.0
  %359 = vmatprep.subr.mxu0 0.0
  %360 = vmatpush1.msra.mxu0 0.0
  %361 = vmatprep.subr.mxu0 0.0
  %362 = vmatpush1.msra.mxu0 0.0
  %363 = vmatprep.subr.mxu0 0.0
  %364 = vmatpush1.msra.mxu0 0.0
  %365 = vmatprep.subr.mxu0 0.0
  %366 = vmatpush1.msra.mxu0 0.0
  %367 = vmatprep.mubr.f32.mxu0 0.0
  %368 = vmatmul.mubr.f32.gmra.mrb[0].mxu0 %v301
  %v369 = vpop.f32.mrb[0].mxu0
  %v370 = vadd.f32 0.0, %v369
  %v371 = vpop.f32.mrb[0].mxu0
  %372 = vdwg.mxu0
  %v374 = vsel %vm33, %v281, 0
  %376 = vmatprep.subr.mxu0 0.0
  %377 = vmatpush1.msra.mxu0 %v24
  %378 = vmatprep.subr.mxu0 0.0
  %379 = vmatpush1.msra.mxu0 %v25
  %380 = vmatprep.subr.mxu0 0.0
  %381 = vmatpush1.msra.mxu0 %v26
  %382 = vmatprep.subr.mxu0 0.0
  %383 = vmatpush1.msra.mxu0 %v27
  %384 = vmatprep.subr.mxu0 0.0
  %385 = vmatpush1.msra.mxu0 0.0
  %386 = vmatprep.subr.mxu0 0.0
  %387 = vmatpush1.msra.mxu0 0.0
  %388 = vmatprep.subr.mxu0 0.0
  %389 = vmatpush1.msra.mxu0 0.0
  %390 = vmatprep.subr.mxu0 0.0
  %391 = vmatpush1.msra.mxu0 0.0
  %392 = vmatprep.subr.mxu0 0.0
  %393 = vmatpush1.msra.mxu0 0.0
  %394 = vmatprep.subr.mxu0 0.0
  %395 = vmatpush1.msra.mxu0 0.0
  %396 = vmatprep.subr.mxu0 0.0
  %397 = vmatpush1.msra.mxu0 0.0
  %398 = vmatprep.subr.mxu0 0.0
  %399 = vmatpush1.msra.mxu0 0.0
  %400 = vmatprep.subr.mxu0 0.0
  %401 = vmatpush1.msra.mxu0 0.0
  %402 = vmatprep.subr.mxu0 0.0
  %403 = vmatpush1.msra.mxu0 0.0
  %404 = vmatprep.subr.mxu0 0.0
  %405 = vmatpush1.msra.mxu0 0.0
  %406 = vmatprep.subr.mxu0 0.0
  %407 = vmatpush1.msra.mxu0 0.0
  %408 = vmatprep.subr.mxu0 0.0
  %409 = vmatpush1.msra.mxu0 0.0
  %410 = vmatprep.subr.mxu0 0.0
  %411 = vmatpush1.msra.mxu0 0.0
  %412 = vmatprep.subr.mxu0 0.0
  %413 = vmatpush1.msra.mxu0 0.0
  %414 = vmatprep.subr.mxu0 0.0
  %415 = vmatpush1.msra.mxu0 0.0
  %416 = vmatprep.subr.mxu0 0.0
  %417 = vmatpush1.msra.mxu0 0.0
  %418 = vmatprep.subr.mxu0 0.0
  %419 = vmatpush1.msra.mxu0 0.0
  %420 = vmatprep.subr.mxu0 0.0
  %421 = vmatpush1.msra.mxu0 0.0
  %422 = vmatprep.subr.mxu0 0.0
  %423 = vmatpush1.msra.mxu0 0.0
  %424 = vmatprep.subr.mxu0 0.0
  %425 = vmatpush1.msra.mxu0 0.0
  %426 = vmatprep.subr.mxu0 0.0
  %427 = vmatpush1.msra.mxu0 0.0
  %428 = vmatprep.subr.mxu0 0.0
  %429 = vmatpush1.msra.mxu0 0.0
  %430 = vmatprep.subr.mxu0 0.0
  %431 = vmatpush1.msra.mxu0 0.0
  %432 = vmatprep.subr.mxu0 0.0
  %433 = vmatpush1.msra.mxu0 0.0
  %434 = vmatprep.subr.mxu0 0.0
  %435 = vmatpush1.msra.mxu0 0.0
  %436 = vmatprep.subr.mxu0 0.0
  %437 = vmatpush1.msra.mxu0 0.0
  %438 = vmatprep.subr.mxu0 0.0
  %439 = vmatpush1.msra.mxu0 0.0
  %440 = vmatprep.mubr.f32.mxu0 0.0
  %441 = vmatmul.mubr.f32.gmra.mrb[0].mxu0 %v374
  %v442 = vpop.f32.mrb[0].mxu0
  %v443 = vadd.f32 0.0, %v442
  %v444 = vpop.f32.mrb[0].mxu0
  %445 = vdwg.mxu0
  %v446 = vadd.f32 %v298, %v370
  %v447 = vxor.u32 %v446, 2147483648
  %v448 = vmul.f32 %v447, 1.442695
  %v449 = vpow.pop %v448
  %v450 = vadd.f32 %v449, 1.0
  %v451 = vrcp.pop %v450
  %v452 = vmul.f32 1.0, %v451
  %v453 = vadd.f32 %v370, %v190
  %v456 = vunpack.c.l.s4 1983009808
  %v457 = vunpack.c.0.s8 %v456
  %v458 = vlaneseq
  %v459 = vshrl.u32 %v458, 7
  %v460 = vsub.s32 %v457, %v459
  %v461 = vrot.slane %v453, %v460
  %462 = vrot.lane.b32.xlu0 %v461, 64
  %v463 = vpop.permute.xlu0 %462
  %v465 = vmul.f32 %v452, %v463
  %467 = vrot.lane.b32.xlu0 %v465, 64
  %v468 = vpop.permute.xlu0 %467
  %v470 = vadd.f32 %v298, %v468
  %v471 = vtanh.pop %v470
  %v472 = vsub.f32 1.0, %v452
  %474 = vrot.lane.b32.xlu0 %v471, 96
  %v475 = vpop.permute.xlu0 %474
  %v477 = vmul.f32 %v472, %v475
  %v478 = vmul.f32 %v452, %v218
  %v479 = vadd.f32 %v477, %v478
  %v482 = vunpack.c.l.s4 1983009808
  %v483 = vunpack.c.0.s8 %v482
  %v484 = vlaneseq
  %v485 = vshrl.u32 %v484, 7
  %v486 = vsub.s32 %v483, %v485
  %v487 = vrot.slane %v443, %v486
  %488 = vrot.lane.b32.xlu0 %v487, 96
  %v489 = vpop.permute.xlu0 %488
  %v491 = vadd.f32 %v300, %v489
  %v492 = vxor.u32 %v491, 2147483648
  %v493 = vmul.f32 %v492, 1.442695
  %v494 = vpow.pop %v493
  %v495 = vadd.f32 %v494, 1.0
  %v496 = vrcp.pop %v495
  %v497 = vmul.f32 1.0, %v496
  %v499 = vrot.slane %v300, 2
  %v501 = vadd.f32 %v499, %v489
  %v502 = vxor.u32 %v501, 2147483648
  %v503 = vmul.f32 %v502, 1.442695
  %v504 = vpow.pop %v503
  %v505 = vadd.f32 %v504, 1.0
  %v506 = vrcp.pop %v505
  %v507 = vmul.f32 1.0, %v506
  %v508 = vadd.f32 %v443, %v253
  %v511 = vunpack.c.l.s4 1983009808
  %v512 = vunpack.c.0.s8 %v511
  %v513 = vlaneseq
  %v514 = vshrl.u32 %v513, 7
  %v515 = vsub.s32 %v512, %v514
  %v516 = vrot.slane %v508, %v515
  %517 = vrot.lane.b32.xlu0 %v516, 32
  %v518 = vpop.permute.xlu0 %517
  %v520 = vmul.f32 %v497, %v518
  %521 = vrot.lane.b32.xlu0 %v300, 96
  %v522 = vpop.permute.xlu0 %521
  %v523 = vrot.slane %v522, 2
  %526 = vrot.lane.b32.xlu0 %v520, 32
  %v527 = vpop.permute.xlu0 %526
  %v529 = vadd.f32 %v523, %v527
  %v530 = vtanh.pop %v529
  %v531 = vsub.f32 1.0, %v507
  %v532 = vmul.f32 %v531, %v530
  %v533 = vmul.f32 %v507, %v281
  %v534 = vadd.f32 %v532, %v533
  %v537 = vunpack.c.l.s4 1983009808
  %v538 = vunpack.c.0.s8 %v537
  %v539 = vlaneseq
  %v540 = vshrl.u32 %v539, 7
  %v541 = vsub.s32 %v538, %v540
  %v542 = vrot.slane %v479, %v541
  %543 = vrot.lane.b32.xlu0 %v542, 96
  %v544 = vpop.permute.xlu0 %543
  %s546 = scalar_lea.vmem %s5, 2
  %547 = vst.msk [vmem:[%s546] sm:$0x3] %vm293, %v544
  %s548 = scalar_lea.vmem %s5, 28
  %549 = vst.msk [vmem:[%s548] sm:$0x3] %vm293, %v534
  %s550 = scalar_lea.vmem %s0, 8
  %v551 = vld [vmem:[%s550] sm:$0xf]
  %s552 = scalar_lea.vmem %s0, 20
  %v553 = vld [vmem:[%s552] sm:$0xf]
  %v554 = vsel %vm33, %v544, 0
  %556 = vmatprep.subr.mxu0 0.0
  %557 = vmatpush1.msra.mxu0 %v20
  %558 = vmatprep.subr.mxu0 0.0
  %559 = vmatpush1.msra.mxu0 %v21
  %560 = vmatprep.subr.mxu0 0.0
  %561 = vmatpush1.msra.mxu0 %v22
  %562 = vmatprep.subr.mxu0 0.0
  %563 = vmatpush1.msra.mxu0 %v23
  %564 = vmatprep.subr.mxu0 0.0
  %565 = vmatpush1.msra.mxu0 0.0
  %566 = vmatprep.subr.mxu0 0.0
  %567 = vmatpush1.msra.mxu0 0.0
  %568 = vmatprep.subr.mxu0 0.0
  %569 = vmatpush1.msra.mxu0 0.0
  %570 = vmatprep.subr.mxu0 0.0
  %571 = vmatpush1.msra.mxu0 0.0
  %572 = vmatprep.subr.mxu0 0.0
  %573 = vmatpush1.msra.mxu0 0.0
  %574 = vmatprep.subr.mxu0 0.0
  %575 = vmatpush1.msra.mxu0 0.0
  %576 = vmatprep.subr.mxu0 0.0
  %577 = vmatpush1.msra.mxu0 0.0
  %578 = vmatprep.subr.mxu0 0.0
  %579 = vmatpush1.msra.mxu0 0.0
  %580 = vmatprep.subr.mxu0 0.0
  %581 = vmatpush1.msra.mxu0 0.0
  %582 = vmatprep.subr.mxu0 0.0
  %583 = vmatpush1.msra.mxu0 0.0
  %584 = vmatprep.subr.mxu0 0.0
  %585 = vmatpush1.msra.mxu0 0.0
  %586 = vmatprep.subr.mxu0 0.0
  %587 = vmatpush1.msra.mxu0 0.0
  %588 = vmatprep.subr.mxu0 0.0
  %589 = vmatpush1.msra.mxu0 0.0
  %590 = vmatprep.subr.mxu0 0.0
  %591 = vmatpush1.msra.mxu0 0.0
  %592 = vmatprep.subr.mxu0 0.0
  %593 = vmatpush1.msra.mxu0 0.0
  %594 = vmatprep.subr.mxu0 0.0
  %595 = vmatpush1.msra.mxu0 0.0
  %596 = vmatprep.subr.mxu0 0.0
  %597 = vmatpush1.msra.mxu0 0.0
  %598 = vmatprep.subr.mxu0 0.0
  %599 = vmatpush1.msra.mxu0 0.0
  %600 = vmatprep.subr.mxu0 0.0
  %601 = vmatpush1.msra.mxu0 0.0
  %602 = vmatprep.subr.mxu0 0.0
  %603 = vmatpush1.msra.mxu0 0.0
  %604 = vmatprep.subr.mxu0 0.0
  %605 = vmatpush1.msra.mxu0 0.0
  %606 = vmatprep.subr.mxu0 0.0
  %607 = vmatpush1.msra.mxu0 0.0
  %608 = vmatprep.subr.mxu0 0.0
  %609 = vmatpush1.msra.mxu0 0.0
  %610 = vmatprep.subr.mxu0 0.0
  %611 = vmatpush1.msra.mxu0 0.0
  %612 = vmatprep.subr.mxu0 0.0
  %613 = vmatpush1.msra.mxu0 0.0
  %614 = vmatprep.subr.mxu0 0.0
  %615 = vmatpush1.msra.mxu0 0.0
  %616 = vmatprep.subr.mxu0 0.0
  %617 = vmatpush1.msra.mxu0 0.0
  %618 = vmatprep.subr.mxu0 0.0
  %619 = vmatpush1.msra.mxu0 0.0
  %620 = vmatprep.mubr.f32.mxu0 0.0
  %621 = vmatmul.mubr.f32.gmra.mrb[0].mxu0 %v554
  %v622 = vpop.f32.mrb[0].mxu0
  %v623 = vadd.f32 0.0, %v622
  %v624 = vpop.f32.mrb[0].mxu0
  %625 = vdwg.mxu0
  %v627 = vsel %vm33, %v534, 0
  %629 = vmatprep.subr.mxu0 0.0
  %630 = vmatpush1.msra.mxu0 %v24
  %631 = vmatprep.subr.mxu0 0.0
  %632 = vmatpush1.msra.mxu0 %v25
  %633 = vmatprep.subr.mxu0 0.0
  %634 = vmatpush1.msra.mxu0 %v26
  %635 = vmatprep.subr.mxu0 0.0
  %636 = vmatpush1.msra.mxu0 %v27
  %637 = vmatprep.subr.mxu0 0.0
  %638 = vmatpush1.msra.mxu0 0.0
  %639 = vmatprep.subr.mxu0 0.0
  %640 = vmatpush1.msra.mxu0 0.0
  %641 = vmatprep.subr.mxu0 0.0
  %642 = vmatpush1.msra.mxu0 0.0
  %643 = vmatprep.subr.mxu0 0.0
  %644 = vmatpush1.msra.mxu0 0.0
  %645 = vmatprep.subr.mxu0 0.0
  %646 = vmatpush1.msra.mxu0 0.0
  %647 = vmatprep.subr.mxu0 0.0
  %648 = vmatpush1.msra.mxu0 0.0
  %649 = vmatprep.subr.mxu0 0.0
  %650 = vmatpush1.msra.mxu0 0.0
  %651 = vmatprep.subr.mxu0 0.0
  %652 = vmatpush1.msra.mxu0 0.0
  %653 = vmatprep.subr.mxu0 0.0
  %654 = vmatpush1.msra.mxu0 0.0
  %655 = vmatprep.subr.mxu0 0.0
  %656 = vmatpush1.msra.mxu0 0.0
  %657 = vmatprep.subr.mxu0 0.0
  %658 = vmatpush1.msra.mxu0 0.0
  %659 = vmatprep.subr.mxu0 0.0
  %660 = vmatpush1.msra.mxu0 0.0
  %661 = vmatprep.subr.mxu0 0.0
  %662 = vmatpush1.msra.mxu0 0.0
  %663 = vmatprep.subr.mxu0 0.0
  %664 = vmatpush1.msra.mxu0 0.0
  %665 = vmatprep.subr.mxu0 0.0
  %666 = vmatpush1.msra.mxu0 0.0
  %667 = vmatprep.subr.mxu0 0.0
  %668 = vmatpush1.msra.mxu0 0.0
  %669 = vmatprep.subr.mxu0 0.0
  %670 = vmatpush1.msra.mxu0 0.0
  %671 = vmatprep.subr.mxu0 0.0
  %672 = vmatpush1.msra.mxu0 0.0
  %673 = vmatprep.subr.mxu0 0.0
  %674 = vmatpush1.msra.mxu0 0.0
  %675 = vmatprep.subr.mxu0 0.0
  %676 = vmatpush1.msra.mxu0 0.0
  %677 = vmatprep.subr.mxu0 0.0
  %678 = vmatpush1.msra.mxu0 0.0
  %679 = vmatprep.subr.mxu0 0.0
  %680 = vmatpush1.msra.mxu0 0.0
  %681 = vmatprep.subr.mxu0 0.0
  %682 = vmatpush1.msra.mxu0 0.0
  %683 = vmatprep.subr.mxu0 0.0
  %684 = vmatpush1.msra.mxu0 0.0
  %685 = vmatprep.subr.mxu0 0.0
  %686 = vmatpush1.msra.mxu0 0.0
  %687 = vmatprep.subr.mxu0 0.0
  %688 = vmatpush1.msra.mxu0 0.0
  %689 = vmatprep.subr.mxu0 0.0
  %690 = vmatpush1.msra.mxu0 0.0
  %691 = vmatprep.subr.mxu0 0.0
  %692 = vmatpush1.msra.mxu0 0.0
  %693 = vmatprep.mubr.f32.mxu0 0.0
  %694 = vmatmul.mubr.f32.gmra.mrb[0].mxu0 %v627
  %v695 = vpop.f32.mrb[0].mxu0
  %v696 = vadd.f32 0.0, %v695
  %v697 = vpop.f32.mrb[0].mxu0
  %698 = vdwg.mxu0
  %v699 = vadd.f32 %v551, %v623
  %v700 = vxor.u32 %v699, 2147483648
  %v701 = vmul.f32 %v700, 1.442695
  %v702 = vpow.pop %v701
  %v703 = vadd.f32 %v702, 1.0
  %v704 = vrcp.pop %v703
  %v705 = vmul.f32 1.0, %v704
  %v706 = vadd.f32 %v623, %v190
  %v709 = vunpack.c.l.s4 1983009808
  %v710 = vunpack.c.0.s8 %v709
  %v711 = vlaneseq
  %v712 = vshrl.u32 %v711, 7
  %v713 = vsub.s32 %v710, %v712
  %v714 = vrot.slane %v706, %v713
  %715 = vrot.lane.b32.xlu0 %v714, 64
  %v716 = vpop.permute.xlu0 %715
  %v718 = vmul.f32 %v705, %v716
  %720 = vrot.lane.b32.xlu0 %v718, 64
  %v721 = vpop.permute.xlu0 %720
  %v723 = vadd.f32 %v551, %v721
  %v724 = vtanh.pop %v723
  %v725 = vsub.f32 1.0, %v705
  %727 = vrot.lane.b32.xlu0 %v724, 96
  %v728 = vpop.permute.xlu0 %727
  %v730 = vmul.f32 %v725, %v728
  %v731 = vmul.f32 %v705, %v479
  %v732 = vadd.f32 %v730, %v731
  %v735 = vunpack.c.l.s4 1983009808
  %v736 = vunpack.c.0.s8 %v735
  %v737 = vlaneseq
  %v738 = vshrl.u32 %v737, 7
  %v739 = vsub.s32 %v736, %v738
  %v740 = vrot.slane %v696, %v739
  %741 = vrot.lane.b32.xlu0 %v740, 96
  %v742 = vpop.permute.xlu0 %741
  %v744 = vadd.f32 %v553, %v742
  %v745 = vxor.u32 %v744, 2147483648
  %v746 = vmul.f32 %v745, 1.442695
  %v747 = vpow.pop %v746
  %v748 = vadd.f32 %v747, 1.0
  %v749 = vrcp.pop %v748
  %v750 = vmul.f32 1.0, %v749
  %v752 = vrot.slane %v553, 2
  %v754 = vadd.f32 %v752, %v742
  %v755 = vxor.u32 %v754, 2147483648
  %v756 = vmul.f32 %v755, 1.442695
  %v757 = vpow.pop %v756
  %v758 = vadd.f32 %v757, 1.0
  %v759 = vrcp.pop %v758
  %v760 = vmul.f32 1.0, %v759
  %v761 = vadd.f32 %v696, %v253
  %v764 = vunpack.c.l.s4 1983009808
  %v765 = vunpack.c.0.s8 %v764
  %v766 = vlaneseq
  %v767 = vshrl.u32 %v766, 7
  %v768 = vsub.s32 %v765, %v767
  %v769 = vrot.slane %v761, %v768
  %770 = vrot.lane.b32.xlu0 %v769, 32
  %v771 = vpop.permute.xlu0 %770
  %v773 = vmul.f32 %v750, %v771
  %774 = vrot.lane.b32.xlu0 %v553, 96
  %v775 = vpop.permute.xlu0 %774
  %v776 = vrot.slane %v775, 2
  %779 = vrot.lane.b32.xlu0 %v773, 32
  %v780 = vpop.permute.xlu0 %779
  %v782 = vadd.f32 %v776, %v780
  %v783 = vtanh.pop %v782
  %v784 = vsub.f32 1.0, %v760
  %v785 = vmul.f32 %v784, %v783
  %v786 = vmul.f32 %v760, %v534
  %v787 = vadd.f32 %v785, %v786
  %v790 = vunpack.c.l.s4 1983009808
  %v791 = vunpack.c.0.s8 %v790
  %v792 = vlaneseq
  %v793 = vshrl.u32 %v792, 7
  %v794 = vsub.s32 %v791, %v793
  %v795 = vrot.slane %v732, %v794
  %796 = vrot.lane.b32.xlu0 %v795, 96
  %v797 = vpop.permute.xlu0 %796
  %s799 = scalar_lea.vmem %s5, 4
  %800 = vst.msk [vmem:[%s799] sm:$0x3] %vm293, %v797
  %s801 = scalar_lea.vmem %s5, 26
  %802 = vst.msk [vmem:[%s801] sm:$0x3] %vm293, %v787
  %s803 = scalar_lea.vmem %s0, 12
  %v804 = vld [vmem:[%s803] sm:$0xf]
  %s805 = scalar_lea.vmem %s0, 16
  %v806 = vld [vmem:[%s805] sm:$0xf]
  %v807 = vsel %vm33, %v797, 0
  %809 = vmatprep.subr.mxu0 0.0
  %810 = vmatpush1.msra.mxu0 %v20
  %811 = vmatprep.subr.mxu0 0.0
  %812 = vmatpush1.msra.mxu0 %v21
  %813 = vmatprep.subr.mxu0 0.0
  %814 = vmatpush1.msra.mxu0 %v22
  %815 = vmatprep.subr.mxu0 0.0
  %816 = vmatpush1.msra.mxu0 %v23
  %817 = vmatprep.subr.mxu0 0.0
  %818 = vmatpush1.msra.mxu0 0.0
  %819 = vmatprep.subr.mxu0 0.0
  %820 = vmatpush1.msra.mxu0 0.0
  %821 = vmatprep.subr.mxu0 0.0
  %822 = vmatpush1.msra.mxu0 0.0
  %823 = vmatprep.subr.mxu0 0.0
  %824 = vmatpush1.msra.mxu0 0.0
  %825 = vmatprep.subr.mxu0 0.0
  %826 = vmatpush1.msra.mxu0 0.0
  %827 = vmatprep.subr.mxu0 0.0
  %828 = vmatpush1.msra.mxu0 0.0
  %829 = vmatprep.subr.mxu0 0.0
  %830 = vmatpush1.msra.mxu0 0.0
  %831 = vmatprep.subr.mxu0 0.0
  %832 = vmatpush1.msra.mxu0 0.0
  %833 = vmatprep.subr.mxu0 0.0
  %834 = vmatpush1.msra.mxu0 0.0
  %835 = vmatprep.subr.mxu0 0.0
  %836 = vmatpush1.msra.mxu0 0.0
  %837 = vmatprep.subr.mxu0 0.0
  %838 = vmatpush1.msra.mxu0 0.0
  %839 = vmatprep.subr.mxu0 0.0
  %840 = vmatpush1.msra.mxu0 0.0
  %841 = vmatprep.subr.mxu0 0.0
  %842 = vmatpush1.msra.mxu0 0.0
  %843 = vmatprep.subr.mxu0 0.0
  %844 = vmatpush1.msra.mxu0 0.0
  %845 = vmatprep.subr.mxu0 0.0
  %846 = vmatpush1.msra.mxu0 0.0
  %847 = vmatprep.subr.mxu0 0.0
  %848 = vmatpush1.msra.mxu0 0.0
  %849 = vmatprep.subr.mxu0 0.0
  %850 = vmatpush1.msra.mxu0 0.0
  %851 = vmatprep.subr.mxu0 0.0
  %852 = vmatpush1.msra.mxu0 0.0
  %853 = vmatprep.subr.mxu0 0.0
  %854 = vmatpush1.msra.mxu0 0.0
  %855 = vmatprep.subr.mxu0 0.0
  %856 = vmatpush1.msra.mxu0 0.0
  %857 = vmatprep.subr.mxu0 0.0
  %858 = vmatpush1.msra.mxu0 0.0
  %859 = vmatprep.subr.mxu0 0.0
  %860 = vmatpush1.msra.mxu0 0.0
  %861 = vmatprep.subr.mxu0 0.0
  %862 = vmatpush1.msra.mxu0 0.0
  %863 = vmatprep.subr.mxu0 0.0
  %864 = vmatpush1.msra.mxu0 0.0
  %865 = vmatprep.subr.mxu0 0.0
  %866 = vmatpush1.msra.mxu0 0.0
  %867 = vmatprep.subr.mxu0 0.0
  %868 = vmatpush1.msra.mxu0 0.0
  %869 = vmatprep.subr.mxu0 0.0
  %870 = vmatpush1.msra.mxu0 0.0
  %871 = vmatprep.subr.mxu0 0.0
  %872 = vmatpush1.msra.mxu0 0.0
  %873 = vmatprep.mubr.f32.mxu0 0.0
  %874 = vmatmul.mubr.f32.gmra.mrb[0].mxu0 %v807
  %v875 = vpop.f32.mrb[0].mxu0
  %v876 = vadd.f32 0.0, %v875
  %v877 = vpop.f32.mrb[0].mxu0
  %878 = vdwg.mxu0
  %v880 = vsel %vm33, %v787, 0
  %882 = vmatprep.subr.mxu0 0.0
  %883 = vmatpush1.msra.mxu0 %v24
  %884 = vmatprep.subr.mxu0 0.0
  %885 = vmatpush1.msra.mxu0 %v25
  %886 = vmatprep.subr.mxu0 0.0
  %887 = vmatpush1.msra.mxu0 %v26
  %888 = vmatprep.subr.mxu0 0.0
  %889 = vmatpush1.msra.mxu0 %v27
  %890 = vmatprep.subr.mxu0 0.0
  %891 = vmatpush1.msra.mxu0 0.0
  %892 = vmatprep.subr.mxu0 0.0
  %893 = vmatpush1.msra.mxu0 0.0
  %894 = vmatprep.subr.mxu0 0.0
  %895 = vmatpush1.msra.mxu0 0.0
  %896 = vmatprep.subr.mxu0 0.0
  %897 = vmatpush1.msra.mxu0 0.0
  %898 = vmatprep.subr.mxu0 0.0
  %899 = vmatpush1.msra.mxu0 0.0
  %900 = vmatprep.subr.mxu0 0.0
  %901 = vmatpush1.msra.mxu0 0.0
  %902 = vmatprep.subr.mxu0 0.0
  %903 = vmatpush1.msra.mxu0 0.0
  %904 = vmatprep.subr.mxu0 0.0
  %905 = vmatpush1.msra.mxu0 0.0
  %906 = vmatprep.subr.mxu0 0.0
  %907 = vmatpush1.msra.mxu0 0.0
  %908 = vmatprep.subr.mxu0 0.0
  %909 = vmatpush1.msra.mxu0 0.0
  %910 = vmatprep.subr.mxu0 0.0
  %911 = vmatpush1.msra.mxu0 0.0
  %912 = vmatprep.subr.mxu0 0.0
  %913 = vmatpush1.msra.mxu0 0.0
  %914 = vmatprep.subr.mxu0 0.0
  %915 = vmatpush1.msra.mxu0 0.0
  %916 = vmatprep.subr.mxu0 0.0
  %917 = vmatpush1.msra.mxu0 0.0
  %918 = vmatprep.subr.mxu0 0.0
  %919 = vmatpush1.msra.mxu0 0.0
  %920 = vmatprep.subr.mxu0 0.0
  %921 = vmatpush1.msra.mxu0 0.0
  %922 = vmatprep.subr.mxu0 0.0
  %923 = vmatpush1.msra.mxu0 0.0
  %924 = vmatprep.subr.mxu0 0.0
  %925 = vmatpush1.msra.mxu0 0.0
  %926 = vmatprep.subr.mxu0 0.0
  %927 = vmatpush1.msra.mxu0 0.0
  %928 = vmatprep.subr.mxu0 0.0
  %929 = vmatpush1.msra.mxu0 0.0
  %930 = vmatprep.subr.mxu0 0.0
  %931 = vmatpush1.msra.mxu0 0.0
  %932 = vmatprep.subr.mxu0 0.0
  %933 = vmatpush1.msra.mxu0 0.0
  %934 = vmatprep.subr.mxu0 0.0
  %935 = vmatpush1.msra.mxu0 0.0
  %936 = vmatprep.subr.mxu0 0.0
  %937 = vmatpush1.msra.mxu0 0.0
  %938 = vmatprep.subr.mxu0 0.0
  %939 = vmatpush1.msra.mxu0 0.0
  %940 = vmatprep.subr.mxu0 0.0
  %941 = vmatpush1.msra.mxu0 0.0
  %942 = vmatprep.subr.mxu0 0.0
  %943 = vmatpush1.msra.mxu0 0.0
  %944 = vmatprep.subr.mxu0 0.0
  %945 = vmatpush1.msra.mxu0 0.0
  %946 = vmatprep.mubr.f32.mxu0 0.0
  %947 = vmatmul.mubr.f32.gmra.mrb[0].mxu0 %v880
  %v948 = vpop.f32.mrb[0].mxu0
  %v949 = vadd.f32 0.0, %v948
  %v950 = vpop.f32.mrb[0].mxu0
  %951 = vdwg.mxu0
  %v952 = vadd.f32 %v804, %v876
  %v953 = vxor.u32 %v952, 2147483648
  %v954 = vmul.f32 %v953, 1.442695
  %v955 = vpow.pop %v954
  %v956 = vadd.f32 %v955, 1.0
  %v957 = vrcp.pop %v956
  %v958 = vmul.f32 1.0, %v957
  %v959 = vadd.f32 %v876, %v190
  %v962 = vunpack.c.l.s4 1983009808
  %v963 = vunpack.c.0.s8 %v962
  %v964 = vlaneseq
  %v965 = vshrl.u32 %v964, 7
  %v966 = vsub.s32 %v963, %v965
  %v967 = vrot.slane %v959, %v966
  %968 = vrot.lane.b32.xlu0 %v967, 64
  %v969 = vpop.permute.xlu0 %968
  %v971 = vmul.f32 %v958, %v969
  %973 = vrot.lane.b32.xlu0 %v971, 64
  %v974 = vpop.permute.xlu0 %973
  %v976 = vadd.f32 %v804, %v974
  %v977 = vtanh.pop %v976
  %v978 = vsub.f32 1.0, %v958
  %980 = vrot.lane.b32.xlu0 %v977, 96
  %v981 = vpop.permute.xlu0 %980
  %v983 = vmul.f32 %v978, %v981
  %v984 = vmul.f32 %v958, %v732
  %v985 = vadd.f32 %v983, %v984
  %v988 = vunpack.c.l.s4 1983009808
  %v989 = vunpack.c.0.s8 %v988
  %v990 = vlaneseq
  %v991 = vshrl.u32 %v990, 7
  %v992 = vsub.s32 %v989, %v991
  %v993 = vrot.slane %v949, %v992
  %994 = vrot.lane.b32.xlu0 %v993, 96
  %v995 = vpop.permute.xlu0 %994
  %v997 = vadd.f32 %v806, %v995
  %v998 = vxor.u32 %v997, 2147483648
  %v999 = vmul.f32 %v998, 1.442695
  %v1000 = vpow.pop %v999
  %v1001 = vadd.f32 %v1000, 1.0
  %v1002 = vrcp.pop %v1001
  %v1003 = vmul.f32 1.0, %v1002
  %v1005 = vrot.slane %v806, 2
  %v1007 = vadd.f32 %v1005, %v995
  %v1008 = vxor.u32 %v1007, 2147483648
  %v1009 = vmul.f32 %v1008, 1.442695
  %v1010 = vpow.pop %v1009
  %v1011 = vadd.f32 %v1010, 1.0
  %v1012 = vrcp.pop %v1011
  %v1013 = vmul.f32 1.0, %v1012
  %v1014 = vadd.f32 %v949, %v253
  %v1017 = vunpack.c.l.s4 1983009808
  %v1018 = vunpack.c.0.s8 %v1017
  %v1019 = vlaneseq
  %v1020 = vshrl.u32 %v1019, 7
  %v1021 = vsub.s32 %v1018, %v1020
  %v1022 = vrot.slane %v1014, %v1021
  %1023 = vrot.lane.b32.xlu0 %v1022, 32
  %v1024 = vpop.permute.xlu0 %1023
  %v1026 = vmul.f32 %v1003, %v1024
  %1027 = vrot.lane.b32.xlu0 %v806, 96
  %v1028 = vpop.permute.xlu0 %1027
  %v1029 = vrot.slane %v1028, 2
  %1032 = vrot.lane.b32.xlu0 %v1026, 32
  %v1033 = vpop.permute.xlu0 %1032
  %v1035 = vadd.f32 %v1029, %v1033
  %v1036 = vtanh.pop %v1035
  %v1037 = vsub.f32 1.0, %v1013
  %v1038 = vmul.f32 %v1037, %v1036
  %v1039 = vmul.f32 %v1013, %v787
  %v1040 = vadd.f32 %v1038, %v1039
  %v1043 = vunpack.c.l.s4 1983009808
  %v1044 = vunpack.c.0.s8 %v1043
  %v1045 = vlaneseq
  %v1046 = vshrl.u32 %v1045, 7
  %v1047 = vsub.s32 %v1044, %v1046
  %v1048 = vrot.slane %v985, %v1047
  %1049 = vrot.lane.b32.xlu0 %v1048, 96
  %v1050 = vpop.permute.xlu0 %1049
  %s1052 = scalar_lea.vmem %s5, 6
  %1053 = vst.msk [vmem:[%s1052] sm:$0x3] %vm293, %v1050
  %s1054 = scalar_lea.vmem %s5, 24
  %1055 = vst.msk [vmem:[%s1054] sm:$0x3] %vm293, %v1040
  %v1056 = vld [vmem:[%s805] sm:$0xf]
  %v1057 = vld [vmem:[%s803] sm:$0xf]
  %v1058 = vsel %vm33, %v1050, 0
  %1060 = vmatprep.subr.mxu0 0.0
  %1061 = vmatpush1.msra.mxu0 %v20
  %1062 = vmatprep.subr.mxu0 0.0
  %1063 = vmatpush1.msra.mxu0 %v21
  %1064 = vmatprep.subr.mxu0 0.0
  %1065 = vmatpush1.msra.mxu0 %v22
  %1066 = vmatprep.subr.mxu0 0.0
  %1067 = vmatpush1.msra.mxu0 %v23
  %1068 = vmatprep.subr.mxu0 0.0
  %1069 = vmatpush1.msra.mxu0 0.0
  %1070 = vmatprep.subr.mxu0 0.0
  %1071 = vmatpush1.msra.mxu0 0.0
  %1072 = vmatprep.subr.mxu0 0.0
  %1073 = vmatpush1.msra.mxu0 0.0
  %1074 = vmatprep.subr.mxu0 0.0
  %1075 = vmatpush1.msra.mxu0 0.0
  %1076 = vmatprep.subr.mxu0 0.0
  %1077 = vmatpush1.msra.mxu0 0.0
  %1078 = vmatprep.subr.mxu0 0.0
  %1079 = vmatpush1.msra.mxu0 0.0
  %1080 = vmatprep.subr.mxu0 0.0
  %1081 = vmatpush1.msra.mxu0 0.0
  %1082 = vmatprep.subr.mxu0 0.0
  %1083 = vmatpush1.msra.mxu0 0.0
  %1084 = vmatprep.subr.mxu0 0.0
  %1085 = vmatpush1.msra.mxu0 0.0
  %1086 = vmatprep.subr.mxu0 0.0
  %1087 = vmatpush1.msra.mxu0 0.0
  %1088 = vmatprep.subr.mxu0 0.0
  %1089 = vmatpush1.msra.mxu0 0.0
  %1090 = vmatprep.subr.mxu0 0.0
  %1091 = vmatpush1.msra.mxu0 0.0
  %1092 = vmatprep.subr.mxu0 0.0
  %1093 = vmatpush1.msra.mxu0 0.0
  %1094 = vmatprep.subr.mxu0 0.0
  %1095 = vmatpush1.msra.mxu0 0.0
  %1096 = vmatprep.subr.mxu0 0.0
  %1097 = vmatpush1.msra.mxu0 0.0
  %1098 = vmatprep.subr.mxu0 0.0
  %1099 = vmatpush1.msra.mxu0 0.0
  %1100 = vmatprep.subr.mxu0 0.0
  %1101 = vmatpush1.msra.mxu0 0.0
  %1102 = vmatprep.subr.mxu0 0.0
  %1103 = vmatpush1.msra.mxu0 0.0
  %1104 = vmatprep.subr.mxu0 0.0
  %1105 = vmatpush1.msra.mxu0 0.0
  %1106 = vmatprep.subr.mxu0 0.0
  %1107 = vmatpush1.msra.mxu0 0.0
  %1108 = vmatprep.subr.mxu0 0.0
  %1109 = vmatpush1.msra.mxu0 0.0
  %1110 = vmatprep.subr.mxu0 0.0
  %1111 = vmatpush1.msra.mxu0 0.0
  %1112 = vmatprep.subr.mxu0 0.0
  %1113 = vmatpush1.msra.mxu0 0.0
  %1114 = vmatprep.subr.mxu0 0.0
  %1115 = vmatpush1.msra.mxu0 0.0
  %1116 = vmatprep.subr.mxu0 0.0
  %1117 = vmatpush1.msra.mxu0 0.0
  %1118 = vmatprep.subr.mxu0 0.0
  %1119 = vmatpush1.msra.mxu0 0.0
  %1120 = vmatprep.subr.mxu0 0.0
  %1121 = vmatpush1.msra.mxu0 0.0
  %1122 = vmatprep.subr.mxu0 0.0
  %1123 = vmatpush1.msra.mxu0 0.0
  %1124 = vmatprep.mubr.f32.mxu0 0.0
  %1125 = vmatmul.mubr.f32.gmra.mrb[0].mxu0 %v1058
  %v1126 = vpop.f32.mrb[0].mxu0
  %v1127 = vadd.f32 0.0, %v1126
  %v1128 = vpop.f32.mrb[0].mxu0
  %1129 = vdwg.mxu0
  %v1131 = vsel %vm33, %v1040, 0
  %1133 = vmatprep.subr.mxu0 0.0
  %1134 = vmatpush1.msra.mxu0 %v24
  %1135 = vmatprep.subr.mxu0 0.0
  %1136 = vmatpush1.msra.mxu0 %v25
  %1137 = vmatprep.subr.mxu0 0.0
  %1138 = vmatpush1.msra.mxu0 %v26
  %1139 = vmatprep.subr.mxu0 0.0
  %1140 = vmatpush1.msra.mxu0 %v27
  %1141 = vmatprep.subr.mxu0 0.0
  %1142 = vmatpush1.msra.mxu0 0.0
  %1143 = vmatprep.subr.mxu0 0.0
  %1144 = vmatpush1.msra.mxu0 0.0
  %1145 = vmatprep.subr.mxu0 0.0
  %1146 = vmatpush1.msra.mxu0 0.0
  %1147 = vmatprep.subr.mxu0 0.0
  %1148 = vmatpush1.msra.mxu0 0.0
  %1149 = vmatprep.subr.mxu0 0.0
  %1150 = vmatpush1.msra.mxu0 0.0
  %1151 = vmatprep.subr.mxu0 0.0
  %1152 = vmatpush1.msra.mxu0 0.0
  %1153 = vmatprep.subr.mxu0 0.0
  %1154 = vmatpush1.msra.mxu0 0.0
  %1155 = vmatprep.subr.mxu0 0.0
  %1156 = vmatpush1.msra.mxu0 0.0
  %1157 = vmatprep.subr.mxu0 0.0
  %1158 = vmatpush1.msra.mxu0 0.0
  %1159 = vmatprep.subr.mxu0 0.0
  %1160 = vmatpush1.msra.mxu0 0.0
  %1161 = vmatprep.subr.mxu0 0.0
  %1162 = vmatpush1.msra.mxu0 0.0
  %1163 = vmatprep.subr.mxu0 0.0
  %1164 = vmatpush1.msra.mxu0 0.0
  %1165 = vmatprep.subr.mxu0 0.0
  %1166 = vmatpush1.msra.mxu0 0.0
  %1167 = vmatprep.subr.mxu0 0.0
  %1168 = vmatpush1.msra.mxu0 0.0
  %1169 = vmatprep.subr.mxu0 0.0
  %1170 = vmatpush1.msra.mxu0 0.0
  %1171 = vmatprep.subr.mxu0 0.0
  %1172 = vmatpush1.msra.mxu0 0.0
  %1173 = vmatprep.subr.mxu0 0.0
  %1174 = vmatpush1.msra.mxu0 0.0
  %1175 = vmatprep.subr.mxu0 0.0
  %1176 = vmatpush1.msra.mxu0 0.0
  %1177 = vmatprep.subr.mxu0 0.0
  %1178 = vmatpush1.msra.mxu0 0.0
  %1179 = vmatprep.subr.mxu0 0.0
  %1180 = vmatpush1.msra.mxu0 0.0
  %1181 = vmatprep.subr.mxu0 0.0
  %1182 = vmatpush1.msra.mxu0 0.0
  %1183 = vmatprep.subr.mxu0 0.0
  %1184 = vmatpush1.msra.mxu0 0.0
  %1185 = vmatprep.subr.mxu0 0.0
  %1186 = vmatpush1.msra.mxu0 0.0
  %1187 = vmatprep.subr.mxu0 0.0
  %1188 = vmatpush1.msra.mxu0 0.0
  %1189 = vmatprep.subr.mxu0 0.0
  %1190 = vmatpush1.msra.mxu0 0.0
  %1191 = vmatprep.subr.mxu0 0.0
  %1192 = vmatpush1.msra.mxu0 0.0
  %1193 = vmatprep.subr.mxu0 0.0
  %1194 = vmatpush1.msra.mxu0 0.0
  %1195 = vmatprep.subr.mxu0 0.0
  %1196 = vmatpush1.msra.mxu0 0.0
  %1197 = vmatprep.mubr.f32.mxu0 0.0
  %1198 = vmatmul.mubr.f32.gmra.mrb[0].mxu0 %v1131
  %v1199 = vpop.f32.mrb[0].mxu0
  %v1200 = vadd.f32 0.0, %v1199
  %v1201 = vpop.f32.mrb[0].mxu0
  %1202 = vdwg.mxu0
  %v1203 = vadd.f32 %v1056, %v1127
  %v1204 = vxor.u32 %v1203, 2147483648
  %v1205 = vmul.f32 %v1204, 1.442695
  %v1206 = vpow.pop %v1205
  %v1207 = vadd.f32 %v1206, 1.0
  %v1208 = vrcp.pop %v1207
  %v1209 = vmul.f32 1.0, %v1208
  %v1210 = vadd.f32 %v1127, %v190
  %v1213 = vunpack.c.l.s4 1983009808
  %v1214 = vunpack.c.0.s8 %v1213
  %v1215 = vlaneseq
  %v1216 = vshrl.u32 %v1215, 7
  %v1217 = vsub.s32 %v1214, %v1216
  %v1218 = vrot.slane %v1210, %v1217
  %1219 = vrot.lane.b32.xlu0 %v1218, 64
  %v1220 = vpop.permute.xlu0 %1219
  %v1222 = vmul.f32 %v1209, %v1220
  %1224 = vrot.lane.b32.xlu0 %v1222, 64
  %v1225 = vpop.permute.xlu0 %1224
  %v1227 = vadd.f32 %v1056, %v1225
  %v1228 = vtanh.pop %v1227
  %v1229 = vsub.f32 1.0, %v1209
  %1231 = vrot.lane.b32.xlu0 %v1228, 96
  %v1232 = vpop.permute.xlu0 %1231
  %v1234 = vmul.f32 %v1229, %v1232
  %v1235 = vmul.f32 %v1209, %v985
  %v1236 = vadd.f32 %v1234, %v1235
  %v1239 = vunpack.c.l.s4 1983009808
  %v1240 = vunpack.c.0.s8 %v1239
  %v1241 = vlaneseq
  %v1242 = vshrl.u32 %v1241, 7
  %v1243 = vsub.s32 %v1240, %v1242
  %v1244 = vrot.slane %v1200, %v1243
  %1245 = vrot.lane.b32.xlu0 %v1244, 96
  %v1246 = vpop.permute.xlu0 %1245
  %v1248 = vadd.f32 %v1057, %v1246
  %v1249 = vxor.u32 %v1248, 2147483648
  %v1250 = vmul.f32 %v1249, 1.442695
  %v1251 = vpow.pop %v1250
  %v1252 = vadd.f32 %v1251, 1.0
  %v1253 = vrcp.pop %v1252
  %v1254 = vmul.f32 1.0, %v1253
  %v1256 = vrot.slane %v1057, 2
  %v1258 = vadd.f32 %v1256, %v1246
  %v1259 = vxor.u32 %v1258, 2147483648
  %v1260 = vmul.f32 %v1259, 1.442695
  %v1261 = vpow.pop %v1260
  %v1262 = vadd.f32 %v1261, 1.0
  %v1263 = vrcp.pop %v1262
  %v1264 = vmul.f32 1.0, %v1263
  %v1265 = vadd.f32 %v1200, %v253
  %v1268 = vunpack.c.l.s4 1983009808
  %v1269 = vunpack.c.0.s8 %v1268
  %v1270 = vlaneseq
  %v1271 = vshrl.u32 %v1270, 7
  %v1272 = vsub.s32 %v1269, %v1271
  %v1273 = vrot.slane %v1265, %v1272
  %1274 = vrot.lane.b32.xlu0 %v1273, 32
  %v1275 = vpop.permute.xlu0 %1274
  %v1277 = vmul.f32 %v1254, %v1275
  %1278 = vrot.lane.b32.xlu0 %v1057, 96
  %v1279 = vpop.permute.xlu0 %1278
  %v1280 = vrot.slane %v1279, 2
  %1283 = vrot.lane.b32.xlu0 %v1277, 32
  %v1284 = vpop.permute.xlu0 %1283
  %v1286 = vadd.f32 %v1280, %v1284
  %v1287 = vtanh.pop %v1286
  %v1288 = vsub.f32 1.0, %v1264
  %v1289 = vmul.f32 %v1288, %v1287
  %v1290 = vmul.f32 %v1264, %v1040
  %v1291 = vadd.f32 %v1289, %v1290
  %v1294 = vunpack.c.l.s4 1983009808
  %v1295 = vunpack.c.0.s8 %v1294
  %v1296 = vlaneseq
  %v1297 = vshrl.u32 %v1296, 7
  %v1298 = vsub.s32 %v1295, %v1297
  %v1299 = vrot.slane %v1236, %v1298
  %1300 = vrot.lane.b32.xlu0 %v1299, 96
  %v1301 = vpop.permute.xlu0 %1300
  %s1303 = scalar_lea.vmem %s5, 8
  %1304 = vst.msk [vmem:[%s1303] sm:$0x3] %vm293, %v1301
  %s1305 = scalar_lea.vmem %s5, 22
  %1306 = vst.msk [vmem:[%s1305] sm:$0x3] %vm293, %v1291
  %v1307 = vld [vmem:[%s552] sm:$0xf]
  %v1308 = vld [vmem:[%s550] sm:$0xf]
  %v1309 = vsel %vm33, %v1301, 0
  %1311 = vmatprep.subr.mxu0 0.0
  %1312 = vmatpush1.msra.mxu0 %v20
  %1313 = vmatprep.subr.mxu0 0.0
  %1314 = vmatpush1.msra.mxu0 %v21
  %1315 = vmatprep.subr.mxu0 0.0
  %1316 = vmatpush1.msra.mxu0 %v22
  %1317 = vmatprep.subr.mxu0 0.0
  %1318 = vmatpush1.msra.mxu0 %v23
  %1319 = vmatprep.subr.mxu0 0.0
  %1320 = vmatpush1.msra.mxu0 0.0
  %1321 = vmatprep.subr.mxu0 0.0
  %1322 = vmatpush1.msra.mxu0 0.0
  %1323 = vmatprep.subr.mxu0 0.0
  %1324 = vmatpush1.msra.mxu0 0.0
  %1325 = vmatprep.subr.mxu0 0.0
  %1326 = vmatpush1.msra.mxu0 0.0
  %1327 = vmatprep.subr.mxu0 0.0
  %1328 = vmatpush1.msra.mxu0 0.0
  %1329 = vmatprep.subr.mxu0 0.0
  %1330 = vmatpush1.msra.mxu0 0.0
  %1331 = vmatprep.subr.mxu0 0.0
  %1332 = vmatpush1.msra.mxu0 0.0
  %1333 = vmatprep.subr.mxu0 0.0
  %1334 = vmatpush1.msra.mxu0 0.0
  %1335 = vmatprep.subr.mxu0 0.0
  %1336 = vmatpush1.msra.mxu0 0.0
  %1337 = vmatprep.subr.mxu0 0.0
  %1338 = vmatpush1.msra.mxu0 0.0
  %1339 = vmatprep.subr.mxu0 0.0
  %1340 = vmatpush1.msra.mxu0 0.0
  %1341 = vmatprep.subr.mxu0 0.0
  %1342 = vmatpush1.msra.mxu0 0.0
  %1343 = vmatprep.subr.mxu0 0.0
  %1344 = vmatpush1.msra.mxu0 0.0
  %1345 = vmatprep.subr.mxu0 0.0
  %1346 = vmatpush1.msra.mxu0 0.0
  %1347 = vmatprep.subr.mxu0 0.0
  %1348 = vmatpush1.msra.mxu0 0.0
  %1349 = vmatprep.subr.mxu0 0.0
  %1350 = vmatpush1.msra.mxu0 0.0
  %1351 = vmatprep.subr.mxu0 0.0
  %1352 = vmatpush1.msra.mxu0 0.0
  %1353 = vmatprep.subr.mxu0 0.0
  %1354 = vmatpush1.msra.mxu0 0.0
  %1355 = vmatprep.subr.mxu0 0.0
  %1356 = vmatpush1.msra.mxu0 0.0
  %1357 = vmatprep.subr.mxu0 0.0
  %1358 = vmatpush1.msra.mxu0 0.0
  %1359 = vmatprep.subr.mxu0 0.0
  %1360 = vmatpush1.msra.mxu0 0.0
  %1361 = vmatprep.subr.mxu0 0.0
  %1362 = vmatpush1.msra.mxu0 0.0
  %1363 = vmatprep.subr.mxu0 0.0
  %1364 = vmatpush1.msra.mxu0 0.0
  %1365 = vmatprep.subr.mxu0 0.0
  %1366 = vmatpush1.msra.mxu0 0.0
  %1367 = vmatprep.subr.mxu0 0.0
  %1368 = vmatpush1.msra.mxu0 0.0
  %1369 = vmatprep.subr.mxu0 0.0
  %1370 = vmatpush1.msra.mxu0 0.0
  %1371 = vmatprep.subr.mxu0 0.0
  %1372 = vmatpush1.msra.mxu0 0.0
  %1373 = vmatprep.subr.mxu0 0.0
  %1374 = vmatpush1.msra.mxu0 0.0
  %1375 = vmatprep.mubr.f32.mxu0 0.0
  %1376 = vmatmul.mubr.f32.gmra.mrb[0].mxu0 %v1309
  %v1377 = vpop.f32.mrb[0].mxu0
  %v1378 = vadd.f32 0.0, %v1377
  %v1379 = vpop.f32.mrb[0].mxu0
  %1380 = vdwg.mxu0
  %v1382 = vsel %vm33, %v1291, 0
  %1384 = vmatprep.subr.mxu0 0.0
  %1385 = vmatpush1.msra.mxu0 %v24
  %1386 = vmatprep.subr.mxu0 0.0
  %1387 = vmatpush1.msra.mxu0 %v25
  %1388 = vmatprep.subr.mxu0 0.0
  %1389 = vmatpush1.msra.mxu0 %v26
  %1390 = vmatprep.subr.mxu0 0.0
  %1391 = vmatpush1.msra.mxu0 %v27
  %1392 = vmatprep.subr.mxu0 0.0
  %1393 = vmatpush1.msra.mxu0 0.0
  %1394 = vmatprep.subr.mxu0 0.0
  %1395 = vmatpush1.msra.mxu0 0.0
  %1396 = vmatprep.subr.mxu0 0.0
  %1397 = vmatpush1.msra.mxu0 0.0
  %1398 = vmatprep.subr.mxu0 0.0
  %1399 = vmatpush1.msra.mxu0 0.0
  %1400 = vmatprep.subr.mxu0 0.0
  %1401 = vmatpush1.msra.mxu0 0.0
  %1402 = vmatprep.subr.mxu0 0.0
  %1403 = vmatpush1.msra.mxu0 0.0
  %1404 = vmatprep.subr.mxu0 0.0
  %1405 = vmatpush1.msra.mxu0 0.0
  %1406 = vmatprep.subr.mxu0 0.0
  %1407 = vmatpush1.msra.mxu0 0.0
  %1408 = vmatprep.subr.mxu0 0.0
  %1409 = vmatpush1.msra.mxu0 0.0
  %1410 = vmatprep.subr.mxu0 0.0
  %1411 = vmatpush1.msra.mxu0 0.0
  %1412 = vmatprep.subr.mxu0 0.0
  %1413 = vmatpush1.msra.mxu0 0.0
  %1414 = vmatprep.subr.mxu0 0.0
  %1415 = vmatpush1.msra.mxu0 0.0
  %1416 = vmatprep.subr.mxu0 0.0
  %1417 = vmatpush1.msra.mxu0 0.0
  %1418 = vmatprep.subr.mxu0 0.0
  %1419 = vmatpush1.msra.mxu0 0.0
  %1420 = vmatprep.subr.mxu0 0.0
  %1421 = vmatpush1.msra.mxu0 0.0
  %1422 = vmatprep.subr.mxu0 0.0
  %1423 = vmatpush1.msra.mxu0 0.0
  %1424 = vmatprep.subr.mxu0 0.0
  %1425 = vmatpush1.msra.mxu0 0.0
  %1426 = vmatprep.subr.mxu0 0.0
  %1427 = vmatpush1.msra.mxu0 0.0
  %1428 = vmatprep.subr.mxu0 0.0
  %1429 = vmatpush1.msra.mxu0 0.0
  %1430 = vmatprep.subr.mxu0 0.0
  %1431 = vmatpush1.msra.mxu0 0.0
  %1432 = vmatprep.subr.mxu0 0.0
  %1433 = vmatpush1.msra.mxu0 0.0
  %1434 = vmatprep.subr.mxu0 0.0
  %1435 = vmatpush1.msra.mxu0 0.0
  %1436 = vmatprep.subr.mxu0 0.0
  %1437 = vmatpush1.msra.mxu0 0.0
  %1438 = vmatprep.subr.mxu0 0.0
  %1439 = vmatpush1.msra.mxu0 0.0
  %1440 = vmatprep.subr.mxu0 0.0
  %1441 = vmatpush1.msra.mxu0 0.0
  %1442 = vmatprep.subr.mxu0 0.0
  %1443 = vmatpush1.msra.mxu0 0.0
  %1444 = vmatprep.subr.mxu0 0.0
  %1445 = vmatpush1.msra.mxu0 0.0
  %1446 = vmatprep.subr.mxu0 0.0
  %1447 = vmatpush1.msra.mxu0 0.0
  %1448 = vmatprep.mubr.f32.mxu0 0.0
  %1449 = vmatmul.mubr.f32.gmra.mrb[0].mxu0 %v1382
  %v1450 = vpop.f32.mrb[0].mxu0
  %v1451 = vadd.f32 0.0, %v1450
  %v1452 = vpop.f32.mrb[0].mxu0
  %1453 = vdwg.mxu0
  %v1454 = vadd.f32 %v1307, %v1378
  %v1455 = vxor.u32 %v1454, 2147483648
  %v1456 = vmul.f32 %v1455, 1.442695
  %v1457 = vpow.pop %v1456
  %v1458 = vadd.f32 %v1457, 1.0
  %v1459 = vrcp.pop %v1458
  %v1460 = vmul.f32 1.0, %v1459
  %v1461 = vadd.f32 %v1378, %v190
  %v1464 = vunpack.c.l.s4 1983009808
  %v1465 = vunpack.c.0.s8 %v1464
  %v1466 = vlaneseq
  %v1467 = vshrl.u32 %v1466, 7
  %v1468 = vsub.s32 %v1465, %v1467
  %v1469 = vrot.slane %v1461, %v1468
  %1470 = vrot.lane.b32.xlu0 %v1469, 64
  %v1471 = vpop.permute.xlu0 %1470
  %v1473 = vmul.f32 %v1460, %v1471
  %1475 = vrot.lane.b32.xlu0 %v1473, 64
  %v1476 = vpop.permute.xlu0 %1475
  %v1478 = vadd.f32 %v1307, %v1476
  %v1479 = vtanh.pop %v1478
  %v1480 = vsub.f32 1.0, %v1460
  %1482 = vrot.lane.b32.xlu0 %v1479, 96
  %v1483 = vpop.permute.xlu0 %1482
  %v1485 = vmul.f32 %v1480, %v1483
  %v1486 = vmul.f32 %v1460, %v1236
  %v1487 = vadd.f32 %v1485, %v1486
  %v1490 = vunpack.c.l.s4 1983009808
  %v1491 = vunpack.c.0.s8 %v1490
  %v1492 = vlaneseq
  %v1493 = vshrl.u32 %v1492, 7
  %v1494 = vsub.s32 %v1491, %v1493
  %v1495 = vrot.slane %v1451, %v1494
  %1496 = vrot.lane.b32.xlu0 %v1495, 96
  %v1497 = vpop.permute.xlu0 %1496
  %v1499 = vadd.f32 %v1308, %v1497
  %v1500 = vxor.u32 %v1499, 2147483648
  %v1501 = vmul.f32 %v1500, 1.442695
  %v1502 = vpow.pop %v1501
  %v1503 = vadd.f32 %v1502, 1.0
  %v1504 = vrcp.pop %v1503
  %v1505 = vmul.f32 1.0, %v1504
  %v1507 = vrot.slane %v1308, 2
  %v1509 = vadd.f32 %v1507, %v1497
  %v1510 = vxor.u32 %v1509, 2147483648
  %v1511 = vmul.f32 %v1510, 1.442695
  %v1512 = vpow.pop %v1511
  %v1513 = vadd.f32 %v1512, 1.0
  %v1514 = vrcp.pop %v1513
  %v1515 = vmul.f32 1.0, %v1514
  %v1516 = vadd.f32 %v1451, %v253
  %v1519 = vunpack.c.l.s4 1983009808
  %v1520 = vunpack.c.0.s8 %v1519
  %v1521 = vlaneseq
  %v1522 = vshrl.u32 %v1521, 7
  %v1523 = vsub.s32 %v1520, %v1522
  %v1524 = vrot.slane %v1516, %v1523
  %1525 = vrot.lane.b32.xlu0 %v1524, 32
  %v1526 = vpop.permute.xlu0 %1525
  %v1528 = vmul.f32 %v1505, %v1526
  %1529 = vrot.lane.b32.xlu0 %v1308, 96
  %v1530 = vpop.permute.xlu0 %1529
  %v1531 = vrot.slane %v1530, 2
  %1534 = vrot.lane.b32.xlu0 %v1528, 32
  %v1535 = vpop.permute.xlu0 %1534
  %v1537 = vadd.f32 %v1531, %v1535
  %v1538 = vtanh.pop %v1537
  %v1539 = vsub.f32 1.0, %v1515
  %v1540 = vmul.f32 %v1539, %v1538
  %v1541 = vmul.f32 %v1515, %v1291
  %v1542 = vadd.f32 %v1540, %v1541
  %v1545 = vunpack.c.l.s4 1983009808
  %v1546 = vunpack.c.0.s8 %v1545
  %v1547 = vlaneseq
  %v1548 = vshrl.u32 %v1547, 7
  %v1549 = vsub.s32 %v1546, %v1548
  %v1550 = vrot.slane %v1487, %v1549
  %1551 = vrot.lane.b32.xlu0 %v1550, 96
  %v1552 = vpop.permute.xlu0 %1551
  %s1554 = scalar_lea.vmem %s5, 10
  %1555 = vst.msk [vmem:[%s1554] sm:$0x3] %vm293, %v1552
  %s1556 = scalar_lea.vmem %s5, 20
  %1557 = vst.msk [vmem:[%s1556] sm:$0x3] %vm293, %v1542
  %v1558 = vld [vmem:[%s299] sm:$0xf]
  %v1559 = vld [vmem:[%s297] sm:$0xf]
  %v1560 = vsel %vm33, %v1552, 0
  %1562 = vmatprep.subr.mxu0 0.0
  %1563 = vmatpush1.msra.mxu0 %v20
  %1564 = vmatprep.subr.mxu0 0.0
  %1565 = vmatpush1.msra.mxu0 %v21
  %1566 = vmatprep.subr.mxu0 0.0
  %1567 = vmatpush1.msra.mxu0 %v22
  %1568 = vmatprep.subr.mxu0 0.0
  %1569 = vmatpush1.msra.mxu0 %v23
  %1570 = vmatprep.subr.mxu0 0.0
  %1571 = vmatpush1.msra.mxu0 0.0
  %1572 = vmatprep.subr.mxu0 0.0
  %1573 = vmatpush1.msra.mxu0 0.0
  %1574 = vmatprep.subr.mxu0 0.0
  %1575 = vmatpush1.msra.mxu0 0.0
  %1576 = vmatprep.subr.mxu0 0.0
  %1577 = vmatpush1.msra.mxu0 0.0
  %1578 = vmatprep.subr.mxu0 0.0
  %1579 = vmatpush1.msra.mxu0 0.0
  %1580 = vmatprep.subr.mxu0 0.0
  %1581 = vmatpush1.msra.mxu0 0.0
  %1582 = vmatprep.subr.mxu0 0.0
  %1583 = vmatpush1.msra.mxu0 0.0
  %1584 = vmatprep.subr.mxu0 0.0
  %1585 = vmatpush1.msra.mxu0 0.0
  %1586 = vmatprep.subr.mxu0 0.0
  %1587 = vmatpush1.msra.mxu0 0.0
  %1588 = vmatprep.subr.mxu0 0.0
  %1589 = vmatpush1.msra.mxu0 0.0
  %1590 = vmatprep.subr.mxu0 0.0
  %1591 = vmatpush1.msra.mxu0 0.0
  %1592 = vmatprep.subr.mxu0 0.0
  %1593 = vmatpush1.msra.mxu0 0.0
  %1594 = vmatprep.subr.mxu0 0.0
  %1595 = vmatpush1.msra.mxu0 0.0
  %1596 = vmatprep.subr.mxu0 0.0
  %1597 = vmatpush1.msra.mxu0 0.0
  %1598 = vmatprep.subr.mxu0 0.0
  %1599 = vmatpush1.msra.mxu0 0.0
  %1600 = vmatprep.subr.mxu0 0.0
  %1601 = vmatpush1.msra.mxu0 0.0
  %1602 = vmatprep.subr.mxu0 0.0
  %1603 = vmatpush1.msra.mxu0 0.0
  %1604 = vmatprep.subr.mxu0 0.0
  %1605 = vmatpush1.msra.mxu0 0.0
  %1606 = vmatprep.subr.mxu0 0.0
  %1607 = vmatpush1.msra.mxu0 0.0
  %1608 = vmatprep.subr.mxu0 0.0
  %1609 = vmatpush1.msra.mxu0 0.0
  %1610 = vmatprep.subr.mxu0 0.0
  %1611 = vmatpush1.msra.mxu0 0.0
  %1612 = vmatprep.subr.mxu0 0.0
  %1613 = vmatpush1.msra.mxu0 0.0
  %1614 = vmatprep.subr.mxu0 0.0
  %1615 = vmatpush1.msra.mxu0 0.0
  %1616 = vmatprep.subr.mxu0 0.0
  %1617 = vmatpush1.msra.mxu0 0.0
  %1618 = vmatprep.subr.mxu0 0.0
  %1619 = vmatpush1.msra.mxu0 0.0
  %1620 = vmatprep.subr.mxu0 0.0
  %1621 = vmatpush1.msra.mxu0 0.0
  %1622 = vmatprep.subr.mxu0 0.0
  %1623 = vmatpush1.msra.mxu0 0.0
  %1624 = vmatprep.subr.mxu0 0.0
  %1625 = vmatpush1.msra.mxu0 0.0
  %1626 = vmatprep.mubr.f32.mxu0 0.0
  %1627 = vmatmul.mubr.f32.gmra.mrb[0].mxu0 %v1560
  %v1628 = vpop.f32.mrb[0].mxu0
  %v1629 = vadd.f32 0.0, %v1628
  %v1630 = vpop.f32.mrb[0].mxu0
  %1631 = vdwg.mxu0
  %v1633 = vsel %vm33, %v1542, 0
  %1635 = vmatprep.subr.mxu0 0.0
  %1636 = vmatpush1.msra.mxu0 %v24
  %1637 = vmatprep.subr.mxu0 0.0
  %1638 = vmatpush1.msra.mxu0 %v25
  %1639 = vmatprep.subr.mxu0 0.0
  %1640 = vmatpush1.msra.mxu0 %v26
  %1641 = vmatprep.subr.mxu0 0.0
  %1642 = vmatpush1.msra.mxu0 %v27
  %1643 = vmatprep.subr.mxu0 0.0
  %1644 = vmatpush1.msra.mxu0 0.0
  %1645 = vmatprep.subr.mxu0 0.0
  %1646 = vmatpush1.msra.mxu0 0.0
  %1647 = vmatprep.subr.mxu0 0.0
  %1648 = vmatpush1.msra.mxu0 0.0
  %1649 = vmatprep.subr.mxu0 0.0
  %1650 = vmatpush1.msra.mxu0 0.0
  %1651 = vmatprep.subr.mxu0 0.0
  %1652 = vmatpush1.msra.mxu0 0.0
  %1653 = vmatprep.subr.mxu0 0.0
  %1654 = vmatpush1.msra.mxu0 0.0
  %1655 = vmatprep.subr.mxu0 0.0
  %1656 = vmatpush1.msra.mxu0 0.0
  %1657 = vmatprep.subr.mxu0 0.0
  %1658 = vmatpush1.msra.mxu0 0.0
  %1659 = vmatprep.subr.mxu0 0.0
  %1660 = vmatpush1.msra.mxu0 0.0
  %1661 = vmatprep.subr.mxu0 0.0
  %1662 = vmatpush1.msra.mxu0 0.0
  %1663 = vmatprep.subr.mxu0 0.0
  %1664 = vmatpush1.msra.mxu0 0.0
  %1665 = vmatprep.subr.mxu0 0.0
  %1666 = vmatpush1.msra.mxu0 0.0
  %1667 = vmatprep.subr.mxu0 0.0
  %1668 = vmatpush1.msra.mxu0 0.0
  %1669 = vmatprep.subr.mxu0 0.0
  %1670 = vmatpush1.msra.mxu0 0.0
  %1671 = vmatprep.subr.mxu0 0.0
  %1672 = vmatpush1.msra.mxu0 0.0
  %1673 = vmatprep.subr.mxu0 0.0
  %1674 = vmatpush1.msra.mxu0 0.0
  %1675 = vmatprep.subr.mxu0 0.0
  %1676 = vmatpush1.msra.mxu0 0.0
  %1677 = vmatprep.subr.mxu0 0.0
  %1678 = vmatpush1.msra.mxu0 0.0
  %1679 = vmatprep.subr.mxu0 0.0
  %1680 = vmatpush1.msra.mxu0 0.0
  %1681 = vmatprep.subr.mxu0 0.0
  %1682 = vmatpush1.msra.mxu0 0.0
  %1683 = vmatprep.subr.mxu0 0.0
  %1684 = vmatpush1.msra.mxu0 0.0
  %1685 = vmatprep.subr.mxu0 0.0
  %1686 = vmatpush1.msra.mxu0 0.0
  %1687 = vmatprep.subr.mxu0 0.0
  %1688 = vmatpush1.msra.mxu0 0.0
  %1689 = vmatprep.subr.mxu0 0.0
  %1690 = vmatpush1.msra.mxu0 0.0
  %1691 = vmatprep.subr.mxu0 0.0
  %1692 = vmatpush1.msra.mxu0 0.0
  %1693 = vmatprep.subr.mxu0 0.0
  %1694 = vmatpush1.msra.mxu0 0.0
  %1695 = vmatprep.subr.mxu0 0.0
  %1696 = vmatpush1.msra.mxu0 0.0
  %1697 = vmatprep.subr.mxu0 0.0
  %1698 = vmatpush1.msra.mxu0 0.0
  %1699 = vmatprep.mubr.f32.mxu0 0.0
  %1700 = vmatmul.mubr.f32.gmra.mrb[0].mxu0 %v1633
  %v1701 = vpop.f32.mrb[0].mxu0
  %v1702 = vadd.f32 0.0, %v1701
  %v1703 = vpop.f32.mrb[0].mxu0
  %1704 = vdwg.mxu0
  %v1705 = vadd.f32 %v1558, %v1629
  %v1706 = vxor.u32 %v1705, 2147483648
  %v1707 = vmul.f32 %v1706, 1.442695
  %v1708 = vpow.pop %v1707
  %v1709 = vadd.f32 %v1708, 1.0
  %v1710 = vrcp.pop %v1709
  %v1711 = vmul.f32 1.0, %v1710
  %v1712 = vadd.f32 %v1629, %v190
  %v1715 = vunpack.c.l.s4 1983009808
  %v1716 = vunpack.c.0.s8 %v1715
  %v1717 = vlaneseq
  %v1718 = vshrl.u32 %v1717, 7
  %v1719 = vsub.s32 %v1716, %v1718
  %v1720 = vrot.slane %v1712, %v1719
  %1721 = vrot.lane.b32.xlu0 %v1720, 64
  %v1722 = vpop.permute.xlu0 %1721
  %v1724 = vmul.f32 %v1711, %v1722
  %1726 = vrot.lane.b32.xlu0 %v1724, 64
  %v1727 = vpop.permute.xlu0 %1726
  %v1729 = vadd.f32 %v1558, %v1727
  %v1730 = vtanh.pop %v1729
  %v1731 = vsub.f32 1.0, %v1711
  %1733 = vrot.lane.b32.xlu0 %v1730, 96
  %v1734 = vpop.permute.xlu0 %1733
  %v1736 = vmul.f32 %v1731, %v1734
  %v1737 = vmul.f32 %v1711, %v1487
  %v1738 = vadd.f32 %v1736, %v1737
  %v1741 = vunpack.c.l.s4 1983009808
  %v1742 = vunpack.c.0.s8 %v1741
  %v1743 = vlaneseq
  %v1744 = vshrl.u32 %v1743, 7
  %v1745 = vsub.s32 %v1742, %v1744
  %v1746 = vrot.slane %v1702, %v1745
  %1747 = vrot.lane.b32.xlu0 %v1746, 96
  %v1748 = vpop.permute.xlu0 %1747
  %v1750 = vadd.f32 %v1559, %v1748
  %v1751 = vxor.u32 %v1750, 2147483648
  %v1752 = vmul.f32 %v1751, 1.442695
  %v1753 = vpow.pop %v1752
  %v1754 = vadd.f32 %v1753, 1.0
  %v1755 = vrcp.pop %v1754
  %v1756 = vmul.f32 1.0, %v1755
  %v1758 = vrot.slane %v1559, 2
  %v1760 = vadd.f32 %v1758, %v1748
  %v1761 = vxor.u32 %v1760, 2147483648
  %v1762 = vmul.f32 %v1761, 1.442695
  %v1763 = vpow.pop %v1762
  %v1764 = vadd.f32 %v1763, 1.0
  %v1765 = vrcp.pop %v1764
  %v1766 = vmul.f32 1.0, %v1765
  %v1767 = vadd.f32 %v1702, %v253
  %v1770 = vunpack.c.l.s4 1983009808
  %v1771 = vunpack.c.0.s8 %v1770
  %v1772 = vlaneseq
  %v1773 = vshrl.u32 %v1772, 7
  %v1774 = vsub.s32 %v1771, %v1773
  %v1775 = vrot.slane %v1767, %v1774
  %1776 = vrot.lane.b32.xlu0 %v1775, 32
  %v1777 = vpop.permute.xlu0 %1776
  %v1779 = vmul.f32 %v1756, %v1777
  %1780 = vrot.lane.b32.xlu0 %v1559, 96
  %v1781 = vpop.permute.xlu0 %1780
  %v1782 = vrot.slane %v1781, 2
  %1785 = vrot.lane.b32.xlu0 %v1779, 32
  %v1786 = vpop.permute.xlu0 %1785
  %v1788 = vadd.f32 %v1782, %v1786
  %v1789 = vtanh.pop %v1788
  %v1790 = vsub.f32 1.0, %v1766
  %v1791 = vmul.f32 %v1790, %v1789
  %v1792 = vmul.f32 %v1766, %v1542
  %v1793 = vadd.f32 %v1791, %v1792
  %v1796 = vunpack.c.l.s4 1983009808
  %v1797 = vunpack.c.0.s8 %v1796
  %v1798 = vlaneseq
  %v1799 = vshrl.u32 %v1798, 7
  %v1800 = vsub.s32 %v1797, %v1799
  %v1801 = vrot.slane %v1738, %v1800
  %1802 = vrot.lane.b32.xlu0 %v1801, 96
  %v1803 = vpop.permute.xlu0 %1802
  %s1805 = scalar_lea.vmem %s5, 12
  %1806 = vst.msk [vmem:[%s1805] sm:$0x3] %vm293, %v1803
  %s1807 = scalar_lea.vmem %s5, 18
  %1808 = vst.msk [vmem:[%s1807] sm:$0x3] %vm293, %v1793
  %v1809 = vld [vmem:[%s31] sm:$0xf]
  %v1810 = vld [vmem:[%s0] sm:$0xf]
  %v1811 = vsel %vm33, %v1803, 0
  %1813 = vmatprep.subr.mxu0 0.0
  %1814 = vmatpush1.msra.mxu0 %v20
  %1815 = vmatprep.subr.mxu0 0.0
  %1816 = vmatpush1.msra.mxu0 %v21
  %1817 = vmatprep.subr.mxu0 0.0
  %1818 = vmatpush1.msra.mxu0 %v22
  %1819 = vmatprep.subr.mxu0 0.0
  %1820 = vmatpush1.msra.mxu0 %v23
  %1821 = vmatprep.subr.mxu0 0.0
  %1822 = vmatpush1.msra.mxu0 0.0
  %1823 = vmatprep.subr.mxu0 0.0
  %1824 = vmatpush1.msra.mxu0 0.0
  %1825 = vmatprep.subr.mxu0 0.0
  %1826 = vmatpush1.msra.mxu0 0.0
  %1827 = vmatprep.subr.mxu0 0.0
  %1828 = vmatpush1.msra.mxu0 0.0
  %1829 = vmatprep.subr.mxu0 0.0
  %1830 = vmatpush1.msra.mxu0 0.0
  %1831 = vmatprep.subr.mxu0 0.0
  %1832 = vmatpush1.msra.mxu0 0.0
  %1833 = vmatprep.subr.mxu0 0.0
  %1834 = vmatpush1.msra.mxu0 0.0
  %1835 = vmatprep.subr.mxu0 0.0
  %1836 = vmatpush1.msra.mxu0 0.0
  %1837 = vmatprep.subr.mxu0 0.0
  %1838 = vmatpush1.msra.mxu0 0.0
  %1839 = vmatprep.subr.mxu0 0.0
  %1840 = vmatpush1.msra.mxu0 0.0
  %1841 = vmatprep.subr.mxu0 0.0
  %1842 = vmatpush1.msra.mxu0 0.0
  %1843 = vmatprep.subr.mxu0 0.0
  %1844 = vmatpush1.msra.mxu0 0.0
  %1845 = vmatprep.subr.mxu0 0.0
  %1846 = vmatpush1.msra.mxu0 0.0
  %1847 = vmatprep.subr.mxu0 0.0
  %1848 = vmatpush1.msra.mxu0 0.0
  %1849 = vmatprep.subr.mxu0 0.0
  %1850 = vmatpush1.msra.mxu0 0.0
  %1851 = vmatprep.subr.mxu0 0.0
  %1852 = vmatpush1.msra.mxu0 0.0
  %1853 = vmatprep.subr.mxu0 0.0
  %1854 = vmatpush1.msra.mxu0 0.0
  %1855 = vmatprep.subr.mxu0 0.0
  %1856 = vmatpush1.msra.mxu0 0.0
  %1857 = vmatprep.subr.mxu0 0.0
  %1858 = vmatpush1.msra.mxu0 0.0
  %1859 = vmatprep.subr.mxu0 0.0
  %1860 = vmatpush1.msra.mxu0 0.0
  %1861 = vmatprep.subr.mxu0 0.0
  %1862 = vmatpush1.msra.mxu0 0.0
  %1863 = vmatprep.subr.mxu0 0.0
  %1864 = vmatpush1.msra.mxu0 0.0
  %1865 = vmatprep.subr.mxu0 0.0
  %1866 = vmatpush1.msra.mxu0 0.0
  %1867 = vmatprep.subr.mxu0 0.0
  %1868 = vmatpush1.msra.mxu0 0.0
  %1869 = vmatprep.subr.mxu0 0.0
  %1870 = vmatpush1.msra.mxu0 0.0
  %1871 = vmatprep.subr.mxu0 0.0
  %1872 = vmatpush1.msra.mxu0 0.0
  %1873 = vmatprep.subr.mxu0 0.0
  %1874 = vmatpush1.msra.mxu0 0.0
  %1875 = vmatprep.subr.mxu0 0.0
  %1876 = vmatpush1.msra.mxu0 0.0
  %1877 = vmatprep.mubr.f32.mxu0 0.0
  %1878 = vmatmul.mubr.f32.gmra.mrb[0].mxu0 %v1811
  %v1879 = vpop.f32.mrb[0].mxu0
  %v1880 = vadd.f32 0.0, %v1879
  %v1881 = vpop.f32.mrb[0].mxu0
  %1882 = vdwg.mxu0
  %v1884 = vsel %vm33, %v1793, 0
  %1886 = vmatprep.subr.mxu0 0.0
  %1887 = vmatpush1.msra.mxu0 %v24
  %1888 = vmatprep.subr.mxu0 0.0
  %1889 = vmatpush1.msra.mxu0 %v25
  %1890 = vmatprep.subr.mxu0 0.0
  %1891 = vmatpush1.msra.mxu0 %v26
  %1892 = vmatprep.subr.mxu0 0.0
  %1893 = vmatpush1.msra.mxu0 %v27
  %1894 = vmatprep.subr.mxu0 0.0
  %1895 = vmatpush1.msra.mxu0 0.0
  %1896 = vmatprep.subr.mxu0 0.0
  %1897 = vmatpush1.msra.mxu0 0.0
  %1898 = vmatprep.subr.mxu0 0.0
  %1899 = vmatpush1.msra.mxu0 0.0
  %1900 = vmatprep.subr.mxu0 0.0
  %1901 = vmatpush1.msra.mxu0 0.0
  %1902 = vmatprep.subr.mxu0 0.0
  %1903 = vmatpush1.msra.mxu0 0.0
  %1904 = vmatprep.subr.mxu0 0.0
  %1905 = vmatpush1.msra.mxu0 0.0
  %1906 = vmatprep.subr.mxu0 0.0
  %1907 = vmatpush1.msra.mxu0 0.0
  %1908 = vmatprep.subr.mxu0 0.0
  %1909 = vmatpush1.msra.mxu0 0.0
  %1910 = vmatprep.subr.mxu0 0.0
  %1911 = vmatpush1.msra.mxu0 0.0
  %1912 = vmatprep.subr.mxu0 0.0
  %1913 = vmatpush1.msra.mxu0 0.0
  %1914 = vmatprep.subr.mxu0 0.0
  %1915 = vmatpush1.msra.mxu0 0.0
  %1916 = vmatprep.subr.mxu0 0.0
  %1917 = vmatpush1.msra.mxu0 0.0
  %1918 = vmatprep.subr.mxu0 0.0
  %1919 = vmatpush1.msra.mxu0 0.0
  %1920 = vmatprep.subr.mxu0 0.0
  %1921 = vmatpush1.msra.mxu0 0.0
  %1922 = vmatprep.subr.mxu0 0.0
  %1923 = vmatpush1.msra.mxu0 0.0
  %1924 = vmatprep.subr.mxu0 0.0
  %1925 = vmatpush1.msra.mxu0 0.0
  %1926 = vmatprep.subr.mxu0 0.0
  %1927 = vmatpush1.msra.mxu0 0.0
  %1928 = vmatprep.subr.mxu0 0.0
  %1929 = vmatpush1.msra.mxu0 0.0
  %1930 = vmatprep.subr.mxu0 0.0
  %1931 = vmatpush1.msra.mxu0 0.0
  %1932 = vmatprep.subr.mxu0 0.0
  %1933 = vmatpush1.msra.mxu0 0.0
  %1934 = vmatprep.subr.mxu0 0.0
  %1935 = vmatpush1.msra.mxu0 0.0
  %1936 = vmatprep.subr.mxu0 0.0
  %1937 = vmatpush1.msra.mxu0 0.0
  %1938 = vmatprep.subr.mxu0 0.0
  %1939 = vmatpush1.msra.mxu0 0.0
  %1940 = vmatprep.subr.mxu0 0.0
  %1941 = vmatpush1.msra.mxu0 0.0
  %1942 = vmatprep.subr.mxu0 0.0
  %1943 = vmatpush1.msra.mxu0 0.0
  %1944 = vmatprep.subr.mxu0 0.0
  %1945 = vmatpush1.msra.mxu0 0.0
  %1946 = vmatprep.subr.mxu0 0.0
  %1947 = vmatpush1.msra.mxu0 0.0
  %1948 = vmatprep.subr.mxu0 0.0
  %1949 = vmatpush1.msra.mxu0 0.0
  %1950 = vmatprep.mubr.f32.mxu0 0.0
  %1951 = vmatmul.mubr.f32.gmra.mrb[0].mxu0 %v1884
  %v1952 = vpop.f32.mrb[0].mxu0
  %v1953 = vadd.f32 0.0, %v1952
  %v1954 = vpop.f32.mrb[0].mxu0
  %1955 = vdwg.mxu0
  %v1956 = vadd.f32 %v1809, %v1880
  %v1957 = vxor.u32 %v1956, 2147483648
  %v1958 = vmul.f32 %v1957, 1.442695
  %v1959 = vpow.pop %v1958
  %v1960 = vadd.f32 %v1959, 1.0
  %v1961 = vrcp.pop %v1960
  %v1962 = vmul.f32 1.0, %v1961
  %v1963 = vadd.f32 %v1880, %v190
  %v1966 = vunpack.c.l.s4 1983009808
  %v1967 = vunpack.c.0.s8 %v1966
  %v1968 = vlaneseq
  %v1969 = vshrl.u32 %v1968, 7
  %v1970 = vsub.s32 %v1967, %v1969
  %v1971 = vrot.slane %v1963, %v1970
  %1972 = vrot.lane.b32.xlu0 %v1971, 64
  %v1973 = vpop.permute.xlu0 %1972
  %v1975 = vmul.f32 %v1962, %v1973
  %1977 = vrot.lane.b32.xlu0 %v1975, 64
  %v1978 = vpop.permute.xlu0 %1977
  %v1980 = vadd.f32 %v1809, %v1978
  %v1981 = vtanh.pop %v1980
  %v1982 = vsub.f32 1.0, %v1962
  %1984 = vrot.lane.b32.xlu0 %v1981, 96
  %v1985 = vpop.permute.xlu0 %1984
  %v1987 = vmul.f32 %v1982, %v1985
  %v1988 = vmul.f32 %v1962, %v1738
  %v1989 = vadd.f32 %v1987, %v1988
  %v1992 = vunpack.c.l.s4 1983009808
  %v1993 = vunpack.c.0.s8 %v1992
  %v1994 = vlaneseq
  %v1995 = vshrl.u32 %v1994, 7
  %v1996 = vsub.s32 %v1993, %v1995
  %v1997 = vrot.slane %v1953, %v1996
  %1998 = vrot.lane.b32.xlu0 %v1997, 96
  %v1999 = vpop.permute.xlu0 %1998
  %v2001 = vadd.f32 %v1810, %v1999
  %v2002 = vxor.u32 %v2001, 2147483648
  %v2003 = vmul.f32 %v2002, 1.442695
  %v2004 = vpow.pop %v2003
  %v2005 = vadd.f32 %v2004, 1.0
  %v2006 = vrcp.pop %v2005
  %v2007 = vmul.f32 1.0, %v2006
  %v2009 = vrot.slane %v1810, 2
  %v2011 = vadd.f32 %v2009, %v1999
  %v2012 = vxor.u32 %v2011, 2147483648
  %v2013 = vmul.f32 %v2012, 1.442695
  %v2014 = vpow.pop %v2013
  %v2015 = vadd.f32 %v2014, 1.0
  %v2016 = vrcp.pop %v2015
  %v2017 = vmul.f32 1.0, %v2016
  %v2018 = vadd.f32 %v1953, %v253
  %v2021 = vunpack.c.l.s4 1983009808
  %v2022 = vunpack.c.0.s8 %v2021
  %v2023 = vlaneseq
  %v2024 = vshrl.u32 %v2023, 7
  %v2025 = vsub.s32 %v2022, %v2024
  %v2026 = vrot.slane %v2018, %v2025
  %2027 = vrot.lane.b32.xlu0 %v2026, 32
  %v2028 = vpop.permute.xlu0 %2027
  %v2030 = vmul.f32 %v2007, %v2028
  %2031 = vrot.lane.b32.xlu0 %v1810, 96
  %v2032 = vpop.permute.xlu0 %2031
  %v2033 = vrot.slane %v2032, 2
  %2036 = vrot.lane.b32.xlu0 %v2030, 32
  %v2037 = vpop.permute.xlu0 %2036
  %v2039 = vadd.f32 %v2033, %v2037
  %v2040 = vtanh.pop %v2039
  %v2041 = vsub.f32 1.0, %v2017
  %v2042 = vmul.f32 %v2041, %v2040
  %v2043 = vmul.f32 %v2017, %v1793
  %v2044 = vadd.f32 %v2042, %v2043
  %v2047 = vunpack.c.l.s4 1983009808
  %v2048 = vunpack.c.0.s8 %v2047
  %v2049 = vlaneseq
  %v2050 = vshrl.u32 %v2049, 7
  %v2051 = vsub.s32 %v2048, %v2050
  %v2052 = vrot.slane %v1989, %v2051
  %2053 = vrot.lane.b32.xlu0 %v2052, 96
  %v2054 = vpop.permute.xlu0 %2053
  %s2056 = scalar_lea.vmem %s5, 14
  %2057 = vst.msk [vmem:[%s2056] sm:$0x3] %vm293, %v2054
  %s2058 = scalar_lea.vmem %s5, 16
  %2059 = vst.msk [vmem:[%s2058] sm:$0x3] %vm293, %v2044
  // Predicated region
  $region22: #{forward.6} parent=0 // pred_check
    _
  $region23: #{forward.6} parent=0 // pred_check_branch
    %2061 = sbr.rel (0) target = $region25
  $region24: #{forward.6} parent=0 // pred_region
    _
  $region25: #{forward.6} parent=0 // pred_fallthru
    _
  // Predicated region
  $region26: #{forward.6} parent=0 // pred_check
    _
  $region27: #{forward.6} parent=0 // pred_check_branch
    %2063 = sbr.rel (0) target = $region29
  $region28: #{forward.6} parent=0 // pred_region
    _
  $region29: #{forward.6} parent=0 // pred_fallthru
    _

// kernel: forward.7
$region0: #{forward.7}
  #allocation0 [shape = 'u32[]', space=smem, size = 0x4, offset = 0x4, fixed_abs, tag = 'smem constant byte address 0x4 - core index']
  #allocation1 [shape = 'u32[144,128]{1,0:T(1,128)}', space=vmem, size = 0x12000, scoped, tag = 'internal scratch']
  %s0 = inlined_call_operand.vmem [shape: f32[16,64], index: 0, kind: input, shape index: {}]
  %s1 = inlined_call_operand.vmem [shape: f32[2,1,8], index: 1, kind: input, shape index: {}]
  %s2 = inlined_call_operand.vmem [shape: f32[64,192], index: 2, kind: input, shape index: {}]
  %s3 = inlined_call_operand.vmem [shape: f32[1,192], index: 3, kind: input, shape index: {}]
  %s4 = inlined_call_operand.vmem [shape: f32[64,64], index: 4, kind: input, shape index: {}]
  %s5 = inlined_call_operand.vmem [shape: f32[1,64], index: 5, kind: input, shape index: {}]
  %s6 = inlined_call_operand.vmem [shape: f32[1,64], index: 6, kind: input, shape index: {}]
  %s7 = inlined_call_operand.vmem [shape: f32[1,64], index: 7, kind: input, shape index: {}]
  %s8 = inlined_call_operand.vmem [shape: f32[64,64], index: 8, kind: input, shape index: {}]
  %s9 = inlined_call_operand.vmem [shape: f32[1,64], index: 9, kind: input, shape index: {}]
  %s10 = inlined_call_operand.vmem [shape: f32[64,64], index: 10, kind: input, shape index: {}]
  %s11 = inlined_call_operand.vmem [shape: f32[1,64], index: 11, kind: input, shape index: {}]
  %s12 = inlined_call_operand.vmem [shape: f32[1,64], index: 12, kind: input, shape index: {}]
  %s13 = inlined_call_operand.vmem [shape: f32[1,64], index: 13, kind: input, shape index: {}]
  %s14 = inlined_call_operand.vmem [shape: f32[16,64], index: 14, kind: output, shape index: {}]
  %s15 = sld [smem:[#allocation0]]
  $region66: #{forward.7} parent=0
    _
  %s17 = ssub.s32 1, %s15
  %s18 = scalar_select 0, %s17, %s15
  // Predicated region
  $region2: #{forward.7} parent=0 // pred_check
    _
  $region3: #{forward.7} parent=0 // pred_check_branch
    %20 = sbr.rel (0) target = $region5
  $region4: #{forward.7} parent=0 // pred_region
    _
  $region5: #{forward.7} parent=0 // pred_fallthru
    _
  // Predicated region
  $region6: #{forward.7} parent=0 // pred_check
    _
  $region7: #{forward.7} parent=0 // pred_check_branch
    %22 = sbr.rel (0) target = $region9
  $region8: #{forward.7} parent=0 // pred_region
    _
  $region9: #{forward.7} parent=0 // pred_fallthru
    _
  // Predicated region
  $region10: #{forward.7} parent=0 // pred_check
    _
  $region11: #{forward.7} parent=0 // pred_check_branch
    %24 = sbr.rel (0) target = $region13
  $region12: #{forward.7} parent=0 // pred_region
    _
  $region13: #{forward.7} parent=0 // pred_fallthru
    _
  // Predicated region
  $region14: #{forward.7} parent=0 // pred_check
    _
  $region15: #{forward.7} parent=0 // pred_check_branch
    %26 = sbr.rel (0) target = $region17
  $region16: #{forward.7} parent=0 // pred_region
    _
  $region17: #{forward.7} parent=0 // pred_fallthru
    _
  // Predicated region
  $region18: #{forward.7} parent=0 // pred_check
    _
  $region19: #{forward.7} parent=0 // pred_check_branch
    %28 = sbr.rel (0) target = $region21
  $region20: #{forward.7} parent=0 // pred_region
    _
  $region21: #{forward.7} parent=0 // pred_fallthru
    _
  // Predicated region
  $region22: #{forward.7} parent=0 // pred_check
    _
  $region23: #{forward.7} parent=0 // pred_check_branch
    %30 = sbr.rel (0) target = $region25
  $region24: #{forward.7} parent=0 // pred_region
    _
  $region25: #{forward.7} parent=0 // pred_fallthru
    _
  // Predicated region
  $region26: #{forward.7} parent=0 // pred_check
    _
  $region27: #{forward.7} parent=0 // pred_check_branch
    %32 = sbr.rel (0) target = $region29
  $region28: #{forward.7} parent=0 // pred_region
    _
  $region29: #{forward.7} parent=0 // pred_fallthru
    _
  // Predicated region
  $region30: #{forward.7} parent=0 // pred_check
    _
  $region31: #{forward.7} parent=0 // pred_check_branch
    %34 = sbr.rel (0) target = $region33
  $region32: #{forward.7} parent=0 // pred_region
    _
  $region33: #{forward.7} parent=0 // pred_fallthru
    _
  // Predicated region
  $region34: #{forward.7} parent=0 // pred_check
    _
  $region35: #{forward.7} parent=0 // pred_check_branch
    %36 = sbr.rel (0) target = $region37
  $region36: #{forward.7} parent=0 // pred_region
    _
  $region37: #{forward.7} parent=0 // pred_fallthru
    _
  // Predicated region
  $region38: #{forward.7} parent=0 // pred_check
    _
  $region39: #{forward.7} parent=0 // pred_check_branch
    %38 = sbr.rel (0) target = $region41
  $region40: #{forward.7} parent=0 // pred_region
    _
  $region41: #{forward.7} parent=0 // pred_fallthru
    _
  // Predicated region
  $region42: #{forward.7} parent=0 // pred_check
    _
  $region43: #{forward.7} parent=0 // pred_check_branch
    %40 = sbr.rel (0) target = $region45
  $region44: #{forward.7} parent=0 // pred_region
    _
  $region45: #{forward.7} parent=0 // pred_fallthru
    _
  // Predicated region
  $region46: #{forward.7} parent=0 // pred_check
    _
  $region47: #{forward.7} parent=0 // pred_check_branch
    %42 = sbr.rel (0) target = $region49
  $region48: #{forward.7} parent=0 // pred_region
    _
  $region49: #{forward.7} parent=0 // pred_fallthru
    _
  // Predicated region
  $region50: #{forward.7} parent=0 // pred_check
    _
  $region51: #{forward.7} parent=0 // pred_check_branch
    %44 = sbr.rel (0) target = $region53
  $region52: #{forward.7} parent=0 // pred_region
    _
  $region53: #{forward.7} parent=0 // pred_fallthru
    _
  // Predicated region
  $region54: #{forward.7} parent=0 // pred_check
    _
  $region55: #{forward.7} parent=0 // pred_check_branch
    %46 = sbr.rel (0) target = $region57
  $region56: #{forward.7} parent=0 // pred_region
    _
  $region57: #{forward.7} parent=0 // pred_fallthru
    _
  %v47 = vld [vmem:[%s0] sm:$0xff]
  %v48 = vld [vmem:[%s0 + $0x8] sm:$0xff]
  %v49 = vld [vmem:[%s4] sm:$0xff]
  %v50 = vld [vmem:[%s4 + $0x8] sm:$0xff]
  %v51 = vld [vmem:[%s4 + $0x10] sm:$0xff]
  %v52 = vld [vmem:[%s4 + $0x18] sm:$0xff]
  %v53 = vld [vmem:[%s4 + $0x20] sm:$0xff]
  %v54 = vld [vmem:[%s4 + $0x28] sm:$0xff]
  %v55 = vld [vmem:[%s4 + $0x30] sm:$0xff]
  %v56 = vld [vmem:[%s4 + $0x38] sm:$0xff]
  %v57 = vld [vmem:[%s2] sm:$0xff]
  %v58 = vld [vmem:[%s2 + $0x8] sm:$0xff]
  %v59 = vld [vmem:[%s2 + $0x10] sm:$0xff]
  %v60 = vld [vmem:[%s2 + $0x18] sm:$0xff]
  %v61 = vld [vmem:[%s2 + $0x20] sm:$0xff]
  %v62 = vld [vmem:[%s2 + $0x28] sm:$0xff]
  %v63 = vld [vmem:[%s2 + $0x30] sm:$0xff]
  %v64 = vld [vmem:[%s2 + $0x38] sm:$0xff]
  %v65 = vld [vmem:[%s2 + $0x40] sm:$0xff]
  %v66 = vld [vmem:[%s2 + $0x48] sm:$0xff]
  %v67 = vld [vmem:[%s2 + $0x50] sm:$0xff]
  %v68 = vld [vmem:[%s2 + $0x58] sm:$0xff]
  %v69 = vld [vmem:[%s2 + $0x60] sm:$0xff]
  %v70 = vld [vmem:[%s2 + $0x68] sm:$0xff]
  %v71 = vld [vmem:[%s2 + $0x70] sm:$0xff]
  %v72 = vld [vmem:[%s2 + $0x78] sm:$0xff]
  %v73 = vld [vmem:[%s3] sm:$0x3]
  %v75 = vlaneseq
  %v76 = vshrl.u32 %v75, 7
  %v77 = vsub.s32 0, %v76
  %v78 = vrot.slane %v73, %v77
  %v79 = vlaneseq
  %v80 = vshrl.u32 %v79, 7
  %v81 = vsub.s32 1, %v80
  %v82 = vrot.slane %v73, %v81
  %vm85 = vcmask 523264
  %v87 = vsel %vm85, %v47, 0
  %v90 = vsel %vm85, %v48, 0
  %92 = vmatprep.subr.mxu0 %v58
  %93 = vmatpush1.msra.mxu0 %v57
  %94 = vmatprep.subr.mxu0 %v60
  %95 = vmatpush1.msra.mxu0 %v59
  %96 = vmatprep.subr.mxu0 %v62
  %97 = vmatpush1.msra.mxu0 %v61
  %98 = vmatprep.subr.mxu0 %v64
  %99 = vmatpush1.msra.mxu0 %v63
  %100 = vmatprep.subr.mxu0 %v66
  %101 = vmatpush1.msra.mxu0 %v65
  %102 = vmatprep.subr.mxu0 %v68
  %103 = vmatpush1.msra.mxu0 %v67
  %104 = vmatprep.subr.mxu0 %v70
  %105 = vmatpush1.msra.mxu0 %v69
  %106 = vmatprep.subr.mxu0 %v72
  %107 = vmatpush1.msra.mxu0 %v71
  %108 = vmatprep.subr.mxu0 0.0
  %109 = vmatpush1.msra.mxu0 0.0
  %110 = vmatprep.subr.mxu0 0.0
  %111 = vmatpush1.msra.mxu0 0.0
  %112 = vmatprep.subr.mxu0 0.0
  %113 = vmatpush1.msra.mxu0 0.0
  %114 = vmatprep.subr.mxu0 0.0
  %115 = vmatpush1.msra.mxu0 0.0
  %116 = vmatprep.subr.mxu0 0.0
  %117 = vmatpush1.msra.mxu0 0.0
  %118 = vmatprep.subr.mxu0 0.0
  %119 = vmatpush1.msra.mxu0 0.0
  %120 = vmatprep.subr.mxu0 0.0
  %121 = vmatpush1.msra.mxu0 0.0
  %122 = vmatprep.subr.mxu0 0.0
  %123 = vmatpush1.msra.mxu0 0.0
  %124 = vmatprep.subr.mxu0 0.0
  %125 = vmatpush1.msra.mxu0 0.0
  %126 = vmatprep.subr.mxu0 0.0
  %127 = vmatpush1.msra.mxu0 0.0
  %128 = vmatprep.subr.mxu0 0.0
  %129 = vmatpush1.msra.mxu0 0.0
  %130 = vmatprep.subr.mxu0 0.0
  %131 = vmatpush1.msra.mxu0 0.0
  %132 = vmatprep.subr.mxu0 0.0
  %133 = vmatpush1.msra.mxu0 0.0
  %134 = vmatprep.subr.mxu0 0.0
  %135 = vmatpush1.msra.mxu0 0.0
  %136 = vmatprep.subr.mxu0 0.0
  %137 = vmatpush1.msra.mxu0 0.0
  %138 = vmatprep.subr.mxu0 0.0
  %139 = vmatpush1.msra.mxu0 0.0
  %140 = vmatprep.subr.mxu0 0.0
  %141 = vmatpush1.msra.mxu0 0.0
  %142 = vmatprep.subr.mxu0 0.0
  %143 = vmatpush1.msra.mxu0 0.0
  %144 = vmatprep.subr.mxu0 0.0
  %145 = vmatpush1.msra.mxu0 0.0
  %146 = vmatprep.subr.mxu0 0.0
  %147 = vmatpush1.msra.mxu0 0.0
  %148 = vmatprep.subr.mxu0 0.0
  %149 = vmatpush1.msra.mxu0 0.0
  %150 = vmatprep.subr.mxu0 0.0
  %151 = vmatpush1.msra.mxu0 0.0
  %152 = vmatprep.subr.mxu0 0.0
  %153 = vmatpush1.msra.mxu0 0.0
  %154 = vmatprep.subr.mxu0 0.0
  %155 = vmatpush1.msra.mxu0 0.0
  %156 = vmatprep.mubr.f32.mxu0 0.0
  %157 = vmatmul.mubr.f32.gmra.mrb[0].mxu0 %v87
  %v158 = vpop.f32.mrb[0].mxu0
  %v159 = vadd.f32 %v78, %v158
  %v160 = vpop.f32.mrb[0].mxu0
  %v161 = vadd.f32 %v82, %v160
  %162 = vmatprep.mubr.f32.mxu0 0.0
  %163 = vmatmul.mubr.f32.gmra.mrb[0].mxu0 %v90
  %v164 = vpop.f32.mrb[0].mxu0
  %v165 = vadd.f32 %v78, %v164
  %v166 = vpop.f32.mrb[0].mxu0
  %v167 = vadd.f32 %v82, %v166
  %168 = vdwg.mxu0
  %v169 = vld [vmem:[%s1] sm:$0x1]
  %171 = vrot.lane.b32.xlu0 %v159, 64
  %v172 = vpop.permute.xlu0 %171
  %vm173 = vcmask 130048
  %v174 = vsel %vm173, %v159, 0
  %v176 = vsel %vm173, %v172, 0
  %178 = vmatprep.subr.mxu0 0.0
  %179 = vmatpush1.xpose.msra.mxu0 %v176
  %180 = vmatprep.subr.mxu0 0.0
  %181 = vmatpush1.xpose.msra.mxu0 0.0
  %182 = vmatprep.subr.mxu0 0.0
  %183 = vmatpush1.xpose.msra.mxu0 0.0
  %184 = vmatprep.subr.mxu0 0.0
  %185 = vmatpush1.xpose.msra.mxu0 0.0
  %186 = vmatprep.subr.mxu0 0.0
  %187 = vmatpush1.xpose.msra.mxu0 0.0
  %188 = vmatprep.subr.mxu0 0.0
  %189 = vmatpush1.xpose.msra.mxu0 0.0
  %190 = vmatprep.subr.mxu0 0.0
  %191 = vmatpush1.xpose.msra.mxu0 0.0
  %192 = vmatprep.subr.mxu0 0.0
  %193 = vmatpush1.xpose.msra.mxu0 0.0
  %194 = vmatprep.subr.mxu0 0.0
  %195 = vmatpush1.xpose.msra.mxu0 0.0
  %196 = vmatprep.subr.mxu0 0.0
  %197 = vmatpush1.xpose.msra.mxu0 0.0
  %198 = vmatprep.subr.mxu0 0.0
  %199 = vmatpush1.xpose.msra.mxu0 0.0
  %200 = vmatprep.subr.mxu0 0.0
  %201 = vmatpush1.xpose.msra.mxu0 0.0
  %202 = vmatprep.subr.mxu0 0.0
  %203 = vmatpush1.xpose.msra.mxu0 0.0
  %204 = vmatprep.subr.mxu0 0.0
  %205 = vmatpush1.xpose.msra.mxu0 0.0
  %206 = vmatprep.subr.mxu0 0.0
  %207 = vmatpush1.xpose.msra.mxu0 0.0
  %208 = vmatprep.subr.mxu0 0.0
  %209 = vmatpush1.xpose.msra.mxu0 0.0
  %210 = vmatprep.subr.mxu0 0.0
  %211 = vmatpush1.xpose.msra.mxu0 0.0
  %212 = vmatprep.subr.mxu0 0.0
  %213 = vmatpush1.xpose.msra.mxu0 0.0
  %214 = vmatprep.subr.mxu0 0.0
  %215 = vmatpush1.xpose.msra.mxu0 0.0
  %216 = vmatprep.subr.mxu0 0.0
  %217 = vmatpush1.xpose.msra.mxu0 0.0
  %218 = vmatprep.subr.mxu0 0.0
  %219 = vmatpush1.xpose.msra.mxu0 0.0
  %220 = vmatprep.subr.mxu0 0.0
  %221 = vmatpush1.xpose.msra.mxu0 0.0
  %222 = vmatprep.subr.mxu0 0.0
  %223 = vmatpush1.xpose.msra.mxu0 0.0
  %224 = vmatprep.subr.mxu0 0.0
  %225 = vmatpush1.xpose.msra.mxu0 0.0
  %226 = vmatprep.subr.mxu0 0.0
  %227 = vmatpush1.xpose.msra.mxu0 0.0
  %228 = vmatprep.subr.mxu0 0.0
  %229 = vmatpush1.xpose.msra.mxu0 0.0
  %230 = vmatprep.subr.mxu0 0.0
  %231 = vmatpush1.xpose.msra.mxu0 0.0
  %232 = vmatprep.subr.mxu0 0.0
  %233 = vmatpush1.xpose.msra.mxu0 0.0
  %234 = vmatprep.subr.mxu0 0.0
  %235 = vmatpush1.xpose.msra.mxu0 0.0
  %236 = vmatprep.subr.mxu0 0.0
  %237 = vmatpush1.xpose.msra.mxu0 0.0
  %238 = vmatprep.subr.mxu0 0.0
  %239 = vmatpush1.xpose.msra.mxu0 0.0
  %240 = vmatprep.subr.mxu0 0.0
  %241 = vmatpush1.xpose.msra.mxu0 0.0
  %242 = vmatprep.mubr.f32.mxu0 0.0
  %243 = vmatmul.mubr.f32.gmra.mrb[0].mxu0 %v174
  %v244 = vpop.f32.mrb[0].mxu0
  %v245 = vadd.f32 0.0, %v244
  %v246 = vpop.f32.mrb[0].mxu0
  %247 = vdwg.mxu0
  %v248 = vmul.f32 %v245, 0.25
  %v250 = vlaneseq
  %v251 = vshrl.u32 %v250, 7
  %v252 = vsub.s32 0, %v251
  %v253 = vrot.slane %v169, %v252
  %v255 = vadd.f32 %v248, %v253
  %vm256 = vcmask 64512
  %v257 = vsel %vm256, %v255, -inf
  %258 = vmax.xlane.f32.xlu0 %v257
  %v259 = vpop.xlane.xlu0 %258
  %v260 = vsub.f32 %v255, %v259
  %v261 = vmul.f32 %v260, 1.442695
  %v262 = vpow.pop %v261
  %v263 = vsel %vm256, %v262, 0.0
  %264 = vadd.xlane.f32.xlu0 %v263
  %v265 = vpop.xlane.xlu0 %264
  %v266 = vrcp.pop %v265
  %v267 = vmul.f32 %v262, %v266
  %v269 = vsel %vm256, %v267, 0
  %271 = vmatprep.subr.mxu0 0.0
  %272 = vmatpush1.msra.mxu0 %v161
  %273 = vmatprep.subr.mxu0 0.0
  %274 = vmatpush1.msra.mxu0 0.0
  %275 = vmatprep.subr.mxu0 0.0
  %276 = vmatpush1.msra.mxu0 0.0
  %277 = vmatprep.subr.mxu0 0.0
  %278 = vmatpush1.msra.mxu0 0.0
  %279 = vmatprep.subr.mxu0 0.0
  %280 = vmatpush1.msra.mxu0 0.0
  %281 = vmatprep.subr.mxu0 0.0
  %282 = vmatpush1.msra.mxu0 0.0
  %283 = vmatprep.subr.mxu0 0.0
  %284 = vmatpush1.msra.mxu0 0.0
  %285 = vmatprep.subr.mxu0 0.0
  %286 = vmatpush1.msra.mxu0 0.0
  %287 = vmatprep.subr.mxu0 0.0
  %288 = vmatpush1.msra.mxu0 0.0
  %289 = vmatprep.subr.mxu0 0.0
  %290 = vmatpush1.msra.mxu0 0.0
  %291 = vmatprep.subr.mxu0 0.0
  %292 = vmatpush1.msra.mxu0 0.0
  %293 = vmatprep.subr.mxu0 0.0
  %294 = vmatpush1.msra.mxu0 0.0
  %295 = vmatprep.subr.mxu0 0.0
  %296 = vmatpush1.msra.mxu0 0.0
  %297 = vmatprep.subr.mxu0 0.0
  %298 = vmatpush1.msra.mxu0 0.0
  %299 = vmatprep.subr.mxu0 0.0
  %300 = vmatpush1.msra.mxu0 0.0
  %301 = vmatprep.subr.mxu0 0.0
  %302 = vmatpush1.msra.mxu0 0.0
  %303 = vmatprep.subr.mxu0 0.0
  %304 = vmatpush1.msra.mxu0 0.0
  %305 = vmatprep.subr.mxu0 0.0
  %306 = vmatpush1.msra.mxu0 0.0
  %307 = vmatprep.subr.mxu0 0.0
  %308 = vmatpush1.msra.mxu0 0.0
  %309 = vmatprep.subr.mxu0 0.0
  %310 = vmatpush1.msra.mxu0 0.0
  %311 = vmatprep.subr.mxu0 0.0
  %312 = vmatpush1.msra.mxu0 0.0
  %313 = vmatprep.subr.mxu0 0.0
  %314 = vmatpush1.msra.mxu0 0.0
  %315 = vmatprep.subr.mxu0 0.0
  %316 = vmatpush1.msra.mxu0 0.0
  %317 = vmatprep.subr.mxu0 0.0
  %318 = vmatpush1.msra.mxu0 0.0
  %319 = vmatprep.subr.mxu0 0.0
  %320 = vmatpush1.msra.mxu0 0.0
  %321 = vmatprep.subr.mxu0 0.0
  %322 = vmatpush1.msra.mxu0 0.0
  %323 = vmatprep.subr.mxu0 0.0
  %324 = vmatpush1.msra.mxu0 0.0
  %325 = vmatprep.subr.mxu0 0.0
  %326 = vmatpush1.msra.mxu0 0.0
  %327 = vmatprep.subr.mxu0 0.0
  %328 = vmatpush1.msra.mxu0 0.0
  %329 = vmatprep.subr.mxu0 0.0
  %330 = vmatpush1.msra.mxu0 0.0
  %331 = vmatprep.subr.mxu0 0.0
  %332 = vmatpush1.msra.mxu0 0.0
  %333 = vmatprep.subr.mxu0 0.0
  %334 = vmatpush1.msra.mxu0 0.0
  %335 = vmatprep.mubr.f32.mxu0 0.0
  %336 = vmatmul.mubr.f32.gmra.mrb[0].mxu0 %v269
  %v337 = vpop.f32.mrb[0].mxu0
  %v338 = vadd.f32 0.0, %v337
  %v339 = vpop.f32.mrb[0].mxu0
  %340 = vdwg.mxu0
  %341 = vrot.lane.b32.xlu0 %v159, 112
  %v342 = vpop.permute.xlu0 %341
  %343 = vrot.lane.b32.xlu0 %v159, 48
  %v344 = vpop.permute.xlu0 %343
  %v345 = vsel %vm173, %v342, 0
  %v347 = vsel %vm173, %v344, 0
  %349 = vmatprep.subr.mxu0 0.0
  %350 = vmatpush1.xpose.msra.mxu0 %v347
  %351 = vmatprep.subr.mxu0 0.0
  %352 = vmatpush1.xpose.msra.mxu0 0.0
  %353 = vmatprep.subr.mxu0 0.0
  %354 = vmatpush1.xpose.msra.mxu0 0.0
  %355 = vmatprep.subr.mxu0 0.0
  %356 = vmatpush1.xpose.msra.mxu0 0.0
  %357 = vmatprep.subr.mxu0 0.0
  %358 = vmatpush1.xpose.msra.mxu0 0.0
  %359 = vmatprep.subr.mxu0 0.0
  %360 = vmatpush1.xpose.msra.mxu0 0.0
  %361 = vmatprep.subr.mxu0 0.0
  %362 = vmatpush1.xpose.msra.mxu0 0.0
  %363 = vmatprep.subr.mxu0 0.0
  %364 = vmatpush1.xpose.msra.mxu0 0.0
  %365 = vmatprep.subr.mxu0 0.0
  %366 = vmatpush1.xpose.msra.mxu0 0.0
  %367 = vmatprep.subr.mxu0 0.0
  %368 = vmatpush1.xpose.msra.mxu0 0.0
  %369 = vmatprep.subr.mxu0 0.0
  %370 = vmatpush1.xpose.msra.mxu0 0.0
  %371 = vmatprep.subr.mxu0 0.0
  %372 = vmatpush1.xpose.msra.mxu0 0.0
  %373 = vmatprep.subr.mxu0 0.0
  %374 = vmatpush1.xpose.msra.mxu0 0.0
  %375 = vmatprep.subr.mxu0 0.0
  %376 = vmatpush1.xpose.msra.mxu0 0.0
  %377 = vmatprep.subr.mxu0 0.0
  %378 = vmatpush1.xpose.msra.mxu0 0.0
  %379 = vmatprep.subr.mxu0 0.0
  %380 = vmatpush1.xpose.msra.mxu0 0.0
  %381 = vmatprep.subr.mxu0 0.0
  %382 = vmatpush1.xpose.msra.mxu0 0.0
  %383 = vmatprep.subr.mxu0 0.0
  %384 = vmatpush1.xpose.msra.mxu0 0.0
  %385 = vmatprep.subr.mxu0 0.0
  %386 = vmatpush1.xpose.msra.mxu0 0.0
  %387 = vmatprep.subr.mxu0 0.0
  %388 = vmatpush1.xpose.msra.mxu0 0.0
  %389 = vmatprep.subr.mxu0 0.0
  %390 = vmatpush1.xpose.msra.mxu0 0.0
  %391 = vmatprep.subr.mxu0 0.0
  %392 = vmatpush1.xpose.msra.mxu0 0.0
  %393 = vmatprep.subr.mxu0 0.0
  %394 = vmatpush1.xpose.msra.mxu0 0.0
  %395 = vmatprep.subr.mxu0 0.0
  %396 = vmatpush1.xpose.msra.mxu0 0.0
  %397 = vmatprep.subr.mxu0 0.0
  %398 = vmatpush1.xpose.msra.mxu0 0.0
  %399 = vmatprep.subr.mxu0 0.0
  %400 = vmatpush1.xpose.msra.mxu0 0.0
  %401 = vmatprep.subr.mxu0 0.0
  %402 = vmatpush1.xpose.msra.mxu0 0.0
  %403 = vmatprep.subr.mxu0 0.0
  %404 = vmatpush1.xpose.msra.mxu0 0.0
  %405 = vmatprep.subr.mxu0 0.0
  %406 = vmatpush1.xpose.msra.mxu0 0.0
  %407 = vmatprep.subr.mxu0 0.0
  %408 = vmatpush1.xpose.msra.mxu0 0.0
  %409 = vmatprep.subr.mxu0 0.0
  %410 = vmatpush1.xpose.msra.mxu0 0.0
  %411 = vmatprep.subr.mxu0 0.0
  %412 = vmatpush1.xpose.msra.mxu0 0.0
  %413 = vmatprep.mubr.f32.mxu0 0.0
  %414 = vmatmul.mubr.f32.gmra.mrb[0].mxu0 %v345
  %v415 = vpop.f32.mrb[0].mxu0
  %v416 = vadd.f32 0.0, %v415
  %v417 = vpop.f32.mrb[0].mxu0
  %418 = vdwg.mxu0
  %v419 = vmul.f32 %v416, 0.25
  %v420 = vadd.f32 %v419, %v253
  %v421 = vsel %vm256, %v420, -inf
  %422 = vmax.xlane.f32.xlu0 %v421
  %v423 = vpop.xlane.xlu0 %422
  %v424 = vsub.f32 %v420, %v423
  %v425 = vmul.f32 %v424, 1.442695
  %v426 = vpow.pop %v425
  %v427 = vsel %vm256, %v426, 0.0
  %428 = vadd.xlane.f32.xlu0 %v427
  %v429 = vpop.xlane.xlu0 %428
  %v430 = vrcp.pop %v429
  %v431 = vmul.f32 %v426, %v430
  %433 = vrot.lane.b32.xlu0 %v161, 112
  %v434 = vpop.permute.xlu0 %433
  %v437 = vsel %vm256, %v431, 0
  %439 = vmatprep.subr.mxu0 0.0
  %440 = vmatpush1.msra.mxu0 %v434
  %441 = vmatprep.subr.mxu0 0.0
  %442 = vmatpush1.msra.mxu0 0.0
  %443 = vmatprep.subr.mxu0 0.0
  %444 = vmatpush1.msra.mxu0 0.0
  %445 = vmatprep.subr.mxu0 0.0
  %446 = vmatpush1.msra.mxu0 0.0
  %447 = vmatprep.subr.mxu0 0.0
  %448 = vmatpush1.msra.mxu0 0.0
  %449 = vmatprep.subr.mxu0 0.0
  %450 = vmatpush1.msra.mxu0 0.0
  %451 = vmatprep.subr.mxu0 0.0
  %452 = vmatpush1.msra.mxu0 0.0
  %453 = vmatprep.subr.mxu0 0.0
  %454 = vmatpush1.msra.mxu0 0.0
  %455 = vmatprep.subr.mxu0 0.0
  %456 = vmatpush1.msra.mxu0 0.0
  %457 = vmatprep.subr.mxu0 0.0
  %458 = vmatpush1.msra.mxu0 0.0
  %459 = vmatprep.subr.mxu0 0.0
  %460 = vmatpush1.msra.mxu0 0.0
  %461 = vmatprep.subr.mxu0 0.0
  %462 = vmatpush1.msra.mxu0 0.0
  %463 = vmatprep.subr.mxu0 0.0
  %464 = vmatpush1.msra.mxu0 0.0
  %465 = vmatprep.subr.mxu0 0.0
  %466 = vmatpush1.msra.mxu0 0.0
  %467 = vmatprep.subr.mxu0 0.0
  %468 = vmatpush1.msra.mxu0 0.0
  %469 = vmatprep.subr.mxu0 0.0
  %470 = vmatpush1.msra.mxu0 0.0
  %471 = vmatprep.subr.mxu0 0.0
  %472 = vmatpush1.msra.mxu0 0.0
  %473 = vmatprep.subr.mxu0 0.0
  %474 = vmatpush1.msra.mxu0 0.0
  %475 = vmatprep.subr.mxu0 0.0
  %476 = vmatpush1.msra.mxu0 0.0
  %477 = vmatprep.subr.mxu0 0.0
  %478 = vmatpush1.msra.mxu0 0.0
  %479 = vmatprep.subr.mxu0 0.0
  %480 = vmatpush1.msra.mxu0 0.0
  %481 = vmatprep.subr.mxu0 0.0
  %482 = vmatpush1.msra.mxu0 0.0
  %483 = vmatprep.subr.mxu0 0.0
  %484 = vmatpush1.msra.mxu0 0.0
  %485 = vmatprep.subr.mxu0 0.0
  %486 = vmatpush1.msra.mxu0 0.0
  %487 = vmatprep.subr.mxu0 0.0
  %488 = vmatpush1.msra.mxu0 0.0
  %489 = vmatprep.subr.mxu0 0.0
  %490 = vmatpush1.msra.mxu0 0.0
  %491 = vmatprep.subr.mxu0 0.0
  %492 = vmatpush1.msra.mxu0 0.0
  %493 = vmatprep.subr.mxu0 0.0
  %494 = vmatpush1.msra.mxu0 0.0
  %495 = vmatprep.subr.mxu0 0.0
  %496 = vmatpush1.msra.mxu0 0.0
  %497 = vmatprep.subr.mxu0 0.0
  %498 = vmatpush1.msra.mxu0 0.0
  %499 = vmatprep.subr.mxu0 0.0
  %500 = vmatpush1.msra.mxu0 0.0
  %501 = vmatprep.subr.mxu0 0.0
  %502 = vmatpush1.msra.mxu0 0.0
  %503 = vmatprep.mubr.f32.mxu0 0.0
  %504 = vmatmul.mubr.f32.gmra.mrb[0].mxu0 %v437
  %v505 = vpop.f32.mrb[0].mxu0
  %v506 = vadd.f32 0.0, %v505
  %v507 = vpop.f32.mrb[0].mxu0
  %508 = vdwg.mxu0
  %v510 = vsel %vm173, %v506, 0
  %512 = vmatprep.subr.mxu0 0.0
  %513 = vmatpush1.msra.mxu0 %v51
  %514 = vmatprep.subr.mxu0 0.0
  %515 = vmatpush1.msra.mxu0 %v52
  %516 = vmatprep.subr.mxu0 0.0
  %517 = vmatpush1.msra.mxu0 0.0
  %518 = vmatprep.subr.mxu0 0.0
  %519 = vmatpush1.msra.mxu0 0.0
  %520 = vmatprep.subr.mxu0 0.0
  %521 = vmatpush1.msra.mxu0 0.0
  %522 = vmatprep.subr.mxu0 0.0
  %523 = vmatpush1.msra.mxu0 0.0
  %524 = vmatprep.subr.mxu0 0.0
  %525 = vmatpush1.msra.mxu0 0.0
  %526 = vmatprep.subr.mxu0 0.0
  %527 = vmatpush1.msra.mxu0 0.0
  %528 = vmatprep.subr.mxu0 0.0
  %529 = vmatpush1.msra.mxu0 0.0
  %530 = vmatprep.subr.mxu0 0.0
  %531 = vmatpush1.msra.mxu0 0.0
  %532 = vmatprep.subr.mxu0 0.0
  %533 = vmatpush1.msra.mxu0 0.0
  %534 = vmatprep.subr.mxu0 0.0
  %535 = vmatpush1.msra.mxu0 0.0
  %536 = vmatprep.subr.mxu0 0.0
  %537 = vmatpush1.msra.mxu0 0.0
  %538 = vmatprep.subr.mxu0 0.0
  %539 = vmatpush1.msra.mxu0 0.0
  %540 = vmatprep.subr.mxu0 0.0
  %541 = vmatpush1.msra.mxu0 0.0
  %542 = vmatprep.subr.mxu0 0.0
  %543 = vmatpush1.msra.mxu0 0.0
  %544 = vmatprep.subr.mxu0 0.0
  %545 = vmatpush1.msra.mxu0 0.0
  %546 = vmatprep.subr.mxu0 0.0
  %547 = vmatpush1.msra.mxu0 0.0
  %548 = vmatprep.subr.mxu0 0.0
  %549 = vmatpush1.msra.mxu0 0.0
  %550 = vmatprep.subr.mxu0 0.0
  %551 = vmatpush1.msra.mxu0 0.0
  %552 = vmatprep.subr.mxu0 0.0
  %553 = vmatpush1.msra.mxu0 0.0
  %554 = vmatprep.subr.mxu0 0.0
  %555 = vmatpush1.msra.mxu0 0.0
  %556 = vmatprep.subr.mxu0 0.0
  %557 = vmatpush1.msra.mxu0 0.0
  %558 = vmatprep.subr.mxu0 0.0
  %559 = vmatpush1.msra.mxu0 0.0
  %560 = vmatprep.subr.mxu0 0.0
  %561 = vmatpush1.msra.mxu0 0.0
  %562 = vmatprep.subr.mxu0 0.0
  %563 = vmatpush1.msra.mxu0 0.0
  %564 = vmatprep.subr.mxu0 0.0
  %565 = vmatpush1.msra.mxu0 0.0
  %566 = vmatprep.subr.mxu0 0.0
  %567 = vmatpush1.msra.mxu0 0.0
  %568 = vmatprep.subr.mxu0 0.0
  %569 = vmatpush1.msra.mxu0 0.0
  %570 = vmatprep.subr.mxu0 0.0
  %571 = vmatpush1.msra.mxu0 0.0
  %572 = vmatprep.subr.mxu0 0.0
  %573 = vmatpush1.msra.mxu0 0.0
  %574 = vmatprep.subr.mxu0 0.0
  %575 = vmatpush1.msra.mxu0 0.0
  %576 = vmatprep.mubr.f32.mxu0 0.0
  %577 = vmatmul.mubr.f32.gmra.mrb[0].mxu0 %v510
  %v578 = vpop.f32.mrb[0].mxu0
  %v579 = vadd.f32 0.0, %v578
  %v580 = vpop.f32.mrb[0].mxu0
  %581 = vdwg.mxu0
  %v583 = vsel %vm173, %v338, 0
  %585 = vmatprep.subr.mxu0 0.0
  %586 = vmatpush1.msra.mxu0 %v49
  %587 = vmatprep.subr.mxu0 0.0
  %588 = vmatpush1.msra.mxu0 %v50
  %589 = vmatprep.subr.mxu0 0.0
  %590 = vmatpush1.msra.mxu0 0.0
  %591 = vmatprep.subr.mxu0 0.0
  %592 = vmatpush1.msra.mxu0 0.0
  %593 = vmatprep.subr.mxu0 0.0
  %594 = vmatpush1.msra.mxu0 0.0
  %595 = vmatprep.subr.mxu0 0.0
  %596 = vmatpush1.msra.mxu0 0.0
  %597 = vmatprep.subr.mxu0 0.0
  %598 = vmatpush1.msra.mxu0 0.0
  %599 = vmatprep.subr.mxu0 0.0
  %600 = vmatpush1.msra.mxu0 0.0
  %601 = vmatprep.subr.mxu0 0.0
  %602 = vmatpush1.msra.mxu0 0.0
  %603 = vmatprep.subr.mxu0 0.0
  %604 = vmatpush1.msra.mxu0 0.0
  %605 = vmatprep.subr.mxu0 0.0
  %606 = vmatpush1.msra.mxu0 0.0
  %607 = vmatprep.subr.mxu0 0.0
  %608 = vmatpush1.msra.mxu0 0.0
  %609 = vmatprep.subr.mxu0 0.0
  %610 = vmatpush1.msra.mxu0 0.0
  %611 = vmatprep.subr.mxu0 0.0
  %612 = vmatpush1.msra.mxu0 0.0
  %613 = vmatprep.subr.mxu0 0.0
  %614 = vmatpush1.msra.mxu0 0.0
  %615 = vmatprep.subr.mxu0 0.0
  %616 = vmatpush1.msra.mxu0 0.0
  %617 = vmatprep.subr.mxu0 0.0
  %618 = vmatpush1.msra.mxu0 0.0
  %619 = vmatprep.subr.mxu0 0.0
  %620 = vmatpush1.msra.mxu0 0.0
  %621 = vmatprep.subr.mxu0 0.0
  %622 = vmatpush1.msra.mxu0 0.0
  %623 = vmatprep.subr.mxu0 0.0
  %624 = vmatpush1.msra.mxu0 0.0
  %625 = vmatprep.subr.mxu0 0.0
  %626 = vmatpush1.msra.mxu0 0.0
  %627 = vmatprep.subr.mxu0 0.0
  %628 = vmatpush1.msra.mxu0 0.0
  %629 = vmatprep.subr.mxu0 0.0
  %630 = vmatpush1.msra.mxu0 0.0
  %631 = vmatprep.subr.mxu0 0.0
  %632 = vmatpush1.msra.mxu0 0.0
  %633 = vmatprep.subr.mxu0 0.0
  %634 = vmatpush1.msra.mxu0 0.0
  %635 = vmatprep.subr.mxu0 0.0
  %636 = vmatpush1.msra.mxu0 0.0
  %637 = vmatprep.subr.mxu0 0.0
  %638 = vmatpush1.msra.mxu0 0.0
  %639 = vmatprep.subr.mxu0 0.0
  %640 = vmatpush1.msra.mxu0 0.0
  %641 = vmatprep.subr.mxu0 0.0
  %642 = vmatpush1.msra.mxu0 0.0
  %643 = vmatprep.subr.mxu0 0.0
  %644 = vmatpush1.msra.mxu0 0.0
  %645 = vmatprep.subr.mxu0 0.0
  %646 = vmatpush1.msra.mxu0 0.0
  %647 = vmatprep.subr.mxu0 0.0
  %648 = vmatpush1.msra.mxu0 0.0
  %649 = vmatprep.mubr.f32.mxu0 0.0
  %650 = vmatmul.mubr.f32.gmra.mrb[0].mxu0 %v583
  %v651 = vpop.f32.mrb[0].mxu0
  %v652 = vadd.f32 %v579, %v651
  %v653 = vpop.f32.mrb[0].mxu0
  %654 = vdwg.mxu0
  %655 = vrot.lane.b32.xlu0 %v159, 96
  %v656 = vpop.permute.xlu0 %655
  %657 = vrot.lane.b32.xlu0 %v159, 32
  %v658 = vpop.permute.xlu0 %657
  %v659 = vsel %vm173, %v656, 0
  %v661 = vsel %vm173, %v658, 0
  %663 = vmatprep.subr.mxu0 0.0
  %664 = vmatpush1.xpose.msra.mxu0 %v661
  %665 = vmatprep.subr.mxu0 0.0
  %666 = vmatpush1.xpose.msra.mxu0 0.0
  %667 = vmatprep.subr.mxu0 0.0
  %668 = vmatpush1.xpose.msra.mxu0 0.0
  %669 = vmatprep.subr.mxu0 0.0
  %670 = vmatpush1.xpose.msra.mxu0 0.0
  %671 = vmatprep.subr.mxu0 0.0
  %672 = vmatpush1.xpose.msra.mxu0 0.0
  %673 = vmatprep.subr.mxu0 0.0
  %674 = vmatpush1.xpose.msra.mxu0 0.0
  %675 = vmatprep.subr.mxu0 0.0
  %676 = vmatpush1.xpose.msra.mxu0 0.0
  %677 = vmatprep.subr.mxu0 0.0
  %678 = vmatpush1.xpose.msra.mxu0 0.0
  %679 = vmatprep.subr.mxu0 0.0
  %680 = vmatpush1.xpose.msra.mxu0 0.0
  %681 = vmatprep.subr.mxu0 0.0
  %682 = vmatpush1.xpose.msra.mxu0 0.0
  %683 = vmatprep.subr.mxu0 0.0
  %684 = vmatpush1.xpose.msra.mxu0 0.0
  %685 = vmatprep.subr.mxu0 0.0
  %686 = vmatpush1.xpose.msra.mxu0 0.0
  %687 = vmatprep.subr.mxu0 0.0
  %688 = vmatpush1.xpose.msra.mxu0 0.0
  %689 = vmatprep.subr.mxu0 0.0
  %690 = vmatpush1.xpose.msra.mxu0 0.0
  %691 = vmatprep.subr.mxu0 0.0
  %692 = vmatpush1.xpose.msra.mxu0 0.0
  %693 = vmatprep.subr.mxu0 0.0
  %694 = vmatpush1.xpose.msra.mxu0 0.0
  %695 = vmatprep.subr.mxu0 0.0
  %696 = vmatpush1.xpose.msra.mxu0 0.0
  %697 = vmatprep.subr.mxu0 0.0
  %698 = vmatpush1.xpose.msra.mxu0 0.0
  %699 = vmatprep.subr.mxu0 0.0
  %700 = vmatpush1.xpose.msra.mxu0 0.0
  %701 = vmatprep.subr.mxu0 0.0
  %702 = vmatpush1.xpose.msra.mxu0 0.0
  %703 = vmatprep.subr.mxu0 0.0
  %704 = vmatpush1.xpose.msra.mxu0 0.0
  %705 = vmatprep.subr.mxu0 0.0
  %706 = vmatpush1.xpose.msra.mxu0 0.0
  %707 = vmatprep.subr.mxu0 0.0
  %708 = vmatpush1.xpose.msra.mxu0 0.0
  %709 = vmatprep.subr.mxu0 0.0
  %710 = vmatpush1.xpose.msra.mxu0 0.0
  %711 = vmatprep.subr.mxu0 0.0
  %712 = vmatpush1.xpose.msra.mxu0 0.0
  %713 = vmatprep.subr.mxu0 0.0
  %714 = vmatpush1.xpose.msra.mxu0 0.0
  %715 = vmatprep.subr.mxu0 0.0
  %716 = vmatpush1.xpose.msra.mxu0 0.0
  %717 = vmatprep.subr.mxu0 0.0
  %718 = vmatpush1.xpose.msra.mxu0 0.0
  %719 = vmatprep.subr.mxu0 0.0
  %720 = vmatpush1.xpose.msra.mxu0 0.0
  %721 = vmatprep.subr.mxu0 0.0
  %722 = vmatpush1.xpose.msra.mxu0 0.0
  %723 = vmatprep.subr.mxu0 0.0
  %724 = vmatpush1.xpose.msra.mxu0 0.0
  %725 = vmatprep.subr.mxu0 0.0
  %726 = vmatpush1.xpose.msra.mxu0 0.0
  %727 = vmatprep.mubr.f32.mxu0 0.0
  %728 = vmatmul.mubr.f32.gmra.mrb[0].mxu0 %v659
  %v729 = vpop.f32.mrb[0].mxu0
  %v730 = vadd.f32 0.0, %v729
  %v731 = vpop.f32.mrb[0].mxu0
  %732 = vdwg.mxu0
  %v733 = vmul.f32 %v730, 0.25
  %v734 = vadd.f32 %v733, %v253
  %v735 = vsel %vm256, %v734, -inf
  %736 = vmax.xlane.f32.xlu0 %v735
  %v737 = vpop.xlane.xlu0 %736
  %v738 = vsub.f32 %v734, %v737
  %v739 = vmul.f32 %v738, 1.442695
  %v740 = vpow.pop %v739
  %v741 = vsel %vm256, %v740, 0.0
  %742 = vadd.xlane.f32.xlu0 %v741
  %v743 = vpop.xlane.xlu0 %742
  %v744 = vrcp.pop %v743
  %v745 = vmul.f32 %v740, %v744
  %746 = vrot.lane.b32.xlu0 %v161, 96
  %v747 = vpop.permute.xlu0 %746
  %v750 = vsel %vm256, %v745, 0
  %752 = vmatprep.subr.mxu0 0.0
  %753 = vmatpush1.msra.mxu0 %v747
  %754 = vmatprep.subr.mxu0 0.0
  %755 = vmatpush1.msra.mxu0 0.0
  %756 = vmatprep.subr.mxu0 0.0
  %757 = vmatpush1.msra.mxu0 0.0
  %758 = vmatprep.subr.mxu0 0.0
  %759 = vmatpush1.msra.mxu0 0.0
  %760 = vmatprep.subr.mxu0 0.0
  %761 = vmatpush1.msra.mxu0 0.0
  %762 = vmatprep.subr.mxu0 0.0
  %763 = vmatpush1.msra.mxu0 0.0
  %764 = vmatprep.subr.mxu0 0.0
  %765 = vmatpush1.msra.mxu0 0.0
  %766 = vmatprep.subr.mxu0 0.0
  %767 = vmatpush1.msra.mxu0 0.0
  %768 = vmatprep.subr.mxu0 0.0
  %769 = vmatpush1.msra.mxu0 0.0
  %770 = vmatprep.subr.mxu0 0.0
  %771 = vmatpush1.msra.mxu0 0.0
  %772 = vmatprep.subr.mxu0 0.0
  %773 = vmatpush1.msra.mxu0 0.0
  %774 = vmatprep.subr.mxu0 0.0
  %775 = vmatpush1.msra.mxu0 0.0
  %776 = vmatprep.subr.mxu0 0.0
  %777 = vmatpush1.msra.mxu0 0.0
  %778 = vmatprep.subr.mxu0 0.0
  %779 = vmatpush1.msra.mxu0 0.0
  %780 = vmatprep.subr.mxu0 0.0
  %781 = vmatpush1.msra.mxu0 0.0
  %782 = vmatprep.subr.mxu0 0.0
  %783 = vmatpush1.msra.mxu0 0.0
  %784 = vmatprep.subr.mxu0 0.0
  %785 = vmatpush1.msra.mxu0 0.0
  %786 = vmatprep.subr.mxu0 0.0
  %787 = vmatpush1.msra.mxu0 0.0
  %788 = vmatprep.subr.mxu0 0.0
  %789 = vmatpush1.msra.mxu0 0.0
  %790 = vmatprep.subr.mxu0 0.0
  %791 = vmatpush1.msra.mxu0 0.0
  %792 = vmatprep.subr.mxu0 0.0
  %793 = vmatpush1.msra.mxu0 0.0
  %794 = vmatprep.subr.mxu0 0.0
  %795 = vmatpush1.msra.mxu0 0.0
  %796 = vmatprep.subr.mxu0 0.0
  %797 = vmatpush1.msra.mxu0 0.0
  %798 = vmatprep.subr.mxu0 0.0
  %799 = vmatpush1.msra.mxu0 0.0
  %800 = vmatprep.subr.mxu0 0.0
  %801 = vmatpush1.msra.mxu0 0.0
  %802 = vmatprep.subr.mxu0 0.0
  %803 = vmatpush1.msra.mxu0 0.0
  %804 = vmatprep.subr.mxu0 0.0
  %805 = vmatpush1.msra.mxu0 0.0
  %806 = vmatprep.subr.mxu0 0.0
  %807 = vmatpush1.msra.mxu0 0.0
  %808 = vmatprep.subr.mxu0 0.0
  %809 = vmatpush1.msra.mxu0 0.0
  %810 = vmatprep.subr.mxu0 0.0
  %811 = vmatpush1.msra.mxu0 0.0
  %812 = vmatprep.subr.mxu0 0.0
  %813 = vmatpush1.msra.mxu0 0.0
  %814 = vmatprep.subr.mxu0 0.0
  %815 = vmatpush1.msra.mxu0 0.0
  %816 = vmatprep.mubr.f32.mxu0 0.0
  %817 = vmatmul.mubr.f32.gmra.mrb[0].mxu0 %v750
  %v818 = vpop.f32.mrb[0].mxu0
  %v819 = vadd.f32 0.0, %v818
  %v820 = vpop.f32.mrb[0].mxu0
  %821 = vdwg.mxu0
  %v823 = vsel %vm173, %v819, 0
  %825 = vmatprep.subr.mxu0 0.0
  %826 = vmatpush1.msra.mxu0 %v53
  %827 = vmatprep.subr.mxu0 0.0
  %828 = vmatpush1.msra.mxu0 %v54
  %829 = vmatprep.subr.mxu0 0.0
  %830 = vmatpush1.msra.mxu0 0.0
  %831 = vmatprep.subr.mxu0 0.0
  %832 = vmatpush1.msra.mxu0 0.0
  %833 = vmatprep.subr.mxu0 0.0
  %834 = vmatpush1.msra.mxu0 0.0
  %835 = vmatprep.subr.mxu0 0.0
  %836 = vmatpush1.msra.mxu0 0.0
  %837 = vmatprep.subr.mxu0 0.0
  %838 = vmatpush1.msra.mxu0 0.0
  %839 = vmatprep.subr.mxu0 0.0
  %840 = vmatpush1.msra.mxu0 0.0
  %841 = vmatprep.subr.mxu0 0.0
  %842 = vmatpush1.msra.mxu0 0.0
  %843 = vmatprep.subr.mxu0 0.0
  %844 = vmatpush1.msra.mxu0 0.0
  %845 = vmatprep.subr.mxu0 0.0
  %846 = vmatpush1.msra.mxu0 0.0
  %847 = vmatprep.subr.mxu0 0.0
  %848 = vmatpush1.msra.mxu0 0.0
  %849 = vmatprep.subr.mxu0 0.0
  %850 = vmatpush1.msra.mxu0 0.0
  %851 = vmatprep.subr.mxu0 0.0
  %852 = vmatpush1.msra.mxu0 0.0
  %853 = vmatprep.subr.mxu0 0.0
  %854 = vmatpush1.msra.mxu0 0.0
  %855 = vmatprep.subr.mxu0 0.0
  %856 = vmatpush1.msra.mxu0 0.0
  %857 = vmatprep.subr.mxu0 0.0
  %858 = vmatpush1.msra.mxu0 0.0
  %859 = vmatprep.subr.mxu0 0.0
  %860 = vmatpush1.msra.mxu0 0.0
  %861 = vmatprep.subr.mxu0 0.0
  %862 = vmatpush1.msra.mxu0 0.0
  %863 = vmatprep.subr.mxu0 0.0
  %864 = vmatpush1.msra.mxu0 0.0
  %865 = vmatprep.subr.mxu0 0.0
  %866 = vmatpush1.msra.mxu0 0.0
  %867 = vmatprep.subr.mxu0 0.0
  %868 = vmatpush1.msra.mxu0 0.0
  %869 = vmatprep.subr.mxu0 0.0
  %870 = vmatpush1.msra.mxu0 0.0
  %871 = vmatprep.subr.mxu0 0.0
  %872 = vmatpush1.msra.mxu0 0.0
  %873 = vmatprep.subr.mxu0 0.0
  %874 = vmatpush1.msra.mxu0 0.0
  %875 = vmatprep.subr.mxu0 0.0
  %876 = vmatpush1.msra.mxu0 0.0
  %877 = vmatprep.subr.mxu0 0.0
  %878 = vmatpush1.msra.mxu0 0.0
  %879 = vmatprep.subr.mxu0 0.0
  %880 = vmatpush1.msra.mxu0 0.0
  %881 = vmatprep.subr.mxu0 0.0
  %882 = vmatpush1.msra.mxu0 0.0
  %883 = vmatprep.subr.mxu0 0.0
  %884 = vmatpush1.msra.mxu0 0.0
  %885 = vmatprep.subr.mxu0 0.0
  %886 = vmatpush1.msra.mxu0 0.0
  %887 = vmatprep.subr.mxu0 0.0
  %888 = vmatpush1.msra.mxu0 0.0
  %889 = vmatprep.mubr.f32.mxu0 0.0
  %890 = vmatmul.mubr.f32.gmra.mrb[0].mxu0 %v823
  %v891 = vpop.f32.mrb[0].mxu0
  %v892 = vadd.f32 0.0, %v891
  %v893 = vpop.f32.mrb[0].mxu0
  %894 = vdwg.mxu0
  %v895 = vadd.f32 %v652, %v892
  %896 = vrot.lane.b32.xlu0 %v159, 80
  %v897 = vpop.permute.xlu0 %896
  %898 = vrot.lane.b32.xlu0 %v159, 16
  %v899 = vpop.permute.xlu0 %898
  %v900 = vsel %vm173, %v897, 0
  %v902 = vsel %vm173, %v899, 0
  %904 = vmatprep.subr.mxu0 0.0
  %905 = vmatpush1.xpose.msra.mxu0 %v902
  %906 = vmatprep.subr.mxu0 0.0
  %907 = vmatpush1.xpose.msra.mxu0 0.0
  %908 = vmatprep.subr.mxu0 0.0
  %909 = vmatpush1.xpose.msra.mxu0 0.0
  %910 = vmatprep.subr.mxu0 0.0
  %911 = vmatpush1.xpose.msra.mxu0 0.0
  %912 = vmatprep.subr.mxu0 0.0
  %913 = vmatpush1.xpose.msra.mxu0 0.0
  %914 = vmatprep.subr.mxu0 0.0
  %915 = vmatpush1.xpose.msra.mxu0 0.0
  %916 = vmatprep.subr.mxu0 0.0
  %917 = vmatpush1.xpose.msra.mxu0 0.0
  %918 = vmatprep.subr.mxu0 0.0
  %919 = vmatpush1.xpose.msra.mxu0 0.0
  %920 = vmatprep.subr.mxu0 0.0
  %921 = vmatpush1.xpose.msra.mxu0 0.0
  %922 = vmatprep.subr.mxu0 0.0
  %923 = vmatpush1.xpose.msra.mxu0 0.0
  %924 = vmatprep.subr.mxu0 0.0
  %925 = vmatpush1.xpose.msra.mxu0 0.0
  %926 = vmatprep.subr.mxu0 0.0
  %927 = vmatpush1.xpose.msra.mxu0 0.0
  %928 = vmatprep.subr.mxu0 0.0
  %929 = vmatpush1.xpose.msra.mxu0 0.0
  %930 = vmatprep.subr.mxu0 0.0
  %931 = vmatpush1.xpose.msra.mxu0 0.0
  %932 = vmatprep.subr.mxu0 0.0
  %933 = vmatpush1.xpose.msra.mxu0 0.0
  %934 = vmatprep.subr.mxu0 0.0
  %935 = vmatpush1.xpose.msra.mxu0 0.0
  %936 = vmatprep.subr.mxu0 0.0
  %937 = vmatpush1.xpose.msra.mxu0 0.0
  %938 = vmatprep.subr.mxu0 0.0
  %939 = vmatpush1.xpose.msra.mxu0 0.0
  %940 = vmatprep.subr.mxu0 0.0
  %941 = vmatpush1.xpose.msra.mxu0 0.0
  %942 = vmatprep.subr.mxu0 0.0
  %943 = vmatpush1.xpose.msra.mxu0 0.0
  %944 = vmatprep.subr.mxu0 0.0
  %945 = vmatpush1.xpose.msra.mxu0 0.0
  %946 = vmatprep.subr.mxu0 0.0
  %947 = vmatpush1.xpose.msra.mxu0 0.0
  %948 = vmatprep.subr.mxu0 0.0
  %949 = vmatpush1.xpose.msra.mxu0 0.0
  %950 = vmatprep.subr.mxu0 0.0
  %951 = vmatpush1.xpose.msra.mxu0 0.0
  %952 = vmatprep.subr.mxu0 0.0
  %953 = vmatpush1.xpose.msra.mxu0 0.0
  %954 = vmatprep.subr.mxu0 0.0
  %955 = vmatpush1.xpose.msra.mxu0 0.0
  %956 = vmatprep.subr.mxu0 0.0
  %957 = vmatpush1.xpose.msra.mxu0 0.0
  %958 = vmatprep.subr.mxu0 0.0
  %959 = vmatpush1.xpose.msra.mxu0 0.0
  %960 = vmatprep.subr.mxu0 0.0
  %961 = vmatpush1.xpose.msra.mxu0 0.0
  %962 = vmatprep.subr.mxu0 0.0
  %963 = vmatpush1.xpose.msra.mxu0 0.0
  %964 = vmatprep.subr.mxu0 0.0
  %965 = vmatpush1.xpose.msra.mxu0 0.0
  %966 = vmatprep.subr.mxu0 0.0
  %967 = vmatpush1.xpose.msra.mxu0 0.0
  %968 = vmatprep.mubr.f32.mxu0 0.0
  %969 = vmatmul.mubr.f32.gmra.mrb[0].mxu0 %v900
  %v970 = vpop.f32.mrb[0].mxu0
  %v971 = vadd.f32 0.0, %v970
  %v972 = vpop.f32.mrb[0].mxu0
  %973 = vdwg.mxu0
  %v974 = vmul.f32 %v971, 0.25
  %v975 = vadd.f32 %v974, %v253
  %v976 = vsel %vm256, %v975, -inf
  %977 = vmax.xlane.f32.xlu0 %v976
  %v978 = vpop.xlane.xlu0 %977
  %v979 = vsub.f32 %v975, %v978
  %v980 = vmul.f32 %v979, 1.442695
  %v981 = vpow.pop %v980
  %v982 = vsel %vm256, %v981, 0.0
  %983 = vadd.xlane.f32.xlu0 %v982
  %v984 = vpop.xlane.xlu0 %983
  %v985 = vrcp.pop %v984
  %v986 = vmul.f32 %v981, %v985
  %987 = vrot.lane.b32.xlu0 %v161, 80
  %v988 = vpop.permute.xlu0 %987
  %v991 = vsel %vm256, %v986, 0
  %993 = vmatprep.subr.mxu0 0.0
  %994 = vmatpush1.msra.mxu0 %v988
  %995 = vmatprep.subr.mxu0 0.0
  %996 = vmatpush1.msra.mxu0 0.0
  %997 = vmatprep.subr.mxu0 0.0
  %998 = vmatpush1.msra.mxu0 0.0
  %999 = vmatprep.subr.mxu0 0.0
  %1000 = vmatpush1.msra.mxu0 0.0
  %1001 = vmatprep.subr.mxu0 0.0
  %1002 = vmatpush1.msra.mxu0 0.0
  %1003 = vmatprep.subr.mxu0 0.0
  %1004 = vmatpush1.msra.mxu0 0.0
  %1005 = vmatprep.subr.mxu0 0.0
  %1006 = vmatpush1.msra.mxu0 0.0
  %1007 = vmatprep.subr.mxu0 0.0
  %1008 = vmatpush1.msra.mxu0 0.0
  %1009 = vmatprep.subr.mxu0 0.0
  %1010 = vmatpush1.msra.mxu0 0.0
  %1011 = vmatprep.subr.mxu0 0.0
  %1012 = vmatpush1.msra.mxu0 0.0
  %1013 = vmatprep.subr.mxu0 0.0
  %1014 = vmatpush1.msra.mxu0 0.0
  %1015 = vmatprep.subr.mxu0 0.0
  %1016 = vmatpush1.msra.mxu0 0.0
  %1017 = vmatprep.subr.mxu0 0.0
  %1018 = vmatpush1.msra.mxu0 0.0
  %1019 = vmatprep.subr.mxu0 0.0
  %1020 = vmatpush1.msra.mxu0 0.0
  %1021 = vmatprep.subr.mxu0 0.0
  %1022 = vmatpush1.msra.mxu0 0.0
  %1023 = vmatprep.subr.mxu0 0.0
  %1024 = vmatpush1.msra.mxu0 0.0
  %1025 = vmatprep.subr.mxu0 0.0
  %1026 = vmatpush1.msra.mxu0 0.0
  %1027 = vmatprep.subr.mxu0 0.0
  %1028 = vmatpush1.msra.mxu0 0.0
  %1029 = vmatprep.subr.mxu0 0.0
  %1030 = vmatpush1.msra.mxu0 0.0
  %1031 = vmatprep.subr.mxu0 0.0
  %1032 = vmatpush1.msra.mxu0 0.0
  %1033 = vmatprep.subr.mxu0 0.0
  %1034 = vmatpush1.msra.mxu0 0.0
  %1035 = vmatprep.subr.mxu0 0.0
  %1036 = vmatpush1.msra.mxu0 0.0
  %1037 = vmatprep.subr.mxu0 0.0
  %1038 = vmatpush1.msra.mxu0 0.0
  %1039 = vmatprep.subr.mxu0 0.0
  %1040 = vmatpush1.msra.mxu0 0.0
  %1041 = vmatprep.subr.mxu0 0.0
  %1042 = vmatpush1.msra.mxu0 0.0
  %1043 = vmatprep.subr.mxu0 0.0
  %1044 = vmatpush1.msra.mxu0 0.0
  %1045 = vmatprep.subr.mxu0 0.0
  %1046 = vmatpush1.msra.mxu0 0.0
  %1047 = vmatprep.subr.mxu0 0.0
  %1048 = vmatpush1.msra.mxu0 0.0
  %1049 = vmatprep.subr.mxu0 0.0
  %1050 = vmatpush1.msra.mxu0 0.0
  %1051 = vmatprep.subr.mxu0 0.0
  %1052 = vmatpush1.msra.mxu0 0.0
  %1053 = vmatprep.subr.mxu0 0.0
  %1054 = vmatpush1.msra.mxu0 0.0
  %1055 = vmatprep.subr.mxu0 0.0
  %1056 = vmatpush1.msra.mxu0 0.0
  %1057 = vmatprep.mubr.f32.mxu0 0.0
  %1058 = vmatmul.mubr.f32.gmra.mrb[0].mxu0 %v991
  %v1059 = vpop.f32.mrb[0].mxu0
  %v1060 = vadd.f32 0.0, %v1059
  %v1061 = vpop.f32.mrb[0].mxu0
  %1062 = vdwg.mxu0
  %v1064 = vsel %vm173, %v1060, 0
  %1066 = vmatprep.subr.mxu0 0.0
  %1067 = vmatpush1.msra.mxu0 %v55
  %1068 = vmatprep.subr.mxu0 0.0
  %1069 = vmatpush1.msra.mxu0 %v56
  %1070 = vmatprep.subr.mxu0 0.0
  %1071 = vmatpush1.msra.mxu0 0.0
  %1072 = vmatprep.subr.mxu0 0.0
  %1073 = vmatpush1.msra.mxu0 0.0
  %1074 = vmatprep.subr.mxu0 0.0
  %1075 = vmatpush1.msra.mxu0 0.0
  %1076 = vmatprep.subr.mxu0 0.0
  %1077 = vmatpush1.msra.mxu0 0.0
  %1078 = vmatprep.subr.mxu0 0.0
  %1079 = vmatpush1.msra.mxu0 0.0
  %1080 = vmatprep.subr.mxu0 0.0
  %1081 = vmatpush1.msra.mxu0 0.0
  %1082 = vmatprep.subr.mxu0 0.0
  %1083 = vmatpush1.msra.mxu0 0.0
  %1084 = vmatprep.subr.mxu0 0.0
  %1085 = vmatpush1.msra.mxu0 0.0
  %1086 = vmatprep.subr.mxu0 0.0
  %1087 = vmatpush1.msra.mxu0 0.0
  %1088 = vmatprep.subr.mxu0 0.0
  %1089 = vmatpush1.msra.mxu0 0.0
  %1090 = vmatprep.subr.mxu0 0.0
  %1091 = vmatpush1.msra.mxu0 0.0
  %1092 = vmatprep.subr.mxu0 0.0
  %1093 = vmatpush1.msra.mxu0 0.0
  %1094 = vmatprep.subr.mxu0 0.0
  %1095 = vmatpush1.msra.mxu0 0.0
  %1096 = vmatprep.subr.mxu0 0.0
  %1097 = vmatpush1.msra.mxu0 0.0
  %1098 = vmatprep.subr.mxu0 0.0
  %1099 = vmatpush1.msra.mxu0 0.0
  %1100 = vmatprep.subr.mxu0 0.0
  %1101 = vmatpush1.msra.mxu0 0.0
  %1102 = vmatprep.subr.mxu0 0.0
  %1103 = vmatpush1.msra.mxu0 0.0
  %1104 = vmatprep.subr.mxu0 0.0
  %1105 = vmatpush1.msra.mxu0 0.0
  %1106 = vmatprep.subr.mxu0 0.0
  %1107 = vmatpush1.msra.mxu0 0.0
  %1108 = vmatprep.subr.mxu0 0.0
  %1109 = vmatpush1.msra.mxu0 0.0
  %1110 = vmatprep.subr.mxu0 0.0
  %1111 = vmatpush1.msra.mxu0 0.0
  %1112 = vmatprep.subr.mxu0 0.0
  %1113 = vmatpush1.msra.mxu0 0.0
  %1114 = vmatprep.subr.mxu0 0.0
  %1115 = vmatpush1.msra.mxu0 0.0
  %1116 = vmatprep.subr.mxu0 0.0
  %1117 = vmatpush1.msra.mxu0 0.0
  %1118 = vmatprep.subr.mxu0 0.0
  %1119 = vmatpush1.msra.mxu0 0.0
  %1120 = vmatprep.subr.mxu0 0.0
  %1121 = vmatpush1.msra.mxu0 0.0
  %1122 = vmatprep.subr.mxu0 0.0
  %1123 = vmatpush1.msra.mxu0 0.0
  %1124 = vmatprep.subr.mxu0 0.0
  %1125 = vmatpush1.msra.mxu0 0.0
  %1126 = vmatprep.subr.mxu0 0.0
  %1127 = vmatpush1.msra.mxu0 0.0
  %1128 = vmatprep.subr.mxu0 0.0
  %1129 = vmatpush1.msra.mxu0 0.0
  %1130 = vmatprep.mubr.f32.mxu0 0.0
  %1131 = vmatmul.mubr.f32.gmra.mrb[0].mxu0 %v1064
  %v1132 = vpop.f32.mrb[0].mxu0
  %v1133 = vadd.f32 0.0, %v1132
  %v1134 = vpop.f32.mrb[0].mxu0
  %1135 = vdwg.mxu0
  %v1136 = vadd.f32 %v895, %v1133
  %v1137 = vld [vmem:[%s5] sm:$0x1]
  %v1139 = vlaneseq
  %v1140 = vshrl.u32 %v1139, 7
  %v1141 = vsub.s32 0, %v1140
  %v1142 = vrot.slane %v1137, %v1141
  %v1144 = vadd.f32 %v1136, %v1142
  %v1145 = vadd.f32 %v47, %v1144
  %v1146 = vld [vmem:[%s6] sm:$0x1]
  %v1147 = vld [vmem:[%s7] sm:$0x1]
  %v1148 = vsel %vm85, %v1145, 0.0
  %1149 = vadd.xlane.f32.xlu0 %v1148
  %v1150 = vpop.xlane.xlu0 %1149
  %v1151 = vrcp.pop 64.0
  %v1152 = vmul.f32 %v1150, %v1151
  %v1153 = vsub.f32 %v1145, %v1152
  %v1154 = vmul.f32 %v1153, %v1153
  %v1155 = vsel %vm85, %v1154, 0.0
  %1156 = vadd.xlane.f32.xlu0 %v1155
  %v1157 = vpop.xlane.xlu0 %1156
  %v1158 = vmul.f32 %v1157, %v1151
  %v1159 = vadd.f32 %v1158, 1e-05
  %v1160 = vrsqrt.pop %v1159
  %v1161 = vmul.f32 %v1153, %v1160
  %v1163 = vlaneseq
  %v1164 = vshrl.u32 %v1163, 7
  %v1165 = vsub.s32 0, %v1164
  %v1166 = vrot.slane %v1146, %v1165
  %v1168 = vmul.f32 %v1161, %v1166
  %v1170 = vlaneseq
  %v1171 = vshrl.u32 %v1170, 7
  %v1172 = vsub.s32 0, %v1171
  %v1173 = vrot.slane %v1147, %v1172
  %v1175 = vadd.f32 %v1168, %v1173
  %v1176 = vld [vmem:[%s8] sm:$0xff]
  %v1177 = vld [vmem:[%s8 + $0x8] sm:$0xff]
  %v1178 = vld [vmem:[%s8 + $0x10] sm:$0xff]
  %v1179 = vld [vmem:[%s8 + $0x18] sm:$0xff]
  %v1180 = vld [vmem:[%s8 + $0x20] sm:$0xff]
  %v1181 = vld [vmem:[%s8 + $0x28] sm:$0xff]
  %v1182 = vld [vmem:[%s8 + $0x30] sm:$0xff]
  %v1183 = vld [vmem:[%s8 + $0x38] sm:$0xff]
  %v1184 = vld [vmem:[%s9] sm:$0x1]
  %v1186 = vlaneseq
  %v1187 = vshrl.u32 %v1186, 7
  %v1188 = vsub.s32 0, %v1187
  %v1189 = vrot.slane %v1184, %v1188
  %v1192 = vsel %vm85, %v1175, 0
  %1194 = vmatprep.subr.mxu0 0.0
  %1195 = vmatpush1.msra.mxu0 %v1176
  %1196 = vmatprep.subr.mxu0 0.0
  %1197 = vmatpush1.msra.mxu0 %v1177
  %1198 = vmatprep.subr.mxu0 0.0
  %1199 = vmatpush1.msra.mxu0 %v1178
  %1200 = vmatprep.subr.mxu0 0.0
  %1201 = vmatpush1.msra.mxu0 %v1179
  %1202 = vmatprep.subr.mxu0 0.0
  %1203 = vmatpush1.msra.mxu0 %v1180
  %1204 = vmatprep.subr.mxu0 0.0
  %1205 = vmatpush1.msra.mxu0 %v1181
  %1206 = vmatprep.subr.mxu0 0.0
  %1207 = vmatpush1.msra.mxu0 %v1182
  %1208 = vmatprep.subr.mxu0 0.0
  %1209 = vmatpush1.msra.mxu0 %v1183
  %1210 = vmatprep.subr.mxu0 0.0
  %1211 = vmatpush1.msra.mxu0 0.0
  %1212 = vmatprep.subr.mxu0 0.0
  %1213 = vmatpush1.msra.mxu0 0.0
  %1214 = vmatprep.subr.mxu0 0.0
  %1215 = vmatpush1.msra.mxu0 0.0
  %1216 = vmatprep.subr.mxu0 0.0
  %1217 = vmatpush1.msra.mxu0 0.0
  %1218 = vmatprep.subr.mxu0 0.0
  %1219 = vmatpush1.msra.mxu0 0.0
  %1220 = vmatprep.subr.mxu0 0.0
  %1221 = vmatpush1.msra.mxu0 0.0
  %1222 = vmatprep.subr.mxu0 0.0
  %1223 = vmatpush1.msra.mxu0 0.0
  %1224 = vmatprep.subr.mxu0 0.0
  %1225 = vmatpush1.msra.mxu0 0.0
  %1226 = vmatprep.subr.mxu0 0.0
  %1227 = vmatpush1.msra.mxu0 0.0
  %1228 = vmatprep.subr.mxu0 0.0
  %1229 = vmatpush1.msra.mxu0 0.0
  %1230 = vmatprep.subr.mxu0 0.0
  %1231 = vmatpush1.msra.mxu0 0.0
  %1232 = vmatprep.subr.mxu0 0.0
  %1233 = vmatpush1.msra.mxu0 0.0
  %1234 = vmatprep.subr.mxu0 0.0
  %1235 = vmatpush1.msra.mxu0 0.0
  %1236 = vmatprep.subr.mxu0 0.0
  %1237 = vmatpush1.msra.mxu0 0.0
  %1238 = vmatprep.subr.mxu0 0.0
  %1239 = vmatpush1.msra.mxu0 0.0
  %1240 = vmatprep.subr.mxu0 0.0
  %1241 = vmatpush1.msra.mxu0 0.0
  %1242 = vmatprep.subr.mxu0 0.0
  %1243 = vmatpush1.msra.mxu0 0.0
  %1244 = vmatprep.subr.mxu0 0.0
  %1245 = vmatpush1.msra.mxu0 0.0
  %1246 = vmatprep.subr.mxu0 0.0
  %1247 = vmatpush1.msra.mxu0 0.0
  %1248 = vmatprep.subr.mxu0 0.0
  %1249 = vmatpush1.msra.mxu0 0.0
  %1250 = vmatprep.subr.mxu0 0.0
  %1251 = vmatpush1.msra.mxu0 0.0
  %1252 = vmatprep.subr.mxu0 0.0
  %1253 = vmatpush1.msra.mxu0 0.0
  %1254 = vmatprep.subr.mxu0 0.0
  %1255 = vmatpush1.msra.mxu0 0.0
  %1256 = vmatprep.subr.mxu0 0.0
  %1257 = vmatpush1.msra.mxu0 0.0
  %1258 = vmatprep.mubr.f32.mxu0 0.0
  %1259 = vmatmul.mubr.f32.gmra.mrb[0].mxu0 %v1192
  %v1260 = vpop.f32.mrb[0].mxu0
  %v1261 = vadd.f32 %v1189, %v1260
  %v1262 = vpop.f32.mrb[0].mxu0
  %1263 = vdwg.mxu0
  %v1264 = vmax.f32 %v1261, 0.0
  %v1265 = vld [vmem:[%s10] sm:$0xff]
  %v1266 = vld [vmem:[%s10 + $0x8] sm:$0xff]
  %v1267 = vld [vmem:[%s10 + $0x10] sm:$0xff]
  %v1268 = vld [vmem:[%s10 + $0x18] sm:$0xff]
  %v1269 = vld [vmem:[%s10 + $0x20] sm:$0xff]
  %v1270 = vld [vmem:[%s10 + $0x28] sm:$0xff]
  %v1271 = vld [vmem:[%s10 + $0x30] sm:$0xff]
  %v1272 = vld [vmem:[%s10 + $0x38] sm:$0xff]
  %v1273 = vld [vmem:[%s11] sm:$0x1]
  %v1275 = vlaneseq
  %v1276 = vshrl.u32 %v1275, 7
  %v1277 = vsub.s32 0, %v1276
  %v1278 = vrot.slane %v1273, %v1277
  %v1281 = vsel %vm85, %v1264, 0
  %1283 = vmatprep.subr.mxu0 0.0
  %1284 = vmatpush1.msra.mxu0 %v1265
  %1285 = vmatprep.subr.mxu0 0.0
  %1286 = vmatpush1.msra.mxu0 %v1266
  %1287 = vmatprep.subr.mxu0 0.0
  %1288 = vmatpush1.msra.mxu0 %v1267
  %1289 = vmatprep.subr.mxu0 0.0
  %1290 = vmatpush1.msra.mxu0 %v1268
  %1291 = vmatprep.subr.mxu0 0.0
  %1292 = vmatpush1.msra.mxu0 %v1269
  %1293 = vmatprep.subr.mxu0 0.0
  %1294 = vmatpush1.msra.mxu0 %v1270
  %1295 = vmatprep.subr.mxu0 0.0
  %1296 = vmatpush1.msra.mxu0 %v1271
  %1297 = vmatprep.subr.mxu0 0.0
  %1298 = vmatpush1.msra.mxu0 %v1272
  %1299 = vmatprep.subr.mxu0 0.0
  %1300 = vmatpush1.msra.mxu0 0.0
  %1301 = vmatprep.subr.mxu0 0.0
  %1302 = vmatpush1.msra.mxu0 0.0
  %1303 = vmatprep.subr.mxu0 0.0
  %1304 = vmatpush1.msra.mxu0 0.0
  %1305 = vmatprep.subr.mxu0 0.0
  %1306 = vmatpush1.msra.mxu0 0.0
  %1307 = vmatprep.subr.mxu0 0.0
  %1308 = vmatpush1.msra.mxu0 0.0
  %1309 = vmatprep.subr.mxu0 0.0
  %1310 = vmatpush1.msra.mxu0 0.0
  %1311 = vmatprep.subr.mxu0 0.0
  %1312 = vmatpush1.msra.mxu0 0.0
  %1313 = vmatprep.subr.mxu0 0.0
  %1314 = vmatpush1.msra.mxu0 0.0
  %1315 = vmatprep.subr.mxu0 0.0
  %1316 = vmatpush1.msra.mxu0 0.0
  %1317 = vmatprep.subr.mxu0 0.0
  %1318 = vmatpush1.msra.mxu0 0.0
  %1319 = vmatprep.subr.mxu0 0.0
  %1320 = vmatpush1.msra.mxu0 0.0
  %1321 = vmatprep.subr.mxu0 0.0
  %1322 = vmatpush1.msra.mxu0 0.0
  %1323 = vmatprep.subr.mxu0 0.0
  %1324 = vmatpush1.msra.mxu0 0.0
  %1325 = vmatprep.subr.mxu0 0.0
  %1326 = vmatpush1.msra.mxu0 0.0
  %1327 = vmatprep.subr.mxu0 0.0
  %1328 = vmatpush1.msra.mxu0 0.0
  %1329 = vmatprep.subr.mxu0 0.0
  %1330 = vmatpush1.msra.mxu0 0.0
  %1331 = vmatprep.subr.mxu0 0.0
  %1332 = vmatpush1.msra.mxu0 0.0
  %1333 = vmatprep.subr.mxu0 0.0
  %1334 = vmatpush1.msra.mxu0 0.0
  %1335 = vmatprep.subr.mxu0 0.0
  %1336 = vmatpush1.msra.mxu0 0.0
  %1337 = vmatprep.subr.mxu0 0.0
  %1338 = vmatpush1.msra.mxu0 0.0
  %1339 = vmatprep.subr.mxu0 0.0
  %1340 = vmatpush1.msra.mxu0 0.0
  %1341 = vmatprep.subr.mxu0 0.0
  %1342 = vmatpush1.msra.mxu0 0.0
  %1343 = vmatprep.subr.mxu0 0.0
  %1344 = vmatpush1.msra.mxu0 0.0
  %1345 = vmatprep.subr.mxu0 0.0
  %1346 = vmatpush1.msra.mxu0 0.0
  %1347 = vmatprep.mubr.f32.mxu0 0.0
  %1348 = vmatmul.mubr.f32.gmra.mrb[0].mxu0 %v1281
  %v1349 = vpop.f32.mrb[0].mxu0
  %v1350 = vadd.f32 %v1278, %v1349
  %v1351 = vpop.f32.mrb[0].mxu0
  %1352 = vdwg.mxu0
  %v1353 = vadd.f32 %v1175, %v1350
  %v1354 = vld [vmem:[%s12] sm:$0x1]
  %v1355 = vld [vmem:[%s13] sm:$0x1]
  %v1356 = vsel %vm85, %v1353, 0.0
  %1357 = vadd.xlane.f32.xlu0 %v1356
  %v1358 = vpop.xlane.xlu0 %1357
  %v1359 = vmul.f32 %v1358, %v1151
  %v1360 = vsub.f32 %v1353, %v1359
  %v1361 = vmul.f32 %v1360, %v1360
  %v1362 = vsel %vm85, %v1361, 0.0
  %1363 = vadd.xlane.f32.xlu0 %v1362
  %v1364 = vpop.xlane.xlu0 %1363
  %v1365 = vmul.f32 %v1364, %v1151
  %v1366 = vadd.f32 %v1365, 1e-05
  %v1367 = vrsqrt.pop %v1366
  %v1368 = vmul.f32 %v1360, %v1367
  %v1370 = vlaneseq
  %v1371 = vshrl.u32 %v1370, 7
  %v1372 = vsub.s32 0, %v1371
  %v1373 = vrot.slane %v1354, %v1372
  %v1375 = vmul.f32 %v1368, %v1373
  %v1377 = vlaneseq
  %v1378 = vshrl.u32 %v1377, 7
  %v1379 = vsub.s32 0, %v1378
  %v1380 = vrot.slane %v1355, %v1379
  %v1382 = vadd.f32 %v1375, %v1380
  %1383 = vst.msk [vmem:[%s14] sm:$0xff] %vm85, %v1382
  %s1384 = scalar_lea.vmem %s1, 1
  %v1385 = vld [vmem:[%s1384] sm:$0x1]
  %1387 = vrot.lane.b32.xlu0 %v165, 64
  %v1388 = vpop.permute.xlu0 %1387
  %v1389 = vsel %vm173, %v165, 0
  %v1391 = vsel %vm173, %v1388, 0
  %1393 = vmatprep.subr.mxu0 0.0
  %1394 = vmatpush1.xpose.msra.mxu0 %v1391
  %1395 = vmatprep.subr.mxu0 0.0
  %1396 = vmatpush1.xpose.msra.mxu0 0.0
  %1397 = vmatprep.subr.mxu0 0.0
  %1398 = vmatpush1.xpose.msra.mxu0 0.0
  %1399 = vmatprep.subr.mxu0 0.0
  %1400 = vmatpush1.xpose.msra.mxu0 0.0
  %1401 = vmatprep.subr.mxu0 0.0
  %1402 = vmatpush1.xpose.msra.mxu0 0.0
  %1403 = vmatprep.subr.mxu0 0.0
  %1404 = vmatpush1.xpose.msra.mxu0 0.0
  %1405 = vmatprep.subr.mxu0 0.0
  %1406 = vmatpush1.xpose.msra.mxu0 0.0
  %1407 = vmatprep.subr.mxu0 0.0
  %1408 = vmatpush1.xpose.msra.mxu0 0.0
  %1409 = vmatprep.subr.mxu0 0.0
  %1410 = vmatpush1.xpose.msra.mxu0 0.0
  %1411 = vmatprep.subr.mxu0 0.0
  %1412 = vmatpush1.xpose.msra.mxu0 0.0
  %1413 = vmatprep.subr.mxu0 0.0
  %1414 = vmatpush1.xpose.msra.mxu0 0.0
  %1415 = vmatprep.subr.mxu0 0.0
  %1416 = vmatpush1.xpose.msra.mxu0 0.0
  %1417 = vmatprep.subr.mxu0 0.0
  %1418 = vmatpush1.xpose.msra.mxu0 0.0
  %1419 = vmatprep.subr.mxu0 0.0
  %1420 = vmatpush1.xpose.msra.mxu0 0.0
  %1421 = vmatprep.subr.mxu0 0.0
  %1422 = vmatpush1.xpose.msra.mxu0 0.0
  %1423 = vmatprep.subr.mxu0 0.0
  %1424 = vmatpush1.xpose.msra.mxu0 0.0
  %1425 = vmatprep.subr.mxu0 0.0
  %1426 = vmatpush1.xpose.msra.mxu0 0.0
  %1427 = vmatprep.subr.mxu0 0.0
  %1428 = vmatpush1.xpose.msra.mxu0 0.0
  %1429 = vmatprep.subr.mxu0 0.0
  %1430 = vmatpush1.xpose.msra.mxu0 0.0
  %1431 = vmatprep.subr.mxu0 0.0
  %1432 = vmatpush1.xpose.msra.mxu0 0.0
  %1433 = vmatprep.subr.mxu0 0.0
  %1434 = vmatpush1.xpose.msra.mxu0 0.0
  %1435 = vmatprep.subr.mxu0 0.0
  %1436 = vmatpush1.xpose.msra.mxu0 0.0
  %1437 = vmatprep.subr.mxu0 0.0
  %1438 = vmatpush1.xpose.msra.mxu0 0.0
  %1439 = vmatprep.subr.mxu0 0.0
  %1440 = vmatpush1.xpose.msra.mxu0 0.0
  %1441 = vmatprep.subr.mxu0 0.0
  %1442 = vmatpush1.xpose.msra.mxu0 0.0
  %1443 = vmatprep.subr.mxu0 0.0
  %1444 = vmatpush1.xpose.msra.mxu0 0.0
  %1445 = vmatprep.subr.mxu0 0.0
  %1446 = vmatpush1.xpose.msra.mxu0 0.0
  %1447 = vmatprep.subr.mxu0 0.0
  %1448 = vmatpush1.xpose.msra.mxu0 0.0
  %1449 = vmatprep.subr.mxu0 0.0
  %1450 = vmatpush1.xpose.msra.mxu0 0.0
  %1451 = vmatprep.subr.mxu0 0.0
  %1452 = vmatpush1.xpose.msra.mxu0 0.0
  %1453 = vmatprep.subr.mxu0 0.0
  %1454 = vmatpush1.xpose.msra.mxu0 0.0
  %1455 = vmatprep.subr.mxu0 0.0
  %1456 = vmatpush1.xpose.msra.mxu0 0.0
  %1457 = vmatprep.mubr.f32.mxu0 0.0
  %1458 = vmatmul.mubr.f32.gmra.mrb[0].mxu0 %v1389
  %v1459 = vpop.f32.mrb[0].mxu0
  %v1460 = vadd.f32 0.0, %v1459
  %v1461 = vpop.f32.mrb[0].mxu0
  %1462 = vdwg.mxu0
  %v1463 = vmul.f32 %v1460, 0.25
  %v1465 = vlaneseq
  %v1466 = vshrl.u32 %v1465, 7
  %v1467 = vsub.s32 0, %v1466
  %v1468 = vrot.slane %v1385, %v1467
  %v1470 = vadd.f32 %v1463, %v1468
  %v1471 = vsel %vm256, %v1470, -inf
  %1472 = vmax.xlane.f32.xlu0 %v1471
  %v1473 = vpop.xlane.xlu0 %1472
  %v1474 = vsub.f32 %v1470, %v1473
  %v1475 = vmul.f32 %v1474, 1.442695
  %v1476 = vpow.pop %v1475
  %v1477 = vsel %vm256, %v1476, 0.0
  %1478 = vadd.xlane.f32.xlu0 %v1477
  %v1479 = vpop.xlane.xlu0 %1478
  %v1480 = vrcp.pop %v1479
  %v1481 = vmul.f32 %v1476, %v1480
  %v1483 = vsel %vm256, %v1481, 0
  %1485 = vmatprep.subr.mxu0 0.0
  %1486 = vmatpush1.msra.mxu0 %v167
  %1487 = vmatprep.subr.mxu0 0.0
  %1488 = vmatpush1.msra.mxu0 0.0
  %1489 = vmatprep.subr.mxu0 0.0
  %1490 = vmatpush1.msra.mxu0 0.0
  %1491 = vmatprep.subr.mxu0 0.0
  %1492 = vmatpush1.msra.mxu0 0.0
  %1493 = vmatprep.subr.mxu0 0.0
  %1494 = vmatpush1.msra.mxu0 0.0
  %1495 = vmatprep.subr.mxu0 0.0
  %1496 = vmatpush1.msra.mxu0 0.0
  %1497 = vmatprep.subr.mxu0 0.0
  %1498 = vmatpush1.msra.mxu0 0.0
  %1499 = vmatprep.subr.mxu0 0.0
  %1500 = vmatpush1.msra.mxu0 0.0
  %1501 = vmatprep.subr.mxu0 0.0
  %1502 = vmatpush1.msra.mxu0 0.0
  %1503 = vmatprep.subr.mxu0 0.0
  %1504 = vmatpush1.msra.mxu0 0.0
  %1505 = vmatprep.subr.mxu0 0.0
  %1506 = vmatpush1.msra.mxu0 0.0
  %1507 = vmatprep.subr.mxu0 0.0
  %1508 = vmatpush1.msra.mxu0 0.0
  %1509 = vmatprep.subr.mxu0 0.0
  %1510 = vmatpush1.msra.mxu0 0.0
  %1511 = vmatprep.subr.mxu0 0.0
  %1512 = vmatpush1.msra.mxu0 0.0
  %1513 = vmatprep.subr.mxu0 0.0
  %1514 = vmatpush1.msra.mxu0 0.0
  %1515 = vmatprep.subr.mxu0 0.0
  %1516 = vmatpush1.msra.mxu0 0.0
  %1517 = vmatprep.subr.mxu0 0.0
  %1518 = vmatpush1.msra.mxu0 0.0
  %1519 = vmatprep.subr.mxu0 0.0
  %1520 = vmatpush1.msra.mxu0 0.0
  %1521 = vmatprep.subr.mxu0 0.0
  %1522 = vmatpush1.msra.mxu0 0.0
  %1523 = vmatprep.subr.mxu0 0.0
  %1524 = vmatpush1.msra.mxu0 0.0
  %1525 = vmatprep.subr.mxu0 0.0
  %1526 = vmatpush1.msra.mxu0 0.0
  %1527 = vmatprep.subr.mxu0 0.0
  %1528 = vmatpush1.msra.mxu0 0.0
  %1529 = vmatprep.subr.mxu0 0.0
  %1530 = vmatpush1.msra.mxu0 0.0
  %1531 = vmatprep.subr.mxu0 0.0
  %1532 = vmatpush1.msra.mxu0 0.0
  %1533 = vmatprep.subr.mxu0 0.0
  %1534 = vmatpush1.msra.mxu0 0.0
  %1535 = vmatprep.subr.mxu0 0.0
  %1536 = vmatpush1.msra.mxu0 0.0
  %1537 = vmatprep.subr.mxu0 0.0
  %1538 = vmatpush1.msra.mxu0 0.0
  %1539 = vmatprep.subr.mxu0 0.0
  %1540 = vmatpush1.msra.mxu0 0.0
  %1541 = vmatprep.subr.mxu0 0.0
  %1542 = vmatpush1.msra.mxu0 0.0
  %1543 = vmatprep.subr.mxu0 0.0
  %1544 = vmatpush1.msra.mxu0 0.0
  %1545 = vmatprep.subr.mxu0 0.0
  %1546 = vmatpush1.msra.mxu0 0.0
  %1547 = vmatprep.subr.mxu0 0.0
  %1548 = vmatpush1.msra.mxu0 0.0
  %1549 = vmatprep.mubr.f32.mxu0 0.0
  %1550 = vmatmul.mubr.f32.gmra.mrb[0].mxu0 %v1483
  %v1551 = vpop.f32.mrb[0].mxu0
  %v1552 = vadd.f32 0.0, %v1551
  %v1553 = vpop.f32.mrb[0].mxu0
  %1554 = vdwg.mxu0
  %1555 = vrot.lane.b32.xlu0 %v165, 112
  %v1556 = vpop.permute.xlu0 %1555
  %1557 = vrot.lane.b32.xlu0 %v165, 48
  %v1558 = vpop.permute.xlu0 %1557
  %v1559 = vsel %vm173, %v1556, 0
  %v1561 = vsel %vm173, %v1558, 0
  %1563 = vmatprep.subr.mxu0 0.0
  %1564 = vmatpush1.xpose.msra.mxu0 %v1561
  %1565 = vmatprep.subr.mxu0 0.0
  %1566 = vmatpush1.xpose.msra.mxu0 0.0
  %1567 = vmatprep.subr.mxu0 0.0
  %1568 = vmatpush1.xpose.msra.mxu0 0.0
  %1569 = vmatprep.subr.mxu0 0.0
  %1570 = vmatpush1.xpose.msra.mxu0 0.0
  %1571 = vmatprep.subr.mxu0 0.0
  %1572 = vmatpush1.xpose.msra.mxu0 0.0
  %1573 = vmatprep.subr.mxu0 0.0
  %1574 = vmatpush1.xpose.msra.mxu0 0.0
  %1575 = vmatprep.subr.mxu0 0.0
  %1576 = vmatpush1.xpose.msra.mxu0 0.0
  %1577 = vmatprep.subr.mxu0 0.0
  %1578 = vmatpush1.xpose.msra.mxu0 0.0
  %1579 = vmatprep.subr.mxu0 0.0
  %1580 = vmatpush1.xpose.msra.mxu0 0.0
  %1581 = vmatprep.subr.mxu0 0.0
  %1582 = vmatpush1.xpose.msra.mxu0 0.0
  %1583 = vmatprep.subr.mxu0 0.0
  %1584 = vmatpush1.xpose.msra.mxu0 0.0
  %1585 = vmatprep.subr.mxu0 0.0
  %1586 = vmatpush1.xpose.msra.mxu0 0.0
  %1587 = vmatprep.subr.mxu0 0.0
  %1588 = vmatpush1.xpose.msra.mxu0 0.0
  %1589 = vmatprep.subr.mxu0 0.0
  %1590 = vmatpush1.xpose.msra.mxu0 0.0
  %1591 = vmatprep.subr.mxu0 0.0
  %1592 = vmatpush1.xpose.msra.mxu0 0.0
  %1593 = vmatprep.subr.mxu0 0.0
  %1594 = vmatpush1.xpose.msra.mxu0 0.0
  %1595 = vmatprep.subr.mxu0 0.0
  %1596 = vmatpush1.xpose.msra.mxu0 0.0
  %1597 = vmatprep.subr.mxu0 0.0
  %1598 = vmatpush1.xpose.msra.mxu0 0.0
  %1599 = vmatprep.subr.mxu0 0.0
  %1600 = vmatpush1.xpose.msra.mxu0 0.0
  %1601 = vmatprep.subr.mxu0 0.0
  %1602 = vmatpush1.xpose.msra.mxu0 0.0
  %1603 = vmatprep.subr.mxu0 0.0
  %1604 = vmatpush1.xpose.msra.mxu0 0.0
  %1605 = vmatprep.subr.mxu0 0.0
  %1606 = vmatpush1.xpose.msra.mxu0 0.0
  %1607 = vmatprep.subr.mxu0 0.0
  %1608 = vmatpush1.xpose.msra.mxu0 0.0
  %1609 = vmatprep.subr.mxu0 0.0
  %1610 = vmatpush1.xpose.msra.mxu0 0.0
  %1611 = vmatprep.subr.mxu0 0.0
  %1612 = vmatpush1.xpose.msra.mxu0 0.0
  %1613 = vmatprep.subr.mxu0 0.0
  %1614 = vmatpush1.xpose.msra.mxu0 0.0
  %1615 = vmatprep.subr.mxu0 0.0
  %1616 = vmatpush1.xpose.msra.mxu0 0.0
  %1617 = vmatprep.subr.mxu0 0.0
  %1618 = vmatpush1.xpose.msra.mxu0 0.0
  %1619 = vmatprep.subr.mxu0 0.0
  %1620 = vmatpush1.xpose.msra.mxu0 0.0
  %1621 = vmatprep.subr.mxu0 0.0
  %1622 = vmatpush1.xpose.msra.mxu0 0.0
  %1623 = vmatprep.subr.mxu0 0.0
  %1624 = vmatpush1.xpose.msra.mxu0 0.0
  %1625 = vmatprep.subr.mxu0 0.0
  %1626 = vmatpush1.xpose.msra.mxu0 0.0
  %1627 = vmatprep.mubr.f32.mxu0 0.0
  %1628 = vmatmul.mubr.f32.gmra.mrb[0].mxu0 %v1559
  %v1629 = vpop.f32.mrb[0].mxu0
  %v1630 = vadd.f32 0.0, %v1629
  %v1631 = vpop.f32.mrb[0].mxu0
  %1632 = vdwg.mxu0
  %v1633 = vmul.f32 %v1630, 0.25
  %v1634 = vadd.f32 %v1633, %v1468
  %v1635 = vsel %vm256, %v1634, -inf
  %1636 = vmax.xlane.f32.xlu0 %v1635
  %v1637 = vpop.xlane.xlu0 %1636
  %v1638 = vsub.f32 %v1634, %v1637
  %v1639 = vmul.f32 %v1638, 1.442695
  %v1640 = vpow.pop %v1639
  %v1641 = vsel %vm256, %v1640, 0.0
  %1642 = vadd.xlane.f32.xlu0 %v1641
  %v1643 = vpop.xlane.xlu0 %1642
  %v1644 = vrcp.pop %v1643
  %v1645 = vmul.f32 %v1640, %v1644
  %1647 = vrot.lane.b32.xlu0 %v167, 112
  %v1648 = vpop.permute.xlu0 %1647
  %v1651 = vsel %vm256, %v1645, 0
  %1653 = vmatprep.subr.mxu0 0.0
  %1654 = vmatpush1.msra.mxu0 %v1648
  %1655 = vmatprep.subr.mxu0 0.0
  %1656 = vmatpush1.msra.mxu0 0.0
  %1657 = vmatprep.subr.mxu0 0.0
  %1658 = vmatpush1.msra.mxu0 0.0
  %1659 = vmatprep.subr.mxu0 0.0
  %1660 = vmatpush1.msra.mxu0 0.0
  %1661 = vmatprep.subr.mxu0 0.0
  %1662 = vmatpush1.msra.mxu0 0.0
  %1663 = vmatprep.subr.mxu0 0.0
  %1664 = vmatpush1.msra.mxu0 0.0
  %1665 = vmatprep.subr.mxu0 0.0
  %1666 = vmatpush1.msra.mxu0 0.0
  %1667 = vmatprep.subr.mxu0 0.0
  %1668 = vmatpush1.msra.mxu0 0.0
  %1669 = vmatprep.subr.mxu0 0.0
  %1670 = vmatpush1.msra.mxu0 0.0
  %1671 = vmatprep.subr.mxu0 0.0
  %1672 = vmatpush1.msra.mxu0 0.0
  %1673 = vmatprep.subr.mxu0 0.0
  %1674 = vmatpush1.msra.mxu0 0.0
  %1675 = vmatprep.subr.mxu0 0.0
  %1676 = vmatpush1.msra.mxu0 0.0
  %1677 = vmatprep.subr.mxu0 0.0
  %1678 = vmatpush1.msra.mxu0 0.0
  %1679 = vmatprep.subr.mxu0 0.0
  %1680 = vmatpush1.msra.mxu0 0.0
  %1681 = vmatprep.subr.mxu0 0.0
  %1682 = vmatpush1.msra.mxu0 0.0
  %1683 = vmatprep.subr.mxu0 0.0
  %1684 = vmatpush1.msra.mxu0 0.0
  %1685 = vmatprep.subr.mxu0 0.0
  %1686 = vmatpush1.msra.mxu0 0.0
  %1687 = vmatprep.subr.mxu0 0.0
  %1688 = vmatpush1.msra.mxu0 0.0
  %1689 = vmatprep.subr.mxu0 0.0
  %1690 = vmatpush1.msra.mxu0 0.0
  %1691 = vmatprep.subr.mxu0 0.0
  %1692 = vmatpush1.msra.mxu0 0.0
  %1693 = vmatprep.subr.mxu0 0.0
  %1694 = vmatpush1.msra.mxu0 0.0
  %1695 = vmatprep.subr.mxu0 0.0
  %1696 = vmatpush1.msra.mxu0 0.0
  %1697 = vmatprep.subr.mxu0 0.0
  %1698 = vmatpush1.msra.mxu0 0.0
  %1699 = vmatprep.subr.mxu0 0.0
  %1700 = vmatpush1.msra.mxu0 0.0
  %1701 = vmatprep.subr.mxu0 0.0
  %1702 = vmatpush1.msra.mxu0 0.0
  %1703 = vmatprep.subr.mxu0 0.0
  %1704 = vmatpush1.msra.mxu0 0.0
  %1705 = vmatprep.subr.mxu0 0.0
  %1706 = vmatpush1.msra.mxu0 0.0
  %1707 = vmatprep.subr.mxu0 0.0
  %1708 = vmatpush1.msra.mxu0 0.0
  %1709 = vmatprep.subr.mxu0 0.0
  %1710 = vmatpush1.msra.mxu0 0.0
  %1711 = vmatprep.subr.mxu0 0.0
  %1712 = vmatpush1.msra.mxu0 0.0
  %1713 = vmatprep.subr.mxu0 0.0
  %1714 = vmatpush1.msra.mxu0 0.0
  %1715 = vmatprep.subr.mxu0 0.0
  %1716 = vmatpush1.msra.mxu0 0.0
  %1717 = vmatprep.mubr.f32.mxu0 0.0
  %1718 = vmatmul.mubr.f32.gmra.mrb[0].mxu0 %v1651
  %v1719 = vpop.f32.mrb[0].mxu0
  %v1720 = vadd.f32 0.0, %v1719
  %v1721 = vpop.f32.mrb[0].mxu0
  %1722 = vdwg.mxu0
  %v1724 = vsel %vm173, %v1720, 0
  %1726 = vmatprep.subr.mxu0 0.0
  %1727 = vmatpush1.msra.mxu0 %v51
  %1728 = vmatprep.subr.mxu0 0.0
  %1729 = vmatpush1.msra.mxu0 %v52
  %1730 = vmatprep.subr.mxu0 0.0
  %1731 = vmatpush1.msra.mxu0 0.0
  %1732 = vmatprep.subr.mxu0 0.0
  %1733 = vmatpush1.msra.mxu0 0.0
  %1734 = vmatprep.subr.mxu0 0.0
  %1735 = vmatpush1.msra.mxu0 0.0
  %1736 = vmatprep.subr.mxu0 0.0
  %1737 = vmatpush1.msra.mxu0 0.0
  %1738 = vmatprep.subr.mxu0 0.0
  %1739 = vmatpush1.msra.mxu0 0.0
  %1740 = vmatprep.subr.mxu0 0.0
  %1741 = vmatpush1.msra.mxu0 0.0
  %1742 = vmatprep.subr.mxu0 0.0
  %1743 = vmatpush1.msra.mxu0 0.0
  %1744 = vmatprep.subr.mxu0 0.0
  %1745 = vmatpush1.msra.mxu0 0.0
  %1746 = vmatprep.subr.mxu0 0.0
  %1747 = vmatpush1.msra.mxu0 0.0
  %1748 = vmatprep.subr.mxu0 0.0
  %1749 = vmatpush1.msra.mxu0 0.0
  %1750 = vmatprep.subr.mxu0 0.0
  %1751 = vmatpush1.msra.mxu0 0.0
  %1752 = vmatprep.subr.mxu0 0.0
  %1753 = vmatpush1.msra.mxu0 0.0
  %1754 = vmatprep.subr.mxu0 0.0
  %1755 = vmatpush1.msra.mxu0 0.0
  %1756 = vmatprep.subr.mxu0 0.0
  %1757 = vmatpush1.msra.mxu0 0.0
  %1758 = vmatprep.subr.mxu0 0.0
  %1759 = vmatpush1.msra.mxu0 0.0
  %1760 = vmatprep.subr.mxu0 0.0
  %1761 = vmatpush1.msra.mxu0 0.0
  %1762 = vmatprep.subr.mxu0 0.0
  %1763 = vmatpush1.msra.mxu0 0.0
  %1764 = vmatprep.subr.mxu0 0.0
  %1765 = vmatpush1.msra.mxu0 0.0
  %1766 = vmatprep.subr.mxu0 0.0
  %1767 = vmatpush1.msra.mxu0 0.0
  %1768 = vmatprep.subr.mxu0 0.0
  %1769 = vmatpush1.msra.mxu0 0.0
  %1770 = vmatprep.subr.mxu0 0.0
  %1771 = vmatpush1.msra.mxu0 0.0
  %1772 = vmatprep.subr.mxu0 0.0
  %1773 = vmatpush1.msra.mxu0 0.0
  %1774 = vmatprep.subr.mxu0 0.0
  %1775 = vmatpush1.msra.mxu0 0.0
  %1776 = vmatprep.subr.mxu0 0.0
  %1777 = vmatpush1.msra.mxu0 0.0
  %1778 = vmatprep.subr.mxu0 0.0
  %1779 = vmatpush1.msra.mxu0 0.0
  %1780 = vmatprep.subr.mxu0 0.0
  %1781 = vmatpush1.msra.mxu0 0.0
  %1782 = vmatprep.subr.mxu0 0.0
  %1783 = vmatpush1.msra.mxu0 0.0
  %1784 = vmatprep.subr.mxu0 0.0
  %1785 = vmatpush1.msra.mxu0 0.0
  %1786 = vmatprep.subr.mxu0 0.0
  %1787 = vmatpush1.msra.mxu0 0.0
  %1788 = vmatprep.subr.mxu0 0.0
  %1789 = vmatpush1.msra.mxu0 0.0
  %1790 = vmatprep.mubr.f32.mxu0 0.0
  %1791 = vmatmul.mubr.f32.gmra.mrb[0].mxu0 %v1724
  %v1792 = vpop.f32.mrb[0].mxu0
  %v1793 = vadd.f32 0.0, %v1792
  %v1794 = vpop.f32.mrb[0].mxu0
  %1795 = vdwg.mxu0
  %v1797 = vsel %vm173, %v1552, 0
  %1799 = vmatprep.subr.mxu0 0.0
  %1800 = vmatpush1.msra.mxu0 %v49
  %1801 = vmatprep.subr.mxu0 0.0
  %1802 = vmatpush1.msra.mxu0 %v50
  %1803 = vmatprep.subr.mxu0 0.0
  %1804 = vmatpush1.msra.mxu0 0.0
  %1805 = vmatprep.subr.mxu0 0.0
  %1806 = vmatpush1.msra.mxu0 0.0
  %1807 = vmatprep.subr.mxu0 0.0
  %1808 = vmatpush1.msra.mxu0 0.0
  %1809 = vmatprep.subr.mxu0 0.0
  %1810 = vmatpush1.msra.mxu0 0.0
  %1811 = vmatprep.subr.mxu0 0.0
  %1812 = vmatpush1.msra.mxu0 0.0
  %1813 = vmatprep.subr.mxu0 0.0
  %1814 = vmatpush1.msra.mxu0 0.0
  %1815 = vmatprep.subr.mxu0 0.0
  %1816 = vmatpush1.msra.mxu0 0.0
  %1817 = vmatprep.subr.mxu0 0.0
  %1818 = vmatpush1.msra.mxu0 0.0
  %1819 = vmatprep.subr.mxu0 0.0
  %1820 = vmatpush1.msra.mxu0 0.0
  %1821 = vmatprep.subr.mxu0 0.0
  %1822 = vmatpush1.msra.mxu0 0.0
  %1823 = vmatprep.subr.mxu0 0.0
  %1824 = vmatpush1.msra.mxu0 0.0
  %1825 = vmatprep.subr.mxu0 0.0
  %1826 = vmatpush1.msra.mxu0 0.0
  %1827 = vmatprep.subr.mxu0 0.0
  %1828 = vmatpush1.msra.mxu0 0.0
  %1829 = vmatprep.subr.mxu0 0.0
  %1830 = vmatpush1.msra.mxu0 0.0
  %1831 = vmatprep.subr.mxu0 0.0
  %1832 = vmatpush1.msra.mxu0 0.0
  %1833 = vmatprep.subr.mxu0 0.0
  %1834 = vmatpush1.msra.mxu0 0.0
  %1835 = vmatprep.subr.mxu0 0.0
  %1836 = vmatpush1.msra.mxu0 0.0
  %1837 = vmatprep.subr.mxu0 0.0
  %1838 = vmatpush1.msra.mxu0 0.0
  %1839 = vmatprep.subr.mxu0 0.0
  %1840 = vmatpush1.msra.mxu0 0.0
  %1841 = vmatprep.subr.mxu0 0.0
  %1842 = vmatpush1.msra.mxu0 0.0
  %1843 = vmatprep.subr.mxu0 0.0
  %1844 = vmatpush1.msra.mxu0 0.0
  %1845 = vmatprep.subr.mxu0 0.0
  %1846 = vmatpush1.msra.mxu0 0.0
  %1847 = vmatprep.subr.mxu0 0.0
  %1848 = vmatpush1.msra.mxu0 0.0
  %1849 = vmatprep.subr.mxu0 0.0
  %1850 = vmatpush1.msra.mxu0 0.0
  %1851 = vmatprep.subr.mxu0 0.0
  %1852 = vmatpush1.msra.mxu0 0.0
  %1853 = vmatprep.subr.mxu0 0.0
  %1854 = vmatpush1.msra.mxu0 0.0
  %1855 = vmatprep.subr.mxu0 0.0
  %1856 = vmatpush1.msra.mxu0 0.0
  %1857 = vmatprep.subr.mxu0 0.0
  %1858 = vmatpush1.msra.mxu0 0.0
  %1859 = vmatprep.subr.mxu0 0.0
  %1860 = vmatpush1.msra.mxu0 0.0
  %1861 = vmatprep.subr.mxu0 0.0
  %1862 = vmatpush1.msra.mxu0 0.0
  %1863 = vmatprep.mubr.f32.mxu0 0.0
  %1864 = vmatmul.mubr.f32.gmra.mrb[0].mxu0 %v1797
  %v1865 = vpop.f32.mrb[0].mxu0
  %v1866 = vadd.f32 %v1793, %v1865
  %v1867 = vpop.f32.mrb[0].mxu0
  %1868 = vdwg.mxu0
  %1869 = vrot.lane.b32.xlu0 %v165, 96
  %v1870 = vpop.permute.xlu0 %1869
  %1871 = vrot.lane.b32.xlu0 %v165, 32
  %v1872 = vpop.permute.xlu0 %1871
  %v1873 = vsel %vm173, %v1870, 0
  %v1875 = vsel %vm173, %v1872, 0
  %1877 = vmatprep.subr.mxu0 0.0
  %1878 = vmatpush1.xpose.msra.mxu0 %v1875
  %1879 = vmatprep.subr.mxu0 0.0
  %1880 = vmatpush1.xpose.msra.mxu0 0.0
  %1881 = vmatprep.subr.mxu0 0.0
  %1882 = vmatpush1.xpose.msra.mxu0 0.0
  %1883 = vmatprep.subr.mxu0 0.0
  %1884 = vmatpush1.xpose.msra.mxu0 0.0
  %1885 = vmatprep.subr.mxu0 0.0
  %1886 = vmatpush1.xpose.msra.mxu0 0.0
  %1887 = vmatprep.subr.mxu0 0.0
  %1888 = vmatpush1.xpose.msra.mxu0 0.0
  %1889 = vmatprep.subr.mxu0 0.0
  %1890 = vmatpush1.xpose.msra.mxu0 0.0
  %1891 = vmatprep.subr.mxu0 0.0
  %1892 = vmatpush1.xpose.msra.mxu0 0.0
  %1893 = vmatprep.subr.mxu0 0.0
  %1894 = vmatpush1.xpose.msra.mxu0 0.0
  %1895 = vmatprep.subr.mxu0 0.0
  %1896 = vmatpush1.xpose.msra.mxu0 0.0
  %1897 = vmatprep.subr.mxu0 0.0
  %1898 = vmatpush1.xpose.msra.mxu0 0.0
  %1899 = vmatprep.subr.mxu0 0.0
  %1900 = vmatpush1.xpose.msra.mxu0 0.0
  %1901 = vmatprep.subr.mxu0 0.0
  %1902 = vmatpush1.xpose.msra.mxu0 0.0
  %1903 = vmatprep.subr.mxu0 0.0
  %1904 = vmatpush1.xpose.msra.mxu0 0.0
  %1905 = vmatprep.subr.mxu0 0.0
  %1906 = vmatpush1.xpose.msra.mxu0 0.0
  %1907 = vmatprep.subr.mxu0 0.0
  %1908 = vmatpush1.xpose.msra.mxu0 0.0
  %1909 = vmatprep.subr.mxu0 0.0
  %1910 = vmatpush1.xpose.msra.mxu0 0.0
  %1911 = vmatprep.subr.mxu0 0.0
  %1912 = vmatpush1.xpose.msra.mxu0 0.0
  %1913 = vmatprep.subr.mxu0 0.0
  %1914 = vmatpush1.xpose.msra.mxu0 0.0
  %1915 = vmatprep.subr.mxu0 0.0
  %1916 = vmatpush1.xpose.msra.mxu0 0.0
  %1917 = vmatprep.subr.mxu0 0.0
  %1918 = vmatpush1.xpose.msra.mxu0 0.0
  %1919 = vmatprep.subr.mxu0 0.0
  %1920 = vmatpush1.xpose.msra.mxu0 0.0
  %1921 = vmatprep.subr.mxu0 0.0
  %1922 = vmatpush1.xpose.msra.mxu0 0.0
  %1923 = vmatprep.subr.mxu0 0.0
  %1924 = vmatpush1.xpose.msra.mxu0 0.0
  %1925 = vmatprep.subr.mxu0 0.0
  %1926 = vmatpush1.xpose.msra.mxu0 0.0
  %1927 = vmatprep.subr.mxu0 0.0
  %1928 = vmatpush1.xpose.msra.mxu0 0.0
  %1929 = vmatprep.subr.mxu0 0.0
  %1930 = vmatpush1.xpose.msra.mxu0 0.0
  %1931 = vmatprep.subr.mxu0 0.0
  %1932 = vmatpush1.xpose.msra.mxu0 0.0
  %1933 = vmatprep.subr.mxu0 0.0
  %1934 = vmatpush1.xpose.msra.mxu0 0.0
  %1935 = vmatprep.subr.mxu0 0.0
  %1936 = vmatpush1.xpose.msra.mxu0 0.0
  %1937 = vmatprep.subr.mxu0 0.0
  %1938 = vmatpush1.xpose.msra.mxu0 0.0
  %1939 = vmatprep.subr.mxu0 0.0
  %1940 = vmatpush1.xpose.msra.mxu0 0.0
  %1941 = vmatprep.mubr.f32.mxu0 0.0
  %1942 = vmatmul.mubr.f32.gmra.mrb[0].mxu0 %v1873
  %v1943 = vpop.f32.mrb[0].mxu0
  %v1944 = vadd.f32 0.0, %v1943
  %v1945 = vpop.f32.mrb[0].mxu0
  %1946 = vdwg.mxu0
  %v1947 = vmul.f32 %v1944, 0.25
  %v1948 = vadd.f32 %v1947, %v1468
  %v1949 = vsel %vm256, %v1948, -inf
  %1950 = vmax.xlane.f32.xlu0 %v1949
  %v1951 = vpop.xlane.xlu0 %1950
  %v1952 = vsub.f32 %v1948, %v1951
  %v1953 = vmul.f32 %v1952, 1.442695
  %v1954 = vpow.pop %v1953
  %v1955 = vsel %vm256, %v1954, 0.0
  %1956 = vadd.xlane.f32.xlu0 %v1955
  %v1957 = vpop.xlane.xlu0 %1956
  %v1958 = vrcp.pop %v1957
  %v1959 = vmul.f32 %v1954, %v1958
  %1960 = vrot.lane.b32.xlu0 %v167, 96
  %v1961 = vpop.permute.xlu0 %1960
  %v1964 = vsel %vm256, %v1959, 0
  %1966 = vmatprep.subr.mxu0 0.0
  %1967 = vmatpush1.msra.mxu0 %v1961
  %1968 = vmatprep.subr.mxu0 0.0
  %1969 = vmatpush1.msra.mxu0 0.0
  %1970 = vmatprep.subr.mxu0 0.0
  %1971 = vmatpush1.msra.mxu0 0.0
  %1972 = vmatprep.subr.mxu0 0.0
  %1973 = vmatpush1.msra.mxu0 0.0
  %1974 = vmatprep.subr.mxu0 0.0
  %1975 = vmatpush1.msra.mxu0 0.0
  %1976 = vmatprep.subr.mxu0 0.0
  %1977 = vmatpush1.msra.mxu0 0.0
  %1978 = vmatprep.subr.mxu0 0.0
  %1979 = vmatpush1.msra.mxu0 0.0
  %1980 = vmatprep.subr.mxu0 0.0
  %1981 = vmatpush1.msra.mxu0 0.0
  %1982 = vmatprep.subr.mxu0 0.0
  %1983 = vmatpush1.msra.mxu0 0.0
  %1984 = vmatprep.subr.mxu0 0.0
  %1985 = vmatpush1.msra.mxu0 0.0
  %1986 = vmatprep.subr.mxu0 0.0
  %1987 = vmatpush1.msra.mxu0 0.0
  %1988 = vmatprep.subr.mxu0 0.0
  %1989 = vmatpush1.msra.mxu0 0.0
  %1990 = vmatprep.subr.mxu0 0.0
  %1991 = vmatpush1.msra.mxu0 0.0
  %1992 = vmatprep.subr.mxu0 0.0
  %1993 = vmatpush1.msra.mxu0 0.0
  %1994 = vmatprep.subr.mxu0 0.0
  %1995 = vmatpush1.msra.mxu0 0.0
  %1996 = vmatprep.subr.mxu0 0.0
  %1997 = vmatpush1.msra.mxu0 0.0
  %1998 = vmatprep.subr.mxu0 0.0
  %1999 = vmatpush1.msra.mxu0 0.0
  %2000 = vmatprep.subr.mxu0 0.0
  %2001 = vmatpush1.msra.mxu0 0.0
  %2002 = vmatprep.subr.mxu0 0.0
  %2003 = vmatpush1.msra.mxu0 0.0
  %2004 = vmatprep.subr.mxu0 0.0
  %2005 = vmatpush1.msra.mxu0 0.0
  %2006 = vmatprep.subr.mxu0 0.0
  %2007 = vmatpush1.msra.mxu0 0.0
  %2008 = vmatprep.subr.mxu0 0.0
  %2009 = vmatpush1.msra.mxu0 0.0
  %2010 = vmatprep.subr.mxu0 0.0
  %2011 = vmatpush1.msra.mxu0 0.0
  %2012 = vmatprep.subr.mxu0 0.0
  %2013 = vmatpush1.msra.mxu0 0.0
  %2014 = vmatprep.subr.mxu0 0.0
  %2015 = vmatpush1.msra.mxu0 0.0
  %2016 = vmatprep.subr.mxu0 0.0
  %2017 = vmatpush1.msra.mxu0 0.0
  %2018 = vmatprep.subr.mxu0 0.0
  %2019 = vmatpush1.msra.mxu0 0.0
  %2020 = vmatprep.subr.mxu0 0.0
  %2021 = vmatpush1.msra.mxu0 0.0
  %2022 = vmatprep.subr.mxu0 0.0
  %2023 = vmatpush1.msra.mxu0 0.0
  %2024 = vmatprep.subr.mxu0 0.0
  %2025 = vmatpush1.msra.mxu0 0.0
  %2026 = vmatprep.subr.mxu0 0.0
  %2027 = vmatpush1.msra.mxu0 0.0
  %2028 = vmatprep.subr.mxu0 0.0
  %2029 = vmatpush1.msra.mxu0 0.0
  %2030 = vmatprep.mubr.f32.mxu0 0.0
  %2031 = vmatmul.mubr.f32.gmra.mrb[0].mxu0 %v1964
  %v2032 = vpop.f32.mrb[0].mxu0
  %v2033 = vadd.f32 0.0, %v2032
  %v2034 = vpop.f32.mrb[0].mxu0
  %2035 = vdwg.mxu0
  %v2037 = vsel %vm173, %v2033, 0
  %2039 = vmatprep.subr.mxu0 0.0
  %2040 = vmatpush1.msra.mxu0 %v53
  %2041 = vmatprep.subr.mxu0 0.0
  %2042 = vmatpush1.msra.mxu0 %v54
  %2043 = vmatprep.subr.mxu0 0.0
  %2044 = vmatpush1.msra.mxu0 0.0
  %2045 = vmatprep.subr.mxu0 0.0
  %2046 = vmatpush1.msra.mxu0 0.0
  %2047 = vmatprep.subr.mxu0 0.0
  %2048 = vmatpush1.msra.mxu0 0.0
  %2049 = vmatprep.subr.mxu0 0.0
  %2050 = vmatpush1.msra.mxu0 0.0
  %2051 = vmatprep.subr.mxu0 0.0
  %2052 = vmatpush1.msra.mxu0 0.0
  %2053 = vmatprep.subr.mxu0 0.0
  %2054 = vmatpush1.msra.mxu0 0.0
  %2055 = vmatprep.subr.mxu0 0.0
  %2056 = vmatpush1.msra.mxu0 0.0
  %2057 = vmatprep.subr.mxu0 0.0
  %2058 = vmatpush1.msra.mxu0 0.0
  %2059 = vmatprep.subr.mxu0 0.0
  %2060 = vmatpush1.msra.mxu0 0.0
  %2061 = vmatprep.subr.mxu0 0.0
  %2062 = vmatpush1.msra.mxu0 0.0
  %2063 = vmatprep.subr.mxu0 0.0
  %2064 = vmatpush1.msra.mxu0 0.0
  %2065 = vmatprep.subr.mxu0 0.0
  %2066 = vmatpush1.msra.mxu0 0.0
  %2067 = vmatprep.subr.mxu0 0.0
  %2068 = vmatpush1.msra.mxu0 0.0
  %2069 = vmatprep.subr.mxu0 0.0
  %2070 = vmatpush1.msra.mxu0 0.0
  %2071 = vmatprep.subr.mxu0 0.0
  %2072 = vmatpush1.msra.mxu0 0.0
  %2073 = vmatprep.subr.mxu0 0.0
  %2074 = vmatpush1.msra.mxu0 0.0
  %2075 = vmatprep.subr.mxu0 0.0
  %2076 = vmatpush1.msra.mxu0 0.0
  %2077 = vmatprep.subr.mxu0 0.0
  %2078 = vmatpush1.msra.mxu0 0.0
  %2079 = vmatprep.subr.mxu0 0.0
  %2080 = vmatpush1.msra.mxu0 0.0
  %2081 = vmatprep.subr.mxu0 0.0
  %2082 = vmatpush1.msra.mxu0 0.0
  %2083 = vmatprep.subr.mxu0 0.0
  %2084 = vmatpush1.msra.mxu0 0.0
  %2085 = vmatprep.subr.mxu0 0.0
  %2086 = vmatpush1.msra.mxu0 0.0
  %2087 = vmatprep.subr.mxu0 0.0
  %2088 = vmatpush1.msra.mxu0 0.0
  %2089 = vmatprep.subr.mxu0 0.0
  %2090 = vmatpush1.msra.mxu0 0.0
  %2091 = vmatprep.subr.mxu0 0.0
  %2092 = vmatpush1.msra.mxu0 0.0
  %2093 = vmatprep.subr.mxu0 0.0
  %2094 = vmatpush1.msra.mxu0 0.0
  %2095 = vmatprep.subr.mxu0 0.0
  %2096 = vmatpush1.msra.mxu0 0.0
  %2097 = vmatprep.subr.mxu0 0.0
  %2098 = vmatpush1.msra.mxu0 0.0
  %2099 = vmatprep.subr.mxu0 0.0
  %2100 = vmatpush1.msra.mxu0 0.0
  %2101 = vmatprep.subr.mxu0 0.0
  %2102 = vmatpush1.msra.mxu0 0.0
  %2103 = vmatprep.mubr.f32.mxu0 0.0
  %2104 = vmatmul.mubr.f32.gmra.mrb[0].mxu0 %v2037
  %v2105 = vpop.f32.mrb[0].mxu0
  %v2106 = vadd.f32 0.0, %v2105
  %v2107 = vpop.f32.mrb[0].mxu0
  %2108 = vdwg.mxu0
  %v2109 = vadd.f32 %v1866, %v2106
  %2110 = vrot.lane.b32.xlu0 %v165, 80
  %v2111 = vpop.permute.xlu0 %2110
  %2112 = vrot.lane.b32.xlu0 %v165, 16
  %v2113 = vpop.permute.xlu0 %2112
  %v2114 = vsel %vm173, %v2111, 0
  %v2116 = vsel %vm173, %v2113, 0
  %2118 = vmatprep.subr.mxu0 0.0
  %2119 = vmatpush1.xpose.msra.mxu0 %v2116
  %2120 = vmatprep.subr.mxu0 0.0
  %2121 = vmatpush1.xpose.msra.mxu0 0.0
  %2122 = vmatprep.subr.mxu0 0.0
  %2123 = vmatpush1.xpose.msra.mxu0 0.0
  %2124 = vmatprep.subr.mxu0 0.0
  %2125 = vmatpush1.xpose.msra.mxu0 0.0
  %2126 = vmatprep.subr.mxu0 0.0
  %2127 = vmatpush1.xpose.msra.mxu0 0.0
  %2128 = vmatprep.subr.mxu0 0.0
  %2129 = vmatpush1.xpose.msra.mxu0 0.0
  %2130 = vmatprep.subr.mxu0 0.0
  %2131 = vmatpush1.xpose.msra.mxu0 0.0
  %2132 = vmatprep.subr.mxu0 0.0
  %2133 = vmatpush1.xpose.msra.mxu0 0.0
  %2134 = vmatprep.subr.mxu0 0.0
  %2135 = vmatpush1.xpose.msra.mxu0 0.0
  %2136 = vmatprep.subr.mxu0 0.0
  %2137 = vmatpush1.xpose.msra.mxu0 0.0
  %2138 = vmatprep.subr.mxu0 0.0
  %2139 = vmatpush1.xpose.msra.mxu0 0.0
  %2140 = vmatprep.subr.mxu0 0.0
  %2141 = vmatpush1.xpose.msra.mxu0 0.0
  %2142 = vmatprep.subr.mxu0 0.0
  %2143 = vmatpush1.xpose.msra.mxu0 0.0
  %2144 = vmatprep.subr.mxu0 0.0
  %2145 = vmatpush1.xpose.msra.mxu0 0.0
  %2146 = vmatprep.subr.mxu0 0.0
  %2147 = vmatpush1.xpose.msra.mxu0 0.0
  %2148 = vmatprep.subr.mxu0 0.0
  %2149 = vmatpush1.xpose.msra.mxu0 0.0
  %2150 = vmatprep.subr.mxu0 0.0
  %2151 = vmatpush1.xpose.msra.mxu0 0.0
  %2152 = vmatprep.subr.mxu0 0.0
  %2153 = vmatpush1.xpose.msra.mxu0 0.0
  %2154 = vmatprep.subr.mxu0 0.0
  %2155 = vmatpush1.xpose.msra.mxu0 0.0
  %2156 = vmatprep.subr.mxu0 0.0
  %2157 = vmatpush1.xpose.msra.mxu0 0.0
  %2158 = vmatprep.subr.mxu0 0.0
  %2159 = vmatpush1.xpose.msra.mxu0 0.0
  %2160 = vmatprep.subr.mxu0 0.0
  %2161 = vmatpush1.xpose.msra.mxu0 0.0
  %2162 = vmatprep.subr.mxu0 0.0
  %2163 = vmatpush1.xpose.msra.mxu0 0.0
  %2164 = vmatprep.subr.mxu0 0.0
  %2165 = vmatpush1.xpose.msra.mxu0 0.0
  %2166 = vmatprep.subr.mxu0 0.0
  %2167 = vmatpush1.xpose.msra.mxu0 0.0
  %2168 = vmatprep.subr.mxu0 0.0
  %2169 = vmatpush1.xpose.msra.mxu0 0.0
  %2170 = vmatprep.subr.mxu0 0.0
  %2171 = vmatpush1.xpose.msra.mxu0 0.0
  %2172 = vmatprep.subr.mxu0 0.0
  %2173 = vmatpush1.xpose.msra.mxu0 0.0
  %2174 = vmatprep.subr.mxu0 0.0
  %2175 = vmatpush1.xpose.msra.mxu0 0.0
  %2176 = vmatprep.subr.mxu0 0.0
  %2177 = vmatpush1.xpose.msra.mxu0 0.0
  %2178 = vmatprep.subr.mxu0 0.0
  %2179 = vmatpush1.xpose.msra.mxu0 0.0
  %2180 = vmatprep.subr.mxu0 0.0
  %2181 = vmatpush1.xpose.msra.mxu0 0.0
  %2182 = vmatprep.mubr.f32.mxu0 0.0
  %2183 = vmatmul.mubr.f32.gmra.mrb[0].mxu0 %v2114
  %v2184 = vpop.f32.mrb[0].mxu0
  %v2185 = vadd.f32 0.0, %v2184
  %v2186 = vpop.f32.mrb[0].mxu0
  %2187 = vdwg.mxu0
  %v2188 = vmul.f32 %v2185, 0.25
  %v2189 = vadd.f32 %v2188, %v1468
  %v2190 = vsel %vm256, %v2189, -inf
  %2191 = vmax.xlane.f32.xlu0 %v2190
  %v2192 = vpop.xlane.xlu0 %2191
  %v2193 = vsub.f32 %v2189, %v2192
  %v2194 = vmul.f32 %v2193, 1.442695
  %v2195 = vpow.pop %v2194
  %v2196 = vsel %vm256, %v2195, 0.0
  %2197 = vadd.xlane.f32.xlu0 %v2196
  %v2198 = vpop.xlane.xlu0 %2197
  %v2199 = vrcp.pop %v2198
  %v2200 = vmul.f32 %v2195, %v2199
  %2201 = vrot.lane.b32.xlu0 %v167, 80
  %v2202 = vpop.permute.xlu0 %2201
  %v2205 = vsel %vm256, %v2200, 0
  %2207 = vmatprep.subr.mxu0 0.0
  %2208 = vmatpush1.msra.mxu0 %v2202
  %2209 = vmatprep.subr.mxu0 0.0
  %2210 = vmatpush1.msra.mxu0 0.0
  %2211 = vmatprep.subr.mxu0 0.0
  %2212 = vmatpush1.msra.mxu0 0.0
  %2213 = vmatprep.subr.mxu0 0.0
  %2214 = vmatpush1.msra.mxu0 0.0
  %2215 = vmatprep.subr.mxu0 0.0
  %2216 = vmatpush1.msra.mxu0 0.0
  %2217 = vmatprep.subr.mxu0 0.0
  %2218 = vmatpush1.msra.mxu0 0.0
  %2219 = vmatprep.subr.mxu0 0.0
  %2220 = vmatpush1.msra.mxu0 0.0
  %2221 = vmatprep.subr.mxu0 0.0
  %2222 = vmatpush1.msra.mxu0 0.0
  %2223 = vmatprep.subr.mxu0 0.0
  %2224 = vmatpush1.msra.mxu0 0.0
  %2225 = vmatprep.subr.mxu0 0.0
  %2226 = vmatpush1.msra.mxu0 0.0
  %2227 = vmatprep.subr.mxu0 0.0
  %2228 = vmatpush1.msra.mxu0 0.0
  %2229 = vmatprep.subr.mxu0 0.0
  %2230 = vmatpush1.msra.mxu0 0.0
  %2231 = vmatprep.subr.mxu0 0.0
  %2232 = vmatpush1.msra.mxu0 0.0
  %2233 = vmatprep.subr.mxu0 0.0
  %2234 = vmatpush1.msra.mxu0 0.0
  %2235 = vmatprep.subr.mxu0 0.0
  %2236 = vmatpush1.msra.mxu0 0.0
  %2237 = vmatprep.subr.mxu0 0.0
  %2238 = vmatpush1.msra.mxu0 0.0
  %2239 = vmatprep.subr.mxu0 0.0
  %2240 = vmatpush1.msra.mxu0 0.0
  %2241 = vmatprep.subr.mxu0 0.0
  %2242 = vmatpush1.msra.mxu0 0.0
  %2243 = vmatprep.subr.mxu0 0.0
  %2244 = vmatpush1.msra.mxu0 0.0
  %2245 = vmatprep.subr.mxu0 0.0
  %2246 = vmatpush1.msra.mxu0 0.0
  %2247 = vmatprep.subr.mxu0 0.0
  %2248 = vmatpush1.msra.mxu0 0.0
  %2249 = vmatprep.subr.mxu0 0.0
  %2250 = vmatpush1.msra.mxu0 0.0
  %2251 = vmatprep.subr.mxu0 0.0
  %2252 = vmatpush1.msra.mxu0 0.0
  %2253 = vmatprep.subr.mxu0 0.0
  %2254 = vmatpush1.msra.mxu0 0.0
  %2255 = vmatprep.subr.mxu0 0.0
  %2256 = vmatpush1.msra.mxu0 0.0
  %2257 = vmatprep.subr.mxu0 0.0
  %2258 = vmatpush1.msra.mxu0 0.0
  %2259 = vmatprep.subr.mxu0 0.0
  %2260 = vmatpush1.msra.mxu0 0.0
  %2261 = vmatprep.subr.mxu0 0.0
  %2262 = vmatpush1.msra.mxu0 0.0
  %2263 = vmatprep.subr.mxu0 0.0
  %2264 = vmatpush1.msra.mxu0 0.0
  %2265 = vmatprep.subr.mxu0 0.0
  %2266 = vmatpush1.msra.mxu0 0.0
  %2267 = vmatprep.subr.mxu0 0.0
  %2268 = vmatpush1.msra.mxu0 0.0
  %2269 = vmatprep.subr.mxu0 0.0
  %2270 = vmatpush1.msra.mxu0 0.0
  %2271 = vmatprep.mubr.f32.mxu0 0.0
  %2272 = vmatmul.mubr.f32.gmra.mrb[0].mxu0 %v2205
  %v2273 = vpop.f32.mrb[0].mxu0
  %v2274 = vadd.f32 0.0, %v2273
  %v2275 = vpop.f32.mrb[0].mxu0
  %2276 = vdwg.mxu0
  %v2278 = vsel %vm173, %v2274, 0
  %2280 = vmatprep.subr.mxu0 0.0
  %2281 = vmatpush1.msra.mxu0 %v55
  %2282 = vmatprep.subr.mxu0 0.0
  %2283 = vmatpush1.msra.mxu0 %v56
  %2284 = vmatprep.subr.mxu0 0.0
  %2285 = vmatpush1.msra.mxu0 0.0
  %2286 = vmatprep.subr.mxu0 0.0
  %2287 = vmatpush1.msra.mxu0 0.0
  %2288 = vmatprep.subr.mxu0 0.0
  %2289 = vmatpush1.msra.mxu0 0.0
  %2290 = vmatprep.subr.mxu0 0.0
  %2291 = vmatpush1.msra.mxu0 0.0
  %2292 = vmatprep.subr.mxu0 0.0
  %2293 = vmatpush1.msra.mxu0 0.0
  %2294 = vmatprep.subr.mxu0 0.0
  %2295 = vmatpush1.msra.mxu0 0.0
  %2296 = vmatprep.subr.mxu0 0.0
  %2297 = vmatpush1.msra.mxu0 0.0
  %2298 = vmatprep.subr.mxu0 0.0
  %2299 = vmatpush1.msra.mxu0 0.0
  %2300 = vmatprep.subr.mxu0 0.0
  %2301 = vmatpush1.msra.mxu0 0.0
  %2302 = vmatprep.subr.mxu0 0.0
  %2303 = vmatpush1.msra.mxu0 0.0
  %2304 = vmatprep.subr.mxu0 0.0
  %2305 = vmatpush1.msra.mxu0 0.0
  %2306 = vmatprep.subr.mxu0 0.0
  %2307 = vmatpush1.msra.mxu0 0.0
  %2308 = vmatprep.subr.mxu0 0.0
  %2309 = vmatpush1.msra.mxu0 0.0
  %2310 = vmatprep.subr.mxu0 0.0
  %2311 = vmatpush1.msra.mxu0 0.0
  %2312 = vmatprep.subr.mxu0 0.0
  %2313 = vmatpush1.msra.mxu0 0.0
  %2314 = vmatprep.subr.mxu0 0.0
  %2315 = vmatpush1.msra.mxu0 0.0
  %2316 = vmatprep.subr.mxu0 0.0
  %2317 = vmatpush1.msra.mxu0 0.0
  %2318 = vmatprep.subr.mxu0 0.0
  %2319 = vmatpush1.msra.mxu0 0.0
  %2320 = vmatprep.subr.mxu0 0.0
  %2321 = vmatpush1.msra.mxu0 0.0
  %2322 = vmatprep.subr.mxu0 0.0
  %2323 = vmatpush1.msra.mxu0 0.0
  %2324 = vmatprep.subr.mxu0 0.0
  %2325 = vmatpush1.msra.mxu0 0.0
  %2326 = vmatprep.subr.mxu0 0.0
  %2327 = vmatpush1.msra.mxu0 0.0
  %2328 = vmatprep.subr.mxu0 0.0
  %2329 = vmatpush1.msra.mxu0 0.0
  %2330 = vmatprep.subr.mxu0 0.0
  %2331 = vmatpush1.msra.mxu0 0.0
  %2332 = vmatprep.subr.mxu0 0.0
  %2333 = vmatpush1.msra.mxu0 0.0
  %2334 = vmatprep.subr.mxu0 0.0
  %2335 = vmatpush1.msra.mxu0 0.0
  %2336 = vmatprep.subr.mxu0 0.0
  %2337 = vmatpush1.msra.mxu0 0.0
  %2338 = vmatprep.subr.mxu0 0.0
  %2339 = vmatpush1.msra.mxu0 0.0
  %2340 = vmatprep.subr.mxu0 0.0
  %2341 = vmatpush1.msra.mxu0 0.0
  %2342 = vmatprep.subr.mxu0 0.0
  %2343 = vmatpush1.msra.mxu0 0.0
  %2344 = vmatprep.mubr.f32.mxu0 0.0
  %2345 = vmatmul.mubr.f32.gmra.mrb[0].mxu0 %v2278
  %v2346 = vpop.f32.mrb[0].mxu0
  %v2347 = vadd.f32 0.0, %v2346
  %v2348 = vpop.f32.mrb[0].mxu0
  %2349 = vdwg.mxu0
  %v2350 = vadd.f32 %v2109, %v2347
  %v2351 = vld [vmem:[%s5] sm:$0x1]
  %v2353 = vlaneseq
  %v2354 = vshrl.u32 %v2353, 7
  %v2355 = vsub.s32 0, %v2354
  %v2356 = vrot.slane %v2351, %v2355
  %v2358 = vadd.f32 %v2350, %v2356
  %v2359 = vadd.f32 %v48, %v2358
  %v2360 = vld [vmem:[%s6] sm:$0x1]
  %v2361 = vld [vmem:[%s7] sm:$0x1]
  %v2362 = vsel %vm85, %v2359, 0.0
  %2363 = vadd.xlane.f32.xlu0 %v2362
  %v2364 = vpop.xlane.xlu0 %2363
  %v2365 = vmul.f32 %v2364, %v1151
  %v2366 = vsub.f32 %v2359, %v2365
  %v2367 = vmul.f32 %v2366, %v2366
  %v2368 = vsel %vm85, %v2367, 0.0
  %2369 = vadd.xlane.f32.xlu0 %v2368
  %v2370 = vpop.xlane.xlu0 %2369
  %v2371 = vmul.f32 %v2370, %v1151
  %v2372 = vadd.f32 %v2371, 1e-05
  %v2373 = vrsqrt.pop %v2372
  %v2374 = vmul.f32 %v2366, %v2373
  %v2376 = vlaneseq
  %v2377 = vshrl.u32 %v2376, 7
  %v2378 = vsub.s32 0, %v2377
  %v2379 = vrot.slane %v2360, %v2378
  %v2381 = vmul.f32 %v2374, %v2379
  %v2383 = vlaneseq
  %v2384 = vshrl.u32 %v2383, 7
  %v2385 = vsub.s32 0, %v2384
  %v2386 = vrot.slane %v2361, %v2385
  %v2388 = vadd.f32 %v2381, %v2386
  %v2389 = vld [vmem:[%s8] sm:$0xff]
  %v2390 = vld [vmem:[%s8 + $0x8] sm:$0xff]
  %v2391 = vld [vmem:[%s8 + $0x10] sm:$0xff]
  %v2392 = vld [vmem:[%s8 + $0x18] sm:$0xff]
  %v2393 = vld [vmem:[%s8 + $0x20] sm:$0xff]
  %v2394 = vld [vmem:[%s8 + $0x28] sm:$0xff]
  %v2395 = vld [vmem:[%s8 + $0x30] sm:$0xff]
  %v2396 = vld [vmem:[%s8 + $0x38] sm:$0xff]
  %v2397 = vld [vmem:[%s9] sm:$0x1]
  %v2399 = vlaneseq
  %v2400 = vshrl.u32 %v2399, 7
  %v2401 = vsub.s32 0, %v2400
  %v2402 = vrot.slane %v2397, %v2401
  %v2405 = vsel %vm85, %v2388, 0
  %2407 = vmatprep.subr.mxu0 0.0
  %2408 = vmatpush1.msra.mxu0 %v2389
  %2409 = vmatprep.subr.mxu0 0.0
  %2410 = vmatpush1.msra.mxu0 %v2390
  %2411 = vmatprep.subr.mxu0 0.0
  %2412 = vmatpush1.msra.mxu0 %v2391
  %2413 = vmatprep.subr.mxu0 0.0
  %2414 = vmatpush1.msra.mxu0 %v2392
  %2415 = vmatprep.subr.mxu0 0.0
  %2416 = vmatpush1.msra.mxu0 %v2393
  %2417 = vmatprep.subr.mxu0 0.0
  %2418 = vmatpush1.msra.mxu0 %v2394
  %2419 = vmatprep.subr.mxu0 0.0
  %2420 = vmatpush1.msra.mxu0 %v2395
  %2421 = vmatprep.subr.mxu0 0.0
  %2422 = vmatpush1.msra.mxu0 %v2396
  %2423 = vmatprep.subr.mxu0 0.0
  %2424 = vmatpush1.msra.mxu0 0.0
  %2425 = vmatprep.subr.mxu0 0.0
  %2426 = vmatpush1.msra.mxu0 0.0
  %2427 = vmatprep.subr.mxu0 0.0
  %2428 = vmatpush1.msra.mxu0 0.0
  %2429 = vmatprep.subr.mxu0 0.0
  %2430 = vmatpush1.msra.mxu0 0.0
  %2431 = vmatprep.subr.mxu0 0.0
  %2432 = vmatpush1.msra.mxu0 0.0
  %2433 = vmatprep.subr.mxu0 0.0
  %2434 = vmatpush1.msra.mxu0 0.0
  %2435 = vmatprep.subr.mxu0 0.0
  %2436 = vmatpush1.msra.mxu0 0.0
  %2437 = vmatprep.subr.mxu0 0.0
  %2438 = vmatpush1.msra.mxu0 0.0
  %2439 = vmatprep.subr.mxu0 0.0
  %2440 = vmatpush1.msra.mxu0 0.0
  %2441 = vmatprep.subr.mxu0 0.0
  %2442 = vmatpush1.msra.mxu0 0.0
  %2443 = vmatprep.subr.mxu0 0.0
  %2444 = vmatpush1.msra.mxu0 0.0
  %2445 = vmatprep.subr.mxu0 0.0
  %2446 = vmatpush1.msra.mxu0 0.0
  %2447 = vmatprep.subr.mxu0 0.0
  %2448 = vmatpush1.msra.mxu0 0.0
  %2449 = vmatprep.subr.mxu0 0.0
  %2450 = vmatpush1.msra.mxu0 0.0
  %2451 = vmatprep.subr.mxu0 0.0
  %2452 = vmatpush1.msra.mxu0 0.0
  %2453 = vmatprep.subr.mxu0 0.0
  %2454 = vmatpush1.msra.mxu0 0.0
  %2455 = vmatprep.subr.mxu0 0.0
  %2456 = vmatpush1.msra.mxu0 0.0
  %2457 = vmatprep.subr.mxu0 0.0
  %2458 = vmatpush1.msra.mxu0 0.0
  %2459 = vmatprep.subr.mxu0 0.0
  %2460 = vmatpush1.msra.mxu0 0.0
  %2461 = vmatprep.subr.mxu0 0.0
  %2462 = vmatpush1.msra.mxu0 0.0
  %2463 = vmatprep.subr.mxu0 0.0
  %2464 = vmatpush1.msra.mxu0 0.0
  %2465 = vmatprep.subr.mxu0 0.0
  %2466 = vmatpush1.msra.mxu0 0.0
  %2467 = vmatprep.subr.mxu0 0.0
  %2468 = vmatpush1.msra.mxu0 0.0
  %2469 = vmatprep.subr.mxu0 0.0
  %2470 = vmatpush1.msra.mxu0 0.0
  %2471 = vmatprep.mubr.f32.mxu0 0.0
  %2472 = vmatmul.mubr.f32.gmra.mrb[0].mxu0 %v2405
  %v2473 = vpop.f32.mrb[0].mxu0
  %v2474 = vadd.f32 %v2402, %v2473
  %v2475 = vpop.f32.mrb[0].mxu0
  %2476 = vdwg.mxu0
  %v2477 = vmax.f32 %v2474, 0.0
  %v2478 = vld [vmem:[%s10] sm:$0xff]
  %v2479 = vld [vmem:[%s10 + $0x8] sm:$0xff]
  %v2480 = vld [vmem:[%s10 + $0x10] sm:$0xff]
  %v2481 = vld [vmem:[%s10 + $0x18] sm:$0xff]
  %v2482 = vld [vmem:[%s10 + $0x20] sm:$0xff]
  %v2483 = vld [vmem:[%s10 + $0x28] sm:$0xff]
  %v2484 = vld [vmem:[%s10 + $0x30] sm:$0xff]
  %v2485 = vld [vmem:[%s10 + $0x38] sm:$0xff]
  %v2486 = vld [vmem:[%s11] sm:$0x1]
  %v2488 = vlaneseq
  %v2489 = vshrl.u32 %v2488, 7
  %v2490 = vsub.s32 0, %v2489
  %v2491 = vrot.slane %v2486, %v2490
  %v2494 = vsel %vm85, %v2477, 0
  %2496 = vmatprep.subr.mxu0 0.0
  %2497 = vmatpush1.msra.mxu0 %v2478
  %2498 = vmatprep.subr.mxu0 0.0
  %2499 = vmatpush1.msra.mxu0 %v2479
  %2500 = vmatprep.subr.mxu0 0.0
  %2501 = vmatpush1.msra.mxu0 %v2480
  %2502 = vmatprep.subr.mxu0 0.0
  %2503 = vmatpush1.msra.mxu0 %v2481
  %2504 = vmatprep.subr.mxu0 0.0
  %2505 = vmatpush1.msra.mxu0 %v2482
  %2506 = vmatprep.subr.mxu0 0.0
  %2507 = vmatpush1.msra.mxu0 %v2483
  %2508 = vmatprep.subr.mxu0 0.0
  %2509 = vmatpush1.msra.mxu0 %v2484
  %2510 = vmatprep.subr.mxu0 0.0
  %2511 = vmatpush1.msra.mxu0 %v2485
  %2512 = vmatprep.subr.mxu0 0.0
  %2513 = vmatpush1.msra.mxu0 0.0
  %2514 = vmatprep.subr.mxu0 0.0
  %2515 = vmatpush1.msra.mxu0 0.0
  %2516 = vmatprep.subr.mxu0 0.0
  %2517 = vmatpush1.msra.mxu0 0.0
  %2518 = vmatprep.subr.mxu0 0.0
  %2519 = vmatpush1.msra.mxu0 0.0
  %2520 = vmatprep.subr.mxu0 0.0
  %2521 = vmatpush1.msra.mxu0 0.0
  %2522 = vmatprep.subr.mxu0 0.0
  %2523 = vmatpush1.msra.mxu0 0.0
  %2524 = vmatprep.subr.mxu0 0.0
  %2525 = vmatpush1.msra.mxu0 0.0
  %2526 = vmatprep.subr.mxu0 0.0
  %2527 = vmatpush1.msra.mxu0 0.0
  %2528 = vmatprep.subr.mxu0 0.0
  %2529 = vmatpush1.msra.mxu0 0.0
  %2530 = vmatprep.subr.mxu0 0.0
  %2531 = vmatpush1.msra.mxu0 0.0
  %2532 = vmatprep.subr.mxu0 0.0
  %2533 = vmatpush1.msra.mxu0 0.0
  %2534 = vmatprep.subr.mxu0 0.0
  %2535 = vmatpush1.msra.mxu0 0.0
  %2536 = vmatprep.subr.mxu0 0.0
  %2537 = vmatpush1.msra.mxu0 0.0
  %2538 = vmatprep.subr.mxu0 0.0
  %2539 = vmatpush1.msra.mxu0 0.0
  %2540 = vmatprep.subr.mxu0 0.0
  %2541 = vmatpush1.msra.mxu0 0.0
  %2542 = vmatprep.subr.mxu0 0.0
  %2543 = vmatpush1.msra.mxu0 0.0
  %2544 = vmatprep.subr.mxu0 0.0
  %2545 = vmatpush1.msra.mxu0 0.0
  %2546 = vmatprep.subr.mxu0 0.0
  %2547 = vmatpush1.msra.mxu0 0.0
  %2548 = vmatprep.subr.mxu0 0.0
  %2549 = vmatpush1.msra.mxu0 0.0
  %2550 = vmatprep.subr.mxu0 0.0
  %2551 = vmatpush1.msra.mxu0 0.0
  %2552 = vmatprep.subr.mxu0 0.0
  %2553 = vmatpush1.msra.mxu0 0.0
  %2554 = vmatprep.subr.mxu0 0.0
  %2555 = vmatpush1.msra.mxu0 0.0
  %2556 = vmatprep.subr.mxu0 0.0
  %2557 = vmatpush1.msra.mxu0 0.0
  %2558 = vmatprep.subr.mxu0 0.0
  %2559 = vmatpush1.msra.mxu0 0.0
  %2560 = vmatprep.mubr.f32.mxu0 0.0
  %2561 = vmatmul.mubr.f32.gmra.mrb[0].mxu0 %v2494
  %v2562 = vpop.f32.mrb[0].mxu0
  %v2563 = vadd.f32 %v2491, %v2562
  %v2564 = vpop.f32.mrb[0].mxu0
  %2565 = vdwg.mxu0
  %v2566 = vadd.f32 %v2388, %v2563
  %v2567 = vld [vmem:[%s12] sm:$0x1]
  %v2568 = vld [vmem:[%s13] sm:$0x1]
  %v2569 = vsel %vm85, %v2566, 0.0
  %2570 = vadd.xlane.f32.xlu0 %v2569
  %v2571 = vpop.xlane.xlu0 %2570
  %v2572 = vmul.f32 %v2571, %v1151
  %v2573 = vsub.f32 %v2566, %v2572
  %v2574 = vmul.f32 %v2573, %v2573
  %v2575 = vsel %vm85, %v2574, 0.0
  %2576 = vadd.xlane.f32.xlu0 %v2575
  %v2577 = vpop.xlane.xlu0 %2576
  %v2578 = vmul.f32 %v2577, %v1151
  %v2579 = vadd.f32 %v2578, 1e-05
  %v2580 = vrsqrt.pop %v2579
  %v2581 = vmul.f32 %v2573, %v2580
  %v2583 = vlaneseq
  %v2584 = vshrl.u32 %v2583, 7
  %v2585 = vsub.s32 0, %v2584
  %v2586 = vrot.slane %v2567, %v2585
  %v2588 = vmul.f32 %v2581, %v2586
  %v2590 = vlaneseq
  %v2591 = vshrl.u32 %v2590, 7
  %v2592 = vsub.s32 0, %v2591
  %v2593 = vrot.slane %v2568, %v2592
  %v2595 = vadd.f32 %v2588, %v2593
  %2596 = vst.msk [vmem:[%s14 + $0x8] sm:$0xff] %vm85, %v2595
  // Predicated region
  $region58: #{forward.7} parent=0 // pred_check
    _
  $region59: #{forward.7} parent=0 // pred_check_branch
    %2598 = sbr.rel (0) target = $region61
  $region60: #{forward.7} parent=0 // pred_region
    _
  $region61: #{forward.7} parent=0 // pred_fallthru
    _
  // Predicated region
  $region62: #{forward.7} parent=0 // pred_check
    _
  $region63: #{forward.7} parent=0 // pred_check_branch
    %2600 = sbr.rel (0) target = $region65
  $region64: #{forward.7} parent=0 // pred_region
    _
  $region65: #{forward.7} parent=0 // pred_fallthru
    _

</llo_original>
